<compile_context>
chip_gen: v7x
topology: tpu7x:2x2x1
jax: 0.10.0
libtpu: 0.0.40
codegen_flags: <defaults>
</compile_context>

<pallas_src>
import jax
import jax.numpy as jnp
from jax.experimental import pallas as pl
from jax.experimental.pallas import tpu as pltpu


# Grid / channel constants implied by the module (input is pinned to 1x28x28 by 32*49).
G1_H, G1_W = 18, 24    # extended conv1 output grid; valid 14x14 output sits at [1:15, 1:15]
G2 = 16                # depthwise/pointwise grid; valid 14x14 output sits at [0:14, 0:14]
C1, C2 = 16, 32        # channel counts
NCLS = 10
NCLS_PAD = 128         # classes padded to a full lane width for lane-dense FC stores

B_TILE_MAX = 32        # images per grid step in the fused conv kernel
FC_ROW_TILE_MAX = 128  # image rows per grid step in the FC kernel


# ---------------------------------------------------------------------------
# Pallas kernels
# ---------------------------------------------------------------------------

def _fused_conv_kernel(taps_ref, mask_ref, w1_ref, b1_ref, wdw_ref, bdw_ref,
                       wpw_ref, bpw_ref, o_ref):
    """A tile of `bt` images per grid step:
       conv1(3x3,s2,p1)+BN+ReLU -> dw3x3(p1)+BN+ReLU -> pw1x1+BN+ReLU.

    taps_ref : (bt*432, 9)  bf16  stride-2 3x3 patches on the extended (18,24) grid.
    mask_ref : (432, 1)     f32   1.0 on the valid 14x14 conv1 region, 0.0 elsewhere
                                  (doubles as the depthwise conv's zero padding ring).
    w1/b1    : (9,16) bf16 / (1,16) f32   BN-folded conv1 weight (tap-major) / bias.
    wdw/bdw  : (9,16) f32  / (1,16) f32   BN-folded depthwise weight / bias.
    wpw/bpw  : (16,32) bf16 / (1,32) f32  BN-folded pointwise weight / bias.
    o_ref    : (bt*256, 32) bf16  pointwise output on the 16x16 grid; rows with
                                  h>=14 or w>=14 are junk and get zero fc weight.
    """
    m1 = G1_H * G1_W
    bt = taps_ref.shape[0] // m1                                  # static

    # --- conv1 as one bf16 MXU matmul over the 9 taps, f32 accumulate ---
    y1 = jnp.dot(taps_ref[...], w1_ref[...], preferred_element_type=jnp.float32)
    y1 = jnp.maximum(y1 + b1_ref[...], 0.0)                       # (bt*432, 16) f32
    # Mask the invalid ring / junk rows (layout-preserving reshapes: last dim kept).
    y1 = y1.reshape(bt, m1, C1) * mask_ref[...].reshape(1, m1, 1)
    y1 = y1.reshape(bt, G1_H, G1_W, C1)                           # (bt, 18, 24, 16)

    # --- depthwise 3x3, stride 1, pad 1: nine per-channel MACs on the VPU.
    # Build the three W-shifted copies once (one unaligned sublane relayout per dj
    # instead of per tap); H shifts slice a major axis and are free.
    wdw = wdw_ref[...]                                            # (9, 16)
    shifted = [y1[:, :, dj:dj + G2, :] for dj in range(3)]        # 3x (bt, 18, 16, 16)
    acc = shifted[0][:, 0:G2, :, :] * wdw[0]
    for t in range(1, 9):
        di, dj = divmod(t, 3)
        acc = acc + shifted[dj][:, di:di + G2, :, :] * wdw[t]
    y2 = jnp.maximum(acc + bdw_ref[...], 0.0)                     # (bt, 16, 16, 16)

    # --- pointwise 1x1 conv (16 -> 32) on the MXU, bf16 operands, f32 accumulate ---
    y2f = y2.reshape(bt * G2 * G2, C1).astype(jnp.bfloat16)       # layout-preserving
    y3 = jnp.dot(y2f, wpw_ref[...], preferred_element_type=jnp.float32)
    o_ref[...] = jnp.maximum(y3 + bpw_ref[...], 0.0).astype(jnp.bfloat16)


def _fc_kernel(x_ref, w_ref, b_ref, o_ref):
    """logits = x @ W + b, AvgPool2d(2,2) + flatten folded into W, classes padded to 128."""
    y = jnp.dot(x_ref[...], w_ref[...], preferred_element_type=jnp.float32)
    o_ref[...] = y + b_ref[...]


# ---------------------------------------------------------------------------
# pallas_call wrappers
# ---------------------------------------------------------------------------

def fused_conv_block(taps, prep, n_imgs, bt):
    m1 = G1_H * G1_W
    rows = G2 * G2
    steps = n_imgs // bt
    flops = n_imgs * 2 * (m1 * 9 * C1 + rows * 9 * C1 + rows * C1 * C2)
    bytes_accessed = (taps.size * 2                      # bf16 taps in
                      + n_imgs * rows * C2 * 2           # bf16 features out
                      + m1 * 4                           # mask
                      + 9 * C1 * 2 + 9 * C1 * 4          # conv1 / dw weights
                      + C1 * C2 * 2 + (2 * C1 + C2) * 4)  # pw weight + biases
    return pl.pallas_call(
        _fused_conv_kernel,
        out_shape=jax.ShapeDtypeStruct((n_imgs * rows, C2), jnp.bfloat16),
        grid=(steps,),
        in_specs=[
            pl.BlockSpec((bt * m1, 9), lambda i: (i, 0)),    # per-tile taps
            pl.BlockSpec((m1, 1), lambda i: (0, 0)),         # validity mask
            pl.BlockSpec((9, C1), lambda i: (0, 0)),         # conv1 weight (bf16)
            pl.BlockSpec((1, C1), lambda i: (0, 0)),         # conv1 bias
            pl.BlockSpec((9, C1), lambda i: (0, 0)),         # depthwise weight
            pl.BlockSpec((1, C1), lambda i: (0, 0)),         # depthwise bias
            pl.BlockSpec((C1, C2), lambda i: (0, 0)),        # pointwise weight (bf16)
            pl.BlockSpec((1, C2), lambda i: (0, 0)),         # pointwise bias
        ],
        out_specs=pl.BlockSpec((bt * rows, C2), lambda i: (i, 0)),
        compiler_params=pltpu.CompilerParams(
            dimension_semantics=("parallel",),
            vmem_limit_bytes=32 * 1024 * 1024),
        cost_estimate=pl.CostEstimate(flops=flops, transcendentals=0,
                                      bytes_accessed=bytes_accessed),
    )(taps, prep["mask1"], prep["w1"], prep["b1"], prep["wdw"], prep["bdw"],
      prep["wpw"], prep["bpw"])


def fc_layer(feats, w, b, rt):
    m, k = feats.shape
    steps = m // rt
    flops = 2 * m * k * NCLS_PAD
    bytes_accessed = m * k * 2 + k * NCLS_PAD * 2 + m * NCLS_PAD * 4 + NCLS_PAD * 4
    return pl.pallas_call(
        _fc_kernel,
        out_shape=jax.ShapeDtypeStruct((m, NCLS_PAD), jnp.float32),
        grid=(steps,),
        in_specs=[
            pl.BlockSpec((rt, k), lambda i: (i, 0)),         # batch-tiled features
            pl.BlockSpec((k, NCLS_PAD), lambda i: (0, 0)),   # resident fc weight (bf16)
            pl.BlockSpec((1, NCLS_PAD), lambda i: (0, 0)),   # fc bias (padded)
        ],
        out_specs=pl.BlockSpec((rt, NCLS_PAD), lambda i: (i, 0)),
        compiler_params=pltpu.CompilerParams(
            dimension_semantics=("parallel",),
            vmem_limit_bytes=32 * 1024 * 1024),
        cost_estimate=pl.CostEstimate(flops=flops, transcendentals=0,
                                      bytes_accessed=bytes_accessed),
    )(feats, w, b)


# ---------------------------------------------------------------------------
# Forward pass (matches MobileNet.forward in eval mode)
# ---------------------------------------------------------------------------

def mobilenet_forward(x_nchw, prep):
    n = x_nchw.shape[0]
    # Image tile per grid step: amortize per-step overhead but keep >= 2 grid steps
    # (so v7x's two TensorCores both get work) and keep VMEM temporaries modest.
    bt = max(1, min(B_TILE_MAX, -(-n // 2)))
    n_pad = -(-n // bt) * bt

    x = x_nchw.astype(jnp.float32)[:, 0]                      # (N, 28, 28)
    if n_pad != n:
        x = jnp.pad(x, ((0, n_pad - n), (0, 0), (0, 0)))

    # Thin XLA glue (bf16): stride-2 3x3 patch taps on the extended (18, 24) grid.
    # Extended-grid coordinate a maps to conv1 output position a-1; original-image
    # index read by tap (di, dj) is 2*a + di - 3, hence pad by 3 on the top/left.
    xp = jnp.pad(x, ((0, 0), (3, 6), (3, 18)))                 # (Np, 37, 49)
    taps = jnp.stack(
        [xp[:, di:di + 2 * G1_H:2, dj:dj + 2 * G1_W:2]
         for di in range(3) for dj in range(3)], axis=-1)      # (Np, 18, 24, 9)
    taps = taps.reshape(n_pad * G1_H * G1_W, 9).astype(jnp.bfloat16)

    y3 = fused_conv_block(taps, prep, n_pad, bt)               # (Np*256, 32) bf16

    # Free (metadata-only) reshape in HBM; AvgPool2d(2,2) + torch flatten live in wfc.
    feats = y3.reshape(n_pad, G2 * G2 * C2)                    # (Np, 8192) bf16

    rt = min(FC_ROW_TILE_MAX, max(8, n_pad))
    m_pad = -(-n_pad // rt) * rt
    if m_pad != n_pad:
        feats = jnp.pad(feats, ((0, m_pad - n_pad), (0, 0)))

    logits = fc_layer(feats, prep["wfc"], prep["bfc"], rt)     # (Mp, 128) f32
    return logits[:n, :NCLS]


# ---------------------------------------------------------------------------
# Parameter init, BN folding and weight packing (runs once, OUTSIDE jit)
# ---------------------------------------------------------------------------

def init_params(key):
    ks = list(jax.random.split(key, 11))
    s = 0.2
    f32 = jnp.float32
    p = {
        "conv1_w": s * jax.random.normal(ks[0], (16, 1, 3, 3), f32),
        "conv1_b": s * jax.random.normal(ks[1], (16,), f32),
        "dw_w": s * jax.random.normal(ks[2], (16, 1, 3, 3), f32),
        "dw_b": s * jax.random.normal(ks[3], (16,), f32),
        "pw_w": s * jax.random.normal(ks[4], (32, 16, 1, 1), f32),
        "pw_b": s * jax.random.normal(ks[5], (32,), f32),
        "fc_w": s * jax.random.normal(ks[6], (10, 32 * 49), f32),
        "fc_b": s * jax.random.normal(ks[7], (10,), f32),
    }
    for name, c, k in (("bn1", 16, ks[8]), ("bn2", 16, ks[9]), ("bn3", 32, ks[10])):
        k1, k2, k3, k4 = jax.random.split(k, 4)
        p[name + "_gamma"] = 1.0 + 0.1 * jax.random.normal(k1, (c,), f32)
        p[name + "_beta"] = 0.1 * jax.random.normal(k2, (c,), f32)
        p[name + "_mean"] = 0.1 * jax.random.normal(k3, (c,), f32)
        p[name + "_var"] = jax.random.uniform(k4, (c,), f32, minval=0.5, maxval=1.5)
    return p


def prepare_params(params, eps=1e-5):
    """Fold eval-mode BatchNorm into the convs, pack weights for the kernels, and fold
    AvgPool2d(2,2) + torch's channel-major flatten into the (class-padded) fc weight."""
    def fold(w, b, pfx):
        scale = params[pfx + "_gamma"] / jnp.sqrt(params[pfx + "_var"] + eps)
        return (w * scale.reshape(-1, 1, 1, 1),
                (b - params[pfx + "_mean"]) * scale + params[pfx + "_beta"])

    w1f, b1f = fold(params["conv1_w"], params["conv1_b"], "bn1")
    wdwf, bdwf = fold(params["dw_w"], params["dw_b"], "bn2")
    wpwf, bpwf = fold(params["pw_w"], params["pw_b"], "bn3")

    prep = {
        "w1": w1f[:, 0].transpose(1, 2, 0).reshape(9, C1).astype(jnp.bfloat16),
        "b1": b1f.reshape(1, C1),
        "wdw": wdwf[:, 0].transpose(1, 2, 0).reshape(9, C1),   # (tap, channel) f32
        "bdw": bdwf.reshape(1, C1),
        "wpw": wpwf[:, :, 0, 0].T.astype(jnp.bfloat16),        # (cin, cout)
        "bpw": bpwf.reshape(1, C2),
    }

    # conv1 validity mask on the extended grid (valid 14x14 sits at [1:15, 1:15]).
    ah = jnp.arange(G1_H)
    aw = jnp.arange(G1_W)
    mask = (((ah >= 1) & (ah <= 14)).astype(jnp.float32)[:, None]
            * ((aw >= 1) & (aw <= 14)).astype(jnp.float32)[None, :])
    prep["mask1"] = mask.reshape(G1_H * G1_W, 1)

    # fc weight with AvgPool2d(2,2) + torch's NCHW flatten folded in, indexed by the
    # kernel-1 output layout (feature index = (h*16 + w)*32 + c), classes padded to 128.
    hh, ww, cc = jnp.meshgrid(jnp.arange(G2), jnp.arange(G2), jnp.arange(C2),
                              indexing="ij")
    valid = ((hh < 14) & (ww < 14)).astype(jnp.float32)
    col = cc * 49 + (jnp.minimum(hh, 13) // 2) * 7 + jnp.minimum(ww, 13) // 2
    wbig = 0.25 * params["fc_w"].T[col] * valid[..., None]     # (16, 16, 32, 10)
    wfc = wbig.reshape(G2 * G2 * C2, NCLS)
    prep["wfc"] = jnp.pad(wfc, ((0, 0), (0, NCLS_PAD - NCLS))).astype(jnp.bfloat16)
    prep["bfc"] = jnp.pad(params["fc_b"], (0, NCLS_PAD - NCLS)).reshape(1, NCLS_PAD)
    return prep


# ---------------------------------------------------------------------------
# Pure-JAX reference (NCHW, eval-mode BN) for a correctness self-check
# ---------------------------------------------------------------------------

def reference_forward(x, params, eps=1e-5):
    def bn(y, pfx):
        shp = (1, -1, 1, 1)
        return ((y - params[pfx + "_mean"].reshape(shp))
                * params[pfx + "_gamma"].reshape(shp)
                / jnp.sqrt(params[pfx + "_var"].reshape(shp) + eps)
                + params[pfx + "_beta"].reshape(shp))

    dn = ("NCHW", "OIHW", "NCHW")
    y = jax.lax.conv_general_dilated(x, params["conv1_w"], (2, 2), ((1, 1), (1, 1)),
                                     dimension_numbers=dn)
    y = jnp.maximum(bn(y + params["conv1_b"].reshape(1, -1, 1, 1), "bn1"), 0.0)
    y = jax.lax.conv_general_dilated(y, params["dw_w"], (1, 1), ((1, 1), (1, 1)),
                                     dimension_numbers=dn, feature_group_count=16)
    y = jnp.maximum(bn(y + params["dw_b"].reshape(1, -1, 1, 1), "bn2"), 0.0)
    y = jax.lax.conv_general_dilated(y, params["pw_w"], (1, 1), ((0, 0), (0, 0)),
                                     dimension_numbers=dn)
    y = jnp.maximum(bn(y + params["pw_b"].reshape(1, -1, 1, 1), "bn3"), 0.0)
    n = y.shape[0]
    y = y.reshape(n, 32, 7, 2, 7, 2).mean(axis=(3, 5))         # AvgPool2d(2, 2)
    y = y.reshape(n, 32 * 49)                                  # torch .view(-1, 32*49)
    return y @ params["fc_w"].T + params["fc_b"]


if __name__ == "__main__":
    key = jax.random.PRNGKey(0)
    k_x, k_p = jax.random.split(key)

    # fc expects 32*49 features, which pins the input to MNIST-shaped 1x28x28.
    x = jax.random.normal(k_x, (2, 1, 28, 28), jnp.float32)    # NCHW, batch = 2
    params = init_params(k_p)
    prep = prepare_params(params)        # BN folding / weight packing: once, outside jit

    fwd = jax.jit(mobilenet_forward)
    out = jax.block_until_ready(fwd(x, prep))

    assert out.shape == (2, 10)
    assert bool(jnp.all(jnp.isfinite(out)))

    ref = jax.jit(reference_forward)(x, params)
    err = float(jnp.max(jnp.abs(out - ref)))
    tol = 5e-2 * (1.0 + float(jnp.max(jnp.abs(ref))))
    assert err < tol, f"mismatch vs reference: max|err|={err:.4g} tol={tol:.4g}"

    print("KERNEL_OK")
</pallas_src>

<mosaic_0001>
module attributes {stable_mosaic.version = 11 : i64} {
  func.func @_fused_conv_kernel(%arg0: i32, %arg1: memref<432x9xbf16, #tpu.memory_space<vmem>>, %arg2: memref<432x1xf32, #tpu.memory_space<vmem>>, %arg3: memref<9x16xbf16, #tpu.memory_space<vmem>>, %arg4: memref<1x16xf32, #tpu.memory_space<vmem>>, %arg5: memref<9x16xf32, #tpu.memory_space<vmem>>, %arg6: memref<1x16xf32, #tpu.memory_space<vmem>>, %arg7: memref<16x32xbf16, #tpu.memory_space<vmem>>, %arg8: memref<1x32xf32, #tpu.memory_space<vmem>>, %arg9: memref<256x32xbf16, #tpu.memory_space<vmem>>) attributes {dimension_semantics = [#tpu.dimension_semantics<parallel>], iteration_bounds = array<i64: 2>, scalar_prefetch = 0 : i64, scratch_operands = 0 : i64, tpu.core_type = #tpu.core_type<tc>, window_params = [{transform_indices = @transform_0, window_bounds = array<i64: 432, 9>}, {pipeline_mode = #tpu.pipeline_mode<synchronous>, transform_indices = @transform_1, window_bounds = array<i64: 432, 1>}, {pipeline_mode = #tpu.pipeline_mode<synchronous>, transform_indices = @transform_2, window_bounds = array<i64: 9, 16>}, {pipeline_mode = #tpu.pipeline_mode<synchronous>, transform_indices = @transform_3, window_bounds = array<i64: 1, 16>}, {pipeline_mode = #tpu.pipeline_mode<synchronous>, transform_indices = @transform_4, window_bounds = array<i64: 9, 16>}, {pipeline_mode = #tpu.pipeline_mode<synchronous>, transform_indices = @transform_5, window_bounds = array<i64: 1, 16>}, {pipeline_mode = #tpu.pipeline_mode<synchronous>, transform_indices = @transform_6, window_bounds = array<i64: 16, 32>}, {pipeline_mode = #tpu.pipeline_mode<synchronous>, transform_indices = @transform_7, window_bounds = array<i64: 1, 32>}, {transform_indices = @transform_8, window_bounds = array<i64: 256, 32>}]} {
    %c0 = arith.constant 0 : index
    %c0_0 = arith.constant 0 : index
    %0 = vector.load %arg1[%c0, %c0_0] : memref<432x9xbf16, #tpu.memory_space<vmem>>, vector<432x9xbf16>
    %c0_1 = arith.constant 0 : index
    %c0_2 = arith.constant 0 : index
    %1 = vector.load %arg3[%c0_1, %c0_2] : memref<9x16xbf16, #tpu.memory_space<vmem>>, vector<9x16xbf16>
    %cst = arith.constant dense<0.000000e+00> : vector<432x16xf32>
    %2 = tpu.matmul %0, %1, %cst {dimension_numbers = #tpu.dot_dimension_numbers<[1], [0], [0], [1], [0, 0, 1, 1], [], []>} : vector<432x9xbf16>, vector<9x16xbf16>, vector<432x16xf32> -> vector<432x16xf32>
    %c0_3 = arith.constant 0 : index
    %c0_4 = arith.constant 0 : index
    %3 = vector.load %arg4[%c0_3, %c0_4] : memref<1x16xf32, #tpu.memory_space<vmem>>, vector<1x16xf32>
    %4 = vector.broadcast %3 : vector<1x16xf32> to vector<432x16xf32>
    %5 = arith.addf %2, %4 : vector<432x16xf32>
    %cst_5 = arith.constant 0.000000e+00 : f32
    %6 = vector.broadcast %cst_5 : f32 to vector<432x16xf32>
    %7 = arith.maximumf %5, %6 : vector<432x16xf32>
    %8 = vector.shape_cast %7 : vector<432x16xf32> to vector<1x432x16xf32>
    %c0_6 = arith.constant 0 : index
    %c0_7 = arith.constant 0 : index
    %9 = vector.load %arg2[%c0_6, %c0_7] : memref<432x1xf32, #tpu.memory_space<vmem>>, vector<432x1xf32>
    %10 = vector.shape_cast %9 : vector<432x1xf32> to vector<1x432x1xf32>
    %11 = vector.broadcast %10 : vector<1x432x1xf32> to vector<1x432x16xf32>
    %12 = arith.mulf %8, %11 : vector<1x432x16xf32>
    %13 = vector.shape_cast %12 : vector<1x432x16xf32> to vector<1x18x24x16xf32>
    %c0_8 = arith.constant 0 : index
    %c0_9 = arith.constant 0 : index
    %14 = vector.load %arg5[%c0_8, %c0_9] : memref<9x16xf32, #tpu.memory_space<vmem>>, vector<9x16xf32>
    %15 = vector.extract_strided_slice %13 {offsets = [0, 0, 0, 0], sizes = [1, 18, 16, 16], strides = [1, 1, 1, 1]} : vector<1x18x24x16xf32> to vector<1x18x16x16xf32>
    %16 = vector.extract_strided_slice %13 {offsets = [0, 0, 1, 0], sizes = [1, 18, 16, 16], strides = [1, 1, 1, 1]} : vector<1x18x24x16xf32> to vector<1x18x16x16xf32>
    %17 = vector.extract_strided_slice %13 {offsets = [0, 0, 2, 0], sizes = [1, 18, 16, 16], strides = [1, 1, 1, 1]} : vector<1x18x24x16xf32> to vector<1x18x16x16xf32>
    %18 = vector.extract_strided_slice %15 {offsets = [0, 0, 0, 0], sizes = [1, 16, 16, 16], strides = [1, 1, 1, 1]} : vector<1x18x16x16xf32> to vector<1x16x16x16xf32>
    %19 = vector.extract_strided_slice %14 {offsets = [0, 0], sizes = [1, 16], strides = [1, 1]} : vector<9x16xf32> to vector<1x16xf32>
    %20 = vector.shape_cast %19 : vector<1x16xf32> to vector<16xf32>
    %21 = vector.shape_cast %20 : vector<16xf32> to vector<1x1x1x16xf32>
    %22 = vector.broadcast %21 : vector<1x1x1x16xf32> to vector<1x16x16x16xf32>
    %23 = arith.mulf %18, %22 : vector<1x16x16x16xf32>
    %24 = vector.extract_strided_slice %16 {offsets = [0, 0, 0, 0], sizes = [1, 16, 16, 16], strides = [1, 1, 1, 1]} : vector<1x18x16x16xf32> to vector<1x16x16x16xf32>
    %25 = vector.extract_strided_slice %14 {offsets = [1, 0], sizes = [1, 16], strides = [1, 1]} : vector<9x16xf32> to vector<1x16xf32>
    %26 = vector.shape_cast %25 : vector<1x16xf32> to vector<16xf32>
    %27 = vector.shape_cast %26 : vector<16xf32> to vector<1x1x1x16xf32>
    %28 = vector.broadcast %27 : vector<1x1x1x16xf32> to vector<1x16x16x16xf32>
    %29 = arith.mulf %24, %28 : vector<1x16x16x16xf32>
    %30 = arith.addf %23, %29 : vector<1x16x16x16xf32>
    %31 = vector.extract_strided_slice %17 {offsets = [0, 0, 0, 0], sizes = [1, 16, 16, 16], strides = [1, 1, 1, 1]} : vector<1x18x16x16xf32> to vector<1x16x16x16xf32>
    %32 = vector.extract_strided_slice %14 {offsets = [2, 0], sizes = [1, 16], strides = [1, 1]} : vector<9x16xf32> to vector<1x16xf32>
    %33 = vector.shape_cast %32 : vector<1x16xf32> to vector<16xf32>
    %34 = vector.shape_cast %33 : vector<16xf32> to vector<1x1x1x16xf32>
    %35 = vector.broadcast %34 : vector<1x1x1x16xf32> to vector<1x16x16x16xf32>
    %36 = arith.mulf %31, %35 : vector<1x16x16x16xf32>
    %37 = arith.addf %30, %36 : vector<1x16x16x16xf32>
    %38 = vector.extract_strided_slice %15 {offsets = [0, 1, 0, 0], sizes = [1, 16, 16, 16], strides = [1, 1, 1, 1]} : vector<1x18x16x16xf32> to vector<1x16x16x16xf32>
    %39 = vector.extract_strided_slice %14 {offsets = [3, 0], sizes = [1, 16], strides = [1, 1]} : vector<9x16xf32> to vector<1x16xf32>
    %40 = vector.shape_cast %39 : vector<1x16xf32> to vector<16xf32>
    %41 = vector.shape_cast %40 : vector<16xf32> to vector<1x1x1x16xf32>
    %42 = vector.broadcast %41 : vector<1x1x1x16xf32> to vector<1x16x16x16xf32>
    %43 = arith.mulf %38, %42 : vector<1x16x16x16xf32>
    %44 = arith.addf %37, %43 : vector<1x16x16x16xf32>
    %45 = vector.extract_strided_slice %16 {offsets = [0, 1, 0, 0], sizes = [1, 16, 16, 16], strides = [1, 1, 1, 1]} : vector<1x18x16x16xf32> to vector<1x16x16x16xf32>
    %46 = vector.extract_strided_slice %14 {offsets = [4, 0], sizes = [1, 16], strides = [1, 1]} : vector<9x16xf32> to vector<1x16xf32>
    %47 = vector.shape_cast %46 : vector<1x16xf32> to vector<16xf32>
    %48 = vector.shape_cast %47 : vector<16xf32> to vector<1x1x1x16xf32>
    %49 = vector.broadcast %48 : vector<1x1x1x16xf32> to vector<1x16x16x16xf32>
    %50 = arith.mulf %45, %49 : vector<1x16x16x16xf32>
    %51 = arith.addf %44, %50 : vector<1x16x16x16xf32>
    %52 = vector.extract_strided_slice %17 {offsets = [0, 1, 0, 0], sizes = [1, 16, 16, 16], strides = [1, 1, 1, 1]} : vector<1x18x16x16xf32> to vector<1x16x16x16xf32>
    %53 = vector.extract_strided_slice %14 {offsets = [5, 0], sizes = [1, 16], strides = [1, 1]} : vector<9x16xf32> to vector<1x16xf32>
    %54 = vector.shape_cast %53 : vector<1x16xf32> to vector<16xf32>
    %55 = vector.shape_cast %54 : vector<16xf32> to vector<1x1x1x16xf32>
    %56 = vector.broadcast %55 : vector<1x1x1x16xf32> to vector<1x16x16x16xf32>
    %57 = arith.mulf %52, %56 : vector<1x16x16x16xf32>
    %58 = arith.addf %51, %57 : vector<1x16x16x16xf32>
    %59 = vector.extract_strided_slice %15 {offsets = [0, 2, 0, 0], sizes = [1, 16, 16, 16], strides = [1, 1, 1, 1]} : vector<1x18x16x16xf32> to vector<1x16x16x16xf32>
    %60 = vector.extract_strided_slice %14 {offsets = [6, 0], sizes = [1, 16], strides = [1, 1]} : vector<9x16xf32> to vector<1x16xf32>
    %61 = vector.shape_cast %60 : vector<1x16xf32> to vector<16xf32>
    %62 = vector.shape_cast %61 : vector<16xf32> to vector<1x1x1x16xf32>
    %63 = vector.broadcast %62 : vector<1x1x1x16xf32> to vector<1x16x16x16xf32>
    %64 = arith.mulf %59, %63 : vector<1x16x16x16xf32>
    %65 = arith.addf %58, %64 : vector<1x16x16x16xf32>
    %66 = vector.extract_strided_slice %16 {offsets = [0, 2, 0, 0], sizes = [1, 16, 16, 16], strides = [1, 1, 1, 1]} : vector<1x18x16x16xf32> to vector<1x16x16x16xf32>
    %67 = vector.extract_strided_slice %14 {offsets = [7, 0], sizes = [1, 16], strides = [1, 1]} : vector<9x16xf32> to vector<1x16xf32>
    %68 = vector.shape_cast %67 : vector<1x16xf32> to vector<16xf32>
    %69 = vector.shape_cast %68 : vector<16xf32> to vector<1x1x1x16xf32>
    %70 = vector.broadcast %69 : vector<1x1x1x16xf32> to vector<1x16x16x16xf32>
    %71 = arith.mulf %66, %70 : vector<1x16x16x16xf32>
    %72 = arith.addf %65, %71 : vector<1x16x16x16xf32>
    %73 = vector.extract_strided_slice %17 {offsets = [0, 2, 0, 0], sizes = [1, 16, 16, 16], strides = [1, 1, 1, 1]} : vector<1x18x16x16xf32> to vector<1x16x16x16xf32>
    %74 = vector.extract_strided_slice %14 {offsets = [8, 0], sizes = [1, 16], strides = [1, 1]} : vector<9x16xf32> to vector<1x16xf32>
    %75 = vector.shape_cast %74 : vector<1x16xf32> to vector<16xf32>
    %76 = vector.shape_cast %75 : vector<16xf32> to vector<1x1x1x16xf32>
    %77 = vector.broadcast %76 : vector<1x1x1x16xf32> to vector<1x16x16x16xf32>
    %78 = arith.mulf %73, %77 : vector<1x16x16x16xf32>
    %79 = arith.addf %72, %78 : vector<1x16x16x16xf32>
    %c0_10 = arith.constant 0 : index
    %c0_11 = arith.constant 0 : index
    %80 = vector.load %arg6[%c0_10, %c0_11] : memref<1x16xf32, #tpu.memory_space<vmem>>, vector<1x16xf32>
    %81 = vector.shape_cast %80 : vector<1x16xf32> to vector<1x1x1x16xf32>
    %82 = vector.broadcast %81 : vector<1x1x1x16xf32> to vector<1x16x16x16xf32>
    %83 = arith.addf %79, %82 : vector<1x16x16x16xf32>
    %cst_12 = arith.constant 0.000000e+00 : f32
    %84 = vector.broadcast %cst_12 : f32 to vector<1x16x16x16xf32>
    %85 = arith.maximumf %83, %84 : vector<1x16x16x16xf32>
    %86 = vector.shape_cast %85 : vector<1x16x16x16xf32> to vector<256x16xf32>
    %87 = arith.truncf %86 : vector<256x16xf32> to vector<256x16xbf16>
    %c0_13 = arith.constant 0 : index
    %c0_14 = arith.constant 0 : index
    %88 = vector.load %arg7[%c0_13, %c0_14] : memref<16x32xbf16, #tpu.memory_space<vmem>>, vector<16x32xbf16>
    %cst_15 = arith.constant dense<0.000000e+00> : vector<256x32xf32>
    %89 = tpu.matmul %87, %88, %cst_15 {dimension_numbers = #tpu.dot_dimension_numbers<[1], [0], [0], [1], [0, 0, 1, 1], [], []>} : vector<256x16xbf16>, vector<16x32xbf16>, vector<256x32xf32> -> vector<256x32xf32>
    %c0_16 = arith.constant 0 : index
    %c0_17 = arith.constant 0 : index
    %90 = vector.load %arg8[%c0_16, %c0_17] : memref<1x32xf32, #tpu.memory_space<vmem>>, vector<1x32xf32>
    %91 = vector.broadcast %90 : vector<1x32xf32> to vector<256x32xf32>
    %92 = arith.addf %89, %91 : vector<256x32xf32>
    %cst_18 = arith.constant 0.000000e+00 : f32
    %93 = vector.broadcast %cst_18 : f32 to vector<256x32xf32>
    %94 = arith.maximumf %92, %93 : vector<256x32xf32>
    %95 = arith.truncf %94 : vector<256x32xf32> to vector<256x32xbf16>
    %c0_19 = arith.constant 0 : index
    %c0_20 = arith.constant 0 : index
    %96 = vector.load %arg9[%c0_19, %c0_20] : memref<256x32xbf16, #tpu.memory_space<vmem>>, vector<256x32xbf16>
    tpu.vector_store %arg9[%c0_19, %c0_20], %95 {strides = array<i32>} : memref<256x32xbf16, #tpu.memory_space<vmem>>, vector<256x32xbf16>,
    return
  }
  func.func @transform_0(%arg0: i32) -> (i32, i32) {
    %c0_i32 = arith.constant 0 : i32
    %c0_i32_0 = arith.constant 0 : i32
    return %arg0, %c0_i32 : i32, i32
  }
  func.func @transform_1(%arg0: i32) -> (i32, i32) {
    %c0_i32 = arith.constant 0 : i32
    %c0_i32_0 = arith.constant 0 : i32
    %c0_i32_1 = arith.constant 0 : i32
    return %c0_i32, %c0_i32_0 : i32, i32
  }
  func.func @transform_2(%arg0: i32) -> (i32, i32) {
    %c0_i32 = arith.constant 0 : i32
    %c0_i32_0 = arith.constant 0 : i32
    %c0_i32_1 = arith.constant 0 : i32
    return %c0_i32, %c0_i32_0 : i32, i32
  }
  func.func @transform_3(%arg0: i32) -> (i32, i32) {
    %c0_i32 = arith.constant 0 : i32
    %c0_i32_0 = arith.constant 0 : i32
    %c0_i32_1 = arith.constant 0 : i32
    return %c0_i32, %c0_i32_0 : i32, i32
  }
  func.func @transform_4(%arg0: i32) -> (i32, i32) {
    %c0_i32 = arith.constant 0 : i32
    %c0_i32_0 = arith.constant 0 : i32
    %c0_i32_1 = arith.constant 0 : i32
    return %c0_i32, %c0_i32_0 : i32, i32
  }
  func.func @transform_5(%arg0: i32) -> (i32, i32) {
    %c0_i32 = arith.constant 0 : i32
    %c0_i32_0 = arith.constant 0 : i32
    %c0_i32_1 = arith.constant 0 : i32
    return %c0_i32, %c0_i32_0 : i32, i32
  }
  func.func @transform_6(%arg0: i32) -> (i32, i32) {
    %c0_i32 = arith.constant 0 : i32
    %c0_i32_0 = arith.constant 0 : i32
    %c0_i32_1 = arith.constant 0 : i32
    return %c0_i32, %c0_i32_0 : i32, i32
  }
  func.func @transform_7(%arg0: i32) -> (i32, i32) {
    %c0_i32 = arith.constant 0 : i32
    %c0_i32_0 = arith.constant 0 : i32
    %c0_i32_1 = arith.constant 0 : i32
    return %c0_i32, %c0_i32_0 : i32, i32
  }
  func.func @transform_8(%arg0: i32) -> (i32, i32) {
    %c0_i32 = arith.constant 0 : i32
    %c0_i32_0 = arith.constant 0 : i32
    return %arg0, %c0_i32 : i32, i32
  }
}

module attributes {stable_mosaic.version = 11 : i64} {
  func.func @_fc_kernel(%arg0: i32, %arg1: memref<8x8192xbf16, #tpu.memory_space<vmem>>, %arg2: memref<8192x128xbf16, #tpu.memory_space<vmem>>, %arg3: memref<1x128xf32, #tpu.memory_space<vmem>>, %arg4: memref<8x128xf32, #tpu.memory_space<vmem>>) attributes {dimension_semantics = [#tpu.dimension_semantics<parallel>], iteration_bounds = array<i64: 1>, scalar_prefetch = 0 : i64, scratch_operands = 0 : i64, tpu.core_type = #tpu.core_type<tc>, window_params = [{transform_indices = @transform_0, window_bounds = array<i64: 8, 8192>}, {pipeline_mode = #tpu.pipeline_mode<synchronous>, transform_indices = @transform_1, window_bounds = array<i64: 8192, 128>}, {pipeline_mode = #tpu.pipeline_mode<synchronous>, transform_indices = @transform_2, window_bounds = array<i64: 1, 128>}, {transform_indices = @transform_3, window_bounds = array<i64: 8, 128>}]} {
    %c0 = arith.constant 0 : index
    %c0_0 = arith.constant 0 : index
    %0 = vector.load %arg1[%c0, %c0_0] : memref<8x8192xbf16, #tpu.memory_space<vmem>>, vector<8x8192xbf16>
    %c0_1 = arith.constant 0 : index
    %c0_2 = arith.constant 0 : index
    %1 = vector.load %arg2[%c0_1, %c0_2] : memref<8192x128xbf16, #tpu.memory_space<vmem>>, vector<8192x128xbf16>
    %cst = arith.constant dense<0.000000e+00> : vector<8x128xf32>
    %2 = tpu.matmul %0, %1, %cst {dimension_numbers = #tpu.dot_dimension_numbers<[1], [0], [0], [1], [0, 0, 1, 1], [], []>} : vector<8x8192xbf16>, vector<8192x128xbf16>, vector<8x128xf32> -> vector<8x128xf32>
    %c0_3 = arith.constant 0 : index
    %c0_4 = arith.constant 0 : index
    %3 = vector.load %arg3[%c0_3, %c0_4] : memref<1x128xf32, #tpu.memory_space<vmem>>, vector<1x128xf32>
    %4 = vector.broadcast %3 : vector<1x128xf32> to vector<8x128xf32>
    %5 = arith.addf %2, %4 : vector<8x128xf32>
    %c0_5 = arith.constant 0 : index
    %c0_6 = arith.constant 0 : index
    %6 = vector.load %arg4[%c0_5, %c0_6] : memref<8x128xf32, #tpu.memory_space<vmem>>, vector<8x128xf32>
    tpu.vector_store %arg4[%c0_5, %c0_6], %5 {strides = array<i32>} : memref<8x128xf32, #tpu.memory_space<vmem>>, vector<8x128xf32>,
    return
  }
  func.func @transform_0(%arg0: i32) -> (i32, i32) {
    %c0_i32 = arith.constant 0 : i32
    %c0_i32_0 = arith.constant 0 : i32
    return %arg0, %c0_i32 : i32, i32
  }
  func.func @transform_1(%arg0: i32) -> (i32, i32) {
    %c0_i32 = arith.constant 0 : i32
    %c0_i32_0 = arith.constant 0 : i32
    %c0_i32_1 = arith.constant 0 : i32
    return %c0_i32, %c0_i32_0 : i32, i32
  }
  func.func @transform_2(%arg0: i32) -> (i32, i32) {
    %c0_i32 = arith.constant 0 : i32
    %c0_i32_0 = arith.constant 0 : i32
    %c0_i32_1 = arith.constant 0 : i32
    return %c0_i32, %c0_i32_0 : i32, i32
  }
  func.func @transform_3(%arg0: i32) -> (i32, i32) {
    %c0_i32 = arith.constant 0 : i32
    %c0_i32_0 = arith.constant 0 : i32
    return %arg0, %c0_i32 : i32, i32
  }
}

</mosaic_0001>

<llo_original>
// kernel: mobilenet_forward.2
$region0: #{mobilenet_forward.2}
  #allocation0 [shape = 'u32[]', space=smem, size = 0x4, offset = 0x4, fixed_abs, tag = 'smem constant byte address 0x4 - core index']
  #allocation1 [shape = 'u32[144,128]{1,0:T(1,128)}', space=vmem, size = 0x12000, scoped, tag = 'internal scratch']
  %s0 = inlined_call_operand.vmem [shape: bf16[864,9], index: 0, kind: input, shape index: {}]
  %s1 = inlined_call_operand.vmem [shape: f32[432,1], index: 1, kind: input, shape index: {}]
  %s2 = inlined_call_operand.hbm [shape: bf16[9,16], index: 2, kind: input, shape index: {}]
  %s3 = inlined_call_operand.hbm [shape: f32[1,16], index: 3, kind: input, shape index: {}]
  %s4 = inlined_call_operand.hbm [shape: f32[9,16], index: 4, kind: input, shape index: {}]
  %s5 = inlined_call_operand.hbm [shape: f32[1,16], index: 5, kind: input, shape index: {}]
  %s6 = inlined_call_operand.hbm [shape: bf16[16,32], index: 6, kind: input, shape index: {}]
  %s7 = inlined_call_operand.hbm [shape: f32[1,32], index: 7, kind: input, shape index: {}]
  %s8 = inlined_call_operand.vmem [shape: bf16[512,32], index: 8, kind: output, shape index: {}]
  %s9 = sld [smem:[#allocation0]]
  $region89: #{mobilenet_forward.2} parent=0
    _
  %s11 = ssub.s32 1, %s9
  %s12 = scalar_select 0, %s11, %s9
  $region1: #{mobilenet_forward.2} parent=0
    #allocation2 [shape = 'u8[4096]{0}', space=vmem, size = 0x1000, scoped, tag = 'input window, operand 2, single buffered']
    #allocation3 [shape = 's32[2]{0}', space=sflag, size = 0x8, scoped, tag = 'scoped memory for mobilenet_forward.2']
    #allocation4 [shape = 'u8[512]{0}', space=vmem, size = 0x400, scoped, tag = 'input window, operand 3, single buffered']
    #allocation5 [shape = 's32[1]{0}', space=sflag, size = 0x4, scoped, tag = 'scoped memory for mobilenet_forward.2']
    #allocation6 [shape = 'u8[8192]{0}', space=vmem, size = 0x2000, scoped, tag = 'input window, operand 4, single buffered']
    #allocation7 [shape = 'u8[512]{0}', space=vmem, size = 0x400, scoped, tag = 'input window, operand 5, single buffered']
    #allocation8 [shape = 's32[1]{0}', space=sflag, size = 0x4, scoped, tag = 'scoped memory for mobilenet_forward.2']
    #allocation9 [shape = 'u8[4096]{0}', space=vmem, size = 0x1000, scoped, tag = 'input window, operand 6, single buffered']
    #allocation10 [shape = 'u8[512]{0}', space=vmem, size = 0x400, scoped, tag = 'input window, operand 7, single buffered']
    #allocation11 [shape = 's32[1]{0}', space=sflag, size = 0x4, scoped, tag = 'scoped memory for mobilenet_forward.2']
    %13 = vsyncpa [#allocation3], 0
    %14 = vsyncpa [#allocation5], 0
    %15 = vsyncpa [#allocation8], 0
    %16 = vsyncpa [#allocation11], 0
    loop: start=0, step=1, limit=4
    $region2: #{mobilenet_forward.2} parent=1 // loop_pre_header
      _
    $region3: #{mobilenet_forward.2} parent=1 // loop_header
      %s18 = sphi 0, %s22
      %p19 = scmp.ge.s32.totalorder %s18, 4
      %s28 = sphi 0, %s30
      %s31 = sphi 0, %s28
      %s32 = sphi 0, %s31
      %s48 = sphi 0, %s32
      %s52 = sphi 0, %s52
      %s54 = sphi 0, %s52
      %s55 = sphi 0, %s54
      %s69 = sphi 0, %s55
      %s73 = sphi 0, %s73
      %s75 = sphi 0, %s73
      %s76 = sphi 0, %s75
      %s90 = sphi 0, %s76
      %s94 = sphi 0, %s94
      %s96 = sphi 0, %s94
      %s97 = sphi 0, %s96
      %s111 = sphi 0, %s97
      %s115 = sphi 0, %s115
      %s117 = sphi 0, %s115
      %s118 = sphi 0, %s117
      %s132 = sphi 0, %s118
      %s136 = sphi 0, %s136
      %s138 = sphi 0, %s136
      %s139 = sphi 0, %s138
      %s153 = sphi 0, %s139
      %s157 = sphi 0, %s157
      %s159 = sphi 0, %s157
      %s160 = sphi 0, %s159
      %s174 = sphi 0, %s160
      %s178 = sphi 0, %s178
      %s180 = sphi 0, %s178
      %s181 = sphi 0, %s180
      %s195 = sphi 0, %s181
      %s201 = sphi 0, %s203
      %s204 = sphi 0, %s201
      %s205 = sphi 0, %s204
      %s221 = sphi 0, %s205
    $region4: #{mobilenet_forward.2} parent=1 // loop_header_branch
      %21 = sbr.rel (%p19) target = $region8
    $region5: #{mobilenet_forward.2} parent=1 // loop_body
      %s23 = ssub.s32 %s18, 1
      %s24 = ssub.s32 %s18, 2
      %s25 = sadd.s32 %s18, 1
      %s26 = ssub.s32 %s18, %s25
      %p27 = scmp.eq.s32.totalorder %s26, 0
      %s29 = sadd.s32 %s28, 1
      %s30 = scalar_select %p27, %s28, %s29
      %p33 = pneg %p27
      %p34 = scmp.eq.s32.totalorder %s18, 1
      %p35 = por %p33, %p34
      %p36 = scmp.ne.s32.totalorder %s28, %s31
      %p37 = scmp.eq.s32.totalorder %s18, 0
      %p38 = por %p36, %p37
      %p39 = scmp.ne.s32.totalorder %s28, %s31
      %p40 = scmp.eq.s32.totalorder %s23, 1
      %p41 = por %p39, %p40
      %p42 = scmp.ne.s32.totalorder %s31, %s32
      %p43 = scmp.eq.s32.totalorder %s23, 0
      %p44 = por %p42, %p43
      %p45 = scmp.ne.s32.totalorder %s31, %s32
      %p46 = scmp.eq.s32.totalorder %s24, 1
      %p47 = por %p45, %p46
      %p49 = scmp.ne.s32.totalorder %s32, %s48
      %p50 = scmp.eq.s32.totalorder %s24, 0
      %p51 = por %p49, %p50
      %s53 = sadd.s32 %s52, 1
      %p56 = scmp.eq.s32.totalorder %s18, 1
      %p57 = scmp.ne.s32.totalorder %s52, %s54
      %p58 = scmp.eq.s32.totalorder %s18, 0
      %p59 = por %p57, %p58
      %p60 = scmp.ne.s32.totalorder %s52, %s54
      %p61 = scmp.eq.s32.totalorder %s23, 1
      %p62 = por %p60, %p61
      %p63 = scmp.ne.s32.totalorder %s54, %s55
      %p64 = scmp.eq.s32.totalorder %s23, 0
      %p65 = por %p63, %p64
      %p66 = scmp.ne.s32.totalorder %s54, %s55
      %p67 = scmp.eq.s32.totalorder %s24, 1
      %p68 = por %p66, %p67
      %p70 = scmp.ne.s32.totalorder %s55, %s69
      %p71 = scmp.eq.s32.totalorder %s24, 0
      %p72 = por %p70, %p71
      %s74 = sadd.s32 %s73, 1
      %p77 = scmp.eq.s32.totalorder %s18, 1
      %p78 = scmp.ne.s32.totalorder %s73, %s75
      %p79 = scmp.eq.s32.totalorder %s18, 0
      %p80 = por %p78, %p79
      %p81 = scmp.ne.s32.totalorder %s73, %s75
      %p82 = scmp.eq.s32.totalorder %s23, 1
      %p83 = por %p81, %p82
      %p84 = scmp.ne.s32.totalorder %s75, %s76
      %p85 = scmp.eq.s32.totalorder %s23, 0
      %p86 = por %p84, %p85
      %p87 = scmp.ne.s32.totalorder %s75, %s76
      %p88 = scmp.eq.s32.totalorder %s24, 1
      %p89 = por %p87, %p88
      %p91 = scmp.ne.s32.totalorder %s76, %s90
      %p92 = scmp.eq.s32.totalorder %s24, 0
      %p93 = por %p91, %p92
      %s95 = sadd.s32 %s94, 1
      %p98 = scmp.eq.s32.totalorder %s18, 1
      %p99 = scmp.ne.s32.totalorder %s94, %s96
      %p100 = scmp.eq.s32.totalorder %s18, 0
      %p101 = por %p99, %p100
      %p102 = scmp.ne.s32.totalorder %s94, %s96
      %p103 = scmp.eq.s32.totalorder %s23, 1
      %p104 = por %p102, %p103
      %p105 = scmp.ne.s32.totalorder %s96, %s97
      %p106 = scmp.eq.s32.totalorder %s23, 0
      %p107 = por %p105, %p106
      %p108 = scmp.ne.s32.totalorder %s96, %s97
      %p109 = scmp.eq.s32.totalorder %s24, 1
      %p110 = por %p108, %p109
      %p112 = scmp.ne.s32.totalorder %s97, %s111
      %p113 = scmp.eq.s32.totalorder %s24, 0
      %p114 = por %p112, %p113
      %s116 = sadd.s32 %s115, 1
      %p119 = scmp.eq.s32.totalorder %s18, 1
      %p120 = scmp.ne.s32.totalorder %s115, %s117
      %p121 = scmp.eq.s32.totalorder %s18, 0
      %p122 = por %p120, %p121
      %p123 = scmp.ne.s32.totalorder %s115, %s117
      %p124 = scmp.eq.s32.totalorder %s23, 1
      %p125 = por %p123, %p124
      %p126 = scmp.ne.s32.totalorder %s117, %s118
      %p127 = scmp.eq.s32.totalorder %s23, 0
      %p128 = por %p126, %p127
      %p129 = scmp.ne.s32.totalorder %s117, %s118
      %p130 = scmp.eq.s32.totalorder %s24, 1
      %p131 = por %p129, %p130
      %p133 = scmp.ne.s32.totalorder %s118, %s132
      %p134 = scmp.eq.s32.totalorder %s24, 0
      %p135 = por %p133, %p134
      %s137 = sadd.s32 %s136, 1
      %p140 = scmp.eq.s32.totalorder %s18, 1
      %p141 = scmp.ne.s32.totalorder %s136, %s138
      %p142 = scmp.eq.s32.totalorder %s18, 0
      %p143 = por %p141, %p142
      %p144 = scmp.ne.s32.totalorder %s136, %s138
      %p145 = scmp.eq.s32.totalorder %s23, 1
      %p146 = por %p144, %p145
      %p147 = scmp.ne.s32.totalorder %s138, %s139
      %p148 = scmp.eq.s32.totalorder %s23, 0
      %p149 = por %p147, %p148
      %p150 = scmp.ne.s32.totalorder %s138, %s139
      %p151 = scmp.eq.s32.totalorder %s24, 1
      %p152 = por %p150, %p151
      %p154 = scmp.ne.s32.totalorder %s139, %s153
      %p155 = scmp.eq.s32.totalorder %s24, 0
      %p156 = por %p154, %p155
      %s158 = sadd.s32 %s157, 1
      %p161 = scmp.eq.s32.totalorder %s18, 1
      %p162 = scmp.ne.s32.totalorder %s157, %s159
      %p163 = scmp.eq.s32.totalorder %s18, 0
      %p164 = por %p162, %p163
      %p165 = scmp.ne.s32.totalorder %s157, %s159
      %p166 = scmp.eq.s32.totalorder %s23, 1
      %p167 = por %p165, %p166
      %p168 = scmp.ne.s32.totalorder %s159, %s160
      %p169 = scmp.eq.s32.totalorder %s23, 0
      %p170 = por %p168, %p169
      %p171 = scmp.ne.s32.totalorder %s159, %s160
      %p172 = scmp.eq.s32.totalorder %s24, 1
      %p173 = por %p171, %p172
      %p175 = scmp.ne.s32.totalorder %s160, %s174
      %p176 = scmp.eq.s32.totalorder %s24, 0
      %p177 = por %p175, %p176
      %s179 = sadd.s32 %s178, 1
      %p182 = scmp.eq.s32.totalorder %s18, 1
      %p183 = scmp.ne.s32.totalorder %s178, %s180
      %p184 = scmp.eq.s32.totalorder %s18, 0
      %p185 = por %p183, %p184
      %p186 = scmp.ne.s32.totalorder %s178, %s180
      %p187 = scmp.eq.s32.totalorder %s23, 1
      %p188 = por %p186, %p187
      %p189 = scmp.ne.s32.totalorder %s180, %s181
      %p190 = scmp.eq.s32.totalorder %s23, 0
      %p191 = por %p189, %p190
      %p192 = scmp.ne.s32.totalorder %s180, %s181
      %p193 = scmp.eq.s32.totalorder %s24, 1
      %p194 = por %p192, %p193
      %p196 = scmp.ne.s32.totalorder %s181, %s195
      %p197 = scmp.eq.s32.totalorder %s24, 0
      %p198 = por %p196, %p197
      %s199 = ssub.s32 %s18, %s25
      %p200 = scmp.eq.s32.totalorder %s199, 0
      %s202 = sadd.s32 %s201, 1
      %s203 = scalar_select %p200, %s201, %s202
      %p206 = pneg %p200
      %p207 = scmp.eq.s32.totalorder %s18, 1
      %p208 = por %p206, %p207
      %p209 = scmp.ne.s32.totalorder %s201, %s204
      %p210 = scmp.eq.s32.totalorder %s18, 0
      %p211 = por %p209, %p210
      %p212 = scmp.ne.s32.totalorder %s201, %s204
      %p213 = scmp.eq.s32.totalorder %s23, 1
      %p214 = por %p212, %p213
      %p215 = scmp.ne.s32.totalorder %s204, %s205
      %p216 = scmp.eq.s32.totalorder %s23, 0
      %p217 = por %p215, %p216
      %p218 = scmp.ne.s32.totalorder %s204, %s205
      %p219 = scmp.eq.s32.totalorder %s24, 1
      %p220 = por %p218, %p219
      %p222 = scmp.ne.s32.totalorder %s205, %s221
      %p223 = scmp.eq.s32.totalorder %s24, 0
      %p224 = por %p222, %p223
      %p225 = scmp.le.s32.totalorder 1, %s18
      %p226 = scmp.lt.s32.totalorder %s18, 3
      %p227 = pnand %p225, %p226
      %p228 = pneg %p227
      // Predicated region
      $region9: #{mobilenet_forward.2} parent=5 // pred_check
        _
      $region10: #{mobilenet_forward.2} parent=5 // pred_check_branch
        %230 = sbr.rel (%p227) target = $region12
      $region11: #{mobilenet_forward.2} parent=5 // pred_region
        %s231 = ssub.s32 %s18, 1
        // Predicated region
        $region13: #{mobilenet_forward.2} parent=11 // pred_check
          %p232 = pneg %p65
        $region14: #{mobilenet_forward.2} parent=11 // pred_check_branch
          %234 = sbr.rel (%p232) target = $region16
        $region15: #{mobilenet_forward.2} parent=11 // pred_region
          _
        $region16: #{mobilenet_forward.2} parent=11 // pred_fallthru
          _
        // Predicated region
        $region17: #{mobilenet_forward.2} parent=11 // pred_check
          %p235 = pneg %p86
        $region18: #{mobilenet_forward.2} parent=11 // pred_check_branch
          %237 = sbr.rel (%p235) target = $region20
        $region19: #{mobilenet_forward.2} parent=11 // pred_region
          %s239 = ssub.s32 128, 128
          %240 = vsyncadd [#allocation3], %s239
          %s241 = sshll.u32 [#allocation2], 4
          %s242 = int_to_ptr.vmem [resolvable:$true] %s241
          %247 = dma.hbm_to_vmem [thread:$0]  %s2, 128, %s242, [#allocation3], 64, 64, 4
        $region20: #{mobilenet_forward.2} parent=11 // pred_fallthru
          _
        // Predicated region
        $region21: #{mobilenet_forward.2} parent=11 // pred_check
          %p248 = pneg %p107
        $region22: #{mobilenet_forward.2} parent=11 // pred_check_branch
          %250 = sbr.rel (%p248) target = $region24
        $region23: #{mobilenet_forward.2} parent=11 // pred_region
          %s252 = ssub.s32 16, 16
          %253 = vsyncadd [#allocation5], %s252
          %s255 = sshll.u32 [#allocation4], 4
          %s256 = int_to_ptr.vmem [resolvable:$true] %s255
          %258 = dma.hbm_to_vmem [thread:$0]  %s3, 16, %s256, [#allocation5]
        $region24: #{mobilenet_forward.2} parent=11 // pred_fallthru
          _
        // Predicated region
        $region25: #{mobilenet_forward.2} parent=11 // pred_check
          %p259 = pneg %p128
        $region26: #{mobilenet_forward.2} parent=11 // pred_check_branch
          %261 = sbr.rel (%p259) target = $region28
        $region27: #{mobilenet_forward.2} parent=11 // pred_region
          %s263 = ssub.s32 256, 256
          %264 = vsyncadd [#allocation5], %s263
          %s265 = sshll.u32 [#allocation6], 4
          %s266 = int_to_ptr.vmem [resolvable:$true] %s265
          %271 = dma.hbm_to_vmem [thread:$0]  %s4, 256, %s266, [#allocation5], 128, 128, 8
        $region28: #{mobilenet_forward.2} parent=11 // pred_fallthru
          _
        // Predicated region
        $region29: #{mobilenet_forward.2} parent=11 // pred_check
          %p272 = pneg %p149
        $region30: #{mobilenet_forward.2} parent=11 // pred_check_branch
          %274 = sbr.rel (%p272) target = $region32
        $region31: #{mobilenet_forward.2} parent=11 // pred_region
          %s276 = ssub.s32 16, 16
          %277 = vsyncadd [#allocation8], %s276
          %s279 = sshll.u32 [#allocation7], 4
          %s280 = int_to_ptr.vmem [resolvable:$true] %s279
          %282 = dma.hbm_to_vmem [thread:$0]  %s5, 16, %s280, [#allocation8]
        $region32: #{mobilenet_forward.2} parent=11 // pred_fallthru
          _
        // Predicated region
        $region33: #{mobilenet_forward.2} parent=11 // pred_check
          %p283 = pneg %p170
        $region34: #{mobilenet_forward.2} parent=11 // pred_check_branch
          %285 = sbr.rel (%p283) target = $region36
        $region35: #{mobilenet_forward.2} parent=11 // pred_region
          %s287 = ssub.s32 128, 128
          %288 = vsyncadd [#allocation8], %s287
          %s289 = sshll.u32 [#allocation9], 4
          %s290 = int_to_ptr.vmem [resolvable:$true] %s289
          %295 = dma.hbm_to_vmem [thread:$0]  %s6, 128, %s290, [#allocation8], 64, 64, 4
        $region36: #{mobilenet_forward.2} parent=11 // pred_fallthru
          _
        // Predicated region
        $region37: #{mobilenet_forward.2} parent=11 // pred_check
          %p296 = pneg %p191
        $region38: #{mobilenet_forward.2} parent=11 // pred_check_branch
          %298 = sbr.rel (%p296) target = $region40
        $region39: #{mobilenet_forward.2} parent=11 // pred_region
          %s300 = ssub.s32 16, 16
          %301 = vsyncadd [#allocation11], %s300
          %s303 = sshll.u32 [#allocation10], 4
          %s304 = int_to_ptr.vmem [resolvable:$true] %s303
          %306 = dma.hbm_to_vmem [thread:$0]  %s7, 16, %s304, [#allocation11]
        $region40: #{mobilenet_forward.2} parent=11 // pred_fallthru
          _
      $region12: #{mobilenet_forward.2} parent=5 // pred_fallthru
        _
      %p307 = scmp.lt.s32.totalorder %s18, 2
      // Predicated region
      $region41: #{mobilenet_forward.2} parent=5 // pred_check
        %p308 = pneg %p307
      $region42: #{mobilenet_forward.2} parent=5 // pred_check_branch
        %310 = sbr.rel (%p308) target = $region44
      $region43: #{mobilenet_forward.2} parent=5 // pred_region
        // Predicated region
        $region45: #{mobilenet_forward.2} parent=43 // pred_check
          %p311 = pneg %p38
        $region46: #{mobilenet_forward.2} parent=43 // pred_check_branch
          %313 = sbr.rel (%p311) target = $region48
        $region47: #{mobilenet_forward.2} parent=43 // pred_region
          %s314 = smul.u32 54, %s18
          %p315 = scmp.lt.s32.totalorder %s314, 107
          %s316 = scalar_select %p315, %s314, 107
          %s317 = smul.addr %s316, 4
          %s318 = scalar_lea.vmem %s0, %s317
          %s319 = smul.u32 54, %s18
        $region48: #{mobilenet_forward.2} parent=43 // pred_fallthru
          _
      $region44: #{mobilenet_forward.2} parent=5 // pred_fallthru
        _
      %p320 = scmp.le.s32.totalorder 1, %s18
      %p321 = scmp.lt.s32.totalorder %s18, 3
      %p322 = pnand %p320, %p321
      %p323 = pneg %p322
      // Predicated region
      $region49: #{mobilenet_forward.2} parent=5 // pred_check
        _
      $region50: #{mobilenet_forward.2} parent=5 // pred_check_branch
        %325 = sbr.rel (%p322) target = $region52
      $region51: #{mobilenet_forward.2} parent=5 // pred_region
        %s326 = ssub.s32 %s18, 1
        // Predicated region
        $region53: #{mobilenet_forward.2} parent=51 // pred_check
          %p327 = pneg %p86
        $region54: #{mobilenet_forward.2} parent=51 // pred_check_branch
          %329 = sbr.rel (%p327) target = $region56
        $region55: #{mobilenet_forward.2} parent=51 // pred_region
          %330 = dma.done [#allocation3], 128
        $region56: #{mobilenet_forward.2} parent=51 // pred_fallthru
          _
        // Predicated region
        $region57: #{mobilenet_forward.2} parent=51 // pred_check
          %p331 = pneg %p107
        $region58: #{mobilenet_forward.2} parent=51 // pred_check_branch
          %333 = sbr.rel (%p331) target = $region60
        $region59: #{mobilenet_forward.2} parent=51 // pred_region
          %334 = dma.done [#allocation5], 16
        $region60: #{mobilenet_forward.2} parent=51 // pred_fallthru
          _
        // Predicated region
        $region61: #{mobilenet_forward.2} parent=51 // pred_check
          %p335 = pneg %p128
        $region62: #{mobilenet_forward.2} parent=51 // pred_check_branch
          %337 = sbr.rel (%p335) target = $region64
        $region63: #{mobilenet_forward.2} parent=51 // pred_region
          %338 = dma.done [#allocation5], 256
        $region64: #{mobilenet_forward.2} parent=51 // pred_fallthru
          _
        // Predicated region
        $region65: #{mobilenet_forward.2} parent=51 // pred_check
          %p339 = pneg %p149
        $region66: #{mobilenet_forward.2} parent=51 // pred_check_branch
          %341 = sbr.rel (%p339) target = $region68
        $region67: #{mobilenet_forward.2} parent=51 // pred_region
          %342 = dma.done [#allocation8], 16
        $region68: #{mobilenet_forward.2} parent=51 // pred_fallthru
          _
        // Predicated region
        $region69: #{mobilenet_forward.2} parent=51 // pred_check
          %p343 = pneg %p170
        $region70: #{mobilenet_forward.2} parent=51 // pred_check_branch
          %345 = sbr.rel (%p343) target = $region72
        $region71: #{mobilenet_forward.2} parent=51 // pred_region
          %346 = dma.done [#allocation8], 128
        $region72: #{mobilenet_forward.2} parent=51 // pred_fallthru
          _
        // Predicated region
        $region73: #{mobilenet_forward.2} parent=51 // pred_check
          %p347 = pneg %p191
        $region74: #{mobilenet_forward.2} parent=51 // pred_check_branch
          %349 = sbr.rel (%p347) target = $region76
        $region75: #{mobilenet_forward.2} parent=51 // pred_region
          %350 = dma.done [#allocation11], 16
        $region76: #{mobilenet_forward.2} parent=51 // pred_fallthru
          _
        %s351 = smul.u32 54, %s23
        %p352 = scmp.lt.s32.totalorder %s351, 107
        %s353 = scalar_select %p352, %s351, 107
        %s354 = smul.addr %s353, 4
        %s355 = scalar_lea.vmem %s0, %s354
        %p356 = pneg %p44
        %p357 = pneg %p41
        %p358 = pneg %p65
        %p359 = pneg %p62
        %p360 = pneg %p86
        %p361 = pneg %p83
        %p362 = pneg %p107
        %p363 = pneg %p104
        %p364 = pneg %p128
        %p365 = pneg %p125
        %p366 = pneg %p149
        %p367 = pneg %p146
        %p368 = pneg %p170
        %p369 = pneg %p167
        %p370 = pneg %p191
        %p371 = pneg %p188
        %p372 = pneg %p217
        %p373 = pneg %p214
        %s374 = smul.u32 32, %s23
        %p375 = scmp.lt.s32.totalorder %s374, 63
        %s376 = scalar_select %p375, %s374, 63
        %s377 = smul.addr %s376, 4
        %s378 = scalar_lea.vmem %s8, %s377
        %s379 = smul.u32 54, %s23
        %p380 = scmp.lt.s32.totalorder %s379, 107
        %s381 = scalar_select %p380, %s379, 107
        %s382 = smul.addr %s381, 4
        %s383 = scalar_lea.vmem %s0, %s382
        %s384 = smul.u32 54, %s23
        %s385 = smul.u32 32, %s23
        %p386 = scmp.lt.s32.totalorder %s385, 63
        %s387 = scalar_select %p386, %s385, 63
        %s388 = smul.addr %s387, 4
        %s389 = scalar_lea.vmem %s8, %s388
        %s390 = smul.u32 32, %s23
        %v392 = vld [vmem:[%s383] sm:$0xf]
        %v393 = vld [vmem:[%s383 + $0x4] sm:$0xf]
        %v394 = vld [vmem:[%s383 + $0x8] sm:$0xf]
        %v395 = vld [vmem:[%s383 + $0xc] sm:$0xf]
        %v396 = vld [vmem:[%s383 + $0x10] sm:$0xf]
        %v397 = vld [vmem:[%s383 + $0x14] sm:$0xf]
        %v398 = vld [vmem:[%s383 + $0x18] sm:$0xf]
        %v399 = vld [vmem:[%s383 + $0x1c] sm:$0xf]
        %v400 = vld [vmem:[%s383 + $0x20] sm:$0xf]
        %v401 = vld [vmem:[%s383 + $0x24] sm:$0xf]
        %v402 = vld [vmem:[%s383 + $0x28] sm:$0xf]
        %v403 = vld [vmem:[%s383 + $0x2c] sm:$0xf]
        %v404 = vld [vmem:[%s383 + $0x30] sm:$0xf]
        %v405 = vld [vmem:[%s383 + $0x34] sm:$0xf]
        %v406 = vld [vmem:[%s383 + $0x38] sm:$0xf]
        %v407 = vld [vmem:[%s383 + $0x3c] sm:$0xf]
        %v408 = vld [vmem:[%s383 + $0x40] sm:$0xf]
        %v409 = vld [vmem:[%s383 + $0x44] sm:$0xf]
        %v410 = vld [vmem:[%s383 + $0x48] sm:$0xf]
        %v411 = vld [vmem:[%s383 + $0x4c] sm:$0xf]
        %v412 = vld [vmem:[%s383 + $0x50] sm:$0xf]
        %v413 = vld [vmem:[%s383 + $0x54] sm:$0xf]
        %v414 = vld [vmem:[%s383 + $0x58] sm:$0xf]
        %v415 = vld [vmem:[%s383 + $0x5c] sm:$0xf]
        %v416 = vld [vmem:[%s383 + $0x60] sm:$0xf]
        %v417 = vld [vmem:[%s383 + $0x64] sm:$0xf]
        %v418 = vld [vmem:[%s383 + $0x68] sm:$0xf]
        %v419 = vld [vmem:[%s383 + $0x6c] sm:$0xf]
        %v420 = vld [vmem:[%s383 + $0x70] sm:$0xf]
        %v421 = vld [vmem:[%s383 + $0x74] sm:$0xf]
        %v422 = vld [vmem:[%s383 + $0x78] sm:$0xf]
        %v423 = vld [vmem:[%s383 + $0x7c] sm:$0xf]
        %v424 = vld [vmem:[%s383 + $0x80] sm:$0xf]
        %v425 = vld [vmem:[%s383 + $0x84] sm:$0xf]
        %v426 = vld [vmem:[%s383 + $0x88] sm:$0xf]
        %v427 = vld [vmem:[%s383 + $0x8c] sm:$0xf]
        %v428 = vld [vmem:[%s383 + $0x90] sm:$0xf]
        %v429 = vld [vmem:[%s383 + $0x94] sm:$0xf]
        %v430 = vld [vmem:[%s383 + $0x98] sm:$0xf]
        %v431 = vld [vmem:[%s383 + $0x9c] sm:$0xf]
        %v432 = vld [vmem:[%s383 + $0xa0] sm:$0xf]
        %v433 = vld [vmem:[%s383 + $0xa4] sm:$0xf]
        %v434 = vld [vmem:[%s383 + $0xa8] sm:$0xf]
        %v435 = vld [vmem:[%s383 + $0xac] sm:$0xf]
        %v436 = vld [vmem:[%s383 + $0xb0] sm:$0xf]
        %v437 = vld [vmem:[%s383 + $0xb4] sm:$0xf]
        %v438 = vld [vmem:[%s383 + $0xb8] sm:$0xf]
        %v439 = vld [vmem:[%s383 + $0xbc] sm:$0xf]
        %v440 = vld [vmem:[%s383 + $0xc0] sm:$0xf]
        %v441 = vld [vmem:[%s383 + $0xc4] sm:$0xf]
        %v442 = vld [vmem:[%s383 + $0xc8] sm:$0xf]
        %v443 = vld [vmem:[%s383 + $0xcc] sm:$0xf]
        %v444 = vld [vmem:[%s383 + $0xd0] sm:$0xf]
        %v445 = vld [vmem:[%s383 + $0xd4] sm:$0xf]
        %v446 = vld [vmem:[#allocation2] sm:$0xf]
        %v447 = vld [vmem:[#allocation2 + $0x4] sm:$0x1]
        %v448 = vld [vmem:[#allocation4] sm:$0x1]
        %v450 = vlaneseq
        %v451 = vshrl.u32 %v450, 7
        %v452 = vsub.s32 0, %v451
        %v453 = vrot.slane %v448, %v452
        %v509 = vunpack.c.l.b16 %v392
        %v510 = vunpack.c.l.b16 %v393
        %v511 = vunpack.c.l.b16 %v394
        %v512 = vunpack.c.l.b16 %v395
        %v513 = vunpack.c.l.b16 %v396
        %v514 = vunpack.c.l.b16 %v397
        %v515 = vunpack.c.l.b16 %v398
        %v516 = vunpack.c.l.b16 %v399
        %v517 = vunpack.c.l.b16 %v400
        %v518 = vunpack.c.l.b16 %v401
        %v519 = vunpack.c.l.b16 %v402
        %v520 = vunpack.c.l.b16 %v403
        %v521 = vunpack.c.l.b16 %v404
        %v522 = vunpack.c.l.b16 %v405
        %v523 = vunpack.c.l.b16 %v406
        %v524 = vunpack.c.l.b16 %v407
        %v525 = vunpack.c.l.b16 %v408
        %v526 = vunpack.c.l.b16 %v409
        %v527 = vunpack.c.l.b16 %v410
        %v528 = vunpack.c.l.b16 %v411
        %v529 = vunpack.c.l.b16 %v412
        %v530 = vunpack.c.l.b16 %v413
        %v531 = vunpack.c.l.b16 %v414
        %v532 = vunpack.c.l.b16 %v415
        %v533 = vunpack.c.l.b16 %v416
        %v534 = vunpack.c.l.b16 %v417
        %v535 = vunpack.c.l.b16 %v418
        %v536 = vunpack.c.l.b16 %v419
        %v537 = vunpack.c.l.b16 %v420
        %v538 = vunpack.c.l.b16 %v421
        %v539 = vunpack.c.l.b16 %v422
        %v540 = vunpack.c.l.b16 %v423
        %v541 = vunpack.c.l.b16 %v424
        %v542 = vunpack.c.l.b16 %v425
        %v543 = vunpack.c.l.b16 %v426
        %v544 = vunpack.c.l.b16 %v427
        %v545 = vunpack.c.l.b16 %v428
        %v546 = vunpack.c.l.b16 %v429
        %v547 = vunpack.c.l.b16 %v430
        %v548 = vunpack.c.l.b16 %v431
        %v549 = vunpack.c.l.b16 %v432
        %v550 = vunpack.c.l.b16 %v433
        %v551 = vunpack.c.l.b16 %v434
        %v552 = vunpack.c.l.b16 %v435
        %v553 = vunpack.c.l.b16 %v436
        %v554 = vunpack.c.l.b16 %v437
        %v555 = vunpack.c.l.b16 %v438
        %v556 = vunpack.c.l.b16 %v439
        %v557 = vunpack.c.l.b16 %v440
        %v558 = vunpack.c.l.b16 %v441
        %v559 = vunpack.c.l.b16 %v442
        %v560 = vunpack.c.l.b16 %v443
        %v561 = vunpack.c.l.b16 %v444
        %v562 = vunpack.c.l.b16 %v445
        %v563 = vpack.c.b16 %v510, %v509
        %v564 = vpack.c.b16 %v512, %v511
        %v565 = vpack.c.b16 %v514, %v513
        %v566 = vpack.c.b16 %v516, %v515
        %v567 = vpack.c.b16 %v518, %v517
        %v568 = vpack.c.b16 %v520, %v519
        %v569 = vpack.c.b16 %v522, %v521
        %v570 = vpack.c.b16 %v524, %v523
        %v571 = vpack.c.b16 %v526, %v525
        %v572 = vpack.c.b16 %v528, %v527
        %v573 = vpack.c.b16 %v530, %v529
        %v574 = vpack.c.b16 %v532, %v531
        %v575 = vpack.c.b16 %v534, %v533
        %v576 = vpack.c.b16 %v536, %v535
        %v577 = vpack.c.b16 %v538, %v537
        %v578 = vpack.c.b16 %v540, %v539
        %v579 = vpack.c.b16 %v542, %v541
        %v580 = vpack.c.b16 %v544, %v543
        %v581 = vpack.c.b16 %v546, %v545
        %v582 = vpack.c.b16 %v548, %v547
        %v583 = vpack.c.b16 %v550, %v549
        %v584 = vpack.c.b16 %v552, %v551
        %v585 = vpack.c.b16 %v554, %v553
        %v586 = vpack.c.b16 %v556, %v555
        %v587 = vpack.c.b16 %v558, %v557
        %v588 = vpack.c.b16 %v560, %v559
        %v589 = vpack.c.b16 %v562, %v561
        %v592 = vunpack.c.l.b16 %v446
        %v593 = vunpack.c.l.b16 %v447
        %v594 = vpack.c.b16 %v593, %v592
        %vm595 = vcmask 72704
        %v597 = vsel %vm595, %v563, 0
        %v600 = vsel %vm595, %v564, 0
        %v603 = vsel %vm595, %v565, 0
        %v606 = vsel %vm595, %v566, 0
        %v609 = vsel %vm595, %v567, 0
        %v612 = vsel %vm595, %v568, 0
        %v615 = vsel %vm595, %v569, 0
        %v618 = vsel %vm595, %v570, 0
        %v621 = vsel %vm595, %v571, 0
        %v624 = vsel %vm595, %v572, 0
        %v627 = vsel %vm595, %v573, 0
        %v630 = vsel %vm595, %v574, 0
        %v633 = vsel %vm595, %v575, 0
        %v636 = vsel %vm595, %v576, 0
        %v639 = vsel %vm595, %v577, 0
        %v642 = vsel %vm595, %v578, 0
        %v645 = vsel %vm595, %v579, 0
        %v648 = vsel %vm595, %v580, 0
        %v651 = vsel %vm595, %v581, 0
        %v654 = vsel %vm595, %v582, 0
        %v657 = vsel %vm595, %v583, 0
        %v660 = vsel %vm595, %v584, 0
        %v663 = vsel %vm595, %v585, 0
        %v666 = vsel %vm595, %v586, 0
        %v669 = vsel %vm595, %v587, 0
        %v672 = vsel %vm595, %v588, 0
        %v675 = vsel %vm595, %v589, 0
        %vm677 = vcmask 1043456
        %vm678 = vcmask 1044480
        %v679 = vsel %vm677, 4294967295, 65535
        %v680 = vsel %vm678, %v679, 0
        %v682 = vand.u32 %v594, %v680
        %684 = vmatprep.subr.bf16.mxu0 0
        %685 = vmatpush1.bf16.msra.mxu0 %v682
        %686 = vmatprep.subr.bf16.mxu0 0
        %687 = vmatpush1.bf16.msra.mxu0 0
        %688 = vmatprep.subr.bf16.mxu0 0
        %689 = vmatpush1.bf16.msra.mxu0 0
        %690 = vmatprep.subr.bf16.mxu0 0
        %691 = vmatpush1.bf16.msra.mxu0 0
        %692 = vmatprep.subr.bf16.mxu0 0
        %693 = vmatpush1.bf16.msra.mxu0 0
        %694 = vmatprep.subr.bf16.mxu0 0
        %695 = vmatpush1.bf16.msra.mxu0 0
        %696 = vmatprep.subr.bf16.mxu0 0
        %697 = vmatpush1.bf16.msra.mxu0 0
        %698 = vmatprep.subr.bf16.mxu0 0
        %699 = vmatpush1.bf16.msra.mxu0 0
        %700 = vmatprep.subr.bf16.mxu0 0
        %701 = vmatpush1.bf16.msra.mxu0 0
        %702 = vmatprep.subr.bf16.mxu0 0
        %703 = vmatpush1.bf16.msra.mxu0 0
        %704 = vmatprep.subr.bf16.mxu0 0
        %705 = vmatpush1.bf16.msra.mxu0 0
        %706 = vmatprep.subr.bf16.mxu0 0
        %707 = vmatpush1.bf16.msra.mxu0 0
        %708 = vmatprep.subr.bf16.mxu0 0
        %709 = vmatpush1.bf16.msra.mxu0 0
        %710 = vmatprep.subr.bf16.mxu0 0
        %711 = vmatpush1.bf16.msra.mxu0 0
        %712 = vmatprep.subr.bf16.mxu0 0
        %713 = vmatpush1.bf16.msra.mxu0 0
        %714 = vmatprep.subr.bf16.mxu0 0
        %715 = vmatpush1.bf16.msra.mxu0 0
        %716 = vmatprep.mubr.bf16.mxu0 0
        %717 = vmatmul.mubr.bf16.gmra.mrb[0].mxu0 %v597
        %v718 = vpop.f32.mrb[0].mxu0
        %v719 = vadd.f32 %v453, %v718
        %v720 = vpop.f32.mrb[0].mxu0
        %v721 = vpop.f32.mrb[0].mxu0
        %v722 = vadd.f32 %v453, %v721
        %v723 = vpop.f32.mrb[0].mxu0
        %724 = vmatprep.mubr.bf16.mxu0 0
        %725 = vmatmul.mubr.bf16.gmra.mrb[0].mxu0 %v600
        %v726 = vpop.f32.mrb[0].mxu0
        %v727 = vadd.f32 %v453, %v726
        %v728 = vpop.f32.mrb[0].mxu0
        %v729 = vpop.f32.mrb[0].mxu0
        %v730 = vadd.f32 %v453, %v729
        %v731 = vpop.f32.mrb[0].mxu0
        %732 = vmatprep.mubr.bf16.mxu0 0
        %733 = vmatmul.mubr.bf16.gmra.mrb[0].mxu0 %v603
        %v734 = vpop.f32.mrb[0].mxu0
        %v735 = vadd.f32 %v453, %v734
        %v736 = vpop.f32.mrb[0].mxu0
        %v737 = vpop.f32.mrb[0].mxu0
        %v738 = vadd.f32 %v453, %v737
        %v739 = vpop.f32.mrb[0].mxu0
        %740 = vmatprep.mubr.bf16.mxu0 0
        %741 = vmatmul.mubr.bf16.gmra.mrb[0].mxu0 %v606
        %v742 = vpop.f32.mrb[0].mxu0
        %v743 = vadd.f32 %v453, %v742
        %v744 = vpop.f32.mrb[0].mxu0
        %v745 = vpop.f32.mrb[0].mxu0
        %v746 = vadd.f32 %v453, %v745
        %v747 = vpop.f32.mrb[0].mxu0
        %748 = vmatprep.mubr.bf16.mxu0 0
        %749 = vmatmul.mubr.bf16.gmra.mrb[0].mxu0 %v609
        %v750 = vpop.f32.mrb[0].mxu0
        %v751 = vadd.f32 %v453, %v750
        %v752 = vpop.f32.mrb[0].mxu0
        %v753 = vpop.f32.mrb[0].mxu0
        %v754 = vadd.f32 %v453, %v753
        %v755 = vpop.f32.mrb[0].mxu0
        %756 = vmatprep.mubr.bf16.mxu0 0
        %757 = vmatmul.mubr.bf16.gmra.mrb[0].mxu0 %v612
        %v758 = vpop.f32.mrb[0].mxu0
        %v759 = vadd.f32 %v453, %v758
        %v760 = vpop.f32.mrb[0].mxu0
        %v761 = vpop.f32.mrb[0].mxu0
        %v762 = vadd.f32 %v453, %v761
        %v763 = vpop.f32.mrb[0].mxu0
        %764 = vmatprep.mubr.bf16.mxu0 0
        %765 = vmatmul.mubr.bf16.gmra.mrb[0].mxu0 %v615
        %v766 = vpop.f32.mrb[0].mxu0
        %v767 = vadd.f32 %v453, %v766
        %v768 = vpop.f32.mrb[0].mxu0
        %v769 = vpop.f32.mrb[0].mxu0
        %v770 = vadd.f32 %v453, %v769
        %v771 = vpop.f32.mrb[0].mxu0
        %772 = vmatprep.mubr.bf16.mxu0 0
        %773 = vmatmul.mubr.bf16.gmra.mrb[0].mxu0 %v618
        %v774 = vpop.f32.mrb[0].mxu0
        %v775 = vadd.f32 %v453, %v774
        %v776 = vpop.f32.mrb[0].mxu0
        %v777 = vpop.f32.mrb[0].mxu0
        %v778 = vadd.f32 %v453, %v777
        %v779 = vpop.f32.mrb[0].mxu0
        %780 = vmatprep.mubr.bf16.mxu0 0
        %781 = vmatmul.mubr.bf16.gmra.mrb[0].mxu0 %v621
        %v782 = vpop.f32.mrb[0].mxu0
        %v783 = vadd.f32 %v453, %v782
        %v784 = vpop.f32.mrb[0].mxu0
        %v785 = vpop.f32.mrb[0].mxu0
        %v786 = vadd.f32 %v453, %v785
        %v787 = vpop.f32.mrb[0].mxu0
        %788 = vmatprep.mubr.bf16.mxu0 0
        %789 = vmatmul.mubr.bf16.gmra.mrb[0].mxu0 %v624
        %v790 = vpop.f32.mrb[0].mxu0
        %v791 = vadd.f32 %v453, %v790
        %v792 = vpop.f32.mrb[0].mxu0
        %v793 = vpop.f32.mrb[0].mxu0
        %v794 = vadd.f32 %v453, %v793
        %v795 = vpop.f32.mrb[0].mxu0
        %796 = vmatprep.mubr.bf16.mxu0 0
        %797 = vmatmul.mubr.bf16.gmra.mrb[0].mxu0 %v627
        %v798 = vpop.f32.mrb[0].mxu0
        %v799 = vadd.f32 %v453, %v798
        %v800 = vpop.f32.mrb[0].mxu0
        %v801 = vpop.f32.mrb[0].mxu0
        %v802 = vadd.f32 %v453, %v801
        %v803 = vpop.f32.mrb[0].mxu0
        %804 = vmatprep.mubr.bf16.mxu0 0
        %805 = vmatmul.mubr.bf16.gmra.mrb[0].mxu0 %v630
        %v806 = vpop.f32.mrb[0].mxu0
        %v807 = vadd.f32 %v453, %v806
        %v808 = vpop.f32.mrb[0].mxu0
        %v809 = vpop.f32.mrb[0].mxu0
        %v810 = vadd.f32 %v453, %v809
        %v811 = vpop.f32.mrb[0].mxu0
        %812 = vmatprep.mubr.bf16.mxu0 0
        %813 = vmatmul.mubr.bf16.gmra.mrb[0].mxu0 %v633
        %v814 = vpop.f32.mrb[0].mxu0
        %v815 = vadd.f32 %v453, %v814
        %v816 = vpop.f32.mrb[0].mxu0
        %v817 = vpop.f32.mrb[0].mxu0
        %v818 = vadd.f32 %v453, %v817
        %v819 = vpop.f32.mrb[0].mxu0
        %820 = vmatprep.mubr.bf16.mxu0 0
        %821 = vmatmul.mubr.bf16.gmra.mrb[0].mxu0 %v636
        %v822 = vpop.f32.mrb[0].mxu0
        %v823 = vadd.f32 %v453, %v822
        %v824 = vpop.f32.mrb[0].mxu0
        %v825 = vpop.f32.mrb[0].mxu0
        %v826 = vadd.f32 %v453, %v825
        %v827 = vpop.f32.mrb[0].mxu0
        %828 = vmatprep.mubr.bf16.mxu0 0
        %829 = vmatmul.mubr.bf16.gmra.mrb[0].mxu0 %v639
        %v830 = vpop.f32.mrb[0].mxu0
        %v831 = vadd.f32 %v453, %v830
        %v832 = vpop.f32.mrb[0].mxu0
        %v833 = vpop.f32.mrb[0].mxu0
        %v834 = vadd.f32 %v453, %v833
        %v835 = vpop.f32.mrb[0].mxu0
        %836 = vmatprep.mubr.bf16.mxu0 0
        %837 = vmatmul.mubr.bf16.gmra.mrb[0].mxu0 %v642
        %v838 = vpop.f32.mrb[0].mxu0
        %v839 = vadd.f32 %v453, %v838
        %v840 = vpop.f32.mrb[0].mxu0
        %v841 = vpop.f32.mrb[0].mxu0
        %v842 = vadd.f32 %v453, %v841
        %v843 = vpop.f32.mrb[0].mxu0
        %844 = vmatprep.mubr.bf16.mxu0 0
        %845 = vmatmul.mubr.bf16.gmra.mrb[0].mxu0 %v645
        %v846 = vpop.f32.mrb[0].mxu0
        %v847 = vadd.f32 %v453, %v846
        %v848 = vpop.f32.mrb[0].mxu0
        %v849 = vpop.f32.mrb[0].mxu0
        %v850 = vadd.f32 %v453, %v849
        %v851 = vpop.f32.mrb[0].mxu0
        %852 = vmatprep.mubr.bf16.mxu0 0
        %853 = vmatmul.mubr.bf16.gmra.mrb[0].mxu0 %v648
        %v854 = vpop.f32.mrb[0].mxu0
        %v855 = vadd.f32 %v453, %v854
        %v856 = vpop.f32.mrb[0].mxu0
        %v857 = vpop.f32.mrb[0].mxu0
        %v858 = vadd.f32 %v453, %v857
        %v859 = vpop.f32.mrb[0].mxu0
        %860 = vmatprep.mubr.bf16.mxu0 0
        %861 = vmatmul.mubr.bf16.gmra.mrb[0].mxu0 %v651
        %v862 = vpop.f32.mrb[0].mxu0
        %v863 = vadd.f32 %v453, %v862
        %v864 = vpop.f32.mrb[0].mxu0
        %v865 = vpop.f32.mrb[0].mxu0
        %v866 = vadd.f32 %v453, %v865
        %v867 = vpop.f32.mrb[0].mxu0
        %868 = vmatprep.mubr.bf16.mxu0 0
        %869 = vmatmul.mubr.bf16.gmra.mrb[0].mxu0 %v654
        %v870 = vpop.f32.mrb[0].mxu0
        %v871 = vadd.f32 %v453, %v870
        %v872 = vpop.f32.mrb[0].mxu0
        %v873 = vpop.f32.mrb[0].mxu0
        %v874 = vadd.f32 %v453, %v873
        %v875 = vpop.f32.mrb[0].mxu0
        %876 = vmatprep.mubr.bf16.mxu0 0
        %877 = vmatmul.mubr.bf16.gmra.mrb[0].mxu0 %v657
        %v878 = vpop.f32.mrb[0].mxu0
        %v879 = vadd.f32 %v453, %v878
        %v880 = vpop.f32.mrb[0].mxu0
        %v881 = vpop.f32.mrb[0].mxu0
        %v882 = vadd.f32 %v453, %v881
        %v883 = vpop.f32.mrb[0].mxu0
        %884 = vmatprep.mubr.bf16.mxu0 0
        %885 = vmatmul.mubr.bf16.gmra.mrb[0].mxu0 %v660
        %v886 = vpop.f32.mrb[0].mxu0
        %v887 = vadd.f32 %v453, %v886
        %v888 = vpop.f32.mrb[0].mxu0
        %v889 = vpop.f32.mrb[0].mxu0
        %v890 = vadd.f32 %v453, %v889
        %v891 = vpop.f32.mrb[0].mxu0
        %892 = vmatprep.mubr.bf16.mxu0 0
        %893 = vmatmul.mubr.bf16.gmra.mrb[0].mxu0 %v663
        %v894 = vpop.f32.mrb[0].mxu0
        %v895 = vadd.f32 %v453, %v894
        %v896 = vpop.f32.mrb[0].mxu0
        %v897 = vpop.f32.mrb[0].mxu0
        %v898 = vadd.f32 %v453, %v897
        %v899 = vpop.f32.mrb[0].mxu0
        %900 = vmatprep.mubr.bf16.mxu0 0
        %901 = vmatmul.mubr.bf16.gmra.mrb[0].mxu0 %v666
        %v902 = vpop.f32.mrb[0].mxu0
        %v903 = vadd.f32 %v453, %v902
        %v904 = vpop.f32.mrb[0].mxu0
        %v905 = vpop.f32.mrb[0].mxu0
        %v906 = vadd.f32 %v453, %v905
        %v907 = vpop.f32.mrb[0].mxu0
        %908 = vmatprep.mubr.bf16.mxu0 0
        %909 = vmatmul.mubr.bf16.gmra.mrb[0].mxu0 %v669
        %v910 = vpop.f32.mrb[0].mxu0
        %v911 = vadd.f32 %v453, %v910
        %v912 = vpop.f32.mrb[0].mxu0
        %v913 = vpop.f32.mrb[0].mxu0
        %v914 = vadd.f32 %v453, %v913
        %v915 = vpop.f32.mrb[0].mxu0
        %916 = vmatprep.mubr.bf16.mxu0 0
        %917 = vmatmul.mubr.bf16.gmra.mrb[0].mxu0 %v672
        %v918 = vpop.f32.mrb[0].mxu0
        %v919 = vadd.f32 %v453, %v918
        %v920 = vpop.f32.mrb[0].mxu0
        %v921 = vpop.f32.mrb[0].mxu0
        %v922 = vadd.f32 %v453, %v921
        %v923 = vpop.f32.mrb[0].mxu0
        %924 = vmatprep.mubr.bf16.mxu0 0
        %925 = vmatmul.mubr.bf16.gmra.mrb[0].mxu0 %v675
        %v926 = vpop.f32.mrb[0].mxu0
        %v927 = vadd.f32 %v453, %v926
        %v928 = vpop.f32.mrb[0].mxu0
        %v929 = vpop.f32.mrb[0].mxu0
        %v930 = vadd.f32 %v453, %v929
        %v931 = vpop.f32.mrb[0].mxu0
        %932 = vdwg.mxu0
        %v933 = vmax.f32 %v719, 0.0
        %v934 = vmax.f32 %v722, 0.0
        %v935 = vmax.f32 %v727, 0.0
        %v936 = vmax.f32 %v730, 0.0
        %v937 = vmax.f32 %v735, 0.0
        %v938 = vmax.f32 %v738, 0.0
        %v939 = vmax.f32 %v743, 0.0
        %v940 = vmax.f32 %v746, 0.0
        %v941 = vmax.f32 %v751, 0.0
        %v942 = vmax.f32 %v754, 0.0
        %v943 = vmax.f32 %v759, 0.0
        %v944 = vmax.f32 %v762, 0.0
        %v945 = vmax.f32 %v767, 0.0
        %v946 = vmax.f32 %v770, 0.0
        %v947 = vmax.f32 %v775, 0.0
        %v948 = vmax.f32 %v778, 0.0
        %v949 = vmax.f32 %v783, 0.0
        %v950 = vmax.f32 %v786, 0.0
        %v951 = vmax.f32 %v791, 0.0
        %v952 = vmax.f32 %v794, 0.0
        %v953 = vmax.f32 %v799, 0.0
        %v954 = vmax.f32 %v802, 0.0
        %v955 = vmax.f32 %v807, 0.0
        %v956 = vmax.f32 %v810, 0.0
        %v957 = vmax.f32 %v815, 0.0
        %v958 = vmax.f32 %v818, 0.0
        %v959 = vmax.f32 %v823, 0.0
        %v960 = vmax.f32 %v826, 0.0
        %v961 = vmax.f32 %v831, 0.0
        %v962 = vmax.f32 %v834, 0.0
        %v963 = vmax.f32 %v839, 0.0
        %v964 = vmax.f32 %v842, 0.0
        %v965 = vmax.f32 %v847, 0.0
        %v966 = vmax.f32 %v850, 0.0
        %v967 = vmax.f32 %v855, 0.0
        %v968 = vmax.f32 %v858, 0.0
        %v969 = vmax.f32 %v863, 0.0
        %v970 = vmax.f32 %v866, 0.0
        %v971 = vmax.f32 %v871, 0.0
        %v972 = vmax.f32 %v874, 0.0
        %v973 = vmax.f32 %v879, 0.0
        %v974 = vmax.f32 %v882, 0.0
        %v975 = vmax.f32 %v887, 0.0
        %v976 = vmax.f32 %v890, 0.0
        %v977 = vmax.f32 %v895, 0.0
        %v978 = vmax.f32 %v898, 0.0
        %v979 = vmax.f32 %v903, 0.0
        %v980 = vmax.f32 %v906, 0.0
        %v981 = vmax.f32 %v911, 0.0
        %v982 = vmax.f32 %v914, 0.0
        %v983 = vmax.f32 %v919, 0.0
        %v984 = vmax.f32 %v922, 0.0
        %v985 = vmax.f32 %v927, 0.0
        %v986 = vmax.f32 %v930, 0.0
        %v987 = vld [vmem:[%s1] sm:$0xff]
        %v988 = vld [vmem:[%s1 + $0x8] sm:$0xff]
        %v989 = vld [vmem:[%s1 + $0x10] sm:$0xff]
        %v990 = vld [vmem:[%s1 + $0x18] sm:$0xff]
        %v991 = vld [vmem:[%s1 + $0x20] sm:$0xff]
        %v992 = vld [vmem:[%s1 + $0x28] sm:$0xff]
        %v993 = vld [vmem:[%s1 + $0x30] sm:$0xff]
        %v994 = vld [vmem:[%s1 + $0x38] sm:$0xff]
        %v995 = vld [vmem:[%s1 + $0x40] sm:$0xff]
        %v996 = vld [vmem:[%s1 + $0x48] sm:$0xff]
        %v997 = vld [vmem:[%s1 + $0x50] sm:$0xff]
        %v998 = vld [vmem:[%s1 + $0x58] sm:$0xff]
        %v999 = vld [vmem:[%s1 + $0x60] sm:$0xff]
        %v1000 = vld [vmem:[%s1 + $0x68] sm:$0xff]
        %v1001 = vld [vmem:[%s1 + $0x70] sm:$0xff]
        %v1002 = vld [vmem:[%s1 + $0x78] sm:$0xff]
        %v1003 = vld [vmem:[%s1 + $0x80] sm:$0xff]
        %v1004 = vld [vmem:[%s1 + $0x88] sm:$0xff]
        %v1005 = vld [vmem:[%s1 + $0x90] sm:$0xff]
        %v1006 = vld [vmem:[%s1 + $0x98] sm:$0xff]
        %v1007 = vld [vmem:[%s1 + $0xa0] sm:$0xff]
        %v1008 = vld [vmem:[%s1 + $0xa8] sm:$0xff]
        %v1009 = vld [vmem:[%s1 + $0xb0] sm:$0xff]
        %v1010 = vld [vmem:[%s1 + $0xb8] sm:$0xff]
        %v1011 = vld [vmem:[%s1 + $0xc0] sm:$0xff]
        %v1012 = vld [vmem:[%s1 + $0xc8] sm:$0xff]
        %v1013 = vld [vmem:[%s1 + $0xd0] sm:$0xff]
        %v1014 = vld [vmem:[%s1 + $0xd8] sm:$0xff]
        %v1015 = vld [vmem:[%s1 + $0xe0] sm:$0xff]
        %v1016 = vld [vmem:[%s1 + $0xe8] sm:$0xff]
        %v1017 = vld [vmem:[%s1 + $0xf0] sm:$0xff]
        %v1018 = vld [vmem:[%s1 + $0xf8] sm:$0xff]
        %v1019 = vld [vmem:[%s1 + $0x100] sm:$0xff]
        %v1020 = vld [vmem:[%s1 + $0x108] sm:$0xff]
        %v1021 = vld [vmem:[%s1 + $0x110] sm:$0xff]
        %v1022 = vld [vmem:[%s1 + $0x118] sm:$0xff]
        %v1023 = vld [vmem:[%s1 + $0x120] sm:$0xff]
        %v1024 = vld [vmem:[%s1 + $0x128] sm:$0xff]
        %v1025 = vld [vmem:[%s1 + $0x130] sm:$0xff]
        %v1026 = vld [vmem:[%s1 + $0x138] sm:$0xff]
        %v1027 = vld [vmem:[%s1 + $0x140] sm:$0xff]
        %v1028 = vld [vmem:[%s1 + $0x148] sm:$0xff]
        %v1029 = vld [vmem:[%s1 + $0x150] sm:$0xff]
        %v1030 = vld [vmem:[%s1 + $0x158] sm:$0xff]
        %v1031 = vld [vmem:[%s1 + $0x160] sm:$0xff]
        %v1032 = vld [vmem:[%s1 + $0x168] sm:$0xff]
        %v1033 = vld [vmem:[%s1 + $0x170] sm:$0xff]
        %v1034 = vld [vmem:[%s1 + $0x178] sm:$0xff]
        %v1035 = vld [vmem:[%s1 + $0x180] sm:$0xff]
        %v1036 = vld [vmem:[%s1 + $0x188] sm:$0xff]
        %v1037 = vld [vmem:[%s1 + $0x190] sm:$0xff]
        %v1038 = vld [vmem:[%s1 + $0x198] sm:$0xff]
        %v1039 = vld [vmem:[%s1 + $0x1a0] sm:$0xff]
        %v1040 = vld [vmem:[%s1 + $0x1a8] sm:$0xff]
        %1042 = vset.pattern.permute.xlu0 0
        %1043 = vperm.xlu0 %1042, %v987
        %v1044 = vpop.permute.xlu0 %1043
        %1047 = vset.pattern.permute.xlu0 0
        %1048 = vperm.xlu0 %1047, %v988
        %v1049 = vpop.permute.xlu0 %1048
        %1052 = vset.pattern.permute.xlu0 0
        %1053 = vperm.xlu0 %1052, %v989
        %v1054 = vpop.permute.xlu0 %1053
        %1057 = vset.pattern.permute.xlu0 0
        %1058 = vperm.xlu0 %1057, %v990
        %v1059 = vpop.permute.xlu0 %1058
        %1062 = vset.pattern.permute.xlu0 0
        %1063 = vperm.xlu0 %1062, %v991
        %v1064 = vpop.permute.xlu0 %1063
        %1067 = vset.pattern.permute.xlu0 0
        %1068 = vperm.xlu0 %1067, %v992
        %v1069 = vpop.permute.xlu0 %1068
        %1072 = vset.pattern.permute.xlu0 0
        %1073 = vperm.xlu0 %1072, %v993
        %v1074 = vpop.permute.xlu0 %1073
        %1077 = vset.pattern.permute.xlu0 0
        %1078 = vperm.xlu0 %1077, %v994
        %v1079 = vpop.permute.xlu0 %1078
        %1082 = vset.pattern.permute.xlu0 0
        %1083 = vperm.xlu0 %1082, %v995
        %v1084 = vpop.permute.xlu0 %1083
        %1087 = vset.pattern.permute.xlu0 0
        %1088 = vperm.xlu0 %1087, %v996
        %v1089 = vpop.permute.xlu0 %1088
        %1092 = vset.pattern.permute.xlu0 0
        %1093 = vperm.xlu0 %1092, %v997
        %v1094 = vpop.permute.xlu0 %1093
        %1097 = vset.pattern.permute.xlu0 0
        %1098 = vperm.xlu0 %1097, %v998
        %v1099 = vpop.permute.xlu0 %1098
        %1102 = vset.pattern.permute.xlu0 0
        %1103 = vperm.xlu0 %1102, %v999
        %v1104 = vpop.permute.xlu0 %1103
        %1107 = vset.pattern.permute.xlu0 0
        %1108 = vperm.xlu0 %1107, %v1000
        %v1109 = vpop.permute.xlu0 %1108
        %1112 = vset.pattern.permute.xlu0 0
        %1113 = vperm.xlu0 %1112, %v1001
        %v1114 = vpop.permute.xlu0 %1113
        %1117 = vset.pattern.permute.xlu0 0
        %1118 = vperm.xlu0 %1117, %v1002
        %v1119 = vpop.permute.xlu0 %1118
        %1122 = vset.pattern.permute.xlu0 0
        %1123 = vperm.xlu0 %1122, %v1003
        %v1124 = vpop.permute.xlu0 %1123
        %1127 = vset.pattern.permute.xlu0 0
        %1128 = vperm.xlu0 %1127, %v1004
        %v1129 = vpop.permute.xlu0 %1128
        %1132 = vset.pattern.permute.xlu0 0
        %1133 = vperm.xlu0 %1132, %v1005
        %v1134 = vpop.permute.xlu0 %1133
        %1137 = vset.pattern.permute.xlu0 0
        %1138 = vperm.xlu0 %1137, %v1006
        %v1139 = vpop.permute.xlu0 %1138
        %1142 = vset.pattern.permute.xlu0 0
        %1143 = vperm.xlu0 %1142, %v1007
        %v1144 = vpop.permute.xlu0 %1143
        %1147 = vset.pattern.permute.xlu0 0
        %1148 = vperm.xlu0 %1147, %v1008
        %v1149 = vpop.permute.xlu0 %1148
        %1152 = vset.pattern.permute.xlu0 0
        %1153 = vperm.xlu0 %1152, %v1009
        %v1154 = vpop.permute.xlu0 %1153
        %1157 = vset.pattern.permute.xlu0 0
        %1158 = vperm.xlu0 %1157, %v1010
        %v1159 = vpop.permute.xlu0 %1158
        %1162 = vset.pattern.permute.xlu0 0
        %1163 = vperm.xlu0 %1162, %v1011
        %v1164 = vpop.permute.xlu0 %1163
        %1167 = vset.pattern.permute.xlu0 0
        %1168 = vperm.xlu0 %1167, %v1012
        %v1169 = vpop.permute.xlu0 %1168
        %1172 = vset.pattern.permute.xlu0 0
        %1173 = vperm.xlu0 %1172, %v1013
        %v1174 = vpop.permute.xlu0 %1173
        %1177 = vset.pattern.permute.xlu0 0
        %1178 = vperm.xlu0 %1177, %v1014
        %v1179 = vpop.permute.xlu0 %1178
        %1182 = vset.pattern.permute.xlu0 0
        %1183 = vperm.xlu0 %1182, %v1015
        %v1184 = vpop.permute.xlu0 %1183
        %1187 = vset.pattern.permute.xlu0 0
        %1188 = vperm.xlu0 %1187, %v1016
        %v1189 = vpop.permute.xlu0 %1188
        %1192 = vset.pattern.permute.xlu0 0
        %1193 = vperm.xlu0 %1192, %v1017
        %v1194 = vpop.permute.xlu0 %1193
        %1197 = vset.pattern.permute.xlu0 0
        %1198 = vperm.xlu0 %1197, %v1018
        %v1199 = vpop.permute.xlu0 %1198
        %1202 = vset.pattern.permute.xlu0 0
        %1203 = vperm.xlu0 %1202, %v1019
        %v1204 = vpop.permute.xlu0 %1203
        %1207 = vset.pattern.permute.xlu0 0
        %1208 = vperm.xlu0 %1207, %v1020
        %v1209 = vpop.permute.xlu0 %1208
        %1212 = vset.pattern.permute.xlu0 0
        %1213 = vperm.xlu0 %1212, %v1021
        %v1214 = vpop.permute.xlu0 %1213
        %1217 = vset.pattern.permute.xlu0 0
        %1218 = vperm.xlu0 %1217, %v1022
        %v1219 = vpop.permute.xlu0 %1218
        %1222 = vset.pattern.permute.xlu0 0
        %1223 = vperm.xlu0 %1222, %v1023
        %v1224 = vpop.permute.xlu0 %1223
        %1227 = vset.pattern.permute.xlu0 0
        %1228 = vperm.xlu0 %1227, %v1024
        %v1229 = vpop.permute.xlu0 %1228
        %1232 = vset.pattern.permute.xlu0 0
        %1233 = vperm.xlu0 %1232, %v1025
        %v1234 = vpop.permute.xlu0 %1233
        %1237 = vset.pattern.permute.xlu0 0
        %1238 = vperm.xlu0 %1237, %v1026
        %v1239 = vpop.permute.xlu0 %1238
        %1242 = vset.pattern.permute.xlu0 0
        %1243 = vperm.xlu0 %1242, %v1027
        %v1244 = vpop.permute.xlu0 %1243
        %1247 = vset.pattern.permute.xlu0 0
        %1248 = vperm.xlu0 %1247, %v1028
        %v1249 = vpop.permute.xlu0 %1248
        %1252 = vset.pattern.permute.xlu0 0
        %1253 = vperm.xlu0 %1252, %v1029
        %v1254 = vpop.permute.xlu0 %1253
        %1257 = vset.pattern.permute.xlu0 0
        %1258 = vperm.xlu0 %1257, %v1030
        %v1259 = vpop.permute.xlu0 %1258
        %1262 = vset.pattern.permute.xlu0 0
        %1263 = vperm.xlu0 %1262, %v1031
        %v1264 = vpop.permute.xlu0 %1263
        %1267 = vset.pattern.permute.xlu0 0
        %1268 = vperm.xlu0 %1267, %v1032
        %v1269 = vpop.permute.xlu0 %1268
        %1272 = vset.pattern.permute.xlu0 0
        %1273 = vperm.xlu0 %1272, %v1033
        %v1274 = vpop.permute.xlu0 %1273
        %1277 = vset.pattern.permute.xlu0 0
        %1278 = vperm.xlu0 %1277, %v1034
        %v1279 = vpop.permute.xlu0 %1278
        %1282 = vset.pattern.permute.xlu0 0
        %1283 = vperm.xlu0 %1282, %v1035
        %v1284 = vpop.permute.xlu0 %1283
        %1287 = vset.pattern.permute.xlu0 0
        %1288 = vperm.xlu0 %1287, %v1036
        %v1289 = vpop.permute.xlu0 %1288
        %1292 = vset.pattern.permute.xlu0 0
        %1293 = vperm.xlu0 %1292, %v1037
        %v1294 = vpop.permute.xlu0 %1293
        %1297 = vset.pattern.permute.xlu0 0
        %1298 = vperm.xlu0 %1297, %v1038
        %v1299 = vpop.permute.xlu0 %1298
        %1302 = vset.pattern.permute.xlu0 0
        %1303 = vperm.xlu0 %1302, %v1039
        %v1304 = vpop.permute.xlu0 %1303
        %1307 = vset.pattern.permute.xlu0 0
        %1308 = vperm.xlu0 %1307, %v1040
        %v1309 = vpop.permute.xlu0 %1308
        %v1311 = vmul.f32 %v933, %v1044
        %v1312 = vmul.f32 %v934, %v1049
        %v1313 = vmul.f32 %v935, %v1054
        %v1314 = vmul.f32 %v936, %v1059
        %v1315 = vmul.f32 %v937, %v1064
        %v1316 = vmul.f32 %v938, %v1069
        %v1317 = vmul.f32 %v939, %v1074
        %v1318 = vmul.f32 %v940, %v1079
        %v1319 = vmul.f32 %v941, %v1084
        %v1320 = vmul.f32 %v942, %v1089
        %v1321 = vmul.f32 %v943, %v1094
        %v1322 = vmul.f32 %v944, %v1099
        %v1323 = vmul.f32 %v945, %v1104
        %v1324 = vmul.f32 %v946, %v1109
        %v1325 = vmul.f32 %v947, %v1114
        %v1326 = vmul.f32 %v948, %v1119
        %v1327 = vmul.f32 %v949, %v1124
        %v1328 = vmul.f32 %v950, %v1129
        %v1329 = vmul.f32 %v951, %v1134
        %v1330 = vmul.f32 %v952, %v1139
        %v1331 = vmul.f32 %v953, %v1144
        %v1332 = vmul.f32 %v954, %v1149
        %v1333 = vmul.f32 %v955, %v1154
        %v1334 = vmul.f32 %v956, %v1159
        %v1335 = vmul.f32 %v957, %v1164
        %v1336 = vmul.f32 %v958, %v1169
        %v1337 = vmul.f32 %v959, %v1174
        %v1338 = vmul.f32 %v960, %v1179
        %v1339 = vmul.f32 %v961, %v1184
        %v1340 = vmul.f32 %v962, %v1189
        %v1341 = vmul.f32 %v963, %v1194
        %v1342 = vmul.f32 %v964, %v1199
        %v1343 = vmul.f32 %v965, %v1204
        %v1344 = vmul.f32 %v966, %v1209
        %v1345 = vmul.f32 %v967, %v1214
        %v1346 = vmul.f32 %v968, %v1219
        %v1347 = vmul.f32 %v969, %v1224
        %v1348 = vmul.f32 %v970, %v1229
        %v1349 = vmul.f32 %v971, %v1234
        %v1350 = vmul.f32 %v972, %v1239
        %v1351 = vmul.f32 %v973, %v1244
        %v1352 = vmul.f32 %v974, %v1249
        %v1353 = vmul.f32 %v975, %v1254
        %v1354 = vmul.f32 %v976, %v1259
        %v1355 = vmul.f32 %v977, %v1264
        %v1356 = vmul.f32 %v978, %v1269
        %v1357 = vmul.f32 %v979, %v1274
        %v1358 = vmul.f32 %v980, %v1279
        %v1359 = vmul.f32 %v981, %v1284
        %v1360 = vmul.f32 %v982, %v1289
        %v1361 = vmul.f32 %v983, %v1294
        %v1362 = vmul.f32 %v984, %v1299
        %v1363 = vmul.f32 %v985, %v1304
        %v1364 = vmul.f32 %v986, %v1309
        %v1365 = vld [vmem:[#allocation6] sm:$0xff]
        %v1366 = vld [vmem:[#allocation6 + $0x8] sm:$0x1]
        %v1367 = vlaneseq
        %v1368 = vshrl.u32 %v1367, 7
        %v1369 = vsub.s32 0, %v1368
        %v1370 = vrot.slane %v1365, %v1369
        %v1371 = vmul.f32 %v1311, %v1370
        %v1372 = vmul.f32 %v1312, %v1370
        %v1373 = vmul.f32 %v1314, %v1370
        %v1374 = vmul.f32 %v1315, %v1370
        %v1375 = vmul.f32 %v1317, %v1370
        %v1376 = vmul.f32 %v1318, %v1370
        %v1377 = vmul.f32 %v1320, %v1370
        %v1378 = vmul.f32 %v1321, %v1370
        %v1379 = vmul.f32 %v1323, %v1370
        %v1380 = vmul.f32 %v1324, %v1370
        %v1381 = vmul.f32 %v1326, %v1370
        %v1382 = vmul.f32 %v1327, %v1370
        %v1383 = vmul.f32 %v1329, %v1370
        %v1384 = vmul.f32 %v1330, %v1370
        %v1385 = vmul.f32 %v1332, %v1370
        %v1386 = vmul.f32 %v1333, %v1370
        %v1387 = vmul.f32 %v1335, %v1370
        %v1388 = vmul.f32 %v1336, %v1370
        %v1389 = vmul.f32 %v1338, %v1370
        %v1390 = vmul.f32 %v1339, %v1370
        %v1391 = vmul.f32 %v1341, %v1370
        %v1392 = vmul.f32 %v1342, %v1370
        %v1393 = vmul.f32 %v1344, %v1370
        %v1394 = vmul.f32 %v1345, %v1370
        %v1395 = vmul.f32 %v1347, %v1370
        %v1396 = vmul.f32 %v1348, %v1370
        %v1397 = vmul.f32 %v1350, %v1370
        %v1398 = vmul.f32 %v1351, %v1370
        %v1399 = vmul.f32 %v1353, %v1370
        %v1400 = vmul.f32 %v1354, %v1370
        %v1401 = vmul.f32 %v1356, %v1370
        %v1402 = vmul.f32 %v1357, %v1370
        %v1403 = vlaneseq
        %v1404 = vshrl.u32 %v1403, 7
        %v1405 = vsub.s32 1, %v1404
        %v1406 = vrot.slane %v1365, %v1405
        %v1407 = vmul.f32 %v1311, %v1406
        %v1408 = vmul.f32 %v1312, %v1406
        %v1409 = vmul.f32 %v1313, %v1406
        %v1410 = vmul.f32 %v1314, %v1406
        %v1411 = vmul.f32 %v1315, %v1406
        %v1412 = vmul.f32 %v1316, %v1406
        %v1413 = vmul.f32 %v1317, %v1406
        %v1414 = vmul.f32 %v1318, %v1406
        %v1415 = vmul.f32 %v1319, %v1406
        %v1416 = vmul.f32 %v1320, %v1406
        %v1417 = vmul.f32 %v1321, %v1406
        %v1418 = vmul.f32 %v1322, %v1406
        %v1419 = vmul.f32 %v1323, %v1406
        %v1420 = vmul.f32 %v1324, %v1406
        %v1421 = vmul.f32 %v1325, %v1406
        %v1422 = vmul.f32 %v1326, %v1406
        %v1423 = vmul.f32 %v1327, %v1406
        %v1424 = vmul.f32 %v1328, %v1406
        %v1425 = vmul.f32 %v1329, %v1406
        %v1426 = vmul.f32 %v1330, %v1406
        %v1427 = vmul.f32 %v1331, %v1406
        %v1428 = vmul.f32 %v1332, %v1406
        %v1429 = vmul.f32 %v1333, %v1406
        %v1430 = vmul.f32 %v1334, %v1406
        %v1431 = vmul.f32 %v1335, %v1406
        %v1432 = vmul.f32 %v1336, %v1406
        %v1433 = vmul.f32 %v1337, %v1406
        %v1434 = vmul.f32 %v1338, %v1406
        %v1435 = vmul.f32 %v1339, %v1406
        %v1436 = vmul.f32 %v1340, %v1406
        %v1437 = vmul.f32 %v1341, %v1406
        %v1438 = vmul.f32 %v1342, %v1406
        %v1439 = vmul.f32 %v1343, %v1406
        %v1440 = vmul.f32 %v1344, %v1406
        %v1441 = vmul.f32 %v1345, %v1406
        %v1442 = vmul.f32 %v1346, %v1406
        %v1443 = vmul.f32 %v1347, %v1406
        %v1444 = vmul.f32 %v1348, %v1406
        %v1445 = vmul.f32 %v1349, %v1406
        %v1446 = vmul.f32 %v1350, %v1406
        %v1447 = vmul.f32 %v1351, %v1406
        %v1448 = vmul.f32 %v1352, %v1406
        %v1449 = vmul.f32 %v1353, %v1406
        %v1450 = vmul.f32 %v1354, %v1406
        %v1451 = vmul.f32 %v1355, %v1406
        %v1452 = vmul.f32 %v1356, %v1406
        %v1453 = vmul.f32 %v1357, %v1406
        %v1454 = vmul.f32 %v1358, %v1406
        %vm1503 = vcmask 1046528
        %v1504 = vrot.slane %v1407, 1
        %v1505 = vrot.slane %v1408, 1
        %v1506 = vsel %vm1503, %v1504, %v1505
        %v1507 = vrot.slane %v1409, 1
        %v1508 = vsel %vm1503, %v1505, %v1507
        %v1509 = vrot.slane %v1410, 1
        %v1510 = vrot.slane %v1411, 1
        %v1511 = vsel %vm1503, %v1509, %v1510
        %v1512 = vrot.slane %v1412, 1
        %v1513 = vsel %vm1503, %v1510, %v1512
        %v1514 = vrot.slane %v1413, 1
        %v1515 = vrot.slane %v1414, 1
        %v1516 = vsel %vm1503, %v1514, %v1515
        %v1517 = vrot.slane %v1415, 1
        %v1518 = vsel %vm1503, %v1515, %v1517
        %v1519 = vrot.slane %v1416, 1
        %v1520 = vrot.slane %v1417, 1
        %v1521 = vsel %vm1503, %v1519, %v1520
        %v1522 = vrot.slane %v1418, 1
        %v1523 = vsel %vm1503, %v1520, %v1522
        %v1524 = vrot.slane %v1419, 1
        %v1525 = vrot.slane %v1420, 1
        %v1526 = vsel %vm1503, %v1524, %v1525
        %v1527 = vrot.slane %v1421, 1
        %v1528 = vsel %vm1503, %v1525, %v1527
        %v1529 = vrot.slane %v1422, 1
        %v1530 = vrot.slane %v1423, 1
        %v1531 = vsel %vm1503, %v1529, %v1530
        %v1532 = vrot.slane %v1424, 1
        %v1533 = vsel %vm1503, %v1530, %v1532
        %v1534 = vrot.slane %v1425, 1
        %v1535 = vrot.slane %v1426, 1
        %v1536 = vsel %vm1503, %v1534, %v1535
        %v1537 = vrot.slane %v1427, 1
        %v1538 = vsel %vm1503, %v1535, %v1537
        %v1539 = vrot.slane %v1428, 1
        %v1540 = vrot.slane %v1429, 1
        %v1541 = vsel %vm1503, %v1539, %v1540
        %v1542 = vrot.slane %v1430, 1
        %v1543 = vsel %vm1503, %v1540, %v1542
        %v1544 = vrot.slane %v1431, 1
        %v1545 = vrot.slane %v1432, 1
        %v1546 = vsel %vm1503, %v1544, %v1545
        %v1547 = vrot.slane %v1433, 1
        %v1548 = vsel %vm1503, %v1545, %v1547
        %v1549 = vrot.slane %v1434, 1
        %v1550 = vrot.slane %v1435, 1
        %v1551 = vsel %vm1503, %v1549, %v1550
        %v1552 = vrot.slane %v1436, 1
        %v1553 = vsel %vm1503, %v1550, %v1552
        %v1554 = vrot.slane %v1437, 1
        %v1555 = vrot.slane %v1438, 1
        %v1556 = vsel %vm1503, %v1554, %v1555
        %v1557 = vrot.slane %v1439, 1
        %v1558 = vsel %vm1503, %v1555, %v1557
        %v1559 = vrot.slane %v1440, 1
        %v1560 = vrot.slane %v1441, 1
        %v1561 = vsel %vm1503, %v1559, %v1560
        %v1562 = vrot.slane %v1442, 1
        %v1563 = vsel %vm1503, %v1560, %v1562
        %v1564 = vrot.slane %v1443, 1
        %v1565 = vrot.slane %v1444, 1
        %v1566 = vsel %vm1503, %v1564, %v1565
        %v1567 = vrot.slane %v1445, 1
        %v1568 = vsel %vm1503, %v1565, %v1567
        %v1569 = vrot.slane %v1446, 1
        %v1570 = vrot.slane %v1447, 1
        %v1571 = vsel %vm1503, %v1569, %v1570
        %v1572 = vrot.slane %v1448, 1
        %v1573 = vsel %vm1503, %v1570, %v1572
        %v1574 = vrot.slane %v1449, 1
        %v1575 = vrot.slane %v1450, 1
        %v1576 = vsel %vm1503, %v1574, %v1575
        %v1577 = vrot.slane %v1451, 1
        %v1578 = vsel %vm1503, %v1575, %v1577
        %v1579 = vrot.slane %v1452, 1
        %v1580 = vrot.slane %v1453, 1
        %v1581 = vsel %vm1503, %v1579, %v1580
        %v1582 = vrot.slane %v1454, 1
        %v1583 = vsel %vm1503, %v1580, %v1582
        %v1616 = vadd.f32 %v1371, %v1506
        %v1617 = vadd.f32 %v1372, %v1508
        %v1618 = vadd.f32 %v1373, %v1511
        %v1619 = vadd.f32 %v1374, %v1513
        %v1620 = vadd.f32 %v1375, %v1516
        %v1621 = vadd.f32 %v1376, %v1518
        %v1622 = vadd.f32 %v1377, %v1521
        %v1623 = vadd.f32 %v1378, %v1523
        %v1624 = vadd.f32 %v1379, %v1526
        %v1625 = vadd.f32 %v1380, %v1528
        %v1626 = vadd.f32 %v1381, %v1531
        %v1627 = vadd.f32 %v1382, %v1533
        %v1628 = vadd.f32 %v1383, %v1536
        %v1629 = vadd.f32 %v1384, %v1538
        %v1630 = vadd.f32 %v1385, %v1541
        %v1631 = vadd.f32 %v1386, %v1543
        %v1632 = vadd.f32 %v1387, %v1546
        %v1633 = vadd.f32 %v1388, %v1548
        %v1634 = vadd.f32 %v1389, %v1551
        %v1635 = vadd.f32 %v1390, %v1553
        %v1636 = vadd.f32 %v1391, %v1556
        %v1637 = vadd.f32 %v1392, %v1558
        %v1638 = vadd.f32 %v1393, %v1561
        %v1639 = vadd.f32 %v1394, %v1563
        %v1640 = vadd.f32 %v1395, %v1566
        %v1641 = vadd.f32 %v1396, %v1568
        %v1642 = vadd.f32 %v1397, %v1571
        %v1643 = vadd.f32 %v1398, %v1573
        %v1644 = vadd.f32 %v1399, %v1576
        %v1645 = vadd.f32 %v1400, %v1578
        %v1646 = vadd.f32 %v1401, %v1581
        %v1647 = vadd.f32 %v1402, %v1583
        %v1648 = vlaneseq
        %v1649 = vshrl.u32 %v1648, 7
        %v1650 = vsub.s32 2, %v1649
        %v1651 = vrot.slane %v1365, %v1650
        %v1652 = vmul.f32 %v1311, %v1651
        %v1653 = vmul.f32 %v1312, %v1651
        %v1654 = vmul.f32 %v1313, %v1651
        %v1655 = vmul.f32 %v1314, %v1651
        %v1656 = vmul.f32 %v1315, %v1651
        %v1657 = vmul.f32 %v1316, %v1651
        %v1658 = vmul.f32 %v1317, %v1651
        %v1659 = vmul.f32 %v1318, %v1651
        %v1660 = vmul.f32 %v1319, %v1651
        %v1661 = vmul.f32 %v1320, %v1651
        %v1662 = vmul.f32 %v1321, %v1651
        %v1663 = vmul.f32 %v1322, %v1651
        %v1664 = vmul.f32 %v1323, %v1651
        %v1665 = vmul.f32 %v1324, %v1651
        %v1666 = vmul.f32 %v1325, %v1651
        %v1667 = vmul.f32 %v1326, %v1651
        %v1668 = vmul.f32 %v1327, %v1651
        %v1669 = vmul.f32 %v1328, %v1651
        %v1670 = vmul.f32 %v1329, %v1651
        %v1671 = vmul.f32 %v1330, %v1651
        %v1672 = vmul.f32 %v1331, %v1651
        %v1673 = vmul.f32 %v1332, %v1651
        %v1674 = vmul.f32 %v1333, %v1651
        %v1675 = vmul.f32 %v1334, %v1651
        %v1676 = vmul.f32 %v1335, %v1651
        %v1677 = vmul.f32 %v1336, %v1651
        %v1678 = vmul.f32 %v1337, %v1651
        %v1679 = vmul.f32 %v1338, %v1651
        %v1680 = vmul.f32 %v1339, %v1651
        %v1681 = vmul.f32 %v1340, %v1651
        %v1682 = vmul.f32 %v1341, %v1651
        %v1683 = vmul.f32 %v1342, %v1651
        %v1684 = vmul.f32 %v1343, %v1651
        %v1685 = vmul.f32 %v1344, %v1651
        %v1686 = vmul.f32 %v1345, %v1651
        %v1687 = vmul.f32 %v1346, %v1651
        %v1688 = vmul.f32 %v1347, %v1651
        %v1689 = vmul.f32 %v1348, %v1651
        %v1690 = vmul.f32 %v1349, %v1651
        %v1691 = vmul.f32 %v1350, %v1651
        %v1692 = vmul.f32 %v1351, %v1651
        %v1693 = vmul.f32 %v1352, %v1651
        %v1694 = vmul.f32 %v1353, %v1651
        %v1695 = vmul.f32 %v1354, %v1651
        %v1696 = vmul.f32 %v1355, %v1651
        %v1697 = vmul.f32 %v1356, %v1651
        %v1698 = vmul.f32 %v1357, %v1651
        %v1699 = vmul.f32 %v1358, %v1651
        %vm1748 = vcmask 1045504
        %v1749 = vrot.slane %v1652, 2
        %v1750 = vrot.slane %v1653, 2
        %v1751 = vsel %vm1748, %v1749, %v1750
        %v1752 = vrot.slane %v1654, 2
        %v1753 = vsel %vm1748, %v1750, %v1752
        %v1754 = vrot.slane %v1655, 2
        %v1755 = vrot.slane %v1656, 2
        %v1756 = vsel %vm1748, %v1754, %v1755
        %v1757 = vrot.slane %v1657, 2
        %v1758 = vsel %vm1748, %v1755, %v1757
        %v1759 = vrot.slane %v1658, 2
        %v1760 = vrot.slane %v1659, 2
        %v1761 = vsel %vm1748, %v1759, %v1760
        %v1762 = vrot.slane %v1660, 2
        %v1763 = vsel %vm1748, %v1760, %v1762
        %v1764 = vrot.slane %v1661, 2
        %v1765 = vrot.slane %v1662, 2
        %v1766 = vsel %vm1748, %v1764, %v1765
        %v1767 = vrot.slane %v1663, 2
        %v1768 = vsel %vm1748, %v1765, %v1767
        %v1769 = vrot.slane %v1664, 2
        %v1770 = vrot.slane %v1665, 2
        %v1771 = vsel %vm1748, %v1769, %v1770
        %v1772 = vrot.slane %v1666, 2
        %v1773 = vsel %vm1748, %v1770, %v1772
        %v1774 = vrot.slane %v1667, 2
        %v1775 = vrot.slane %v1668, 2
        %v1776 = vsel %vm1748, %v1774, %v1775
        %v1777 = vrot.slane %v1669, 2
        %v1778 = vsel %vm1748, %v1775, %v1777
        %v1779 = vrot.slane %v1670, 2
        %v1780 = vrot.slane %v1671, 2
        %v1781 = vsel %vm1748, %v1779, %v1780
        %v1782 = vrot.slane %v1672, 2
        %v1783 = vsel %vm1748, %v1780, %v1782
        %v1784 = vrot.slane %v1673, 2
        %v1785 = vrot.slane %v1674, 2
        %v1786 = vsel %vm1748, %v1784, %v1785
        %v1787 = vrot.slane %v1675, 2
        %v1788 = vsel %vm1748, %v1785, %v1787
        %v1789 = vrot.slane %v1676, 2
        %v1790 = vrot.slane %v1677, 2
        %v1791 = vsel %vm1748, %v1789, %v1790
        %v1792 = vrot.slane %v1678, 2
        %v1793 = vsel %vm1748, %v1790, %v1792
        %v1794 = vrot.slane %v1679, 2
        %v1795 = vrot.slane %v1680, 2
        %v1796 = vsel %vm1748, %v1794, %v1795
        %v1797 = vrot.slane %v1681, 2
        %v1798 = vsel %vm1748, %v1795, %v1797
        %v1799 = vrot.slane %v1682, 2
        %v1800 = vrot.slane %v1683, 2
        %v1801 = vsel %vm1748, %v1799, %v1800
        %v1802 = vrot.slane %v1684, 2
        %v1803 = vsel %vm1748, %v1800, %v1802
        %v1804 = vrot.slane %v1685, 2
        %v1805 = vrot.slane %v1686, 2
        %v1806 = vsel %vm1748, %v1804, %v1805
        %v1807 = vrot.slane %v1687, 2
        %v1808 = vsel %vm1748, %v1805, %v1807
        %v1809 = vrot.slane %v1688, 2
        %v1810 = vrot.slane %v1689, 2
        %v1811 = vsel %vm1748, %v1809, %v1810
        %v1812 = vrot.slane %v1690, 2
        %v1813 = vsel %vm1748, %v1810, %v1812
        %v1814 = vrot.slane %v1691, 2
        %v1815 = vrot.slane %v1692, 2
        %v1816 = vsel %vm1748, %v1814, %v1815
        %v1817 = vrot.slane %v1693, 2
        %v1818 = vsel %vm1748, %v1815, %v1817
        %v1819 = vrot.slane %v1694, 2
        %v1820 = vrot.slane %v1695, 2
        %v1821 = vsel %vm1748, %v1819, %v1820
        %v1822 = vrot.slane %v1696, 2
        %v1823 = vsel %vm1748, %v1820, %v1822
        %v1824 = vrot.slane %v1697, 2
        %v1825 = vrot.slane %v1698, 2
        %v1826 = vsel %vm1748, %v1824, %v1825
        %v1827 = vrot.slane %v1699, 2
        %v1828 = vsel %vm1748, %v1825, %v1827
        %v1861 = vadd.f32 %v1616, %v1751
        %v1862 = vadd.f32 %v1617, %v1753
        %v1863 = vadd.f32 %v1618, %v1756
        %v1864 = vadd.f32 %v1619, %v1758
        %v1865 = vadd.f32 %v1620, %v1761
        %v1866 = vadd.f32 %v1621, %v1763
        %v1867 = vadd.f32 %v1622, %v1766
        %v1868 = vadd.f32 %v1623, %v1768
        %v1869 = vadd.f32 %v1624, %v1771
        %v1870 = vadd.f32 %v1625, %v1773
        %v1871 = vadd.f32 %v1626, %v1776
        %v1872 = vadd.f32 %v1627, %v1778
        %v1873 = vadd.f32 %v1628, %v1781
        %v1874 = vadd.f32 %v1629, %v1783
        %v1875 = vadd.f32 %v1630, %v1786
        %v1876 = vadd.f32 %v1631, %v1788
        %v1877 = vadd.f32 %v1632, %v1791
        %v1878 = vadd.f32 %v1633, %v1793
        %v1879 = vadd.f32 %v1634, %v1796
        %v1880 = vadd.f32 %v1635, %v1798
        %v1881 = vadd.f32 %v1636, %v1801
        %v1882 = vadd.f32 %v1637, %v1803
        %v1883 = vadd.f32 %v1638, %v1806
        %v1884 = vadd.f32 %v1639, %v1808
        %v1885 = vadd.f32 %v1640, %v1811
        %v1886 = vadd.f32 %v1641, %v1813
        %v1887 = vadd.f32 %v1642, %v1816
        %v1888 = vadd.f32 %v1643, %v1818
        %v1889 = vadd.f32 %v1644, %v1821
        %v1890 = vadd.f32 %v1645, %v1823
        %v1891 = vadd.f32 %v1646, %v1826
        %v1892 = vadd.f32 %v1647, %v1828
        %v1893 = vlaneseq
        %v1894 = vshrl.u32 %v1893, 7
        %v1895 = vsub.s32 3, %v1894
        %v1896 = vrot.slane %v1365, %v1895
        %v1897 = vmul.f32 %v1314, %v1896
        %v1898 = vmul.f32 %v1315, %v1896
        %v1899 = vmul.f32 %v1317, %v1896
        %v1900 = vmul.f32 %v1318, %v1896
        %v1901 = vmul.f32 %v1320, %v1896
        %v1902 = vmul.f32 %v1321, %v1896
        %v1903 = vmul.f32 %v1323, %v1896
        %v1904 = vmul.f32 %v1324, %v1896
        %v1905 = vmul.f32 %v1326, %v1896
        %v1906 = vmul.f32 %v1327, %v1896
        %v1907 = vmul.f32 %v1329, %v1896
        %v1908 = vmul.f32 %v1330, %v1896
        %v1909 = vmul.f32 %v1332, %v1896
        %v1910 = vmul.f32 %v1333, %v1896
        %v1911 = vmul.f32 %v1335, %v1896
        %v1912 = vmul.f32 %v1336, %v1896
        %v1913 = vmul.f32 %v1338, %v1896
        %v1914 = vmul.f32 %v1339, %v1896
        %v1915 = vmul.f32 %v1341, %v1896
        %v1916 = vmul.f32 %v1342, %v1896
        %v1917 = vmul.f32 %v1344, %v1896
        %v1918 = vmul.f32 %v1345, %v1896
        %v1919 = vmul.f32 %v1347, %v1896
        %v1920 = vmul.f32 %v1348, %v1896
        %v1921 = vmul.f32 %v1350, %v1896
        %v1922 = vmul.f32 %v1351, %v1896
        %v1923 = vmul.f32 %v1353, %v1896
        %v1924 = vmul.f32 %v1354, %v1896
        %v1925 = vmul.f32 %v1356, %v1896
        %v1926 = vmul.f32 %v1357, %v1896
        %v1927 = vmul.f32 %v1359, %v1896
        %v1928 = vmul.f32 %v1360, %v1896
        %v1929 = vadd.f32 %v1861, %v1897
        %v1930 = vadd.f32 %v1862, %v1898
        %v1931 = vadd.f32 %v1863, %v1899
        %v1932 = vadd.f32 %v1864, %v1900
        %v1933 = vadd.f32 %v1865, %v1901
        %v1934 = vadd.f32 %v1866, %v1902
        %v1935 = vadd.f32 %v1867, %v1903
        %v1936 = vadd.f32 %v1868, %v1904
        %v1937 = vadd.f32 %v1869, %v1905
        %v1938 = vadd.f32 %v1870, %v1906
        %v1939 = vadd.f32 %v1871, %v1907
        %v1940 = vadd.f32 %v1872, %v1908
        %v1941 = vadd.f32 %v1873, %v1909
        %v1942 = vadd.f32 %v1874, %v1910
        %v1943 = vadd.f32 %v1875, %v1911
        %v1944 = vadd.f32 %v1876, %v1912
        %v1945 = vadd.f32 %v1877, %v1913
        %v1946 = vadd.f32 %v1878, %v1914
        %v1947 = vadd.f32 %v1879, %v1915
        %v1948 = vadd.f32 %v1880, %v1916
        %v1949 = vadd.f32 %v1881, %v1917
        %v1950 = vadd.f32 %v1882, %v1918
        %v1951 = vadd.f32 %v1883, %v1919
        %v1952 = vadd.f32 %v1884, %v1920
        %v1953 = vadd.f32 %v1885, %v1921
        %v1954 = vadd.f32 %v1886, %v1922
        %v1955 = vadd.f32 %v1887, %v1923
        %v1956 = vadd.f32 %v1888, %v1924
        %v1957 = vadd.f32 %v1889, %v1925
        %v1958 = vadd.f32 %v1890, %v1926
        %v1959 = vadd.f32 %v1891, %v1927
        %v1960 = vadd.f32 %v1892, %v1928
        %v1961 = vlaneseq
        %v1962 = vshrl.u32 %v1961, 7
        %v1963 = vsub.s32 4, %v1962
        %v1964 = vrot.slane %v1365, %v1963
        %v1965 = vmul.f32 %v1314, %v1964
        %v1966 = vmul.f32 %v1315, %v1964
        %v1967 = vmul.f32 %v1316, %v1964
        %v1968 = vmul.f32 %v1317, %v1964
        %v1969 = vmul.f32 %v1318, %v1964
        %v1970 = vmul.f32 %v1319, %v1964
        %v1971 = vmul.f32 %v1320, %v1964
        %v1972 = vmul.f32 %v1321, %v1964
        %v1973 = vmul.f32 %v1322, %v1964
        %v1974 = vmul.f32 %v1323, %v1964
        %v1975 = vmul.f32 %v1324, %v1964
        %v1976 = vmul.f32 %v1325, %v1964
        %v1977 = vmul.f32 %v1326, %v1964
        %v1978 = vmul.f32 %v1327, %v1964
        %v1979 = vmul.f32 %v1328, %v1964
        %v1980 = vmul.f32 %v1329, %v1964
        %v1981 = vmul.f32 %v1330, %v1964
        %v1982 = vmul.f32 %v1331, %v1964
        %v1983 = vmul.f32 %v1332, %v1964
        %v1984 = vmul.f32 %v1333, %v1964
        %v1985 = vmul.f32 %v1334, %v1964
        %v1986 = vmul.f32 %v1335, %v1964
        %v1987 = vmul.f32 %v1336, %v1964
        %v1988 = vmul.f32 %v1337, %v1964
        %v1989 = vmul.f32 %v1338, %v1964
        %v1990 = vmul.f32 %v1339, %v1964
        %v1991 = vmul.f32 %v1340, %v1964
        %v1992 = vmul.f32 %v1341, %v1964
        %v1993 = vmul.f32 %v1342, %v1964
        %v1994 = vmul.f32 %v1343, %v1964
        %v1995 = vmul.f32 %v1344, %v1964
        %v1996 = vmul.f32 %v1345, %v1964
        %v1997 = vmul.f32 %v1346, %v1964
        %v1998 = vmul.f32 %v1347, %v1964
        %v1999 = vmul.f32 %v1348, %v1964
        %v2000 = vmul.f32 %v1349, %v1964
        %v2001 = vmul.f32 %v1350, %v1964
        %v2002 = vmul.f32 %v1351, %v1964
        %v2003 = vmul.f32 %v1352, %v1964
        %v2004 = vmul.f32 %v1353, %v1964
        %v2005 = vmul.f32 %v1354, %v1964
        %v2006 = vmul.f32 %v1355, %v1964
        %v2007 = vmul.f32 %v1356, %v1964
        %v2008 = vmul.f32 %v1357, %v1964
        %v2009 = vmul.f32 %v1358, %v1964
        %v2010 = vmul.f32 %v1359, %v1964
        %v2011 = vmul.f32 %v1360, %v1964
        %v2012 = vmul.f32 %v1361, %v1964
        %v2061 = vrot.slane %v1965, 1
        %v2062 = vrot.slane %v1966, 1
        %v2063 = vsel %vm1503, %v2061, %v2062
        %v2064 = vrot.slane %v1967, 1
        %v2065 = vsel %vm1503, %v2062, %v2064
        %v2066 = vrot.slane %v1968, 1
        %v2067 = vrot.slane %v1969, 1
        %v2068 = vsel %vm1503, %v2066, %v2067
        %v2069 = vrot.slane %v1970, 1
        %v2070 = vsel %vm1503, %v2067, %v2069
        %v2071 = vrot.slane %v1971, 1
        %v2072 = vrot.slane %v1972, 1
        %v2073 = vsel %vm1503, %v2071, %v2072
        %v2074 = vrot.slane %v1973, 1
        %v2075 = vsel %vm1503, %v2072, %v2074
        %v2076 = vrot.slane %v1974, 1
        %v2077 = vrot.slane %v1975, 1
        %v2078 = vsel %vm1503, %v2076, %v2077
        %v2079 = vrot.slane %v1976, 1
        %v2080 = vsel %vm1503, %v2077, %v2079
        %v2081 = vrot.slane %v1977, 1
        %v2082 = vrot.slane %v1978, 1
        %v2083 = vsel %vm1503, %v2081, %v2082
        %v2084 = vrot.slane %v1979, 1
        %v2085 = vsel %vm1503, %v2082, %v2084
        %v2086 = vrot.slane %v1980, 1
        %v2087 = vrot.slane %v1981, 1
        %v2088 = vsel %vm1503, %v2086, %v2087
        %v2089 = vrot.slane %v1982, 1
        %v2090 = vsel %vm1503, %v2087, %v2089
        %v2091 = vrot.slane %v1983, 1
        %v2092 = vrot.slane %v1984, 1
        %v2093 = vsel %vm1503, %v2091, %v2092
        %v2094 = vrot.slane %v1985, 1
        %v2095 = vsel %vm1503, %v2092, %v2094
        %v2096 = vrot.slane %v1986, 1
        %v2097 = vrot.slane %v1987, 1
        %v2098 = vsel %vm1503, %v2096, %v2097
        %v2099 = vrot.slane %v1988, 1
        %v2100 = vsel %vm1503, %v2097, %v2099
        %v2101 = vrot.slane %v1989, 1
        %v2102 = vrot.slane %v1990, 1
        %v2103 = vsel %vm1503, %v2101, %v2102
        %v2104 = vrot.slane %v1991, 1
        %v2105 = vsel %vm1503, %v2102, %v2104
        %v2106 = vrot.slane %v1992, 1
        %v2107 = vrot.slane %v1993, 1
        %v2108 = vsel %vm1503, %v2106, %v2107
        %v2109 = vrot.slane %v1994, 1
        %v2110 = vsel %vm1503, %v2107, %v2109
        %v2111 = vrot.slane %v1995, 1
        %v2112 = vrot.slane %v1996, 1
        %v2113 = vsel %vm1503, %v2111, %v2112
        %v2114 = vrot.slane %v1997, 1
        %v2115 = vsel %vm1503, %v2112, %v2114
        %v2116 = vrot.slane %v1998, 1
        %v2117 = vrot.slane %v1999, 1
        %v2118 = vsel %vm1503, %v2116, %v2117
        %v2119 = vrot.slane %v2000, 1
        %v2120 = vsel %vm1503, %v2117, %v2119
        %v2121 = vrot.slane %v2001, 1
        %v2122 = vrot.slane %v2002, 1
        %v2123 = vsel %vm1503, %v2121, %v2122
        %v2124 = vrot.slane %v2003, 1
        %v2125 = vsel %vm1503, %v2122, %v2124
        %v2126 = vrot.slane %v2004, 1
        %v2127 = vrot.slane %v2005, 1
        %v2128 = vsel %vm1503, %v2126, %v2127
        %v2129 = vrot.slane %v2006, 1
        %v2130 = vsel %vm1503, %v2127, %v2129
        %v2131 = vrot.slane %v2007, 1
        %v2132 = vrot.slane %v2008, 1
        %v2133 = vsel %vm1503, %v2131, %v2132
        %v2134 = vrot.slane %v2009, 1
        %v2135 = vsel %vm1503, %v2132, %v2134
        %v2136 = vrot.slane %v2010, 1
        %v2137 = vrot.slane %v2011, 1
        %v2138 = vsel %vm1503, %v2136, %v2137
        %v2139 = vrot.slane %v2012, 1
        %v2140 = vsel %vm1503, %v2137, %v2139
        %v2173 = vadd.f32 %v1929, %v2063
        %v2174 = vadd.f32 %v1930, %v2065
        %v2175 = vadd.f32 %v1931, %v2068
        %v2176 = vadd.f32 %v1932, %v2070
        %v2177 = vadd.f32 %v1933, %v2073
        %v2178 = vadd.f32 %v1934, %v2075
        %v2179 = vadd.f32 %v1935, %v2078
        %v2180 = vadd.f32 %v1936, %v2080
        %v2181 = vadd.f32 %v1937, %v2083
        %v2182 = vadd.f32 %v1938, %v2085
        %v2183 = vadd.f32 %v1939, %v2088
        %v2184 = vadd.f32 %v1940, %v2090
        %v2185 = vadd.f32 %v1941, %v2093
        %v2186 = vadd.f32 %v1942, %v2095
        %v2187 = vadd.f32 %v1943, %v2098
        %v2188 = vadd.f32 %v1944, %v2100
        %v2189 = vadd.f32 %v1945, %v2103
        %v2190 = vadd.f32 %v1946, %v2105
        %v2191 = vadd.f32 %v1947, %v2108
        %v2192 = vadd.f32 %v1948, %v2110
        %v2193 = vadd.f32 %v1949, %v2113
        %v2194 = vadd.f32 %v1950, %v2115
        %v2195 = vadd.f32 %v1951, %v2118
        %v2196 = vadd.f32 %v1952, %v2120
        %v2197 = vadd.f32 %v1953, %v2123
        %v2198 = vadd.f32 %v1954, %v2125
        %v2199 = vadd.f32 %v1955, %v2128
        %v2200 = vadd.f32 %v1956, %v2130
        %v2201 = vadd.f32 %v1957, %v2133
        %v2202 = vadd.f32 %v1958, %v2135
        %v2203 = vadd.f32 %v1959, %v2138
        %v2204 = vadd.f32 %v1960, %v2140
        %v2205 = vlaneseq
        %v2206 = vshrl.u32 %v2205, 7
        %v2207 = vsub.s32 5, %v2206
        %v2208 = vrot.slane %v1365, %v2207
        %v2209 = vmul.f32 %v1314, %v2208
        %v2210 = vmul.f32 %v1315, %v2208
        %v2211 = vmul.f32 %v1316, %v2208
        %v2212 = vmul.f32 %v1317, %v2208
        %v2213 = vmul.f32 %v1318, %v2208
        %v2214 = vmul.f32 %v1319, %v2208
        %v2215 = vmul.f32 %v1320, %v2208
        %v2216 = vmul.f32 %v1321, %v2208
        %v2217 = vmul.f32 %v1322, %v2208
        %v2218 = vmul.f32 %v1323, %v2208
        %v2219 = vmul.f32 %v1324, %v2208
        %v2220 = vmul.f32 %v1325, %v2208
        %v2221 = vmul.f32 %v1326, %v2208
        %v2222 = vmul.f32 %v1327, %v2208
        %v2223 = vmul.f32 %v1328, %v2208
        %v2224 = vmul.f32 %v1329, %v2208
        %v2225 = vmul.f32 %v1330, %v2208
        %v2226 = vmul.f32 %v1331, %v2208
        %v2227 = vmul.f32 %v1332, %v2208
        %v2228 = vmul.f32 %v1333, %v2208
        %v2229 = vmul.f32 %v1334, %v2208
        %v2230 = vmul.f32 %v1335, %v2208
        %v2231 = vmul.f32 %v1336, %v2208
        %v2232 = vmul.f32 %v1337, %v2208
        %v2233 = vmul.f32 %v1338, %v2208
        %v2234 = vmul.f32 %v1339, %v2208
        %v2235 = vmul.f32 %v1340, %v2208
        %v2236 = vmul.f32 %v1341, %v2208
        %v2237 = vmul.f32 %v1342, %v2208
        %v2238 = vmul.f32 %v1343, %v2208
        %v2239 = vmul.f32 %v1344, %v2208
        %v2240 = vmul.f32 %v1345, %v2208
        %v2241 = vmul.f32 %v1346, %v2208
        %v2242 = vmul.f32 %v1347, %v2208
        %v2243 = vmul.f32 %v1348, %v2208
        %v2244 = vmul.f32 %v1349, %v2208
        %v2245 = vmul.f32 %v1350, %v2208
        %v2246 = vmul.f32 %v1351, %v2208
        %v2247 = vmul.f32 %v1352, %v2208
        %v2248 = vmul.f32 %v1353, %v2208
        %v2249 = vmul.f32 %v1354, %v2208
        %v2250 = vmul.f32 %v1355, %v2208
        %v2251 = vmul.f32 %v1356, %v2208
        %v2252 = vmul.f32 %v1357, %v2208
        %v2253 = vmul.f32 %v1358, %v2208
        %v2254 = vmul.f32 %v1359, %v2208
        %v2255 = vmul.f32 %v1360, %v2208
        %v2256 = vmul.f32 %v1361, %v2208
        %v2305 = vrot.slane %v2209, 2
        %v2306 = vrot.slane %v2210, 2
        %v2307 = vsel %vm1748, %v2305, %v2306
        %v2308 = vrot.slane %v2211, 2
        %v2309 = vsel %vm1748, %v2306, %v2308
        %v2310 = vrot.slane %v2212, 2
        %v2311 = vrot.slane %v2213, 2
        %v2312 = vsel %vm1748, %v2310, %v2311
        %v2313 = vrot.slane %v2214, 2
        %v2314 = vsel %vm1748, %v2311, %v2313
        %v2315 = vrot.slane %v2215, 2
        %v2316 = vrot.slane %v2216, 2
        %v2317 = vsel %vm1748, %v2315, %v2316
        %v2318 = vrot.slane %v2217, 2
        %v2319 = vsel %vm1748, %v2316, %v2318
        %v2320 = vrot.slane %v2218, 2
        %v2321 = vrot.slane %v2219, 2
        %v2322 = vsel %vm1748, %v2320, %v2321
        %v2323 = vrot.slane %v2220, 2
        %v2324 = vsel %vm1748, %v2321, %v2323
        %v2325 = vrot.slane %v2221, 2
        %v2326 = vrot.slane %v2222, 2
        %v2327 = vsel %vm1748, %v2325, %v2326
        %v2328 = vrot.slane %v2223, 2
        %v2329 = vsel %vm1748, %v2326, %v2328
        %v2330 = vrot.slane %v2224, 2
        %v2331 = vrot.slane %v2225, 2
        %v2332 = vsel %vm1748, %v2330, %v2331
        %v2333 = vrot.slane %v2226, 2
        %v2334 = vsel %vm1748, %v2331, %v2333
        %v2335 = vrot.slane %v2227, 2
        %v2336 = vrot.slane %v2228, 2
        %v2337 = vsel %vm1748, %v2335, %v2336
        %v2338 = vrot.slane %v2229, 2
        %v2339 = vsel %vm1748, %v2336, %v2338
        %v2340 = vrot.slane %v2230, 2
        %v2341 = vrot.slane %v2231, 2
        %v2342 = vsel %vm1748, %v2340, %v2341
        %v2343 = vrot.slane %v2232, 2
        %v2344 = vsel %vm1748, %v2341, %v2343
        %v2345 = vrot.slane %v2233, 2
        %v2346 = vrot.slane %v2234, 2
        %v2347 = vsel %vm1748, %v2345, %v2346
        %v2348 = vrot.slane %v2235, 2
        %v2349 = vsel %vm1748, %v2346, %v2348
        %v2350 = vrot.slane %v2236, 2
        %v2351 = vrot.slane %v2237, 2
        %v2352 = vsel %vm1748, %v2350, %v2351
        %v2353 = vrot.slane %v2238, 2
        %v2354 = vsel %vm1748, %v2351, %v2353
        %v2355 = vrot.slane %v2239, 2
        %v2356 = vrot.slane %v2240, 2
        %v2357 = vsel %vm1748, %v2355, %v2356
        %v2358 = vrot.slane %v2241, 2
        %v2359 = vsel %vm1748, %v2356, %v2358
        %v2360 = vrot.slane %v2242, 2
        %v2361 = vrot.slane %v2243, 2
        %v2362 = vsel %vm1748, %v2360, %v2361
        %v2363 = vrot.slane %v2244, 2
        %v2364 = vsel %vm1748, %v2361, %v2363
        %v2365 = vrot.slane %v2245, 2
        %v2366 = vrot.slane %v2246, 2
        %v2367 = vsel %vm1748, %v2365, %v2366
        %v2368 = vrot.slane %v2247, 2
        %v2369 = vsel %vm1748, %v2366, %v2368
        %v2370 = vrot.slane %v2248, 2
        %v2371 = vrot.slane %v2249, 2
        %v2372 = vsel %vm1748, %v2370, %v2371
        %v2373 = vrot.slane %v2250, 2
        %v2374 = vsel %vm1748, %v2371, %v2373
        %v2375 = vrot.slane %v2251, 2
        %v2376 = vrot.slane %v2252, 2
        %v2377 = vsel %vm1748, %v2375, %v2376
        %v2378 = vrot.slane %v2253, 2
        %v2379 = vsel %vm1748, %v2376, %v2378
        %v2380 = vrot.slane %v2254, 2
        %v2381 = vrot.slane %v2255, 2
        %v2382 = vsel %vm1748, %v2380, %v2381
        %v2383 = vrot.slane %v2256, 2
        %v2384 = vsel %vm1748, %v2381, %v2383
        %v2417 = vadd.f32 %v2173, %v2307
        %v2418 = vadd.f32 %v2174, %v2309
        %v2419 = vadd.f32 %v2175, %v2312
        %v2420 = vadd.f32 %v2176, %v2314
        %v2421 = vadd.f32 %v2177, %v2317
        %v2422 = vadd.f32 %v2178, %v2319
        %v2423 = vadd.f32 %v2179, %v2322
        %v2424 = vadd.f32 %v2180, %v2324
        %v2425 = vadd.f32 %v2181, %v2327
        %v2426 = vadd.f32 %v2182, %v2329
        %v2427 = vadd.f32 %v2183, %v2332
        %v2428 = vadd.f32 %v2184, %v2334
        %v2429 = vadd.f32 %v2185, %v2337
        %v2430 = vadd.f32 %v2186, %v2339
        %v2431 = vadd.f32 %v2187, %v2342
        %v2432 = vadd.f32 %v2188, %v2344
        %v2433 = vadd.f32 %v2189, %v2347
        %v2434 = vadd.f32 %v2190, %v2349
        %v2435 = vadd.f32 %v2191, %v2352
        %v2436 = vadd.f32 %v2192, %v2354
        %v2437 = vadd.f32 %v2193, %v2357
        %v2438 = vadd.f32 %v2194, %v2359
        %v2439 = vadd.f32 %v2195, %v2362
        %v2440 = vadd.f32 %v2196, %v2364
        %v2441 = vadd.f32 %v2197, %v2367
        %v2442 = vadd.f32 %v2198, %v2369
        %v2443 = vadd.f32 %v2199, %v2372
        %v2444 = vadd.f32 %v2200, %v2374
        %v2445 = vadd.f32 %v2201, %v2377
        %v2446 = vadd.f32 %v2202, %v2379
        %v2447 = vadd.f32 %v2203, %v2382
        %v2448 = vadd.f32 %v2204, %v2384
        %v2449 = vlaneseq
        %v2450 = vshrl.u32 %v2449, 7
        %v2451 = vsub.s32 6, %v2450
        %v2452 = vrot.slane %v1365, %v2451
        %v2453 = vmul.f32 %v1317, %v2452
        %v2454 = vmul.f32 %v1318, %v2452
        %v2455 = vmul.f32 %v1320, %v2452
        %v2456 = vmul.f32 %v1321, %v2452
        %v2457 = vmul.f32 %v1323, %v2452
        %v2458 = vmul.f32 %v1324, %v2452
        %v2459 = vmul.f32 %v1326, %v2452
        %v2460 = vmul.f32 %v1327, %v2452
        %v2461 = vmul.f32 %v1329, %v2452
        %v2462 = vmul.f32 %v1330, %v2452
        %v2463 = vmul.f32 %v1332, %v2452
        %v2464 = vmul.f32 %v1333, %v2452
        %v2465 = vmul.f32 %v1335, %v2452
        %v2466 = vmul.f32 %v1336, %v2452
        %v2467 = vmul.f32 %v1338, %v2452
        %v2468 = vmul.f32 %v1339, %v2452
        %v2469 = vmul.f32 %v1341, %v2452
        %v2470 = vmul.f32 %v1342, %v2452
        %v2471 = vmul.f32 %v1344, %v2452
        %v2472 = vmul.f32 %v1345, %v2452
        %v2473 = vmul.f32 %v1347, %v2452
        %v2474 = vmul.f32 %v1348, %v2452
        %v2475 = vmul.f32 %v1350, %v2452
        %v2476 = vmul.f32 %v1351, %v2452
        %v2477 = vmul.f32 %v1353, %v2452
        %v2478 = vmul.f32 %v1354, %v2452
        %v2479 = vmul.f32 %v1356, %v2452
        %v2480 = vmul.f32 %v1357, %v2452
        %v2481 = vmul.f32 %v1359, %v2452
        %v2482 = vmul.f32 %v1360, %v2452
        %v2483 = vmul.f32 %v1362, %v2452
        %v2484 = vmul.f32 %v1363, %v2452
        %v2485 = vadd.f32 %v2417, %v2453
        %v2486 = vadd.f32 %v2418, %v2454
        %v2487 = vadd.f32 %v2419, %v2455
        %v2488 = vadd.f32 %v2420, %v2456
        %v2489 = vadd.f32 %v2421, %v2457
        %v2490 = vadd.f32 %v2422, %v2458
        %v2491 = vadd.f32 %v2423, %v2459
        %v2492 = vadd.f32 %v2424, %v2460
        %v2493 = vadd.f32 %v2425, %v2461
        %v2494 = vadd.f32 %v2426, %v2462
        %v2495 = vadd.f32 %v2427, %v2463
        %v2496 = vadd.f32 %v2428, %v2464
        %v2497 = vadd.f32 %v2429, %v2465
        %v2498 = vadd.f32 %v2430, %v2466
        %v2499 = vadd.f32 %v2431, %v2467
        %v2500 = vadd.f32 %v2432, %v2468
        %v2501 = vadd.f32 %v2433, %v2469
        %v2502 = vadd.f32 %v2434, %v2470
        %v2503 = vadd.f32 %v2435, %v2471
        %v2504 = vadd.f32 %v2436, %v2472
        %v2505 = vadd.f32 %v2437, %v2473
        %v2506 = vadd.f32 %v2438, %v2474
        %v2507 = vadd.f32 %v2439, %v2475
        %v2508 = vadd.f32 %v2440, %v2476
        %v2509 = vadd.f32 %v2441, %v2477
        %v2510 = vadd.f32 %v2442, %v2478
        %v2511 = vadd.f32 %v2443, %v2479
        %v2512 = vadd.f32 %v2444, %v2480
        %v2513 = vadd.f32 %v2445, %v2481
        %v2514 = vadd.f32 %v2446, %v2482
        %v2515 = vadd.f32 %v2447, %v2483
        %v2516 = vadd.f32 %v2448, %v2484
        %v2517 = vlaneseq
        %v2518 = vshrl.u32 %v2517, 7
        %v2519 = vsub.s32 7, %v2518
        %v2520 = vrot.slane %v1365, %v2519
        %v2521 = vmul.f32 %v1317, %v2520
        %v2522 = vmul.f32 %v1318, %v2520
        %v2523 = vmul.f32 %v1319, %v2520
        %v2524 = vmul.f32 %v1320, %v2520
        %v2525 = vmul.f32 %v1321, %v2520
        %v2526 = vmul.f32 %v1322, %v2520
        %v2527 = vmul.f32 %v1323, %v2520
        %v2528 = vmul.f32 %v1324, %v2520
        %v2529 = vmul.f32 %v1325, %v2520
        %v2530 = vmul.f32 %v1326, %v2520
        %v2531 = vmul.f32 %v1327, %v2520
        %v2532 = vmul.f32 %v1328, %v2520
        %v2533 = vmul.f32 %v1329, %v2520
        %v2534 = vmul.f32 %v1330, %v2520
        %v2535 = vmul.f32 %v1331, %v2520
        %v2536 = vmul.f32 %v1332, %v2520
        %v2537 = vmul.f32 %v1333, %v2520
        %v2538 = vmul.f32 %v1334, %v2520
        %v2539 = vmul.f32 %v1335, %v2520
        %v2540 = vmul.f32 %v1336, %v2520
        %v2541 = vmul.f32 %v1337, %v2520
        %v2542 = vmul.f32 %v1338, %v2520
        %v2543 = vmul.f32 %v1339, %v2520
        %v2544 = vmul.f32 %v1340, %v2520
        %v2545 = vmul.f32 %v1341, %v2520
        %v2546 = vmul.f32 %v1342, %v2520
        %v2547 = vmul.f32 %v1343, %v2520
        %v2548 = vmul.f32 %v1344, %v2520
        %v2549 = vmul.f32 %v1345, %v2520
        %v2550 = vmul.f32 %v1346, %v2520
        %v2551 = vmul.f32 %v1347, %v2520
        %v2552 = vmul.f32 %v1348, %v2520
        %v2553 = vmul.f32 %v1349, %v2520
        %v2554 = vmul.f32 %v1350, %v2520
        %v2555 = vmul.f32 %v1351, %v2520
        %v2556 = vmul.f32 %v1352, %v2520
        %v2557 = vmul.f32 %v1353, %v2520
        %v2558 = vmul.f32 %v1354, %v2520
        %v2559 = vmul.f32 %v1355, %v2520
        %v2560 = vmul.f32 %v1356, %v2520
        %v2561 = vmul.f32 %v1357, %v2520
        %v2562 = vmul.f32 %v1358, %v2520
        %v2563 = vmul.f32 %v1359, %v2520
        %v2564 = vmul.f32 %v1360, %v2520
        %v2565 = vmul.f32 %v1361, %v2520
        %v2566 = vmul.f32 %v1362, %v2520
        %v2567 = vmul.f32 %v1363, %v2520
        %v2568 = vmul.f32 %v1364, %v2520
        %v2617 = vrot.slane %v2521, 1
        %v2618 = vrot.slane %v2522, 1
        %v2619 = vsel %vm1503, %v2617, %v2618
        %v2620 = vrot.slane %v2523, 1
        %v2621 = vsel %vm1503, %v2618, %v2620
        %v2622 = vrot.slane %v2524, 1
        %v2623 = vrot.slane %v2525, 1
        %v2624 = vsel %vm1503, %v2622, %v2623
        %v2625 = vrot.slane %v2526, 1
        %v2626 = vsel %vm1503, %v2623, %v2625
        %v2627 = vrot.slane %v2527, 1
        %v2628 = vrot.slane %v2528, 1
        %v2629 = vsel %vm1503, %v2627, %v2628
        %v2630 = vrot.slane %v2529, 1
        %v2631 = vsel %vm1503, %v2628, %v2630
        %v2632 = vrot.slane %v2530, 1
        %v2633 = vrot.slane %v2531, 1
        %v2634 = vsel %vm1503, %v2632, %v2633
        %v2635 = vrot.slane %v2532, 1
        %v2636 = vsel %vm1503, %v2633, %v2635
        %v2637 = vrot.slane %v2533, 1
        %v2638 = vrot.slane %v2534, 1
        %v2639 = vsel %vm1503, %v2637, %v2638
        %v2640 = vrot.slane %v2535, 1
        %v2641 = vsel %vm1503, %v2638, %v2640
        %v2642 = vrot.slane %v2536, 1
        %v2643 = vrot.slane %v2537, 1
        %v2644 = vsel %vm1503, %v2642, %v2643
        %v2645 = vrot.slane %v2538, 1
        %v2646 = vsel %vm1503, %v2643, %v2645
        %v2647 = vrot.slane %v2539, 1
        %v2648 = vrot.slane %v2540, 1
        %v2649 = vsel %vm1503, %v2647, %v2648
        %v2650 = vrot.slane %v2541, 1
        %v2651 = vsel %vm1503, %v2648, %v2650
        %v2652 = vrot.slane %v2542, 1
        %v2653 = vrot.slane %v2543, 1
        %v2654 = vsel %vm1503, %v2652, %v2653
        %v2655 = vrot.slane %v2544, 1
        %v2656 = vsel %vm1503, %v2653, %v2655
        %v2657 = vrot.slane %v2545, 1
        %v2658 = vrot.slane %v2546, 1
        %v2659 = vsel %vm1503, %v2657, %v2658
        %v2660 = vrot.slane %v2547, 1
        %v2661 = vsel %vm1503, %v2658, %v2660
        %v2662 = vrot.slane %v2548, 1
        %v2663 = vrot.slane %v2549, 1
        %v2664 = vsel %vm1503, %v2662, %v2663
        %v2665 = vrot.slane %v2550, 1
        %v2666 = vsel %vm1503, %v2663, %v2665
        %v2667 = vrot.slane %v2551, 1
        %v2668 = vrot.slane %v2552, 1
        %v2669 = vsel %vm1503, %v2667, %v2668
        %v2670 = vrot.slane %v2553, 1
        %v2671 = vsel %vm1503, %v2668, %v2670
        %v2672 = vrot.slane %v2554, 1
        %v2673 = vrot.slane %v2555, 1
        %v2674 = vsel %vm1503, %v2672, %v2673
        %v2675 = vrot.slane %v2556, 1
        %v2676 = vsel %vm1503, %v2673, %v2675
        %v2677 = vrot.slane %v2557, 1
        %v2678 = vrot.slane %v2558, 1
        %v2679 = vsel %vm1503, %v2677, %v2678
        %v2680 = vrot.slane %v2559, 1
        %v2681 = vsel %vm1503, %v2678, %v2680
        %v2682 = vrot.slane %v2560, 1
        %v2683 = vrot.slane %v2561, 1
        %v2684 = vsel %vm1503, %v2682, %v2683
        %v2685 = vrot.slane %v2562, 1
        %v2686 = vsel %vm1503, %v2683, %v2685
        %v2687 = vrot.slane %v2563, 1
        %v2688 = vrot.slane %v2564, 1
        %v2689 = vsel %vm1503, %v2687, %v2688
        %v2690 = vrot.slane %v2565, 1
        %v2691 = vsel %vm1503, %v2688, %v2690
        %v2692 = vrot.slane %v2566, 1
        %v2693 = vrot.slane %v2567, 1
        %v2694 = vsel %vm1503, %v2692, %v2693
        %v2695 = vrot.slane %v2568, 1
        %v2696 = vsel %vm1503, %v2693, %v2695
        %v2729 = vadd.f32 %v2485, %v2619
        %v2730 = vadd.f32 %v2486, %v2621
        %v2731 = vadd.f32 %v2487, %v2624
        %v2732 = vadd.f32 %v2488, %v2626
        %v2733 = vadd.f32 %v2489, %v2629
        %v2734 = vadd.f32 %v2490, %v2631
        %v2735 = vadd.f32 %v2491, %v2634
        %v2736 = vadd.f32 %v2492, %v2636
        %v2737 = vadd.f32 %v2493, %v2639
        %v2738 = vadd.f32 %v2494, %v2641
        %v2739 = vadd.f32 %v2495, %v2644
        %v2740 = vadd.f32 %v2496, %v2646
        %v2741 = vadd.f32 %v2497, %v2649
        %v2742 = vadd.f32 %v2498, %v2651
        %v2743 = vadd.f32 %v2499, %v2654
        %v2744 = vadd.f32 %v2500, %v2656
        %v2745 = vadd.f32 %v2501, %v2659
        %v2746 = vadd.f32 %v2502, %v2661
        %v2747 = vadd.f32 %v2503, %v2664
        %v2748 = vadd.f32 %v2504, %v2666
        %v2749 = vadd.f32 %v2505, %v2669
        %v2750 = vadd.f32 %v2506, %v2671
        %v2751 = vadd.f32 %v2507, %v2674
        %v2752 = vadd.f32 %v2508, %v2676
        %v2753 = vadd.f32 %v2509, %v2679
        %v2754 = vadd.f32 %v2510, %v2681
        %v2755 = vadd.f32 %v2511, %v2684
        %v2756 = vadd.f32 %v2512, %v2686
        %v2757 = vadd.f32 %v2513, %v2689
        %v2758 = vadd.f32 %v2514, %v2691
        %v2759 = vadd.f32 %v2515, %v2694
        %v2760 = vadd.f32 %v2516, %v2696
        %v2761 = vlaneseq
        %v2762 = vshrl.u32 %v2761, 7
        %v2763 = vsub.s32 0, %v2762
        %v2764 = vrot.slane %v1366, %v2763
        %v2765 = vmul.f32 %v1317, %v2764
        %v2766 = vmul.f32 %v1318, %v2764
        %v2767 = vmul.f32 %v1319, %v2764
        %v2768 = vmul.f32 %v1320, %v2764
        %v2769 = vmul.f32 %v1321, %v2764
        %v2770 = vmul.f32 %v1322, %v2764
        %v2771 = vmul.f32 %v1323, %v2764
        %v2772 = vmul.f32 %v1324, %v2764
        %v2773 = vmul.f32 %v1325, %v2764
        %v2774 = vmul.f32 %v1326, %v2764
        %v2775 = vmul.f32 %v1327, %v2764
        %v2776 = vmul.f32 %v1328, %v2764
        %v2777 = vmul.f32 %v1329, %v2764
        %v2778 = vmul.f32 %v1330, %v2764
        %v2779 = vmul.f32 %v1331, %v2764
        %v2780 = vmul.f32 %v1332, %v2764
        %v2781 = vmul.f32 %v1333, %v2764
        %v2782 = vmul.f32 %v1334, %v2764
        %v2783 = vmul.f32 %v1335, %v2764
        %v2784 = vmul.f32 %v1336, %v2764
        %v2785 = vmul.f32 %v1337, %v2764
        %v2786 = vmul.f32 %v1338, %v2764
        %v2787 = vmul.f32 %v1339, %v2764
        %v2788 = vmul.f32 %v1340, %v2764
        %v2789 = vmul.f32 %v1341, %v2764
        %v2790 = vmul.f32 %v1342, %v2764
        %v2791 = vmul.f32 %v1343, %v2764
        %v2792 = vmul.f32 %v1344, %v2764
        %v2793 = vmul.f32 %v1345, %v2764
        %v2794 = vmul.f32 %v1346, %v2764
        %v2795 = vmul.f32 %v1347, %v2764
        %v2796 = vmul.f32 %v1348, %v2764
        %v2797 = vmul.f32 %v1349, %v2764
        %v2798 = vmul.f32 %v1350, %v2764
        %v2799 = vmul.f32 %v1351, %v2764
        %v2800 = vmul.f32 %v1352, %v2764
        %v2801 = vmul.f32 %v1353, %v2764
        %v2802 = vmul.f32 %v1354, %v2764
        %v2803 = vmul.f32 %v1355, %v2764
        %v2804 = vmul.f32 %v1356, %v2764
        %v2805 = vmul.f32 %v1357, %v2764
        %v2806 = vmul.f32 %v1358, %v2764
        %v2807 = vmul.f32 %v1359, %v2764
        %v2808 = vmul.f32 %v1360, %v2764
        %v2809 = vmul.f32 %v1361, %v2764
        %v2810 = vmul.f32 %v1362, %v2764
        %v2811 = vmul.f32 %v1363, %v2764
        %v2812 = vmul.f32 %v1364, %v2764
        %v2861 = vrot.slane %v2765, 2
        %v2862 = vrot.slane %v2766, 2
        %v2863 = vsel %vm1748, %v2861, %v2862
        %v2864 = vrot.slane %v2767, 2
        %v2865 = vsel %vm1748, %v2862, %v2864
        %v2866 = vrot.slane %v2768, 2
        %v2867 = vrot.slane %v2769, 2
        %v2868 = vsel %vm1748, %v2866, %v2867
        %v2869 = vrot.slane %v2770, 2
        %v2870 = vsel %vm1748, %v2867, %v2869
        %v2871 = vrot.slane %v2771, 2
        %v2872 = vrot.slane %v2772, 2
        %v2873 = vsel %vm1748, %v2871, %v2872
        %v2874 = vrot.slane %v2773, 2
        %v2875 = vsel %vm1748, %v2872, %v2874
        %v2876 = vrot.slane %v2774, 2
        %v2877 = vrot.slane %v2775, 2
        %v2878 = vsel %vm1748, %v2876, %v2877
        %v2879 = vrot.slane %v2776, 2
        %v2880 = vsel %vm1748, %v2877, %v2879
        %v2881 = vrot.slane %v2777, 2
        %v2882 = vrot.slane %v2778, 2
        %v2883 = vsel %vm1748, %v2881, %v2882
        %v2884 = vrot.slane %v2779, 2
        %v2885 = vsel %vm1748, %v2882, %v2884
        %v2886 = vrot.slane %v2780, 2
        %v2887 = vrot.slane %v2781, 2
        %v2888 = vsel %vm1748, %v2886, %v2887
        %v2889 = vrot.slane %v2782, 2
        %v2890 = vsel %vm1748, %v2887, %v2889
        %v2891 = vrot.slane %v2783, 2
        %v2892 = vrot.slane %v2784, 2
        %v2893 = vsel %vm1748, %v2891, %v2892
        %v2894 = vrot.slane %v2785, 2
        %v2895 = vsel %vm1748, %v2892, %v2894
        %v2896 = vrot.slane %v2786, 2
        %v2897 = vrot.slane %v2787, 2
        %v2898 = vsel %vm1748, %v2896, %v2897
        %v2899 = vrot.slane %v2788, 2
        %v2900 = vsel %vm1748, %v2897, %v2899
        %v2901 = vrot.slane %v2789, 2
        %v2902 = vrot.slane %v2790, 2
        %v2903 = vsel %vm1748, %v2901, %v2902
        %v2904 = vrot.slane %v2791, 2
        %v2905 = vsel %vm1748, %v2902, %v2904
        %v2906 = vrot.slane %v2792, 2
        %v2907 = vrot.slane %v2793, 2
        %v2908 = vsel %vm1748, %v2906, %v2907
        %v2909 = vrot.slane %v2794, 2
        %v2910 = vsel %vm1748, %v2907, %v2909
        %v2911 = vrot.slane %v2795, 2
        %v2912 = vrot.slane %v2796, 2
        %v2913 = vsel %vm1748, %v2911, %v2912
        %v2914 = vrot.slane %v2797, 2
        %v2915 = vsel %vm1748, %v2912, %v2914
        %v2916 = vrot.slane %v2798, 2
        %v2917 = vrot.slane %v2799, 2
        %v2918 = vsel %vm1748, %v2916, %v2917
        %v2919 = vrot.slane %v2800, 2
        %v2920 = vsel %vm1748, %v2917, %v2919
        %v2921 = vrot.slane %v2801, 2
        %v2922 = vrot.slane %v2802, 2
        %v2923 = vsel %vm1748, %v2921, %v2922
        %v2924 = vrot.slane %v2803, 2
        %v2925 = vsel %vm1748, %v2922, %v2924
        %v2926 = vrot.slane %v2804, 2
        %v2927 = vrot.slane %v2805, 2
        %v2928 = vsel %vm1748, %v2926, %v2927
        %v2929 = vrot.slane %v2806, 2
        %v2930 = vsel %vm1748, %v2927, %v2929
        %v2931 = vrot.slane %v2807, 2
        %v2932 = vrot.slane %v2808, 2
        %v2933 = vsel %vm1748, %v2931, %v2932
        %v2934 = vrot.slane %v2809, 2
        %v2935 = vsel %vm1748, %v2932, %v2934
        %v2936 = vrot.slane %v2810, 2
        %v2937 = vrot.slane %v2811, 2
        %v2938 = vsel %vm1748, %v2936, %v2937
        %v2939 = vrot.slane %v2812, 2
        %v2940 = vsel %vm1748, %v2937, %v2939
        %v2973 = vadd.f32 %v2729, %v2863
        %v2974 = vadd.f32 %v2730, %v2865
        %v2975 = vadd.f32 %v2731, %v2868
        %v2976 = vadd.f32 %v2732, %v2870
        %v2977 = vadd.f32 %v2733, %v2873
        %v2978 = vadd.f32 %v2734, %v2875
        %v2979 = vadd.f32 %v2735, %v2878
        %v2980 = vadd.f32 %v2736, %v2880
        %v2981 = vadd.f32 %v2737, %v2883
        %v2982 = vadd.f32 %v2738, %v2885
        %v2983 = vadd.f32 %v2739, %v2888
        %v2984 = vadd.f32 %v2740, %v2890
        %v2985 = vadd.f32 %v2741, %v2893
        %v2986 = vadd.f32 %v2742, %v2895
        %v2987 = vadd.f32 %v2743, %v2898
        %v2988 = vadd.f32 %v2744, %v2900
        %v2989 = vadd.f32 %v2745, %v2903
        %v2990 = vadd.f32 %v2746, %v2905
        %v2991 = vadd.f32 %v2747, %v2908
        %v2992 = vadd.f32 %v2748, %v2910
        %v2993 = vadd.f32 %v2749, %v2913
        %v2994 = vadd.f32 %v2750, %v2915
        %v2995 = vadd.f32 %v2751, %v2918
        %v2996 = vadd.f32 %v2752, %v2920
        %v2997 = vadd.f32 %v2753, %v2923
        %v2998 = vadd.f32 %v2754, %v2925
        %v2999 = vadd.f32 %v2755, %v2928
        %v3000 = vadd.f32 %v2756, %v2930
        %v3001 = vadd.f32 %v2757, %v2933
        %v3002 = vadd.f32 %v2758, %v2935
        %v3003 = vadd.f32 %v2759, %v2938
        %v3004 = vadd.f32 %v2760, %v2940
        %v3005 = vld [vmem:[#allocation7] sm:$0x1]
        %v3007 = vlaneseq
        %v3008 = vshrl.u32 %v3007, 7
        %v3009 = vsub.s32 0, %v3008
        %v3010 = vrot.slane %v3005, %v3009
        %v3012 = vadd.f32 %v2973, %v3010
        %v3013 = vadd.f32 %v2974, %v3010
        %v3014 = vadd.f32 %v2975, %v3010
        %v3015 = vadd.f32 %v2976, %v3010
        %v3016 = vadd.f32 %v2977, %v3010
        %v3017 = vadd.f32 %v2978, %v3010
        %v3018 = vadd.f32 %v2979, %v3010
        %v3019 = vadd.f32 %v2980, %v3010
        %v3020 = vadd.f32 %v2981, %v3010
        %v3021 = vadd.f32 %v2982, %v3010
        %v3022 = vadd.f32 %v2983, %v3010
        %v3023 = vadd.f32 %v2984, %v3010
        %v3024 = vadd.f32 %v2985, %v3010
        %v3025 = vadd.f32 %v2986, %v3010
        %v3026 = vadd.f32 %v2987, %v3010
        %v3027 = vadd.f32 %v2988, %v3010
        %v3028 = vadd.f32 %v2989, %v3010
        %v3029 = vadd.f32 %v2990, %v3010
        %v3030 = vadd.f32 %v2991, %v3010
        %v3031 = vadd.f32 %v2992, %v3010
        %v3032 = vadd.f32 %v2993, %v3010
        %v3033 = vadd.f32 %v2994, %v3010
        %v3034 = vadd.f32 %v2995, %v3010
        %v3035 = vadd.f32 %v2996, %v3010
        %v3036 = vadd.f32 %v2997, %v3010
        %v3037 = vadd.f32 %v2998, %v3010
        %v3038 = vadd.f32 %v2999, %v3010
        %v3039 = vadd.f32 %v3000, %v3010
        %v3040 = vadd.f32 %v3001, %v3010
        %v3041 = vadd.f32 %v3002, %v3010
        %v3042 = vadd.f32 %v3003, %v3010
        %v3043 = vadd.f32 %v3004, %v3010
        %v3044 = vmax.f32 %v3012, 0.0
        %v3045 = vmax.f32 %v3013, 0.0
        %v3046 = vmax.f32 %v3014, 0.0
        %v3047 = vmax.f32 %v3015, 0.0
        %v3048 = vmax.f32 %v3016, 0.0
        %v3049 = vmax.f32 %v3017, 0.0
        %v3050 = vmax.f32 %v3018, 0.0
        %v3051 = vmax.f32 %v3019, 0.0
        %v3052 = vmax.f32 %v3020, 0.0
        %v3053 = vmax.f32 %v3021, 0.0
        %v3054 = vmax.f32 %v3022, 0.0
        %v3055 = vmax.f32 %v3023, 0.0
        %v3056 = vmax.f32 %v3024, 0.0
        %v3057 = vmax.f32 %v3025, 0.0
        %v3058 = vmax.f32 %v3026, 0.0
        %v3059 = vmax.f32 %v3027, 0.0
        %v3060 = vmax.f32 %v3028, 0.0
        %v3061 = vmax.f32 %v3029, 0.0
        %v3062 = vmax.f32 %v3030, 0.0
        %v3063 = vmax.f32 %v3031, 0.0
        %v3064 = vmax.f32 %v3032, 0.0
        %v3065 = vmax.f32 %v3033, 0.0
        %v3066 = vmax.f32 %v3034, 0.0
        %v3067 = vmax.f32 %v3035, 0.0
        %v3068 = vmax.f32 %v3036, 0.0
        %v3069 = vmax.f32 %v3037, 0.0
        %v3070 = vmax.f32 %v3038, 0.0
        %v3071 = vmax.f32 %v3039, 0.0
        %v3072 = vmax.f32 %v3040, 0.0
        %v3073 = vmax.f32 %v3041, 0.0
        %v3074 = vmax.f32 %v3042, 0.0
        %v3075 = vmax.f32 %v3043, 0.0
        %v3076 = vpack.c.bf16 %v3045, %v3044
        %v3077 = vpack.c.bf16 %v3047, %v3046
        %v3078 = vpack.c.bf16 %v3049, %v3048
        %v3079 = vpack.c.bf16 %v3051, %v3050
        %v3080 = vpack.c.bf16 %v3053, %v3052
        %v3081 = vpack.c.bf16 %v3055, %v3054
        %v3082 = vpack.c.bf16 %v3057, %v3056
        %v3083 = vpack.c.bf16 %v3059, %v3058
        %v3084 = vpack.c.bf16 %v3061, %v3060
        %v3085 = vpack.c.bf16 %v3063, %v3062
        %v3086 = vpack.c.bf16 %v3065, %v3064
        %v3087 = vpack.c.bf16 %v3067, %v3066
        %v3088 = vpack.c.bf16 %v3069, %v3068
        %v3089 = vpack.c.bf16 %v3071, %v3070
        %v3090 = vpack.c.bf16 %v3073, %v3072
        %v3091 = vpack.c.bf16 %v3075, %v3074
        %v3092 = vld [vmem:[#allocation9] sm:$0xf]
        %v3093 = vld [vmem:[#allocation9 + $0x4] sm:$0xf]
        %v3094 = vld [vmem:[#allocation10] sm:$0x1]
        %v3096 = vlaneseq
        %v3097 = vshrl.u32 %v3096, 7
        %v3098 = vsub.s32 0, %v3097
        %v3099 = vrot.slane %v3094, %v3098
        %v3103 = vunpack.c.l.b16 %v3092
        %v3104 = vunpack.c.l.b16 %v3093
        %v3105 = vpack.c.b16 %v3104, %v3103
        %vm3107 = vcmask 130048
        %v3109 = vsel %vm3107, %v3076, 0
        %v3112 = vsel %vm3107, %v3077, 0
        %v3115 = vsel %vm3107, %v3078, 0
        %v3118 = vsel %vm3107, %v3079, 0
        %v3121 = vsel %vm3107, %v3080, 0
        %v3124 = vsel %vm3107, %v3081, 0
        %v3127 = vsel %vm3107, %v3082, 0
        %v3130 = vsel %vm3107, %v3083, 0
        %v3133 = vsel %vm3107, %v3084, 0
        %v3136 = vsel %vm3107, %v3085, 0
        %v3139 = vsel %vm3107, %v3086, 0
        %v3142 = vsel %vm3107, %v3087, 0
        %v3145 = vsel %vm3107, %v3088, 0
        %v3148 = vsel %vm3107, %v3089, 0
        %v3151 = vsel %vm3107, %v3090, 0
        %v3154 = vsel %vm3107, %v3091, 0
        %3156 = vmatprep.subr.bf16.mxu0 0
        %3157 = vmatpush1.bf16.msra.mxu0 %v3105
        %3158 = vmatprep.subr.bf16.mxu0 0
        %3159 = vmatpush1.bf16.msra.mxu0 0
        %3160 = vmatprep.subr.bf16.mxu0 0
        %3161 = vmatpush1.bf16.msra.mxu0 0
        %3162 = vmatprep.subr.bf16.mxu0 0
        %3163 = vmatpush1.bf16.msra.mxu0 0
        %3164 = vmatprep.subr.bf16.mxu0 0
        %3165 = vmatpush1.bf16.msra.mxu0 0
        %3166 = vmatprep.subr.bf16.mxu0 0
        %3167 = vmatpush1.bf16.msra.mxu0 0
        %3168 = vmatprep.subr.bf16.mxu0 0
        %3169 = vmatpush1.bf16.msra.mxu0 0
        %3170 = vmatprep.subr.bf16.mxu0 0
        %3171 = vmatpush1.bf16.msra.mxu0 0
        %3172 = vmatprep.subr.bf16.mxu0 0
        %3173 = vmatpush1.bf16.msra.mxu0 0
        %3174 = vmatprep.subr.bf16.mxu0 0
        %3175 = vmatpush1.bf16.msra.mxu0 0
        %3176 = vmatprep.subr.bf16.mxu0 0
        %3177 = vmatpush1.bf16.msra.mxu0 0
        %3178 = vmatprep.subr.bf16.mxu0 0
        %3179 = vmatpush1.bf16.msra.mxu0 0
        %3180 = vmatprep.subr.bf16.mxu0 0
        %3181 = vmatpush1.bf16.msra.mxu0 0
        %3182 = vmatprep.subr.bf16.mxu0 0
        %3183 = vmatpush1.bf16.msra.mxu0 0
        %3184 = vmatprep.subr.bf16.mxu0 0
        %3185 = vmatpush1.bf16.msra.mxu0 0
        %3186 = vmatprep.subr.bf16.mxu0 0
        %3187 = vmatpush1.bf16.msra.mxu0 0
        %3188 = vmatprep.mubr.bf16.mxu0 0
        %3189 = vmatmul.mubr.bf16.gmra.mrb[0].mxu0 %v3109
        %v3190 = vpop.f32.mrb[0].mxu0
        %v3191 = vadd.f32 %v3099, %v3190
        %v3192 = vpop.f32.mrb[0].mxu0
        %v3193 = vpop.f32.mrb[0].mxu0
        %v3194 = vadd.f32 %v3099, %v3193
        %v3195 = vpop.f32.mrb[0].mxu0
        %3196 = vmatprep.mubr.bf16.mxu0 0
        %3197 = vmatmul.mubr.bf16.gmra.mrb[0].mxu0 %v3112
        %v3198 = vpop.f32.mrb[0].mxu0
        %v3199 = vadd.f32 %v3099, %v3198
        %v3200 = vpop.f32.mrb[0].mxu0
        %v3201 = vpop.f32.mrb[0].mxu0
        %v3202 = vadd.f32 %v3099, %v3201
        %v3203 = vpop.f32.mrb[0].mxu0
        %3204 = vmatprep.mubr.bf16.mxu0 0
        %3205 = vmatmul.mubr.bf16.gmra.mrb[0].mxu0 %v3115
        %v3206 = vpop.f32.mrb[0].mxu0
        %v3207 = vadd.f32 %v3099, %v3206
        %v3208 = vpop.f32.mrb[0].mxu0
        %v3209 = vpop.f32.mrb[0].mxu0
        %v3210 = vadd.f32 %v3099, %v3209
        %v3211 = vpop.f32.mrb[0].mxu0
        %3212 = vmatprep.mubr.bf16.mxu0 0
        %3213 = vmatmul.mubr.bf16.gmra.mrb[0].mxu0 %v3118
        %v3214 = vpop.f32.mrb[0].mxu0
        %v3215 = vadd.f32 %v3099, %v3214
        %v3216 = vpop.f32.mrb[0].mxu0
        %v3217 = vpop.f32.mrb[0].mxu0
        %v3218 = vadd.f32 %v3099, %v3217
        %v3219 = vpop.f32.mrb[0].mxu0
        %3220 = vmatprep.mubr.bf16.mxu0 0
        %3221 = vmatmul.mubr.bf16.gmra.mrb[0].mxu0 %v3121
        %v3222 = vpop.f32.mrb[0].mxu0
        %v3223 = vadd.f32 %v3099, %v3222
        %v3224 = vpop.f32.mrb[0].mxu0
        %v3225 = vpop.f32.mrb[0].mxu0
        %v3226 = vadd.f32 %v3099, %v3225
        %v3227 = vpop.f32.mrb[0].mxu0
        %3228 = vmatprep.mubr.bf16.mxu0 0
        %3229 = vmatmul.mubr.bf16.gmra.mrb[0].mxu0 %v3124
        %v3230 = vpop.f32.mrb[0].mxu0
        %v3231 = vadd.f32 %v3099, %v3230
        %v3232 = vpop.f32.mrb[0].mxu0
        %v3233 = vpop.f32.mrb[0].mxu0
        %v3234 = vadd.f32 %v3099, %v3233
        %v3235 = vpop.f32.mrb[0].mxu0
        %3236 = vmatprep.mubr.bf16.mxu0 0
        %3237 = vmatmul.mubr.bf16.gmra.mrb[0].mxu0 %v3127
        %v3238 = vpop.f32.mrb[0].mxu0
        %v3239 = vadd.f32 %v3099, %v3238
        %v3240 = vpop.f32.mrb[0].mxu0
        %v3241 = vpop.f32.mrb[0].mxu0
        %v3242 = vadd.f32 %v3099, %v3241
        %v3243 = vpop.f32.mrb[0].mxu0
        %3244 = vmatprep.mubr.bf16.mxu0 0
        %3245 = vmatmul.mubr.bf16.gmra.mrb[0].mxu0 %v3130
        %v3246 = vpop.f32.mrb[0].mxu0
        %v3247 = vadd.f32 %v3099, %v3246
        %v3248 = vpop.f32.mrb[0].mxu0
        %v3249 = vpop.f32.mrb[0].mxu0
        %v3250 = vadd.f32 %v3099, %v3249
        %v3251 = vpop.f32.mrb[0].mxu0
        %3252 = vmatprep.mubr.bf16.mxu0 0
        %3253 = vmatmul.mubr.bf16.gmra.mrb[0].mxu0 %v3133
        %v3254 = vpop.f32.mrb[0].mxu0
        %v3255 = vadd.f32 %v3099, %v3254
        %v3256 = vpop.f32.mrb[0].mxu0
        %v3257 = vpop.f32.mrb[0].mxu0
        %v3258 = vadd.f32 %v3099, %v3257
        %v3259 = vpop.f32.mrb[0].mxu0
        %3260 = vmatprep.mubr.bf16.mxu0 0
        %3261 = vmatmul.mubr.bf16.gmra.mrb[0].mxu0 %v3136
        %v3262 = vpop.f32.mrb[0].mxu0
        %v3263 = vadd.f32 %v3099, %v3262
        %v3264 = vpop.f32.mrb[0].mxu0
        %v3265 = vpop.f32.mrb[0].mxu0
        %v3266 = vadd.f32 %v3099, %v3265
        %v3267 = vpop.f32.mrb[0].mxu0
        %3268 = vmatprep.mubr.bf16.mxu0 0
        %3269 = vmatmul.mubr.bf16.gmra.mrb[0].mxu0 %v3139
        %v3270 = vpop.f32.mrb[0].mxu0
        %v3271 = vadd.f32 %v3099, %v3270
        %v3272 = vpop.f32.mrb[0].mxu0
        %v3273 = vpop.f32.mrb[0].mxu0
        %v3274 = vadd.f32 %v3099, %v3273
        %v3275 = vpop.f32.mrb[0].mxu0
        %3276 = vmatprep.mubr.bf16.mxu0 0
        %3277 = vmatmul.mubr.bf16.gmra.mrb[0].mxu0 %v3142
        %v3278 = vpop.f32.mrb[0].mxu0
        %v3279 = vadd.f32 %v3099, %v3278
        %v3280 = vpop.f32.mrb[0].mxu0
        %v3281 = vpop.f32.mrb[0].mxu0
        %v3282 = vadd.f32 %v3099, %v3281
        %v3283 = vpop.f32.mrb[0].mxu0
        %3284 = vmatprep.mubr.bf16.mxu0 0
        %3285 = vmatmul.mubr.bf16.gmra.mrb[0].mxu0 %v3145
        %v3286 = vpop.f32.mrb[0].mxu0
        %v3287 = vadd.f32 %v3099, %v3286
        %v3288 = vpop.f32.mrb[0].mxu0
        %v3289 = vpop.f32.mrb[0].mxu0
        %v3290 = vadd.f32 %v3099, %v3289
        %v3291 = vpop.f32.mrb[0].mxu0
        %3292 = vmatprep.mubr.bf16.mxu0 0
        %3293 = vmatmul.mubr.bf16.gmra.mrb[0].mxu0 %v3148
        %v3294 = vpop.f32.mrb[0].mxu0
        %v3295 = vadd.f32 %v3099, %v3294
        %v3296 = vpop.f32.mrb[0].mxu0
        %v3297 = vpop.f32.mrb[0].mxu0
        %v3298 = vadd.f32 %v3099, %v3297
        %v3299 = vpop.f32.mrb[0].mxu0
        %3300 = vmatprep.mubr.bf16.mxu0 0
        %3301 = vmatmul.mubr.bf16.gmra.mrb[0].mxu0 %v3151
        %v3302 = vpop.f32.mrb[0].mxu0
        %v3303 = vadd.f32 %v3099, %v3302
        %v3304 = vpop.f32.mrb[0].mxu0
        %v3305 = vpop.f32.mrb[0].mxu0
        %v3306 = vadd.f32 %v3099, %v3305
        %v3307 = vpop.f32.mrb[0].mxu0
        %3308 = vmatprep.mubr.bf16.mxu0 0
        %3309 = vmatmul.mubr.bf16.gmra.mrb[0].mxu0 %v3154
        %v3310 = vpop.f32.mrb[0].mxu0
        %v3311 = vadd.f32 %v3099, %v3310
        %v3312 = vpop.f32.mrb[0].mxu0
        %v3313 = vpop.f32.mrb[0].mxu0
        %v3314 = vadd.f32 %v3099, %v3313
        %v3315 = vpop.f32.mrb[0].mxu0
        %3316 = vdwg.mxu0
        %v3317 = vmax.f32 %v3191, 0.0
        %v3318 = vmax.f32 %v3194, 0.0
        %v3319 = vmax.f32 %v3199, 0.0
        %v3320 = vmax.f32 %v3202, 0.0
        %v3321 = vmax.f32 %v3207, 0.0
        %v3322 = vmax.f32 %v3210, 0.0
        %v3323 = vmax.f32 %v3215, 0.0
        %v3324 = vmax.f32 %v3218, 0.0
        %v3325 = vmax.f32 %v3223, 0.0
        %v3326 = vmax.f32 %v3226, 0.0
        %v3327 = vmax.f32 %v3231, 0.0
        %v3328 = vmax.f32 %v3234, 0.0
        %v3329 = vmax.f32 %v3239, 0.0
        %v3330 = vmax.f32 %v3242, 0.0
        %v3331 = vmax.f32 %v3247, 0.0
        %v3332 = vmax.f32 %v3250, 0.0
        %v3333 = vmax.f32 %v3255, 0.0
        %v3334 = vmax.f32 %v3258, 0.0
        %v3335 = vmax.f32 %v3263, 0.0
        %v3336 = vmax.f32 %v3266, 0.0
        %v3337 = vmax.f32 %v3271, 0.0
        %v3338 = vmax.f32 %v3274, 0.0
        %v3339 = vmax.f32 %v3279, 0.0
        %v3340 = vmax.f32 %v3282, 0.0
        %v3341 = vmax.f32 %v3287, 0.0
        %v3342 = vmax.f32 %v3290, 0.0
        %v3343 = vmax.f32 %v3295, 0.0
        %v3344 = vmax.f32 %v3298, 0.0
        %v3345 = vmax.f32 %v3303, 0.0
        %v3346 = vmax.f32 %v3306, 0.0
        %v3347 = vmax.f32 %v3311, 0.0
        %v3348 = vmax.f32 %v3314, 0.0
        %v3349 = vpack.c.bf16 %v3318, %v3317
        %v3350 = vpack.c.bf16 %v3320, %v3319
        %v3351 = vpack.c.bf16 %v3322, %v3321
        %v3352 = vpack.c.bf16 %v3324, %v3323
        %v3353 = vpack.c.bf16 %v3326, %v3325
        %v3354 = vpack.c.bf16 %v3328, %v3327
        %v3355 = vpack.c.bf16 %v3330, %v3329
        %v3356 = vpack.c.bf16 %v3332, %v3331
        %v3357 = vpack.c.bf16 %v3334, %v3333
        %v3358 = vpack.c.bf16 %v3336, %v3335
        %v3359 = vpack.c.bf16 %v3338, %v3337
        %v3360 = vpack.c.bf16 %v3340, %v3339
        %v3361 = vpack.c.bf16 %v3342, %v3341
        %v3362 = vpack.c.bf16 %v3344, %v3343
        %v3363 = vpack.c.bf16 %v3346, %v3345
        %v3364 = vpack.c.bf16 %v3348, %v3347
        %v3381 = vunpack.c.l.b16 %v3349
        %v3382 = vunpack.c.h.b16 %v3349
        %v3383 = vunpack.c.l.b16 %v3350
        %v3384 = vunpack.c.h.b16 %v3350
        %v3385 = vunpack.c.l.b16 %v3351
        %v3386 = vunpack.c.h.b16 %v3351
        %v3387 = vunpack.c.l.b16 %v3352
        %v3388 = vunpack.c.h.b16 %v3352
        %v3389 = vunpack.c.l.b16 %v3353
        %v3390 = vunpack.c.h.b16 %v3353
        %v3391 = vunpack.c.l.b16 %v3354
        %v3392 = vunpack.c.h.b16 %v3354
        %v3393 = vunpack.c.l.b16 %v3355
        %v3394 = vunpack.c.h.b16 %v3355
        %v3395 = vunpack.c.l.b16 %v3356
        %v3396 = vunpack.c.h.b16 %v3356
        %v3397 = vunpack.c.l.b16 %v3357
        %v3398 = vunpack.c.h.b16 %v3357
        %v3399 = vunpack.c.l.b16 %v3358
        %v3400 = vunpack.c.h.b16 %v3358
        %v3401 = vunpack.c.l.b16 %v3359
        %v3402 = vunpack.c.h.b16 %v3359
        %v3403 = vunpack.c.l.b16 %v3360
        %v3404 = vunpack.c.h.b16 %v3360
        %v3405 = vunpack.c.l.b16 %v3361
        %v3406 = vunpack.c.h.b16 %v3361
        %v3407 = vunpack.c.l.b16 %v3362
        %v3408 = vunpack.c.h.b16 %v3362
        %v3409 = vunpack.c.l.b16 %v3363
        %v3410 = vunpack.c.h.b16 %v3363
        %v3411 = vunpack.c.l.b16 %v3364
        %v3412 = vunpack.c.h.b16 %v3364
        %v3413 = vpack.c.b16 %v3381, %v3381
        %v3414 = vpack.c.b16 %v3382, %v3382
        %v3415 = vpack.c.b16 %v3383, %v3383
        %v3416 = vpack.c.b16 %v3384, %v3384
        %v3417 = vpack.c.b16 %v3385, %v3385
        %v3418 = vpack.c.b16 %v3386, %v3386
        %v3419 = vpack.c.b16 %v3387, %v3387
        %v3420 = vpack.c.b16 %v3388, %v3388
        %v3421 = vpack.c.b16 %v3389, %v3389
        %v3422 = vpack.c.b16 %v3390, %v3390
        %v3423 = vpack.c.b16 %v3391, %v3391
        %v3424 = vpack.c.b16 %v3392, %v3392
        %v3425 = vpack.c.b16 %v3393, %v3393
        %v3426 = vpack.c.b16 %v3394, %v3394
        %v3427 = vpack.c.b16 %v3395, %v3395
        %v3428 = vpack.c.b16 %v3396, %v3396
        %v3429 = vpack.c.b16 %v3397, %v3397
        %v3430 = vpack.c.b16 %v3398, %v3398
        %v3431 = vpack.c.b16 %v3399, %v3399
        %v3432 = vpack.c.b16 %v3400, %v3400
        %v3433 = vpack.c.b16 %v3401, %v3401
        %v3434 = vpack.c.b16 %v3402, %v3402
        %v3435 = vpack.c.b16 %v3403, %v3403
        %v3436 = vpack.c.b16 %v3404, %v3404
        %v3437 = vpack.c.b16 %v3405, %v3405
        %v3438 = vpack.c.b16 %v3406, %v3406
        %v3439 = vpack.c.b16 %v3407, %v3407
        %v3440 = vpack.c.b16 %v3408, %v3408
        %v3441 = vpack.c.b16 %v3409, %v3409
        %v3442 = vpack.c.b16 %v3410, %v3410
        %v3443 = vpack.c.b16 %v3411, %v3411
        %v3444 = vpack.c.b16 %v3412, %v3412
        %vm3477 = vcmask 257024
        %3478 = vst.msk [vmem:[%s389] sm:$0xf] %vm3477, %v3413
        %3479 = vst.msk [vmem:[%s389 + $0x4] sm:$0xf] %vm3477, %v3414
        %3480 = vst.msk [vmem:[%s389 + $0x8] sm:$0xf] %vm3477, %v3415
        %3481 = vst.msk [vmem:[%s389 + $0xc] sm:$0xf] %vm3477, %v3416
        %3482 = vst.msk [vmem:[%s389 + $0x10] sm:$0xf] %vm3477, %v3417
        %3483 = vst.msk [vmem:[%s389 + $0x14] sm:$0xf] %vm3477, %v3418
        %3484 = vst.msk [vmem:[%s389 + $0x18] sm:$0xf] %vm3477, %v3419
        %3485 = vst.msk [vmem:[%s389 + $0x1c] sm:$0xf] %vm3477, %v3420
        %3486 = vst.msk [vmem:[%s389 + $0x20] sm:$0xf] %vm3477, %v3421
        %3487 = vst.msk [vmem:[%s389 + $0x24] sm:$0xf] %vm3477, %v3422
        %3488 = vst.msk [vmem:[%s389 + $0x28] sm:$0xf] %vm3477, %v3423
        %3489 = vst.msk [vmem:[%s389 + $0x2c] sm:$0xf] %vm3477, %v3424
        %3490 = vst.msk [vmem:[%s389 + $0x30] sm:$0xf] %vm3477, %v3425
        %3491 = vst.msk [vmem:[%s389 + $0x34] sm:$0xf] %vm3477, %v3426
        %3492 = vst.msk [vmem:[%s389 + $0x38] sm:$0xf] %vm3477, %v3427
        %3493 = vst.msk [vmem:[%s389 + $0x3c] sm:$0xf] %vm3477, %v3428
        %3494 = vst.msk [vmem:[%s389 + $0x40] sm:$0xf] %vm3477, %v3429
        %3495 = vst.msk [vmem:[%s389 + $0x44] sm:$0xf] %vm3477, %v3430
        %3496 = vst.msk [vmem:[%s389 + $0x48] sm:$0xf] %vm3477, %v3431
        %3497 = vst.msk [vmem:[%s389 + $0x4c] sm:$0xf] %vm3477, %v3432
        %3498 = vst.msk [vmem:[%s389 + $0x50] sm:$0xf] %vm3477, %v3433
        %3499 = vst.msk [vmem:[%s389 + $0x54] sm:$0xf] %vm3477, %v3434
        %3500 = vst.msk [vmem:[%s389 + $0x58] sm:$0xf] %vm3477, %v3435
        %3501 = vst.msk [vmem:[%s389 + $0x5c] sm:$0xf] %vm3477, %v3436
        %3502 = vst.msk [vmem:[%s389 + $0x60] sm:$0xf] %vm3477, %v3437
        %3503 = vst.msk [vmem:[%s389 + $0x64] sm:$0xf] %vm3477, %v3438
        %3504 = vst.msk [vmem:[%s389 + $0x68] sm:$0xf] %vm3477, %v3439
        %3505 = vst.msk [vmem:[%s389 + $0x6c] sm:$0xf] %vm3477, %v3440
        %3506 = vst.msk [vmem:[%s389 + $0x70] sm:$0xf] %vm3477, %v3441
        %3507 = vst.msk [vmem:[%s389 + $0x74] sm:$0xf] %vm3477, %v3442
        %3508 = vst.msk [vmem:[%s389 + $0x78] sm:$0xf] %vm3477, %v3443
        %3509 = vst.msk [vmem:[%s389 + $0x7c] sm:$0xf] %vm3477, %v3444
        %s3510 = smul.u32 32, %s23
        %p3511 = scmp.lt.s32.totalorder %s3510, 63
        %s3512 = scalar_select %p3511, %s3510, 63
        %s3513 = smul.addr %s3512, 4
        %s3514 = scalar_lea.vmem %s8, %s3513
        // Predicated region
        $region77: #{mobilenet_forward.2} parent=51 // pred_check
          %p3515 = pneg %p214
        $region78: #{mobilenet_forward.2} parent=51 // pred_check_branch
          %3517 = sbr.rel (%p3515) target = $region80
        $region79: #{mobilenet_forward.2} parent=51 // pred_region
          %s3518 = smul.u32 32, %s23
        $region80: #{mobilenet_forward.2} parent=51 // pred_fallthru
          _
      $region52: #{mobilenet_forward.2} parent=5 // pred_fallthru
        _
      %p3519 = scmp.le.s32.totalorder 2, %s18
      // Predicated region
      $region81: #{mobilenet_forward.2} parent=5 // pred_check
        %p3520 = pneg %p3519
      $region82: #{mobilenet_forward.2} parent=5 // pred_check_branch
        %3522 = sbr.rel (%p3520) target = $region84
      $region83: #{mobilenet_forward.2} parent=5 // pred_region
        %s3523 = ssub.s32 %s18, 2
        // Predicated region
        $region85: #{mobilenet_forward.2} parent=83 // pred_check
          %p3524 = pneg %p220
        $region86: #{mobilenet_forward.2} parent=83 // pred_check_branch
          %3526 = sbr.rel (%p3524) target = $region88
        $region87: #{mobilenet_forward.2} parent=83 // pred_region
          %s3527 = smul.u32 32, %s24
          %p3528 = scmp.lt.s32.totalorder %s3527, 63
          %s3529 = scalar_select %p3528, %s3527, 63
          %s3530 = smul.addr %s3529, 4
          %s3531 = scalar_lea.vmem %s8, %s3530
        $region88: #{mobilenet_forward.2} parent=83 // pred_fallthru
          _
      $region84: #{mobilenet_forward.2} parent=5 // pred_fallthru
        _
    $region6: #{mobilenet_forward.2} parent=1 // loop_footer
      %s22 = sadd.s32 1, %s18
    $region7: #{mobilenet_forward.2} parent=1 // loop_footer_branch
      %17 = sbr.rel target = $region3
    $region8: #{mobilenet_forward.2} parent=1 // loop_exit
      _
    %3532 = vsyncpa [#allocation3], 1
    %s3533 = scalar_lea.sflag [#allocation3], 1
    %3534 = vsyncpa %s3533, 1
    %3535 = vsyncpa [#allocation5], 1
    %3536 = vsyncpa [#allocation8], 1
    %3537 = vsyncpa [#allocation11], 1

// kernel: mobilenet_forward.3
$region0: #{mobilenet_forward.3}
  #allocation0 [shape = 'u32[]', space=smem, size = 0x4, offset = 0x4, fixed_abs, tag = 'smem constant byte address 0x4 - core index']
  #allocation1 [shape = 'u32[144,128]{1,0:T(1,128)}', space=vmem, size = 0x12000, scoped, tag = 'internal scratch']
  %s0 = inlined_call_operand.vmem [shape: bf16[8,8192], index: 0, kind: input, shape index: {}]
  %s1 = inlined_call_operand.hbm [shape: bf16[8192,128], index: 1, kind: input, shape index: {}]
  %s2 = inlined_call_operand.hbm [shape: f32[1,128], index: 2, kind: input, shape index: {}]
  %s3 = inlined_call_operand.vmem [shape: f32[8,128], index: 3, kind: output, shape index: {}]
  %s4 = sld [smem:[#allocation0]]
  $region30: #{mobilenet_forward.3} parent=0
    _
  %s6 = ssub.s32 1, %s4
  %s7 = scalar_select 0, %s6, %s4
  $region1: #{mobilenet_forward.3} parent=0
    #allocation2 [shape = 'u8[2097152]{0}', space=vmem, size = 0x200000, scoped, tag = 'input window, operand 1, single buffered']
    #allocation3 [shape = 's32[1]{0}', space=sflag, size = 0x4, scoped, tag = 'scoped memory for mobilenet_forward.3']
    #allocation4 [shape = 'u8[512]{0}', space=vmem, size = 0x400, scoped, tag = 'input window, operand 2, single buffered']
    #allocation5 [shape = 's32[1]{0}', space=sflag, size = 0x4, scoped, tag = 'scoped memory for mobilenet_forward.3']
    %8 = vsyncpa [#allocation3], 0
    %9 = vsyncpa [#allocation5], 0
    // Predicated region
    $region2: #{mobilenet_forward.3} parent=1 // pred_check
      _
    $region3: #{mobilenet_forward.3} parent=1 // pred_check_branch
      %11 = sbr.rel (0) target = $region5
    $region4: #{mobilenet_forward.3} parent=1 // pred_region
      _
    $region5: #{mobilenet_forward.3} parent=1 // pred_fallthru
      _
    // Predicated region
    $region6: #{mobilenet_forward.3} parent=1 // pred_check
      _
    $region7: #{mobilenet_forward.3} parent=1 // pred_check_branch
      %13 = sbr.rel (0) target = $region9
    $region8: #{mobilenet_forward.3} parent=1 // pred_region
      %s15 = ssub.s32 65536, 65536
      %16 = vsyncadd [#allocation3], %s15
      %s17 = sshll.u32 [#allocation2], 4
      %s18 = int_to_ptr.vmem [resolvable:$true] %s17
      %23 = dma.hbm_to_vmem [thread:$0]  %s1, 65536, %s18, [#allocation3], 64, 64, 4
    $region9: #{mobilenet_forward.3} parent=1 // pred_fallthru
      _
    // Predicated region
    $region10: #{mobilenet_forward.3} parent=1 // pred_check
      _
    $region11: #{mobilenet_forward.3} parent=1 // pred_check_branch
      %25 = sbr.rel (0) target = $region13
    $region12: #{mobilenet_forward.3} parent=1 // pred_region
      %s27 = ssub.s32 16, 16
      %28 = vsyncadd [#allocation5], %s27
      %s30 = sshll.u32 [#allocation4], 4
      %s31 = int_to_ptr.vmem [resolvable:$true] %s30
      %33 = dma.hbm_to_vmem [thread:$0]  %s2, 16, %s31, [#allocation5]
    $region13: #{mobilenet_forward.3} parent=1 // pred_fallthru
      _
    // Predicated region
    $region14: #{mobilenet_forward.3} parent=1 // pred_check
      _
    $region15: #{mobilenet_forward.3} parent=1 // pred_check_branch
      %35 = sbr.rel (0) target = $region17
    $region16: #{mobilenet_forward.3} parent=1 // pred_region
      %36 = dma.done [#allocation3], 65536
    $region17: #{mobilenet_forward.3} parent=1 // pred_fallthru
      _
    // Predicated region
    $region18: #{mobilenet_forward.3} parent=1 // pred_check
      _
    $region19: #{mobilenet_forward.3} parent=1 // pred_check_branch
      %38 = sbr.rel (0) target = $region21
    $region20: #{mobilenet_forward.3} parent=1 // pred_region
      %39 = dma.done [#allocation5], 16
    $region21: #{mobilenet_forward.3} parent=1 // pred_fallthru
      _
    %v41 = vld [vmem:[%s0] sm:$0xff]
    %v42 = vld [vmem:[%s0 + $0x8] sm:$0xff]
    %v43 = vld [vmem:[%s0 + $0x10] sm:$0xff]
    %v44 = vld [vmem:[%s0 + $0x18] sm:$0xff]
    %v45 = vld [vmem:[%s0 + $0x20] sm:$0xff]
    %v46 = vld [vmem:[%s0 + $0x28] sm:$0xff]
    %v47 = vld [vmem:[%s0 + $0x30] sm:$0xff]
    %v48 = vld [vmem:[%s0 + $0x38] sm:$0xff]
    %v49 = vld [vmem:[%s0 + $0x40] sm:$0xff]
    %v50 = vld [vmem:[%s0 + $0x48] sm:$0xff]
    %v51 = vld [vmem:[%s0 + $0x50] sm:$0xff]
    %v52 = vld [vmem:[%s0 + $0x58] sm:$0xff]
    %v53 = vld [vmem:[%s0 + $0x60] sm:$0xff]
    %v54 = vld [vmem:[%s0 + $0x68] sm:$0xff]
    %v55 = vld [vmem:[%s0 + $0x70] sm:$0xff]
    %v56 = vld [vmem:[%s0 + $0x78] sm:$0xff]
    %v57 = vld [vmem:[%s0 + $0x80] sm:$0xff]
    %v58 = vld [vmem:[%s0 + $0x88] sm:$0xff]
    %v59 = vld [vmem:[%s0 + $0x90] sm:$0xff]
    %v60 = vld [vmem:[%s0 + $0x98] sm:$0xff]
    %v61 = vld [vmem:[%s0 + $0xa0] sm:$0xff]
    %v62 = vld [vmem:[%s0 + $0xa8] sm:$0xff]
    %v63 = vld [vmem:[%s0 + $0xb0] sm:$0xff]
    %v64 = vld [vmem:[%s0 + $0xb8] sm:$0xff]
    %v65 = vld [vmem:[%s0 + $0xc0] sm:$0xff]
    %v66 = vld [vmem:[%s0 + $0xc8] sm:$0xff]
    %v67 = vld [vmem:[%s0 + $0xd0] sm:$0xff]
    %v68 = vld [vmem:[%s0 + $0xd8] sm:$0xff]
    %v69 = vld [vmem:[%s0 + $0xe0] sm:$0xff]
    %v70 = vld [vmem:[%s0 + $0xe8] sm:$0xff]
    %v71 = vld [vmem:[%s0 + $0xf0] sm:$0xff]
    %v72 = vld [vmem:[%s0 + $0xf8] sm:$0xff]
    %v73 = vld [vmem:[#allocation2] sm:$0xf]
    %v74 = vld [vmem:[#allocation2 + $0x4] sm:$0xf]
    %v75 = vld [vmem:[#allocation2 + $0x8] sm:$0xf]
    %v76 = vld [vmem:[#allocation2 + $0xc] sm:$0xf]
    %v77 = vld [vmem:[#allocation2 + $0x10] sm:$0xf]
    %v78 = vld [vmem:[#allocation2 + $0x14] sm:$0xf]
    %v79 = vld [vmem:[#allocation2 + $0x18] sm:$0xf]
    %v80 = vld [vmem:[#allocation2 + $0x1c] sm:$0xf]
    %v81 = vld [vmem:[#allocation2 + $0x20] sm:$0xf]
    %v82 = vld [vmem:[#allocation2 + $0x24] sm:$0xf]
    %v83 = vld [vmem:[#allocation2 + $0x28] sm:$0xf]
    %v84 = vld [vmem:[#allocation2 + $0x2c] sm:$0xf]
    %v85 = vld [vmem:[#allocation2 + $0x30] sm:$0xf]
    %v86 = vld [vmem:[#allocation2 + $0x34] sm:$0xf]
    %v87 = vld [vmem:[#allocation2 + $0x38] sm:$0xf]
    %v88 = vld [vmem:[#allocation2 + $0x3c] sm:$0xf]
    %v89 = vld [vmem:[#allocation2 + $0x40] sm:$0xf]
    %v90 = vld [vmem:[#allocation2 + $0x44] sm:$0xf]
    %v91 = vld [vmem:[#allocation2 + $0x48] sm:$0xf]
    %v92 = vld [vmem:[#allocation2 + $0x4c] sm:$0xf]
    %v93 = vld [vmem:[#allocation2 + $0x50] sm:$0xf]
    %v94 = vld [vmem:[#allocation2 + $0x54] sm:$0xf]
    %v95 = vld [vmem:[#allocation2 + $0x58] sm:$0xf]
    %v96 = vld [vmem:[#allocation2 + $0x5c] sm:$0xf]
    %v97 = vld [vmem:[#allocation2 + $0x60] sm:$0xf]
    %v98 = vld [vmem:[#allocation2 + $0x64] sm:$0xf]
    %v99 = vld [vmem:[#allocation2 + $0x68] sm:$0xf]
    %v100 = vld [vmem:[#allocation2 + $0x6c] sm:$0xf]
    %v101 = vld [vmem:[#allocation2 + $0x70] sm:$0xf]
    %v102 = vld [vmem:[#allocation2 + $0x74] sm:$0xf]
    %v103 = vld [vmem:[#allocation2 + $0x78] sm:$0xf]
    %v104 = vld [vmem:[#allocation2 + $0x7c] sm:$0xf]
    %v105 = vld [vmem:[#allocation2 + $0x80] sm:$0xf]
    %v106 = vld [vmem:[#allocation2 + $0x84] sm:$0xf]
    %v107 = vld [vmem:[#allocation2 + $0x88] sm:$0xf]
    %v108 = vld [vmem:[#allocation2 + $0x8c] sm:$0xf]
    %v109 = vld [vmem:[#allocation2 + $0x90] sm:$0xf]
    %v110 = vld [vmem:[#allocation2 + $0x94] sm:$0xf]
    %v111 = vld [vmem:[#allocation2 + $0x98] sm:$0xf]
    %v112 = vld [vmem:[#allocation2 + $0x9c] sm:$0xf]
    %v113 = vld [vmem:[#allocation2 + $0xa0] sm:$0xf]
    %v114 = vld [vmem:[#allocation2 + $0xa4] sm:$0xf]
    %v115 = vld [vmem:[#allocation2 + $0xa8] sm:$0xf]
    %v116 = vld [vmem:[#allocation2 + $0xac] sm:$0xf]
    %v117 = vld [vmem:[#allocation2 + $0xb0] sm:$0xf]
    %v118 = vld [vmem:[#allocation2 + $0xb4] sm:$0xf]
    %v119 = vld [vmem:[#allocation2 + $0xb8] sm:$0xf]
    %v120 = vld [vmem:[#allocation2 + $0xbc] sm:$0xf]
    %v121 = vld [vmem:[#allocation2 + $0xc0] sm:$0xf]
    %v122 = vld [vmem:[#allocation2 + $0xc4] sm:$0xf]
    %v123 = vld [vmem:[#allocation2 + $0xc8] sm:$0xf]
    %v124 = vld [vmem:[#allocation2 + $0xcc] sm:$0xf]
    %v125 = vld [vmem:[#allocation2 + $0xd0] sm:$0xf]
    %v126 = vld [vmem:[#allocation2 + $0xd4] sm:$0xf]
    %v127 = vld [vmem:[#allocation2 + $0xd8] sm:$0xf]
    %v128 = vld [vmem:[#allocation2 + $0xdc] sm:$0xf]
    %v129 = vld [vmem:[#allocation2 + $0xe0] sm:$0xf]
    %v130 = vld [vmem:[#allocation2 + $0xe4] sm:$0xf]
    %v131 = vld [vmem:[#allocation2 + $0xe8] sm:$0xf]
    %v132 = vld [vmem:[#allocation2 + $0xec] sm:$0xf]
    %v133 = vld [vmem:[#allocation2 + $0xf0] sm:$0xf]
    %v134 = vld [vmem:[#allocation2 + $0xf4] sm:$0xf]
    %v135 = vld [vmem:[#allocation2 + $0xf8] sm:$0xf]
    %v136 = vld [vmem:[#allocation2 + $0xfc] sm:$0xf]
    %v137 = vld [vmem:[#allocation2 + $0x100] sm:$0xf]
    %v138 = vld [vmem:[#allocation2 + $0x104] sm:$0xf]
    %v139 = vld [vmem:[#allocation2 + $0x108] sm:$0xf]
    %v140 = vld [vmem:[#allocation2 + $0x10c] sm:$0xf]
    %v141 = vld [vmem:[#allocation2 + $0x110] sm:$0xf]
    %v142 = vld [vmem:[#allocation2 + $0x114] sm:$0xf]
    %v143 = vld [vmem:[#allocation2 + $0x118] sm:$0xf]
    %v144 = vld [vmem:[#allocation2 + $0x11c] sm:$0xf]
    %v145 = vld [vmem:[#allocation2 + $0x120] sm:$0xf]
    %v146 = vld [vmem:[#allocation2 + $0x124] sm:$0xf]
    %v147 = vld [vmem:[#allocation2 + $0x128] sm:$0xf]
    %v148 = vld [vmem:[#allocation2 + $0x12c] sm:$0xf]
    %v149 = vld [vmem:[#allocation2 + $0x130] sm:$0xf]
    %v150 = vld [vmem:[#allocation2 + $0x134] sm:$0xf]
    %v151 = vld [vmem:[#allocation2 + $0x138] sm:$0xf]
    %v152 = vld [vmem:[#allocation2 + $0x13c] sm:$0xf]
    %v153 = vld [vmem:[#allocation2 + $0x140] sm:$0xf]
    %v154 = vld [vmem:[#allocation2 + $0x144] sm:$0xf]
    %v155 = vld [vmem:[#allocation2 + $0x148] sm:$0xf]
    %v156 = vld [vmem:[#allocation2 + $0x14c] sm:$0xf]
    %v157 = vld [vmem:[#allocation2 + $0x150] sm:$0xf]
    %v158 = vld [vmem:[#allocation2 + $0x154] sm:$0xf]
    %v159 = vld [vmem:[#allocation2 + $0x158] sm:$0xf]
    %v160 = vld [vmem:[#allocation2 + $0x15c] sm:$0xf]
    %v161 = vld [vmem:[#allocation2 + $0x160] sm:$0xf]
    %v162 = vld [vmem:[#allocation2 + $0x164] sm:$0xf]
    %v163 = vld [vmem:[#allocation2 + $0x168] sm:$0xf]
    %v164 = vld [vmem:[#allocation2 + $0x16c] sm:$0xf]
    %v165 = vld [vmem:[#allocation2 + $0x170] sm:$0xf]
    %v166 = vld [vmem:[#allocation2 + $0x174] sm:$0xf]
    %v167 = vld [vmem:[#allocation2 + $0x178] sm:$0xf]
    %v168 = vld [vmem:[#allocation2 + $0x17c] sm:$0xf]
    %v169 = vld [vmem:[#allocation2 + $0x180] sm:$0xf]
    %v170 = vld [vmem:[#allocation2 + $0x184] sm:$0xf]
    %v171 = vld [vmem:[#allocation2 + $0x188] sm:$0xf]
    %v172 = vld [vmem:[#allocation2 + $0x18c] sm:$0xf]
    %v173 = vld [vmem:[#allocation2 + $0x190] sm:$0xf]
    %v174 = vld [vmem:[#allocation2 + $0x194] sm:$0xf]
    %v175 = vld [vmem:[#allocation2 + $0x198] sm:$0xf]
    %v176 = vld [vmem:[#allocation2 + $0x19c] sm:$0xf]
    %v177 = vld [vmem:[#allocation2 + $0x1a0] sm:$0xf]
    %v178 = vld [vmem:[#allocation2 + $0x1a4] sm:$0xf]
    %v179 = vld [vmem:[#allocation2 + $0x1a8] sm:$0xf]
    %v180 = vld [vmem:[#allocation2 + $0x1ac] sm:$0xf]
    %v181 = vld [vmem:[#allocation2 + $0x1b0] sm:$0xf]
    %v182 = vld [vmem:[#allocation2 + $0x1b4] sm:$0xf]
    %v183 = vld [vmem:[#allocation2 + $0x1b8] sm:$0xf]
    %v184 = vld [vmem:[#allocation2 + $0x1bc] sm:$0xf]
    %v185 = vld [vmem:[#allocation2 + $0x1c0] sm:$0xf]
    %v186 = vld [vmem:[#allocation2 + $0x1c4] sm:$0xf]
    %v187 = vld [vmem:[#allocation2 + $0x1c8] sm:$0xf]
    %v188 = vld [vmem:[#allocation2 + $0x1cc] sm:$0xf]
    %v189 = vld [vmem:[#allocation2 + $0x1d0] sm:$0xf]
    %v190 = vld [vmem:[#allocation2 + $0x1d4] sm:$0xf]
    %v191 = vld [vmem:[#allocation2 + $0x1d8] sm:$0xf]
    %v192 = vld [vmem:[#allocation2 + $0x1dc] sm:$0xf]
    %v193 = vld [vmem:[#allocation2 + $0x1e0] sm:$0xf]
    %v194 = vld [vmem:[#allocation2 + $0x1e4] sm:$0xf]
    %v195 = vld [vmem:[#allocation2 + $0x1e8] sm:$0xf]
    %v196 = vld [vmem:[#allocation2 + $0x1ec] sm:$0xf]
    %v197 = vld [vmem:[#allocation2 + $0x1f0] sm:$0xf]
    %v198 = vld [vmem:[#allocation2 + $0x1f4] sm:$0xf]
    %v199 = vld [vmem:[#allocation2 + $0x1f8] sm:$0xf]
    %v200 = vld [vmem:[#allocation2 + $0x1fc] sm:$0xf]
    %v201 = vld [vmem:[#allocation2 + $0x200] sm:$0xf]
    %v202 = vld [vmem:[#allocation2 + $0x204] sm:$0xf]
    %v203 = vld [vmem:[#allocation2 + $0x208] sm:$0xf]
    %v204 = vld [vmem:[#allocation2 + $0x20c] sm:$0xf]
    %v205 = vld [vmem:[#allocation2 + $0x210] sm:$0xf]
    %v206 = vld [vmem:[#allocation2 + $0x214] sm:$0xf]
    %v207 = vld [vmem:[#allocation2 + $0x218] sm:$0xf]
    %v208 = vld [vmem:[#allocation2 + $0x21c] sm:$0xf]
    %v209 = vld [vmem:[#allocation2 + $0x220] sm:$0xf]
    %v210 = vld [vmem:[#allocation2 + $0x224] sm:$0xf]
    %v211 = vld [vmem:[#allocation2 + $0x228] sm:$0xf]
    %v212 = vld [vmem:[#allocation2 + $0x22c] sm:$0xf]
    %v213 = vld [vmem:[#allocation2 + $0x230] sm:$0xf]
    %v214 = vld [vmem:[#allocation2 + $0x234] sm:$0xf]
    %v215 = vld [vmem:[#allocation2 + $0x238] sm:$0xf]
    %v216 = vld [vmem:[#allocation2 + $0x23c] sm:$0xf]
    %v217 = vld [vmem:[#allocation2 + $0x240] sm:$0xf]
    %v218 = vld [vmem:[#allocation2 + $0x244] sm:$0xf]
    %v219 = vld [vmem:[#allocation2 + $0x248] sm:$0xf]
    %v220 = vld [vmem:[#allocation2 + $0x24c] sm:$0xf]
    %v221 = vld [vmem:[#allocation2 + $0x250] sm:$0xf]
    %v222 = vld [vmem:[#allocation2 + $0x254] sm:$0xf]
    %v223 = vld [vmem:[#allocation2 + $0x258] sm:$0xf]
    %v224 = vld [vmem:[#allocation2 + $0x25c] sm:$0xf]
    %v225 = vld [vmem:[#allocation2 + $0x260] sm:$0xf]
    %v226 = vld [vmem:[#allocation2 + $0x264] sm:$0xf]
    %v227 = vld [vmem:[#allocation2 + $0x268] sm:$0xf]
    %v228 = vld [vmem:[#allocation2 + $0x26c] sm:$0xf]
    %v229 = vld [vmem:[#allocation2 + $0x270] sm:$0xf]
    %v230 = vld [vmem:[#allocation2 + $0x274] sm:$0xf]
    %v231 = vld [vmem:[#allocation2 + $0x278] sm:$0xf]
    %v232 = vld [vmem:[#allocation2 + $0x27c] sm:$0xf]
    %v233 = vld [vmem:[#allocation2 + $0x280] sm:$0xf]
    %v234 = vld [vmem:[#allocation2 + $0x284] sm:$0xf]
    %v235 = vld [vmem:[#allocation2 + $0x288] sm:$0xf]
    %v236 = vld [vmem:[#allocation2 + $0x28c] sm:$0xf]
    %v237 = vld [vmem:[#allocation2 + $0x290] sm:$0xf]
    %v238 = vld [vmem:[#allocation2 + $0x294] sm:$0xf]
    %v239 = vld [vmem:[#allocation2 + $0x298] sm:$0xf]
    %v240 = vld [vmem:[#allocation2 + $0x29c] sm:$0xf]
    %v241 = vld [vmem:[#allocation2 + $0x2a0] sm:$0xf]
    %v242 = vld [vmem:[#allocation2 + $0x2a4] sm:$0xf]
    %v243 = vld [vmem:[#allocation2 + $0x2a8] sm:$0xf]
    %v244 = vld [vmem:[#allocation2 + $0x2ac] sm:$0xf]
    %v245 = vld [vmem:[#allocation2 + $0x2b0] sm:$0xf]
    %v246 = vld [vmem:[#allocation2 + $0x2b4] sm:$0xf]
    %v247 = vld [vmem:[#allocation2 + $0x2b8] sm:$0xf]
    %v248 = vld [vmem:[#allocation2 + $0x2bc] sm:$0xf]
    %v249 = vld [vmem:[#allocation2 + $0x2c0] sm:$0xf]
    %v250 = vld [vmem:[#allocation2 + $0x2c4] sm:$0xf]
    %v251 = vld [vmem:[#allocation2 + $0x2c8] sm:$0xf]
    %v252 = vld [vmem:[#allocation2 + $0x2cc] sm:$0xf]
    %v253 = vld [vmem:[#allocation2 + $0x2d0] sm:$0xf]
    %v254 = vld [vmem:[#allocation2 + $0x2d4] sm:$0xf]
    %v255 = vld [vmem:[#allocation2 + $0x2d8] sm:$0xf]
    %v256 = vld [vmem:[#allocation2 + $0x2dc] sm:$0xf]
    %v257 = vld [vmem:[#allocation2 + $0x2e0] sm:$0xf]
    %v258 = vld [vmem:[#allocation2 + $0x2e4] sm:$0xf]
    %v259 = vld [vmem:[#allocation2 + $0x2e8] sm:$0xf]
    %v260 = vld [vmem:[#allocation2 + $0x2ec] sm:$0xf]
    %v261 = vld [vmem:[#allocation2 + $0x2f0] sm:$0xf]
    %v262 = vld [vmem:[#allocation2 + $0x2f4] sm:$0xf]
    %v263 = vld [vmem:[#allocation2 + $0x2f8] sm:$0xf]
    %v264 = vld [vmem:[#allocation2 + $0x2fc] sm:$0xf]
    %v265 = vld [vmem:[#allocation2 + $0x300] sm:$0xf]
    %v266 = vld [vmem:[#allocation2 + $0x304] sm:$0xf]
    %v267 = vld [vmem:[#allocation2 + $0x308] sm:$0xf]
    %v268 = vld [vmem:[#allocation2 + $0x30c] sm:$0xf]
    %v269 = vld [vmem:[#allocation2 + $0x310] sm:$0xf]
    %v270 = vld [vmem:[#allocation2 + $0x314] sm:$0xf]
    %v271 = vld [vmem:[#allocation2 + $0x318] sm:$0xf]
    %v272 = vld [vmem:[#allocation2 + $0x31c] sm:$0xf]
    %v273 = vld [vmem:[#allocation2 + $0x320] sm:$0xf]
    %v274 = vld [vmem:[#allocation2 + $0x324] sm:$0xf]
    %v275 = vld [vmem:[#allocation2 + $0x328] sm:$0xf]
    %v276 = vld [vmem:[#allocation2 + $0x32c] sm:$0xf]
    %v277 = vld [vmem:[#allocation2 + $0x330] sm:$0xf]
    %v278 = vld [vmem:[#allocation2 + $0x334] sm:$0xf]
    %v279 = vld [vmem:[#allocation2 + $0x338] sm:$0xf]
    %v280 = vld [vmem:[#allocation2 + $0x33c] sm:$0xf]
    %v281 = vld [vmem:[#allocation2 + $0x340] sm:$0xf]
    %v282 = vld [vmem:[#allocation2 + $0x344] sm:$0xf]
    %v283 = vld [vmem:[#allocation2 + $0x348] sm:$0xf]
    %v284 = vld [vmem:[#allocation2 + $0x34c] sm:$0xf]
    %v285 = vld [vmem:[#allocation2 + $0x350] sm:$0xf]
    %v286 = vld [vmem:[#allocation2 + $0x354] sm:$0xf]
    %v287 = vld [vmem:[#allocation2 + $0x358] sm:$0xf]
    %v288 = vld [vmem:[#allocation2 + $0x35c] sm:$0xf]
    %v289 = vld [vmem:[#allocation2 + $0x360] sm:$0xf]
    %v290 = vld [vmem:[#allocation2 + $0x364] sm:$0xf]
    %v291 = vld [vmem:[#allocation2 + $0x368] sm:$0xf]
    %v292 = vld [vmem:[#allocation2 + $0x36c] sm:$0xf]
    %v293 = vld [vmem:[#allocation2 + $0x370] sm:$0xf]
    %v294 = vld [vmem:[#allocation2 + $0x374] sm:$0xf]
    %v295 = vld [vmem:[#allocation2 + $0x378] sm:$0xf]
    %v296 = vld [vmem:[#allocation2 + $0x37c] sm:$0xf]
    %v297 = vld [vmem:[#allocation2 + $0x380] sm:$0xf]
    %v298 = vld [vmem:[#allocation2 + $0x384] sm:$0xf]
    %v299 = vld [vmem:[#allocation2 + $0x388] sm:$0xf]
    %v300 = vld [vmem:[#allocation2 + $0x38c] sm:$0xf]
    %v301 = vld [vmem:[#allocation2 + $0x390] sm:$0xf]
    %v302 = vld [vmem:[#allocation2 + $0x394] sm:$0xf]
    %v303 = vld [vmem:[#allocation2 + $0x398] sm:$0xf]
    %v304 = vld [vmem:[#allocation2 + $0x39c] sm:$0xf]
    %v305 = vld [vmem:[#allocation2 + $0x3a0] sm:$0xf]
    %v306 = vld [vmem:[#allocation2 + $0x3a4] sm:$0xf]
    %v307 = vld [vmem:[#allocation2 + $0x3a8] sm:$0xf]
    %v308 = vld [vmem:[#allocation2 + $0x3ac] sm:$0xf]
    %v309 = vld [vmem:[#allocation2 + $0x3b0] sm:$0xf]
    %v310 = vld [vmem:[#allocation2 + $0x3b4] sm:$0xf]
    %v311 = vld [vmem:[#allocation2 + $0x3b8] sm:$0xf]
    %v312 = vld [vmem:[#allocation2 + $0x3bc] sm:$0xf]
    %v313 = vld [vmem:[#allocation2 + $0x3c0] sm:$0xf]
    %v314 = vld [vmem:[#allocation2 + $0x3c4] sm:$0xf]
    %v315 = vld [vmem:[#allocation2 + $0x3c8] sm:$0xf]
    %v316 = vld [vmem:[#allocation2 + $0x3cc] sm:$0xf]
    %v317 = vld [vmem:[#allocation2 + $0x3d0] sm:$0xf]
    %v318 = vld [vmem:[#allocation2 + $0x3d4] sm:$0xf]
    %v319 = vld [vmem:[#allocation2 + $0x3d8] sm:$0xf]
    %v320 = vld [vmem:[#allocation2 + $0x3dc] sm:$0xf]
    %v321 = vld [vmem:[#allocation2 + $0x3e0] sm:$0xf]
    %v322 = vld [vmem:[#allocation2 + $0x3e4] sm:$0xf]
    %v323 = vld [vmem:[#allocation2 + $0x3e8] sm:$0xf]
    %v324 = vld [vmem:[#allocation2 + $0x3ec] sm:$0xf]
    %v325 = vld [vmem:[#allocation2 + $0x3f0] sm:$0xf]
    %v326 = vld [vmem:[#allocation2 + $0x3f4] sm:$0xf]
    %v327 = vld [vmem:[#allocation2 + $0x3f8] sm:$0xf]
    %v328 = vld [vmem:[#allocation2 + $0x3fc] sm:$0xf]
    %v329 = vld [vmem:[#allocation2 + $0x400] sm:$0xf]
    %v330 = vld [vmem:[#allocation2 + $0x404] sm:$0xf]
    %v331 = vld [vmem:[#allocation2 + $0x408] sm:$0xf]
    %v332 = vld [vmem:[#allocation2 + $0x40c] sm:$0xf]
    %v333 = vld [vmem:[#allocation2 + $0x410] sm:$0xf]
    %v334 = vld [vmem:[#allocation2 + $0x414] sm:$0xf]
    %v335 = vld [vmem:[#allocation2 + $0x418] sm:$0xf]
    %v336 = vld [vmem:[#allocation2 + $0x41c] sm:$0xf]
    %v337 = vld [vmem:[#allocation2 + $0x420] sm:$0xf]
    %v338 = vld [vmem:[#allocation2 + $0x424] sm:$0xf]
    %v339 = vld [vmem:[#allocation2 + $0x428] sm:$0xf]
    %v340 = vld [vmem:[#allocation2 + $0x42c] sm:$0xf]
    %v341 = vld [vmem:[#allocation2 + $0x430] sm:$0xf]
    %v342 = vld [vmem:[#allocation2 + $0x434] sm:$0xf]
    %v343 = vld [vmem:[#allocation2 + $0x438] sm:$0xf]
    %v344 = vld [vmem:[#allocation2 + $0x43c] sm:$0xf]
    %v345 = vld [vmem:[#allocation2 + $0x440] sm:$0xf]
    %v346 = vld [vmem:[#allocation2 + $0x444] sm:$0xf]
    %v347 = vld [vmem:[#allocation2 + $0x448] sm:$0xf]
    %v348 = vld [vmem:[#allocation2 + $0x44c] sm:$0xf]
    %v349 = vld [vmem:[#allocation2 + $0x450] sm:$0xf]
    %v350 = vld [vmem:[#allocation2 + $0x454] sm:$0xf]
    %v351 = vld [vmem:[#allocation2 + $0x458] sm:$0xf]
    %v352 = vld [vmem:[#allocation2 + $0x45c] sm:$0xf]
    %v353 = vld [vmem:[#allocation2 + $0x460] sm:$0xf]
    %v354 = vld [vmem:[#allocation2 + $0x464] sm:$0xf]
    %v355 = vld [vmem:[#allocation2 + $0x468] sm:$0xf]
    %v356 = vld [vmem:[#allocation2 + $0x46c] sm:$0xf]
    %v357 = vld [vmem:[#allocation2 + $0x470] sm:$0xf]
    %v358 = vld [vmem:[#allocation2 + $0x474] sm:$0xf]
    %v359 = vld [vmem:[#allocation2 + $0x478] sm:$0xf]
    %v360 = vld [vmem:[#allocation2 + $0x47c] sm:$0xf]
    %v361 = vld [vmem:[#allocation2 + $0x480] sm:$0xf]
    %v362 = vld [vmem:[#allocation2 + $0x484] sm:$0xf]
    %v363 = vld [vmem:[#allocation2 + $0x488] sm:$0xf]
    %v364 = vld [vmem:[#allocation2 + $0x48c] sm:$0xf]
    %v365 = vld [vmem:[#allocation2 + $0x490] sm:$0xf]
    %v366 = vld [vmem:[#allocation2 + $0x494] sm:$0xf]
    %v367 = vld [vmem:[#allocation2 + $0x498] sm:$0xf]
    %v368 = vld [vmem:[#allocation2 + $0x49c] sm:$0xf]
    %v369 = vld [vmem:[#allocation2 + $0x4a0] sm:$0xf]
    %v370 = vld [vmem:[#allocation2 + $0x4a4] sm:$0xf]
    %v371 = vld [vmem:[#allocation2 + $0x4a8] sm:$0xf]
    %v372 = vld [vmem:[#allocation2 + $0x4ac] sm:$0xf]
    %v373 = vld [vmem:[#allocation2 + $0x4b0] sm:$0xf]
    %v374 = vld [vmem:[#allocation2 + $0x4b4] sm:$0xf]
    %v375 = vld [vmem:[#allocation2 + $0x4b8] sm:$0xf]
    %v376 = vld [vmem:[#allocation2 + $0x4bc] sm:$0xf]
    %v377 = vld [vmem:[#allocation2 + $0x4c0] sm:$0xf]
    %v378 = vld [vmem:[#allocation2 + $0x4c4] sm:$0xf]
    %v379 = vld [vmem:[#allocation2 + $0x4c8] sm:$0xf]
    %v380 = vld [vmem:[#allocation2 + $0x4cc] sm:$0xf]
    %v381 = vld [vmem:[#allocation2 + $0x4d0] sm:$0xf]
    %v382 = vld [vmem:[#allocation2 + $0x4d4] sm:$0xf]
    %v383 = vld [vmem:[#allocation2 + $0x4d8] sm:$0xf]
    %v384 = vld [vmem:[#allocation2 + $0x4dc] sm:$0xf]
    %v385 = vld [vmem:[#allocation2 + $0x4e0] sm:$0xf]
    %v386 = vld [vmem:[#allocation2 + $0x4e4] sm:$0xf]
    %v387 = vld [vmem:[#allocation2 + $0x4e8] sm:$0xf]
    %v388 = vld [vmem:[#allocation2 + $0x4ec] sm:$0xf]
    %v389 = vld [vmem:[#allocation2 + $0x4f0] sm:$0xf]
    %v390 = vld [vmem:[#allocation2 + $0x4f4] sm:$0xf]
    %v391 = vld [vmem:[#allocation2 + $0x4f8] sm:$0xf]
    %v392 = vld [vmem:[#allocation2 + $0x4fc] sm:$0xf]
    %v393 = vld [vmem:[#allocation2 + $0x500] sm:$0xf]
    %v394 = vld [vmem:[#allocation2 + $0x504] sm:$0xf]
    %v395 = vld [vmem:[#allocation2 + $0x508] sm:$0xf]
    %v396 = vld [vmem:[#allocation2 + $0x50c] sm:$0xf]
    %v397 = vld [vmem:[#allocation2 + $0x510] sm:$0xf]
    %v398 = vld [vmem:[#allocation2 + $0x514] sm:$0xf]
    %v399 = vld [vmem:[#allocation2 + $0x518] sm:$0xf]
    %v400 = vld [vmem:[#allocation2 + $0x51c] sm:$0xf]
    %v401 = vld [vmem:[#allocation2 + $0x520] sm:$0xf]
    %v402 = vld [vmem:[#allocation2 + $0x524] sm:$0xf]
    %v403 = vld [vmem:[#allocation2 + $0x528] sm:$0xf]
    %v404 = vld [vmem:[#allocation2 + $0x52c] sm:$0xf]
    %v405 = vld [vmem:[#allocation2 + $0x530] sm:$0xf]
    %v406 = vld [vmem:[#allocation2 + $0x534] sm:$0xf]
    %v407 = vld [vmem:[#allocation2 + $0x538] sm:$0xf]
    %v408 = vld [vmem:[#allocation2 + $0x53c] sm:$0xf]
    %v409 = vld [vmem:[#allocation2 + $0x540] sm:$0xf]
    %v410 = vld [vmem:[#allocation2 + $0x544] sm:$0xf]
    %v411 = vld [vmem:[#allocation2 + $0x548] sm:$0xf]
    %v412 = vld [vmem:[#allocation2 + $0x54c] sm:$0xf]
    %v413 = vld [vmem:[#allocation2 + $0x550] sm:$0xf]
    %v414 = vld [vmem:[#allocation2 + $0x554] sm:$0xf]
    %v415 = vld [vmem:[#allocation2 + $0x558] sm:$0xf]
    %v416 = vld [vmem:[#allocation2 + $0x55c] sm:$0xf]
    %v417 = vld [vmem:[#allocation2 + $0x560] sm:$0xf]
    %v418 = vld [vmem:[#allocation2 + $0x564] sm:$0xf]
    %v419 = vld [vmem:[#allocation2 + $0x568] sm:$0xf]
    %v420 = vld [vmem:[#allocation2 + $0x56c] sm:$0xf]
    %v421 = vld [vmem:[#allocation2 + $0x570] sm:$0xf]
    %v422 = vld [vmem:[#allocation2 + $0x574] sm:$0xf]
    %v423 = vld [vmem:[#allocation2 + $0x578] sm:$0xf]
    %v424 = vld [vmem:[#allocation2 + $0x57c] sm:$0xf]
    %v425 = vld [vmem:[#allocation2 + $0x580] sm:$0xf]
    %v426 = vld [vmem:[#allocation2 + $0x584] sm:$0xf]
    %v427 = vld [vmem:[#allocation2 + $0x588] sm:$0xf]
    %v428 = vld [vmem:[#allocation2 + $0x58c] sm:$0xf]
    %v429 = vld [vmem:[#allocation2 + $0x590] sm:$0xf]
    %v430 = vld [vmem:[#allocation2 + $0x594] sm:$0xf]
    %v431 = vld [vmem:[#allocation2 + $0x598] sm:$0xf]
    %v432 = vld [vmem:[#allocation2 + $0x59c] sm:$0xf]
    %v433 = vld [vmem:[#allocation2 + $0x5a0] sm:$0xf]
    %v434 = vld [vmem:[#allocation2 + $0x5a4] sm:$0xf]
    %v435 = vld [vmem:[#allocation2 + $0x5a8] sm:$0xf]
    %v436 = vld [vmem:[#allocation2 + $0x5ac] sm:$0xf]
    %v437 = vld [vmem:[#allocation2 + $0x5b0] sm:$0xf]
    %v438 = vld [vmem:[#allocation2 + $0x5b4] sm:$0xf]
    %v439 = vld [vmem:[#allocation2 + $0x5b8] sm:$0xf]
    %v440 = vld [vmem:[#allocation2 + $0x5bc] sm:$0xf]
    %v441 = vld [vmem:[#allocation2 + $0x5c0] sm:$0xf]
    %v442 = vld [vmem:[#allocation2 + $0x5c4] sm:$0xf]
    %v443 = vld [vmem:[#allocation2 + $0x5c8] sm:$0xf]
    %v444 = vld [vmem:[#allocation2 + $0x5cc] sm:$0xf]
    %v445 = vld [vmem:[#allocation2 + $0x5d0] sm:$0xf]
    %v446 = vld [vmem:[#allocation2 + $0x5d4] sm:$0xf]
    %v447 = vld [vmem:[#allocation2 + $0x5d8] sm:$0xf]
    %v448 = vld [vmem:[#allocation2 + $0x5dc] sm:$0xf]
    %v449 = vld [vmem:[#allocation2 + $0x5e0] sm:$0xf]
    %v450 = vld [vmem:[#allocation2 + $0x5e4] sm:$0xf]
    %v451 = vld [vmem:[#allocation2 + $0x5e8] sm:$0xf]
    %v452 = vld [vmem:[#allocation2 + $0x5ec] sm:$0xf]
    %v453 = vld [vmem:[#allocation2 + $0x5f0] sm:$0xf]
    %v454 = vld [vmem:[#allocation2 + $0x5f4] sm:$0xf]
    %v455 = vld [vmem:[#allocation2 + $0x5f8] sm:$0xf]
    %v456 = vld [vmem:[#allocation2 + $0x5fc] sm:$0xf]
    %v457 = vld [vmem:[#allocation2 + $0x600] sm:$0xf]
    %v458 = vld [vmem:[#allocation2 + $0x604] sm:$0xf]
    %v459 = vld [vmem:[#allocation2 + $0x608] sm:$0xf]
    %v460 = vld [vmem:[#allocation2 + $0x60c] sm:$0xf]
    %v461 = vld [vmem:[#allocation2 + $0x610] sm:$0xf]
    %v462 = vld [vmem:[#allocation2 + $0x614] sm:$0xf]
    %v463 = vld [vmem:[#allocation2 + $0x618] sm:$0xf]
    %v464 = vld [vmem:[#allocation2 + $0x61c] sm:$0xf]
    %v465 = vld [vmem:[#allocation2 + $0x620] sm:$0xf]
    %v466 = vld [vmem:[#allocation2 + $0x624] sm:$0xf]
    %v467 = vld [vmem:[#allocation2 + $0x628] sm:$0xf]
    %v468 = vld [vmem:[#allocation2 + $0x62c] sm:$0xf]
    %v469 = vld [vmem:[#allocation2 + $0x630] sm:$0xf]
    %v470 = vld [vmem:[#allocation2 + $0x634] sm:$0xf]
    %v471 = vld [vmem:[#allocation2 + $0x638] sm:$0xf]
    %v472 = vld [vmem:[#allocation2 + $0x63c] sm:$0xf]
    %v473 = vld [vmem:[#allocation2 + $0x640] sm:$0xf]
    %v474 = vld [vmem:[#allocation2 + $0x644] sm:$0xf]
    %v475 = vld [vmem:[#allocation2 + $0x648] sm:$0xf]
    %v476 = vld [vmem:[#allocation2 + $0x64c] sm:$0xf]
    %v477 = vld [vmem:[#allocation2 + $0x650] sm:$0xf]
    %v478 = vld [vmem:[#allocation2 + $0x654] sm:$0xf]
    %v479 = vld [vmem:[#allocation2 + $0x658] sm:$0xf]
    %v480 = vld [vmem:[#allocation2 + $0x65c] sm:$0xf]
    %v481 = vld [vmem:[#allocation2 + $0x660] sm:$0xf]
    %v482 = vld [vmem:[#allocation2 + $0x664] sm:$0xf]
    %v483 = vld [vmem:[#allocation2 + $0x668] sm:$0xf]
    %v484 = vld [vmem:[#allocation2 + $0x66c] sm:$0xf]
    %v485 = vld [vmem:[#allocation2 + $0x670] sm:$0xf]
    %v486 = vld [vmem:[#allocation2 + $0x674] sm:$0xf]
    %v487 = vld [vmem:[#allocation2 + $0x678] sm:$0xf]
    %v488 = vld [vmem:[#allocation2 + $0x67c] sm:$0xf]
    %v489 = vld [vmem:[#allocation2 + $0x680] sm:$0xf]
    %v490 = vld [vmem:[#allocation2 + $0x684] sm:$0xf]
    %v491 = vld [vmem:[#allocation2 + $0x688] sm:$0xf]
    %v492 = vld [vmem:[#allocation2 + $0x68c] sm:$0xf]
    %v493 = vld [vmem:[#allocation2 + $0x690] sm:$0xf]
    %v494 = vld [vmem:[#allocation2 + $0x694] sm:$0xf]
    %v495 = vld [vmem:[#allocation2 + $0x698] sm:$0xf]
    %v496 = vld [vmem:[#allocation2 + $0x69c] sm:$0xf]
    %v497 = vld [vmem:[#allocation2 + $0x6a0] sm:$0xf]
    %v498 = vld [vmem:[#allocation2 + $0x6a4] sm:$0xf]
    %v499 = vld [vmem:[#allocation2 + $0x6a8] sm:$0xf]
    %v500 = vld [vmem:[#allocation2 + $0x6ac] sm:$0xf]
    %v501 = vld [vmem:[#allocation2 + $0x6b0] sm:$0xf]
    %v502 = vld [vmem:[#allocation2 + $0x6b4] sm:$0xf]
    %v503 = vld [vmem:[#allocation2 + $0x6b8] sm:$0xf]
    %v504 = vld [vmem:[#allocation2 + $0x6bc] sm:$0xf]
    %v505 = vld [vmem:[#allocation2 + $0x6c0] sm:$0xf]
    %v506 = vld [vmem:[#allocation2 + $0x6c4] sm:$0xf]
    %v507 = vld [vmem:[#allocation2 + $0x6c8] sm:$0xf]
    %v508 = vld [vmem:[#allocation2 + $0x6cc] sm:$0xf]
    %v509 = vld [vmem:[#allocation2 + $0x6d0] sm:$0xf]
    %v510 = vld [vmem:[#allocation2 + $0x6d4] sm:$0xf]
    %v511 = vld [vmem:[#allocation2 + $0x6d8] sm:$0xf]
    %v512 = vld [vmem:[#allocation2 + $0x6dc] sm:$0xf]
    %v513 = vld [vmem:[#allocation2 + $0x6e0] sm:$0xf]
    %v514 = vld [vmem:[#allocation2 + $0x6e4] sm:$0xf]
    %v515 = vld [vmem:[#allocation2 + $0x6e8] sm:$0xf]
    %v516 = vld [vmem:[#allocation2 + $0x6ec] sm:$0xf]
    %v517 = vld [vmem:[#allocation2 + $0x6f0] sm:$0xf]
    %v518 = vld [vmem:[#allocation2 + $0x6f4] sm:$0xf]
    %v519 = vld [vmem:[#allocation2 + $0x6f8] sm:$0xf]
    %v520 = vld [vmem:[#allocation2 + $0x6fc] sm:$0xf]
    %v521 = vld [vmem:[#allocation2 + $0x700] sm:$0xf]
    %v522 = vld [vmem:[#allocation2 + $0x704] sm:$0xf]
    %v523 = vld [vmem:[#allocation2 + $0x708] sm:$0xf]
    %v524 = vld [vmem:[#allocation2 + $0x70c] sm:$0xf]
    %v525 = vld [vmem:[#allocation2 + $0x710] sm:$0xf]
    %v526 = vld [vmem:[#allocation2 + $0x714] sm:$0xf]
    %v527 = vld [vmem:[#allocation2 + $0x718] sm:$0xf]
    %v528 = vld [vmem:[#allocation2 + $0x71c] sm:$0xf]
    %v529 = vld [vmem:[#allocation2 + $0x720] sm:$0xf]
    %v530 = vld [vmem:[#allocation2 + $0x724] sm:$0xf]
    %v531 = vld [vmem:[#allocation2 + $0x728] sm:$0xf]
    %v532 = vld [vmem:[#allocation2 + $0x72c] sm:$0xf]
    %v533 = vld [vmem:[#allocation2 + $0x730] sm:$0xf]
    %v534 = vld [vmem:[#allocation2 + $0x734] sm:$0xf]
    %v535 = vld [vmem:[#allocation2 + $0x738] sm:$0xf]
    %v536 = vld [vmem:[#allocation2 + $0x73c] sm:$0xf]
    %v537 = vld [vmem:[#allocation2 + $0x740] sm:$0xf]
    %v538 = vld [vmem:[#allocation2 + $0x744] sm:$0xf]
    %v539 = vld [vmem:[#allocation2 + $0x748] sm:$0xf]
    %v540 = vld [vmem:[#allocation2 + $0x74c] sm:$0xf]
    %v541 = vld [vmem:[#allocation2 + $0x750] sm:$0xf]
    %v542 = vld [vmem:[#allocation2 + $0x754] sm:$0xf]
    %v543 = vld [vmem:[#allocation2 + $0x758] sm:$0xf]
    %v544 = vld [vmem:[#allocation2 + $0x75c] sm:$0xf]
    %v545 = vld [vmem:[#allocation2 + $0x760] sm:$0xf]
    %v546 = vld [vmem:[#allocation2 + $0x764] sm:$0xf]
    %v547 = vld [vmem:[#allocation2 + $0x768] sm:$0xf]
    %v548 = vld [vmem:[#allocation2 + $0x76c] sm:$0xf]
    %v549 = vld [vmem:[#allocation2 + $0x770] sm:$0xf]
    %v550 = vld [vmem:[#allocation2 + $0x774] sm:$0xf]
    %v551 = vld [vmem:[#allocation2 + $0x778] sm:$0xf]
    %v552 = vld [vmem:[#allocation2 + $0x77c] sm:$0xf]
    %v553 = vld [vmem:[#allocation2 + $0x780] sm:$0xf]
    %v554 = vld [vmem:[#allocation2 + $0x784] sm:$0xf]
    %v555 = vld [vmem:[#allocation2 + $0x788] sm:$0xf]
    %v556 = vld [vmem:[#allocation2 + $0x78c] sm:$0xf]
    %v557 = vld [vmem:[#allocation2 + $0x790] sm:$0xf]
    %v558 = vld [vmem:[#allocation2 + $0x794] sm:$0xf]
    %v559 = vld [vmem:[#allocation2 + $0x798] sm:$0xf]
    %v560 = vld [vmem:[#allocation2 + $0x79c] sm:$0xf]
    %v561 = vld [vmem:[#allocation2 + $0x7a0] sm:$0xf]
    %v562 = vld [vmem:[#allocation2 + $0x7a4] sm:$0xf]
    %v563 = vld [vmem:[#allocation2 + $0x7a8] sm:$0xf]
    %v564 = vld [vmem:[#allocation2 + $0x7ac] sm:$0xf]
    %v565 = vld [vmem:[#allocation2 + $0x7b0] sm:$0xf]
    %v566 = vld [vmem:[#allocation2 + $0x7b4] sm:$0xf]
    %v567 = vld [vmem:[#allocation2 + $0x7b8] sm:$0xf]
    %v568 = vld [vmem:[#allocation2 + $0x7bc] sm:$0xf]
    %v569 = vld [vmem:[#allocation2 + $0x7c0] sm:$0xf]
    %v570 = vld [vmem:[#allocation2 + $0x7c4] sm:$0xf]
    %v571 = vld [vmem:[#allocation2 + $0x7c8] sm:$0xf]
    %v572 = vld [vmem:[#allocation2 + $0x7cc] sm:$0xf]
    %v573 = vld [vmem:[#allocation2 + $0x7d0] sm:$0xf]
    %v574 = vld [vmem:[#allocation2 + $0x7d4] sm:$0xf]
    %v575 = vld [vmem:[#allocation2 + $0x7d8] sm:$0xf]
    %v576 = vld [vmem:[#allocation2 + $0x7dc] sm:$0xf]
    %v577 = vld [vmem:[#allocation2 + $0x7e0] sm:$0xf]
    %v578 = vld [vmem:[#allocation2 + $0x7e4] sm:$0xf]
    %v579 = vld [vmem:[#allocation2 + $0x7e8] sm:$0xf]
    %v580 = vld [vmem:[#allocation2 + $0x7ec] sm:$0xf]
    %v581 = vld [vmem:[#allocation2 + $0x7f0] sm:$0xf]
    %v582 = vld [vmem:[#allocation2 + $0x7f4] sm:$0xf]
    %v583 = vld [vmem:[#allocation2 + $0x7f8] sm:$0xf]
    %v584 = vld [vmem:[#allocation2 + $0x7fc] sm:$0xf]
    %v585 = vld [vmem:[#allocation2 + $0x800] sm:$0xf]
    %v586 = vld [vmem:[#allocation2 + $0x804] sm:$0xf]
    %v587 = vld [vmem:[#allocation2 + $0x808] sm:$0xf]
    %v588 = vld [vmem:[#allocation2 + $0x80c] sm:$0xf]
    %v589 = vld [vmem:[#allocation2 + $0x810] sm:$0xf]
    %v590 = vld [vmem:[#allocation2 + $0x814] sm:$0xf]
    %v591 = vld [vmem:[#allocation2 + $0x818] sm:$0xf]
    %v592 = vld [vmem:[#allocation2 + $0x81c] sm:$0xf]
    %v593 = vld [vmem:[#allocation2 + $0x820] sm:$0xf]
    %v594 = vld [vmem:[#allocation2 + $0x824] sm:$0xf]
    %v595 = vld [vmem:[#allocation2 + $0x828] sm:$0xf]
    %v596 = vld [vmem:[#allocation2 + $0x82c] sm:$0xf]
    %v597 = vld [vmem:[#allocation2 + $0x830] sm:$0xf]
    %v598 = vld [vmem:[#allocation2 + $0x834] sm:$0xf]
    %v599 = vld [vmem:[#allocation2 + $0x838] sm:$0xf]
    %v600 = vld [vmem:[#allocation2 + $0x83c] sm:$0xf]
    %v601 = vld [vmem:[#allocation2 + $0x840] sm:$0xf]
    %v602 = vld [vmem:[#allocation2 + $0x844] sm:$0xf]
    %v603 = vld [vmem:[#allocation2 + $0x848] sm:$0xf]
    %v604 = vld [vmem:[#allocation2 + $0x84c] sm:$0xf]
    %v605 = vld [vmem:[#allocation2 + $0x850] sm:$0xf]
    %v606 = vld [vmem:[#allocation2 + $0x854] sm:$0xf]
    %v607 = vld [vmem:[#allocation2 + $0x858] sm:$0xf]
    %v608 = vld [vmem:[#allocation2 + $0x85c] sm:$0xf]
    %v609 = vld [vmem:[#allocation2 + $0x860] sm:$0xf]
    %v610 = vld [vmem:[#allocation2 + $0x864] sm:$0xf]
    %v611 = vld [vmem:[#allocation2 + $0x868] sm:$0xf]
    %v612 = vld [vmem:[#allocation2 + $0x86c] sm:$0xf]
    %v613 = vld [vmem:[#allocation2 + $0x870] sm:$0xf]
    %v614 = vld [vmem:[#allocation2 + $0x874] sm:$0xf]
    %v615 = vld [vmem:[#allocation2 + $0x878] sm:$0xf]
    %v616 = vld [vmem:[#allocation2 + $0x87c] sm:$0xf]
    %v617 = vld [vmem:[#allocation2 + $0x880] sm:$0xf]
    %v618 = vld [vmem:[#allocation2 + $0x884] sm:$0xf]
    %v619 = vld [vmem:[#allocation2 + $0x888] sm:$0xf]
    %v620 = vld [vmem:[#allocation2 + $0x88c] sm:$0xf]
    %v621 = vld [vmem:[#allocation2 + $0x890] sm:$0xf]
    %v622 = vld [vmem:[#allocation2 + $0x894] sm:$0xf]
    %v623 = vld [vmem:[#allocation2 + $0x898] sm:$0xf]
    %v624 = vld [vmem:[#allocation2 + $0x89c] sm:$0xf]
    %v625 = vld [vmem:[#allocation2 + $0x8a0] sm:$0xf]
    %v626 = vld [vmem:[#allocation2 + $0x8a4] sm:$0xf]
    %v627 = vld [vmem:[#allocation2 + $0x8a8] sm:$0xf]
    %v628 = vld [vmem:[#allocation2 + $0x8ac] sm:$0xf]
    %v629 = vld [vmem:[#allocation2 + $0x8b0] sm:$0xf]
    %v630 = vld [vmem:[#allocation2 + $0x8b4] sm:$0xf]
    %v631 = vld [vmem:[#allocation2 + $0x8b8] sm:$0xf]
    %v632 = vld [vmem:[#allocation2 + $0x8bc] sm:$0xf]
    %v633 = vld [vmem:[#allocation2 + $0x8c0] sm:$0xf]
    %v634 = vld [vmem:[#allocation2 + $0x8c4] sm:$0xf]
    %v635 = vld [vmem:[#allocation2 + $0x8c8] sm:$0xf]
    %v636 = vld [vmem:[#allocation2 + $0x8cc] sm:$0xf]
    %v637 = vld [vmem:[#allocation2 + $0x8d0] sm:$0xf]
    %v638 = vld [vmem:[#allocation2 + $0x8d4] sm:$0xf]
    %v639 = vld [vmem:[#allocation2 + $0x8d8] sm:$0xf]
    %v640 = vld [vmem:[#allocation2 + $0x8dc] sm:$0xf]
    %v641 = vld [vmem:[#allocation2 + $0x8e0] sm:$0xf]
    %v642 = vld [vmem:[#allocation2 + $0x8e4] sm:$0xf]
    %v643 = vld [vmem:[#allocation2 + $0x8e8] sm:$0xf]
    %v644 = vld [vmem:[#allocation2 + $0x8ec] sm:$0xf]
    %v645 = vld [vmem:[#allocation2 + $0x8f0] sm:$0xf]
    %v646 = vld [vmem:[#allocation2 + $0x8f4] sm:$0xf]
    %v647 = vld [vmem:[#allocation2 + $0x8f8] sm:$0xf]
    %v648 = vld [vmem:[#allocation2 + $0x8fc] sm:$0xf]
    %v649 = vld [vmem:[#allocation2 + $0x900] sm:$0xf]
    %v650 = vld [vmem:[#allocation2 + $0x904] sm:$0xf]
    %v651 = vld [vmem:[#allocation2 + $0x908] sm:$0xf]
    %v652 = vld [vmem:[#allocation2 + $0x90c] sm:$0xf]
    %v653 = vld [vmem:[#allocation2 + $0x910] sm:$0xf]
    %v654 = vld [vmem:[#allocation2 + $0x914] sm:$0xf]
    %v655 = vld [vmem:[#allocation2 + $0x918] sm:$0xf]
    %v656 = vld [vmem:[#allocation2 + $0x91c] sm:$0xf]
    %v657 = vld [vmem:[#allocation2 + $0x920] sm:$0xf]
    %v658 = vld [vmem:[#allocation2 + $0x924] sm:$0xf]
    %v659 = vld [vmem:[#allocation2 + $0x928] sm:$0xf]
    %v660 = vld [vmem:[#allocation2 + $0x92c] sm:$0xf]
    %v661 = vld [vmem:[#allocation2 + $0x930] sm:$0xf]
    %v662 = vld [vmem:[#allocation2 + $0x934] sm:$0xf]
    %v663 = vld [vmem:[#allocation2 + $0x938] sm:$0xf]
    %v664 = vld [vmem:[#allocation2 + $0x93c] sm:$0xf]
    %v665 = vld [vmem:[#allocation2 + $0x940] sm:$0xf]
    %v666 = vld [vmem:[#allocation2 + $0x944] sm:$0xf]
    %v667 = vld [vmem:[#allocation2 + $0x948] sm:$0xf]
    %v668 = vld [vmem:[#allocation2 + $0x94c] sm:$0xf]
    %v669 = vld [vmem:[#allocation2 + $0x950] sm:$0xf]
    %v670 = vld [vmem:[#allocation2 + $0x954] sm:$0xf]
    %v671 = vld [vmem:[#allocation2 + $0x958] sm:$0xf]
    %v672 = vld [vmem:[#allocation2 + $0x95c] sm:$0xf]
    %v673 = vld [vmem:[#allocation2 + $0x960] sm:$0xf]
    %v674 = vld [vmem:[#allocation2 + $0x964] sm:$0xf]
    %v675 = vld [vmem:[#allocation2 + $0x968] sm:$0xf]
    %v676 = vld [vmem:[#allocation2 + $0x96c] sm:$0xf]
    %v677 = vld [vmem:[#allocation2 + $0x970] sm:$0xf]
    %v678 = vld [vmem:[#allocation2 + $0x974] sm:$0xf]
    %v679 = vld [vmem:[#allocation2 + $0x978] sm:$0xf]
    %v680 = vld [vmem:[#allocation2 + $0x97c] sm:$0xf]
    %v681 = vld [vmem:[#allocation2 + $0x980] sm:$0xf]
    %v682 = vld [vmem:[#allocation2 + $0x984] sm:$0xf]
    %v683 = vld [vmem:[#allocation2 + $0x988] sm:$0xf]
    %v684 = vld [vmem:[#allocation2 + $0x98c] sm:$0xf]
    %v685 = vld [vmem:[#allocation2 + $0x990] sm:$0xf]
    %v686 = vld [vmem:[#allocation2 + $0x994] sm:$0xf]
    %v687 = vld [vmem:[#allocation2 + $0x998] sm:$0xf]
    %v688 = vld [vmem:[#allocation2 + $0x99c] sm:$0xf]
    %v689 = vld [vmem:[#allocation2 + $0x9a0] sm:$0xf]
    %v690 = vld [vmem:[#allocation2 + $0x9a4] sm:$0xf]
    %v691 = vld [vmem:[#allocation2 + $0x9a8] sm:$0xf]
    %v692 = vld [vmem:[#allocation2 + $0x9ac] sm:$0xf]
    %v693 = vld [vmem:[#allocation2 + $0x9b0] sm:$0xf]
    %v694 = vld [vmem:[#allocation2 + $0x9b4] sm:$0xf]
    %v695 = vld [vmem:[#allocation2 + $0x9b8] sm:$0xf]
    %v696 = vld [vmem:[#allocation2 + $0x9bc] sm:$0xf]
    %v697 = vld [vmem:[#allocation2 + $0x9c0] sm:$0xf]
    %v698 = vld [vmem:[#allocation2 + $0x9c4] sm:$0xf]
    %v699 = vld [vmem:[#allocation2 + $0x9c8] sm:$0xf]
    %v700 = vld [vmem:[#allocation2 + $0x9cc] sm:$0xf]
    %v701 = vld [vmem:[#allocation2 + $0x9d0] sm:$0xf]
    %v702 = vld [vmem:[#allocation2 + $0x9d4] sm:$0xf]
    %v703 = vld [vmem:[#allocation2 + $0x9d8] sm:$0xf]
    %v704 = vld [vmem:[#allocation2 + $0x9dc] sm:$0xf]
    %v705 = vld [vmem:[#allocation2 + $0x9e0] sm:$0xf]
    %v706 = vld [vmem:[#allocation2 + $0x9e4] sm:$0xf]
    %v707 = vld [vmem:[#allocation2 + $0x9e8] sm:$0xf]
    %v708 = vld [vmem:[#allocation2 + $0x9ec] sm:$0xf]
    %v709 = vld [vmem:[#allocation2 + $0x9f0] sm:$0xf]
    %v710 = vld [vmem:[#allocation2 + $0x9f4] sm:$0xf]
    %v711 = vld [vmem:[#allocation2 + $0x9f8] sm:$0xf]
    %v712 = vld [vmem:[#allocation2 + $0x9fc] sm:$0xf]
    %v713 = vld [vmem:[#allocation2 + $0xa00] sm:$0xf]
    %v714 = vld [vmem:[#allocation2 + $0xa04] sm:$0xf]
    %v715 = vld [vmem:[#allocation2 + $0xa08] sm:$0xf]
    %v716 = vld [vmem:[#allocation2 + $0xa0c] sm:$0xf]
    %v717 = vld [vmem:[#allocation2 + $0xa10] sm:$0xf]
    %v718 = vld [vmem:[#allocation2 + $0xa14] sm:$0xf]
    %v719 = vld [vmem:[#allocation2 + $0xa18] sm:$0xf]
    %v720 = vld [vmem:[#allocation2 + $0xa1c] sm:$0xf]
    %v721 = vld [vmem:[#allocation2 + $0xa20] sm:$0xf]
    %v722 = vld [vmem:[#allocation2 + $0xa24] sm:$0xf]
    %v723 = vld [vmem:[#allocation2 + $0xa28] sm:$0xf]
    %v724 = vld [vmem:[#allocation2 + $0xa2c] sm:$0xf]
    %v725 = vld [vmem:[#allocation2 + $0xa30] sm:$0xf]
    %v726 = vld [vmem:[#allocation2 + $0xa34] sm:$0xf]
    %v727 = vld [vmem:[#allocation2 + $0xa38] sm:$0xf]
    %v728 = vld [vmem:[#allocation2 + $0xa3c] sm:$0xf]
    %v729 = vld [vmem:[#allocation2 + $0xa40] sm:$0xf]
    %v730 = vld [vmem:[#allocation2 + $0xa44] sm:$0xf]
    %v731 = vld [vmem:[#allocation2 + $0xa48] sm:$0xf]
    %v732 = vld [vmem:[#allocation2 + $0xa4c] sm:$0xf]
    %v733 = vld [vmem:[#allocation2 + $0xa50] sm:$0xf]
    %v734 = vld [vmem:[#allocation2 + $0xa54] sm:$0xf]
    %v735 = vld [vmem:[#allocation2 + $0xa58] sm:$0xf]
    %v736 = vld [vmem:[#allocation2 + $0xa5c] sm:$0xf]
    %v737 = vld [vmem:[#allocation2 + $0xa60] sm:$0xf]
    %v738 = vld [vmem:[#allocation2 + $0xa64] sm:$0xf]
    %v739 = vld [vmem:[#allocation2 + $0xa68] sm:$0xf]
    %v740 = vld [vmem:[#allocation2 + $0xa6c] sm:$0xf]
    %v741 = vld [vmem:[#allocation2 + $0xa70] sm:$0xf]
    %v742 = vld [vmem:[#allocation2 + $0xa74] sm:$0xf]
    %v743 = vld [vmem:[#allocation2 + $0xa78] sm:$0xf]
    %v744 = vld [vmem:[#allocation2 + $0xa7c] sm:$0xf]
    %v745 = vld [vmem:[#allocation2 + $0xa80] sm:$0xf]
    %v746 = vld [vmem:[#allocation2 + $0xa84] sm:$0xf]
    %v747 = vld [vmem:[#allocation2 + $0xa88] sm:$0xf]
    %v748 = vld [vmem:[#allocation2 + $0xa8c] sm:$0xf]
    %v749 = vld [vmem:[#allocation2 + $0xa90] sm:$0xf]
    %v750 = vld [vmem:[#allocation2 + $0xa94] sm:$0xf]
    %v751 = vld [vmem:[#allocation2 + $0xa98] sm:$0xf]
    %v752 = vld [vmem:[#allocation2 + $0xa9c] sm:$0xf]
    %v753 = vld [vmem:[#allocation2 + $0xaa0] sm:$0xf]
    %v754 = vld [vmem:[#allocation2 + $0xaa4] sm:$0xf]
    %v755 = vld [vmem:[#allocation2 + $0xaa8] sm:$0xf]
    %v756 = vld [vmem:[#allocation2 + $0xaac] sm:$0xf]
    %v757 = vld [vmem:[#allocation2 + $0xab0] sm:$0xf]
    %v758 = vld [vmem:[#allocation2 + $0xab4] sm:$0xf]
    %v759 = vld [vmem:[#allocation2 + $0xab8] sm:$0xf]
    %v760 = vld [vmem:[#allocation2 + $0xabc] sm:$0xf]
    %v761 = vld [vmem:[#allocation2 + $0xac0] sm:$0xf]
    %v762 = vld [vmem:[#allocation2 + $0xac4] sm:$0xf]
    %v763 = vld [vmem:[#allocation2 + $0xac8] sm:$0xf]
    %v764 = vld [vmem:[#allocation2 + $0xacc] sm:$0xf]
    %v765 = vld [vmem:[#allocation2 + $0xad0] sm:$0xf]
    %v766 = vld [vmem:[#allocation2 + $0xad4] sm:$0xf]
    %v767 = vld [vmem:[#allocation2 + $0xad8] sm:$0xf]
    %v768 = vld [vmem:[#allocation2 + $0xadc] sm:$0xf]
    %v769 = vld [vmem:[#allocation2 + $0xae0] sm:$0xf]
    %v770 = vld [vmem:[#allocation2 + $0xae4] sm:$0xf]
    %v771 = vld [vmem:[#allocation2 + $0xae8] sm:$0xf]
    %v772 = vld [vmem:[#allocation2 + $0xaec] sm:$0xf]
    %v773 = vld [vmem:[#allocation2 + $0xaf0] sm:$0xf]
    %v774 = vld [vmem:[#allocation2 + $0xaf4] sm:$0xf]
    %v775 = vld [vmem:[#allocation2 + $0xaf8] sm:$0xf]
    %v776 = vld [vmem:[#allocation2 + $0xafc] sm:$0xf]
    %v777 = vld [vmem:[#allocation2 + $0xb00] sm:$0xf]
    %v778 = vld [vmem:[#allocation2 + $0xb04] sm:$0xf]
    %v779 = vld [vmem:[#allocation2 + $0xb08] sm:$0xf]
    %v780 = vld [vmem:[#allocation2 + $0xb0c] sm:$0xf]
    %v781 = vld [vmem:[#allocation2 + $0xb10] sm:$0xf]
    %v782 = vld [vmem:[#allocation2 + $0xb14] sm:$0xf]
    %v783 = vld [vmem:[#allocation2 + $0xb18] sm:$0xf]
    %v784 = vld [vmem:[#allocation2 + $0xb1c] sm:$0xf]
    %v785 = vld [vmem:[#allocation2 + $0xb20] sm:$0xf]
    %v786 = vld [vmem:[#allocation2 + $0xb24] sm:$0xf]
    %v787 = vld [vmem:[#allocation2 + $0xb28] sm:$0xf]
    %v788 = vld [vmem:[#allocation2 + $0xb2c] sm:$0xf]
    %v789 = vld [vmem:[#allocation2 + $0xb30] sm:$0xf]
    %v790 = vld [vmem:[#allocation2 + $0xb34] sm:$0xf]
    %v791 = vld [vmem:[#allocation2 + $0xb38] sm:$0xf]
    %v792 = vld [vmem:[#allocation2 + $0xb3c] sm:$0xf]
    %v793 = vld [vmem:[#allocation2 + $0xb40] sm:$0xf]
    %v794 = vld [vmem:[#allocation2 + $0xb44] sm:$0xf]
    %v795 = vld [vmem:[#allocation2 + $0xb48] sm:$0xf]
    %v796 = vld [vmem:[#allocation2 + $0xb4c] sm:$0xf]
    %v797 = vld [vmem:[#allocation2 + $0xb50] sm:$0xf]
    %v798 = vld [vmem:[#allocation2 + $0xb54] sm:$0xf]
    %v799 = vld [vmem:[#allocation2 + $0xb58] sm:$0xf]
    %v800 = vld [vmem:[#allocation2 + $0xb5c] sm:$0xf]
    %v801 = vld [vmem:[#allocation2 + $0xb60] sm:$0xf]
    %v802 = vld [vmem:[#allocation2 + $0xb64] sm:$0xf]
    %v803 = vld [vmem:[#allocation2 + $0xb68] sm:$0xf]
    %v804 = vld [vmem:[#allocation2 + $0xb6c] sm:$0xf]
    %v805 = vld [vmem:[#allocation2 + $0xb70] sm:$0xf]
    %v806 = vld [vmem:[#allocation2 + $0xb74] sm:$0xf]
    %v807 = vld [vmem:[#allocation2 + $0xb78] sm:$0xf]
    %v808 = vld [vmem:[#allocation2 + $0xb7c] sm:$0xf]
    %v809 = vld [vmem:[#allocation2 + $0xb80] sm:$0xf]
    %v810 = vld [vmem:[#allocation2 + $0xb84] sm:$0xf]
    %v811 = vld [vmem:[#allocation2 + $0xb88] sm:$0xf]
    %v812 = vld [vmem:[#allocation2 + $0xb8c] sm:$0xf]
    %v813 = vld [vmem:[#allocation2 + $0xb90] sm:$0xf]
    %v814 = vld [vmem:[#allocation2 + $0xb94] sm:$0xf]
    %v815 = vld [vmem:[#allocation2 + $0xb98] sm:$0xf]
    %v816 = vld [vmem:[#allocation2 + $0xb9c] sm:$0xf]
    %v817 = vld [vmem:[#allocation2 + $0xba0] sm:$0xf]
    %v818 = vld [vmem:[#allocation2 + $0xba4] sm:$0xf]
    %v819 = vld [vmem:[#allocation2 + $0xba8] sm:$0xf]
    %v820 = vld [vmem:[#allocation2 + $0xbac] sm:$0xf]
    %v821 = vld [vmem:[#allocation2 + $0xbb0] sm:$0xf]
    %v822 = vld [vmem:[#allocation2 + $0xbb4] sm:$0xf]
    %v823 = vld [vmem:[#allocation2 + $0xbb8] sm:$0xf]
    %v824 = vld [vmem:[#allocation2 + $0xbbc] sm:$0xf]
    %v825 = vld [vmem:[#allocation2 + $0xbc0] sm:$0xf]
    %v826 = vld [vmem:[#allocation2 + $0xbc4] sm:$0xf]
    %v827 = vld [vmem:[#allocation2 + $0xbc8] sm:$0xf]
    %v828 = vld [vmem:[#allocation2 + $0xbcc] sm:$0xf]
    %v829 = vld [vmem:[#allocation2 + $0xbd0] sm:$0xf]
    %v830 = vld [vmem:[#allocation2 + $0xbd4] sm:$0xf]
    %v831 = vld [vmem:[#allocation2 + $0xbd8] sm:$0xf]
    %v832 = vld [vmem:[#allocation2 + $0xbdc] sm:$0xf]
    %v833 = vld [vmem:[#allocation2 + $0xbe0] sm:$0xf]
    %v834 = vld [vmem:[#allocation2 + $0xbe4] sm:$0xf]
    %v835 = vld [vmem:[#allocation2 + $0xbe8] sm:$0xf]
    %v836 = vld [vmem:[#allocation2 + $0xbec] sm:$0xf]
    %v837 = vld [vmem:[#allocation2 + $0xbf0] sm:$0xf]
    %v838 = vld [vmem:[#allocation2 + $0xbf4] sm:$0xf]
    %v839 = vld [vmem:[#allocation2 + $0xbf8] sm:$0xf]
    %v840 = vld [vmem:[#allocation2 + $0xbfc] sm:$0xf]
    %v841 = vld [vmem:[#allocation2 + $0xc00] sm:$0xf]
    %v842 = vld [vmem:[#allocation2 + $0xc04] sm:$0xf]
    %v843 = vld [vmem:[#allocation2 + $0xc08] sm:$0xf]
    %v844 = vld [vmem:[#allocation2 + $0xc0c] sm:$0xf]
    %v845 = vld [vmem:[#allocation2 + $0xc10] sm:$0xf]
    %v846 = vld [vmem:[#allocation2 + $0xc14] sm:$0xf]
    %v847 = vld [vmem:[#allocation2 + $0xc18] sm:$0xf]
    %v848 = vld [vmem:[#allocation2 + $0xc1c] sm:$0xf]
    %v849 = vld [vmem:[#allocation2 + $0xc20] sm:$0xf]
    %v850 = vld [vmem:[#allocation2 + $0xc24] sm:$0xf]
    %v851 = vld [vmem:[#allocation2 + $0xc28] sm:$0xf]
    %v852 = vld [vmem:[#allocation2 + $0xc2c] sm:$0xf]
    %v853 = vld [vmem:[#allocation2 + $0xc30] sm:$0xf]
    %v854 = vld [vmem:[#allocation2 + $0xc34] sm:$0xf]
    %v855 = vld [vmem:[#allocation2 + $0xc38] sm:$0xf]
    %v856 = vld [vmem:[#allocation2 + $0xc3c] sm:$0xf]
    %v857 = vld [vmem:[#allocation2 + $0xc40] sm:$0xf]
    %v858 = vld [vmem:[#allocation2 + $0xc44] sm:$0xf]
    %v859 = vld [vmem:[#allocation2 + $0xc48] sm:$0xf]
    %v860 = vld [vmem:[#allocation2 + $0xc4c] sm:$0xf]
    %v861 = vld [vmem:[#allocation2 + $0xc50] sm:$0xf]
    %v862 = vld [vmem:[#allocation2 + $0xc54] sm:$0xf]
    %v863 = vld [vmem:[#allocation2 + $0xc58] sm:$0xf]
    %v864 = vld [vmem:[#allocation2 + $0xc5c] sm:$0xf]
    %v865 = vld [vmem:[#allocation2 + $0xc60] sm:$0xf]
    %v866 = vld [vmem:[#allocation2 + $0xc64] sm:$0xf]
    %v867 = vld [vmem:[#allocation2 + $0xc68] sm:$0xf]
    %v868 = vld [vmem:[#allocation2 + $0xc6c] sm:$0xf]
    %v869 = vld [vmem:[#allocation2 + $0xc70] sm:$0xf]
    %v870 = vld [vmem:[#allocation2 + $0xc74] sm:$0xf]
    %v871 = vld [vmem:[#allocation2 + $0xc78] sm:$0xf]
    %v872 = vld [vmem:[#allocation2 + $0xc7c] sm:$0xf]
    %v873 = vld [vmem:[#allocation2 + $0xc80] sm:$0xf]
    %v874 = vld [vmem:[#allocation2 + $0xc84] sm:$0xf]
    %v875 = vld [vmem:[#allocation2 + $0xc88] sm:$0xf]
    %v876 = vld [vmem:[#allocation2 + $0xc8c] sm:$0xf]
    %v877 = vld [vmem:[#allocation2 + $0xc90] sm:$0xf]
    %v878 = vld [vmem:[#allocation2 + $0xc94] sm:$0xf]
    %v879 = vld [vmem:[#allocation2 + $0xc98] sm:$0xf]
    %v880 = vld [vmem:[#allocation2 + $0xc9c] sm:$0xf]
    %v881 = vld [vmem:[#allocation2 + $0xca0] sm:$0xf]
    %v882 = vld [vmem:[#allocation2 + $0xca4] sm:$0xf]
    %v883 = vld [vmem:[#allocation2 + $0xca8] sm:$0xf]
    %v884 = vld [vmem:[#allocation2 + $0xcac] sm:$0xf]
    %v885 = vld [vmem:[#allocation2 + $0xcb0] sm:$0xf]
    %v886 = vld [vmem:[#allocation2 + $0xcb4] sm:$0xf]
    %v887 = vld [vmem:[#allocation2 + $0xcb8] sm:$0xf]
    %v888 = vld [vmem:[#allocation2 + $0xcbc] sm:$0xf]
    %v889 = vld [vmem:[#allocation2 + $0xcc0] sm:$0xf]
    %v890 = vld [vmem:[#allocation2 + $0xcc4] sm:$0xf]
    %v891 = vld [vmem:[#allocation2 + $0xcc8] sm:$0xf]
    %v892 = vld [vmem:[#allocation2 + $0xccc] sm:$0xf]
    %v893 = vld [vmem:[#allocation2 + $0xcd0] sm:$0xf]
    %v894 = vld [vmem:[#allocation2 + $0xcd4] sm:$0xf]
    %v895 = vld [vmem:[#allocation2 + $0xcd8] sm:$0xf]
    %v896 = vld [vmem:[#allocation2 + $0xcdc] sm:$0xf]
    %v897 = vld [vmem:[#allocation2 + $0xce0] sm:$0xf]
    %v898 = vld [vmem:[#allocation2 + $0xce4] sm:$0xf]
    %v899 = vld [vmem:[#allocation2 + $0xce8] sm:$0xf]
    %v900 = vld [vmem:[#allocation2 + $0xcec] sm:$0xf]
    %v901 = vld [vmem:[#allocation2 + $0xcf0] sm:$0xf]
    %v902 = vld [vmem:[#allocation2 + $0xcf4] sm:$0xf]
    %v903 = vld [vmem:[#allocation2 + $0xcf8] sm:$0xf]
    %v904 = vld [vmem:[#allocation2 + $0xcfc] sm:$0xf]
    %v905 = vld [vmem:[#allocation2 + $0xd00] sm:$0xf]
    %v906 = vld [vmem:[#allocation2 + $0xd04] sm:$0xf]
    %v907 = vld [vmem:[#allocation2 + $0xd08] sm:$0xf]
    %v908 = vld [vmem:[#allocation2 + $0xd0c] sm:$0xf]
    %v909 = vld [vmem:[#allocation2 + $0xd10] sm:$0xf]
    %v910 = vld [vmem:[#allocation2 + $0xd14] sm:$0xf]
    %v911 = vld [vmem:[#allocation2 + $0xd18] sm:$0xf]
    %v912 = vld [vmem:[#allocation2 + $0xd1c] sm:$0xf]
    %v913 = vld [vmem:[#allocation2 + $0xd20] sm:$0xf]
    %v914 = vld [vmem:[#allocation2 + $0xd24] sm:$0xf]
    %v915 = vld [vmem:[#allocation2 + $0xd28] sm:$0xf]
    %v916 = vld [vmem:[#allocation2 + $0xd2c] sm:$0xf]
    %v917 = vld [vmem:[#allocation2 + $0xd30] sm:$0xf]
    %v918 = vld [vmem:[#allocation2 + $0xd34] sm:$0xf]
    %v919 = vld [vmem:[#allocation2 + $0xd38] sm:$0xf]
    %v920 = vld [vmem:[#allocation2 + $0xd3c] sm:$0xf]
    %v921 = vld [vmem:[#allocation2 + $0xd40] sm:$0xf]
    %v922 = vld [vmem:[#allocation2 + $0xd44] sm:$0xf]
    %v923 = vld [vmem:[#allocation2 + $0xd48] sm:$0xf]
    %v924 = vld [vmem:[#allocation2 + $0xd4c] sm:$0xf]
    %v925 = vld [vmem:[#allocation2 + $0xd50] sm:$0xf]
    %v926 = vld [vmem:[#allocation2 + $0xd54] sm:$0xf]
    %v927 = vld [vmem:[#allocation2 + $0xd58] sm:$0xf]
    %v928 = vld [vmem:[#allocation2 + $0xd5c] sm:$0xf]
    %v929 = vld [vmem:[#allocation2 + $0xd60] sm:$0xf]
    %v930 = vld [vmem:[#allocation2 + $0xd64] sm:$0xf]
    %v931 = vld [vmem:[#allocation2 + $0xd68] sm:$0xf]
    %v932 = vld [vmem:[#allocation2 + $0xd6c] sm:$0xf]
    %v933 = vld [vmem:[#allocation2 + $0xd70] sm:$0xf]
    %v934 = vld [vmem:[#allocation2 + $0xd74] sm:$0xf]
    %v935 = vld [vmem:[#allocation2 + $0xd78] sm:$0xf]
    %v936 = vld [vmem:[#allocation2 + $0xd7c] sm:$0xf]
    %v937 = vld [vmem:[#allocation2 + $0xd80] sm:$0xf]
    %v938 = vld [vmem:[#allocation2 + $0xd84] sm:$0xf]
    %v939 = vld [vmem:[#allocation2 + $0xd88] sm:$0xf]
    %v940 = vld [vmem:[#allocation2 + $0xd8c] sm:$0xf]
    %v941 = vld [vmem:[#allocation2 + $0xd90] sm:$0xf]
    %v942 = vld [vmem:[#allocation2 + $0xd94] sm:$0xf]
    %v943 = vld [vmem:[#allocation2 + $0xd98] sm:$0xf]
    %v944 = vld [vmem:[#allocation2 + $0xd9c] sm:$0xf]
    %v945 = vld [vmem:[#allocation2 + $0xda0] sm:$0xf]
    %v946 = vld [vmem:[#allocation2 + $0xda4] sm:$0xf]
    %v947 = vld [vmem:[#allocation2 + $0xda8] sm:$0xf]
    %v948 = vld [vmem:[#allocation2 + $0xdac] sm:$0xf]
    %v949 = vld [vmem:[#allocation2 + $0xdb0] sm:$0xf]
    %v950 = vld [vmem:[#allocation2 + $0xdb4] sm:$0xf]
    %v951 = vld [vmem:[#allocation2 + $0xdb8] sm:$0xf]
    %v952 = vld [vmem:[#allocation2 + $0xdbc] sm:$0xf]
    %v953 = vld [vmem:[#allocation2 + $0xdc0] sm:$0xf]
    %v954 = vld [vmem:[#allocation2 + $0xdc4] sm:$0xf]
    %v955 = vld [vmem:[#allocation2 + $0xdc8] sm:$0xf]
    %v956 = vld [vmem:[#allocation2 + $0xdcc] sm:$0xf]
    %v957 = vld [vmem:[#allocation2 + $0xdd0] sm:$0xf]
    %v958 = vld [vmem:[#allocation2 + $0xdd4] sm:$0xf]
    %v959 = vld [vmem:[#allocation2 + $0xdd8] sm:$0xf]
    %v960 = vld [vmem:[#allocation2 + $0xddc] sm:$0xf]
    %v961 = vld [vmem:[#allocation2 + $0xde0] sm:$0xf]
    %v962 = vld [vmem:[#allocation2 + $0xde4] sm:$0xf]
    %v963 = vld [vmem:[#allocation2 + $0xde8] sm:$0xf]
    %v964 = vld [vmem:[#allocation2 + $0xdec] sm:$0xf]
    %v965 = vld [vmem:[#allocation2 + $0xdf0] sm:$0xf]
    %v966 = vld [vmem:[#allocation2 + $0xdf4] sm:$0xf]
    %v967 = vld [vmem:[#allocation2 + $0xdf8] sm:$0xf]
    %v968 = vld [vmem:[#allocation2 + $0xdfc] sm:$0xf]
    %v969 = vld [vmem:[#allocation2 + $0xe00] sm:$0xf]
    %v970 = vld [vmem:[#allocation2 + $0xe04] sm:$0xf]
    %v971 = vld [vmem:[#allocation2 + $0xe08] sm:$0xf]
    %v972 = vld [vmem:[#allocation2 + $0xe0c] sm:$0xf]
    %v973 = vld [vmem:[#allocation2 + $0xe10] sm:$0xf]
    %v974 = vld [vmem:[#allocation2 + $0xe14] sm:$0xf]
    %v975 = vld [vmem:[#allocation2 + $0xe18] sm:$0xf]
    %v976 = vld [vmem:[#allocation2 + $0xe1c] sm:$0xf]
    %v977 = vld [vmem:[#allocation2 + $0xe20] sm:$0xf]
    %v978 = vld [vmem:[#allocation2 + $0xe24] sm:$0xf]
    %v979 = vld [vmem:[#allocation2 + $0xe28] sm:$0xf]
    %v980 = vld [vmem:[#allocation2 + $0xe2c] sm:$0xf]
    %v981 = vld [vmem:[#allocation2 + $0xe30] sm:$0xf]
    %v982 = vld [vmem:[#allocation2 + $0xe34] sm:$0xf]
    %v983 = vld [vmem:[#allocation2 + $0xe38] sm:$0xf]
    %v984 = vld [vmem:[#allocation2 + $0xe3c] sm:$0xf]
    %v985 = vld [vmem:[#allocation2 + $0xe40] sm:$0xf]
    %v986 = vld [vmem:[#allocation2 + $0xe44] sm:$0xf]
    %v987 = vld [vmem:[#allocation2 + $0xe48] sm:$0xf]
    %v988 = vld [vmem:[#allocation2 + $0xe4c] sm:$0xf]
    %v989 = vld [vmem:[#allocation2 + $0xe50] sm:$0xf]
    %v990 = vld [vmem:[#allocation2 + $0xe54] sm:$0xf]
    %v991 = vld [vmem:[#allocation2 + $0xe58] sm:$0xf]
    %v992 = vld [vmem:[#allocation2 + $0xe5c] sm:$0xf]
    %v993 = vld [vmem:[#allocation2 + $0xe60] sm:$0xf]
    %v994 = vld [vmem:[#allocation2 + $0xe64] sm:$0xf]
    %v995 = vld [vmem:[#allocation2 + $0xe68] sm:$0xf]
    %v996 = vld [vmem:[#allocation2 + $0xe6c] sm:$0xf]
    %v997 = vld [vmem:[#allocation2 + $0xe70] sm:$0xf]
    %v998 = vld [vmem:[#allocation2 + $0xe74] sm:$0xf]
    %v999 = vld [vmem:[#allocation2 + $0xe78] sm:$0xf]
    %v1000 = vld [vmem:[#allocation2 + $0xe7c] sm:$0xf]
    %v1001 = vld [vmem:[#allocation2 + $0xe80] sm:$0xf]
    %v1002 = vld [vmem:[#allocation2 + $0xe84] sm:$0xf]
    %v1003 = vld [vmem:[#allocation2 + $0xe88] sm:$0xf]
    %v1004 = vld [vmem:[#allocation2 + $0xe8c] sm:$0xf]
    %v1005 = vld [vmem:[#allocation2 + $0xe90] sm:$0xf]
    %v1006 = vld [vmem:[#allocation2 + $0xe94] sm:$0xf]
    %v1007 = vld [vmem:[#allocation2 + $0xe98] sm:$0xf]
    %v1008 = vld [vmem:[#allocation2 + $0xe9c] sm:$0xf]
    %v1009 = vld [vmem:[#allocation2 + $0xea0] sm:$0xf]
    %v1010 = vld [vmem:[#allocation2 + $0xea4] sm:$0xf]
    %v1011 = vld [vmem:[#allocation2 + $0xea8] sm:$0xf]
    %v1012 = vld [vmem:[#allocation2 + $0xeac] sm:$0xf]
    %v1013 = vld [vmem:[#allocation2 + $0xeb0] sm:$0xf]
    %v1014 = vld [vmem:[#allocation2 + $0xeb4] sm:$0xf]
    %v1015 = vld [vmem:[#allocation2 + $0xeb8] sm:$0xf]
    %v1016 = vld [vmem:[#allocation2 + $0xebc] sm:$0xf]
    %v1017 = vld [vmem:[#allocation2 + $0xec0] sm:$0xf]
    %v1018 = vld [vmem:[#allocation2 + $0xec4] sm:$0xf]
    %v1019 = vld [vmem:[#allocation2 + $0xec8] sm:$0xf]
    %v1020 = vld [vmem:[#allocation2 + $0xecc] sm:$0xf]
    %v1021 = vld [vmem:[#allocation2 + $0xed0] sm:$0xf]
    %v1022 = vld [vmem:[#allocation2 + $0xed4] sm:$0xf]
    %v1023 = vld [vmem:[#allocation2 + $0xed8] sm:$0xf]
    %v1024 = vld [vmem:[#allocation2 + $0xedc] sm:$0xf]
    %v1025 = vld [vmem:[#allocation2 + $0xee0] sm:$0xf]
    %v1026 = vld [vmem:[#allocation2 + $0xee4] sm:$0xf]
    %v1027 = vld [vmem:[#allocation2 + $0xee8] sm:$0xf]
    %v1028 = vld [vmem:[#allocation2 + $0xeec] sm:$0xf]
    %v1029 = vld [vmem:[#allocation2 + $0xef0] sm:$0xf]
    %v1030 = vld [vmem:[#allocation2 + $0xef4] sm:$0xf]
    %v1031 = vld [vmem:[#allocation2 + $0xef8] sm:$0xf]
    %v1032 = vld [vmem:[#allocation2 + $0xefc] sm:$0xf]
    %v1033 = vld [vmem:[#allocation2 + $0xf00] sm:$0xf]
    %v1034 = vld [vmem:[#allocation2 + $0xf04] sm:$0xf]
    %v1035 = vld [vmem:[#allocation2 + $0xf08] sm:$0xf]
    %v1036 = vld [vmem:[#allocation2 + $0xf0c] sm:$0xf]
    %v1037 = vld [vmem:[#allocation2 + $0xf10] sm:$0xf]
    %v1038 = vld [vmem:[#allocation2 + $0xf14] sm:$0xf]
    %v1039 = vld [vmem:[#allocation2 + $0xf18] sm:$0xf]
    %v1040 = vld [vmem:[#allocation2 + $0xf1c] sm:$0xf]
    %v1041 = vld [vmem:[#allocation2 + $0xf20] sm:$0xf]
    %v1042 = vld [vmem:[#allocation2 + $0xf24] sm:$0xf]
    %v1043 = vld [vmem:[#allocation2 + $0xf28] sm:$0xf]
    %v1044 = vld [vmem:[#allocation2 + $0xf2c] sm:$0xf]
    %v1045 = vld [vmem:[#allocation2 + $0xf30] sm:$0xf]
    %v1046 = vld [vmem:[#allocation2 + $0xf34] sm:$0xf]
    %v1047 = vld [vmem:[#allocation2 + $0xf38] sm:$0xf]
    %v1048 = vld [vmem:[#allocation2 + $0xf3c] sm:$0xf]
    %v1049 = vld [vmem:[#allocation2 + $0xf40] sm:$0xf]
    %v1050 = vld [vmem:[#allocation2 + $0xf44] sm:$0xf]
    %v1051 = vld [vmem:[#allocation2 + $0xf48] sm:$0xf]
    %v1052 = vld [vmem:[#allocation2 + $0xf4c] sm:$0xf]
    %v1053 = vld [vmem:[#allocation2 + $0xf50] sm:$0xf]
    %v1054 = vld [vmem:[#allocation2 + $0xf54] sm:$0xf]
    %v1055 = vld [vmem:[#allocation2 + $0xf58] sm:$0xf]
    %v1056 = vld [vmem:[#allocation2 + $0xf5c] sm:$0xf]
    %v1057 = vld [vmem:[#allocation2 + $0xf60] sm:$0xf]
    %v1058 = vld [vmem:[#allocation2 + $0xf64] sm:$0xf]
    %v1059 = vld [vmem:[#allocation2 + $0xf68] sm:$0xf]
    %v1060 = vld [vmem:[#allocation2 + $0xf6c] sm:$0xf]
    %v1061 = vld [vmem:[#allocation2 + $0xf70] sm:$0xf]
    %v1062 = vld [vmem:[#allocation2 + $0xf74] sm:$0xf]
    %v1063 = vld [vmem:[#allocation2 + $0xf78] sm:$0xf]
    %v1064 = vld [vmem:[#allocation2 + $0xf7c] sm:$0xf]
    %v1065 = vld [vmem:[#allocation2 + $0xf80] sm:$0xf]
    %v1066 = vld [vmem:[#allocation2 + $0xf84] sm:$0xf]
    %v1067 = vld [vmem:[#allocation2 + $0xf88] sm:$0xf]
    %v1068 = vld [vmem:[#allocation2 + $0xf8c] sm:$0xf]
    %v1069 = vld [vmem:[#allocation2 + $0xf90] sm:$0xf]
    %v1070 = vld [vmem:[#allocation2 + $0xf94] sm:$0xf]
    %v1071 = vld [vmem:[#allocation2 + $0xf98] sm:$0xf]
    %v1072 = vld [vmem:[#allocation2 + $0xf9c] sm:$0xf]
    %v1073 = vld [vmem:[#allocation2 + $0xfa0] sm:$0xf]
    %v1074 = vld [vmem:[#allocation2 + $0xfa4] sm:$0xf]
    %v1075 = vld [vmem:[#allocation2 + $0xfa8] sm:$0xf]
    %v1076 = vld [vmem:[#allocation2 + $0xfac] sm:$0xf]
    %v1077 = vld [vmem:[#allocation2 + $0xfb0] sm:$0xf]
    %v1078 = vld [vmem:[#allocation2 + $0xfb4] sm:$0xf]
    %v1079 = vld [vmem:[#allocation2 + $0xfb8] sm:$0xf]
    %v1080 = vld [vmem:[#allocation2 + $0xfbc] sm:$0xf]
    %v1081 = vld [vmem:[#allocation2 + $0xfc0] sm:$0xf]
    %v1082 = vld [vmem:[#allocation2 + $0xfc4] sm:$0xf]
    %v1083 = vld [vmem:[#allocation2 + $0xfc8] sm:$0xf]
    %v1084 = vld [vmem:[#allocation2 + $0xfcc] sm:$0xf]
    %v1085 = vld [vmem:[#allocation2 + $0xfd0] sm:$0xf]
    %v1086 = vld [vmem:[#allocation2 + $0xfd4] sm:$0xf]
    %v1087 = vld [vmem:[#allocation2 + $0xfd8] sm:$0xf]
    %v1088 = vld [vmem:[#allocation2 + $0xfdc] sm:$0xf]
    %v1089 = vld [vmem:[#allocation2 + $0xfe0] sm:$0xf]
    %v1090 = vld [vmem:[#allocation2 + $0xfe4] sm:$0xf]
    %v1091 = vld [vmem:[#allocation2 + $0xfe8] sm:$0xf]
    %v1092 = vld [vmem:[#allocation2 + $0xfec] sm:$0xf]
    %v1093 = vld [vmem:[#allocation2 + $0xff0] sm:$0xf]
    %v1094 = vld [vmem:[#allocation2 + $0xff4] sm:$0xf]
    %v1095 = vld [vmem:[#allocation2 + $0xff8] sm:$0xf]
    %v1096 = vld [vmem:[#allocation2 + $0xffc] sm:$0xf]
    %v1097 = vld [vmem:[#allocation4] sm:$0x1]
    %v1099 = vlaneseq
    %v1100 = vshrl.u32 %v1099, 7
    %v1101 = vsub.s32 0, %v1100
    %v1102 = vrot.slane %v1097, %v1101
    %v1136 = vunpack.c.l.b16 %v41
    %v1137 = vunpack.c.h.b16 %v41
    %v1138 = vunpack.c.l.b16 %v42
    %v1139 = vunpack.c.h.b16 %v42
    %v1140 = vunpack.c.l.b16 %v43
    %v1141 = vunpack.c.h.b16 %v43
    %v1142 = vunpack.c.l.b16 %v44
    %v1143 = vunpack.c.h.b16 %v44
    %v1144 = vunpack.c.l.b16 %v45
    %v1145 = vunpack.c.h.b16 %v45
    %v1146 = vunpack.c.l.b16 %v46
    %v1147 = vunpack.c.h.b16 %v46
    %v1148 = vunpack.c.l.b16 %v47
    %v1149 = vunpack.c.h.b16 %v47
    %v1150 = vunpack.c.l.b16 %v48
    %v1151 = vunpack.c.h.b16 %v48
    %v1152 = vunpack.c.l.b16 %v49
    %v1153 = vunpack.c.h.b16 %v49
    %v1154 = vunpack.c.l.b16 %v50
    %v1155 = vunpack.c.h.b16 %v50
    %v1156 = vunpack.c.l.b16 %v51
    %v1157 = vunpack.c.h.b16 %v51
    %v1158 = vunpack.c.l.b16 %v52
    %v1159 = vunpack.c.h.b16 %v52
    %v1160 = vunpack.c.l.b16 %v53
    %v1161 = vunpack.c.h.b16 %v53
    %v1162 = vunpack.c.l.b16 %v54
    %v1163 = vunpack.c.h.b16 %v54
    %v1164 = vunpack.c.l.b16 %v55
    %v1165 = vunpack.c.h.b16 %v55
    %v1166 = vunpack.c.l.b16 %v56
    %v1167 = vunpack.c.h.b16 %v56
    %v1168 = vunpack.c.l.b16 %v57
    %v1169 = vunpack.c.h.b16 %v57
    %v1170 = vunpack.c.l.b16 %v58
    %v1171 = vunpack.c.h.b16 %v58
    %v1172 = vunpack.c.l.b16 %v59
    %v1173 = vunpack.c.h.b16 %v59
    %v1174 = vunpack.c.l.b16 %v60
    %v1175 = vunpack.c.h.b16 %v60
    %v1176 = vunpack.c.l.b16 %v61
    %v1177 = vunpack.c.h.b16 %v61
    %v1178 = vunpack.c.l.b16 %v62
    %v1179 = vunpack.c.h.b16 %v62
    %v1180 = vunpack.c.l.b16 %v63
    %v1181 = vunpack.c.h.b16 %v63
    %v1182 = vunpack.c.l.b16 %v64
    %v1183 = vunpack.c.h.b16 %v64
    %v1184 = vunpack.c.l.b16 %v65
    %v1185 = vunpack.c.h.b16 %v65
    %v1186 = vunpack.c.l.b16 %v66
    %v1187 = vunpack.c.h.b16 %v66
    %v1188 = vunpack.c.l.b16 %v67
    %v1189 = vunpack.c.h.b16 %v67
    %v1190 = vunpack.c.l.b16 %v68
    %v1191 = vunpack.c.h.b16 %v68
    %v1192 = vunpack.c.l.b16 %v69
    %v1193 = vunpack.c.h.b16 %v69
    %v1194 = vunpack.c.l.b16 %v70
    %v1195 = vunpack.c.h.b16 %v70
    %v1196 = vunpack.c.l.b16 %v71
    %v1197 = vunpack.c.h.b16 %v71
    %v1198 = vunpack.c.l.b16 %v72
    %v1199 = vunpack.c.h.b16 %v72
    %v1200 = vpack.c.b16 %v1136, %v1136
    %v1201 = vpack.c.b16 %v1137, %v1137
    %v1202 = vpack.c.b16 %v1138, %v1138
    %v1203 = vpack.c.b16 %v1139, %v1139
    %v1204 = vpack.c.b16 %v1140, %v1140
    %v1205 = vpack.c.b16 %v1141, %v1141
    %v1206 = vpack.c.b16 %v1142, %v1142
    %v1207 = vpack.c.b16 %v1143, %v1143
    %v1208 = vpack.c.b16 %v1144, %v1144
    %v1209 = vpack.c.b16 %v1145, %v1145
    %v1210 = vpack.c.b16 %v1146, %v1146
    %v1211 = vpack.c.b16 %v1147, %v1147
    %v1212 = vpack.c.b16 %v1148, %v1148
    %v1213 = vpack.c.b16 %v1149, %v1149
    %v1214 = vpack.c.b16 %v1150, %v1150
    %v1215 = vpack.c.b16 %v1151, %v1151
    %v1216 = vpack.c.b16 %v1152, %v1152
    %v1217 = vpack.c.b16 %v1153, %v1153
    %v1218 = vpack.c.b16 %v1154, %v1154
    %v1219 = vpack.c.b16 %v1155, %v1155
    %v1220 = vpack.c.b16 %v1156, %v1156
    %v1221 = vpack.c.b16 %v1157, %v1157
    %v1222 = vpack.c.b16 %v1158, %v1158
    %v1223 = vpack.c.b16 %v1159, %v1159
    %v1224 = vpack.c.b16 %v1160, %v1160
    %v1225 = vpack.c.b16 %v1161, %v1161
    %v1226 = vpack.c.b16 %v1162, %v1162
    %v1227 = vpack.c.b16 %v1163, %v1163
    %v1228 = vpack.c.b16 %v1164, %v1164
    %v1229 = vpack.c.b16 %v1165, %v1165
    %v1230 = vpack.c.b16 %v1166, %v1166
    %v1231 = vpack.c.b16 %v1167, %v1167
    %v1232 = vpack.c.b16 %v1168, %v1168
    %v1233 = vpack.c.b16 %v1169, %v1169
    %v1234 = vpack.c.b16 %v1170, %v1170
    %v1235 = vpack.c.b16 %v1171, %v1171
    %v1236 = vpack.c.b16 %v1172, %v1172
    %v1237 = vpack.c.b16 %v1173, %v1173
    %v1238 = vpack.c.b16 %v1174, %v1174
    %v1239 = vpack.c.b16 %v1175, %v1175
    %v1240 = vpack.c.b16 %v1176, %v1176
    %v1241 = vpack.c.b16 %v1177, %v1177
    %v1242 = vpack.c.b16 %v1178, %v1178
    %v1243 = vpack.c.b16 %v1179, %v1179
    %v1244 = vpack.c.b16 %v1180, %v1180
    %v1245 = vpack.c.b16 %v1181, %v1181
    %v1246 = vpack.c.b16 %v1182, %v1182
    %v1247 = vpack.c.b16 %v1183, %v1183
    %v1248 = vpack.c.b16 %v1184, %v1184
    %v1249 = vpack.c.b16 %v1185, %v1185
    %v1250 = vpack.c.b16 %v1186, %v1186
    %v1251 = vpack.c.b16 %v1187, %v1187
    %v1252 = vpack.c.b16 %v1188, %v1188
    %v1253 = vpack.c.b16 %v1189, %v1189
    %v1254 = vpack.c.b16 %v1190, %v1190
    %v1255 = vpack.c.b16 %v1191, %v1191
    %v1256 = vpack.c.b16 %v1192, %v1192
    %v1257 = vpack.c.b16 %v1193, %v1193
    %v1258 = vpack.c.b16 %v1194, %v1194
    %v1259 = vpack.c.b16 %v1195, %v1195
    %v1260 = vpack.c.b16 %v1196, %v1196
    %v1261 = vpack.c.b16 %v1197, %v1197
    %v1262 = vpack.c.b16 %v1198, %v1198
    %v1263 = vpack.c.b16 %v1199, %v1199
    %v2352 = vunpack.c.l.b16 %v73
    %v2353 = vunpack.c.l.b16 %v74
    %v2354 = vunpack.c.l.b16 %v75
    %v2355 = vunpack.c.l.b16 %v76
    %v2356 = vunpack.c.l.b16 %v77
    %v2357 = vunpack.c.l.b16 %v78
    %v2358 = vunpack.c.l.b16 %v79
    %v2359 = vunpack.c.l.b16 %v80
    %v2360 = vunpack.c.l.b16 %v81
    %v2361 = vunpack.c.l.b16 %v82
    %v2362 = vunpack.c.l.b16 %v83
    %v2363 = vunpack.c.l.b16 %v84
    %v2364 = vunpack.c.l.b16 %v85
    %v2365 = vunpack.c.l.b16 %v86
    %v2366 = vunpack.c.l.b16 %v87
    %v2367 = vunpack.c.l.b16 %v88
    %v2368 = vunpack.c.l.b16 %v89
    %v2369 = vunpack.c.l.b16 %v90
    %v2370 = vunpack.c.l.b16 %v91
    %v2371 = vunpack.c.l.b16 %v92
    %v2372 = vunpack.c.l.b16 %v93
    %v2373 = vunpack.c.l.b16 %v94
    %v2374 = vunpack.c.l.b16 %v95
    %v2375 = vunpack.c.l.b16 %v96
    %v2376 = vunpack.c.l.b16 %v97
    %v2377 = vunpack.c.l.b16 %v98
    %v2378 = vunpack.c.l.b16 %v99
    %v2379 = vunpack.c.l.b16 %v100
    %v2380 = vunpack.c.l.b16 %v101
    %v2381 = vunpack.c.l.b16 %v102
    %v2382 = vunpack.c.l.b16 %v103
    %v2383 = vunpack.c.l.b16 %v104
    %v2384 = vunpack.c.l.b16 %v105
    %v2385 = vunpack.c.l.b16 %v106
    %v2386 = vunpack.c.l.b16 %v107
    %v2387 = vunpack.c.l.b16 %v108
    %v2388 = vunpack.c.l.b16 %v109
    %v2389 = vunpack.c.l.b16 %v110
    %v2390 = vunpack.c.l.b16 %v111
    %v2391 = vunpack.c.l.b16 %v112
    %v2392 = vunpack.c.l.b16 %v113
    %v2393 = vunpack.c.l.b16 %v114
    %v2394 = vunpack.c.l.b16 %v115
    %v2395 = vunpack.c.l.b16 %v116
    %v2396 = vunpack.c.l.b16 %v117
    %v2397 = vunpack.c.l.b16 %v118
    %v2398 = vunpack.c.l.b16 %v119
    %v2399 = vunpack.c.l.b16 %v120
    %v2400 = vunpack.c.l.b16 %v121
    %v2401 = vunpack.c.l.b16 %v122
    %v2402 = vunpack.c.l.b16 %v123
    %v2403 = vunpack.c.l.b16 %v124
    %v2404 = vunpack.c.l.b16 %v125
    %v2405 = vunpack.c.l.b16 %v126
    %v2406 = vunpack.c.l.b16 %v127
    %v2407 = vunpack.c.l.b16 %v128
    %v2408 = vunpack.c.l.b16 %v129
    %v2409 = vunpack.c.l.b16 %v130
    %v2410 = vunpack.c.l.b16 %v131
    %v2411 = vunpack.c.l.b16 %v132
    %v2412 = vunpack.c.l.b16 %v133
    %v2413 = vunpack.c.l.b16 %v134
    %v2414 = vunpack.c.l.b16 %v135
    %v2415 = vunpack.c.l.b16 %v136
    %v2416 = vunpack.c.l.b16 %v137
    %v2417 = vunpack.c.l.b16 %v138
    %v2418 = vunpack.c.l.b16 %v139
    %v2419 = vunpack.c.l.b16 %v140
    %v2420 = vunpack.c.l.b16 %v141
    %v2421 = vunpack.c.l.b16 %v142
    %v2422 = vunpack.c.l.b16 %v143
    %v2423 = vunpack.c.l.b16 %v144
    %v2424 = vunpack.c.l.b16 %v145
    %v2425 = vunpack.c.l.b16 %v146
    %v2426 = vunpack.c.l.b16 %v147
    %v2427 = vunpack.c.l.b16 %v148
    %v2428 = vunpack.c.l.b16 %v149
    %v2429 = vunpack.c.l.b16 %v150
    %v2430 = vunpack.c.l.b16 %v151
    %v2431 = vunpack.c.l.b16 %v152
    %v2432 = vunpack.c.l.b16 %v153
    %v2433 = vunpack.c.l.b16 %v154
    %v2434 = vunpack.c.l.b16 %v155
    %v2435 = vunpack.c.l.b16 %v156
    %v2436 = vunpack.c.l.b16 %v157
    %v2437 = vunpack.c.l.b16 %v158
    %v2438 = vunpack.c.l.b16 %v159
    %v2439 = vunpack.c.l.b16 %v160
    %v2440 = vunpack.c.l.b16 %v161
    %v2441 = vunpack.c.l.b16 %v162
    %v2442 = vunpack.c.l.b16 %v163
    %v2443 = vunpack.c.l.b16 %v164
    %v2444 = vunpack.c.l.b16 %v165
    %v2445 = vunpack.c.l.b16 %v166
    %v2446 = vunpack.c.l.b16 %v167
    %v2447 = vunpack.c.l.b16 %v168
    %v2448 = vunpack.c.l.b16 %v169
    %v2449 = vunpack.c.l.b16 %v170
    %v2450 = vunpack.c.l.b16 %v171
    %v2451 = vunpack.c.l.b16 %v172
    %v2452 = vunpack.c.l.b16 %v173
    %v2453 = vunpack.c.l.b16 %v174
    %v2454 = vunpack.c.l.b16 %v175
    %v2455 = vunpack.c.l.b16 %v176
    %v2456 = vunpack.c.l.b16 %v177
    %v2457 = vunpack.c.l.b16 %v178
    %v2458 = vunpack.c.l.b16 %v179
    %v2459 = vunpack.c.l.b16 %v180
    %v2460 = vunpack.c.l.b16 %v181
    %v2461 = vunpack.c.l.b16 %v182
    %v2462 = vunpack.c.l.b16 %v183
    %v2463 = vunpack.c.l.b16 %v184
    %v2464 = vunpack.c.l.b16 %v185
    %v2465 = vunpack.c.l.b16 %v186
    %v2466 = vunpack.c.l.b16 %v187
    %v2467 = vunpack.c.l.b16 %v188
    %v2468 = vunpack.c.l.b16 %v189
    %v2469 = vunpack.c.l.b16 %v190
    %v2470 = vunpack.c.l.b16 %v191
    %v2471 = vunpack.c.l.b16 %v192
    %v2472 = vunpack.c.l.b16 %v193
    %v2473 = vunpack.c.l.b16 %v194
    %v2474 = vunpack.c.l.b16 %v195
    %v2475 = vunpack.c.l.b16 %v196
    %v2476 = vunpack.c.l.b16 %v197
    %v2477 = vunpack.c.l.b16 %v198
    %v2478 = vunpack.c.l.b16 %v199
    %v2479 = vunpack.c.l.b16 %v200
    %v2480 = vunpack.c.l.b16 %v201
    %v2481 = vunpack.c.l.b16 %v202
    %v2482 = vunpack.c.l.b16 %v203
    %v2483 = vunpack.c.l.b16 %v204
    %v2484 = vunpack.c.l.b16 %v205
    %v2485 = vunpack.c.l.b16 %v206
    %v2486 = vunpack.c.l.b16 %v207
    %v2487 = vunpack.c.l.b16 %v208
    %v2488 = vunpack.c.l.b16 %v209
    %v2489 = vunpack.c.l.b16 %v210
    %v2490 = vunpack.c.l.b16 %v211
    %v2491 = vunpack.c.l.b16 %v212
    %v2492 = vunpack.c.l.b16 %v213
    %v2493 = vunpack.c.l.b16 %v214
    %v2494 = vunpack.c.l.b16 %v215
    %v2495 = vunpack.c.l.b16 %v216
    %v2496 = vunpack.c.l.b16 %v217
    %v2497 = vunpack.c.l.b16 %v218
    %v2498 = vunpack.c.l.b16 %v219
    %v2499 = vunpack.c.l.b16 %v220
    %v2500 = vunpack.c.l.b16 %v221
    %v2501 = vunpack.c.l.b16 %v222
    %v2502 = vunpack.c.l.b16 %v223
    %v2503 = vunpack.c.l.b16 %v224
    %v2504 = vunpack.c.l.b16 %v225
    %v2505 = vunpack.c.l.b16 %v226
    %v2506 = vunpack.c.l.b16 %v227
    %v2507 = vunpack.c.l.b16 %v228
    %v2508 = vunpack.c.l.b16 %v229
    %v2509 = vunpack.c.l.b16 %v230
    %v2510 = vunpack.c.l.b16 %v231
    %v2511 = vunpack.c.l.b16 %v232
    %v2512 = vunpack.c.l.b16 %v233
    %v2513 = vunpack.c.l.b16 %v234
    %v2514 = vunpack.c.l.b16 %v235
    %v2515 = vunpack.c.l.b16 %v236
    %v2516 = vunpack.c.l.b16 %v237
    %v2517 = vunpack.c.l.b16 %v238
    %v2518 = vunpack.c.l.b16 %v239
    %v2519 = vunpack.c.l.b16 %v240
    %v2520 = vunpack.c.l.b16 %v241
    %v2521 = vunpack.c.l.b16 %v242
    %v2522 = vunpack.c.l.b16 %v243
    %v2523 = vunpack.c.l.b16 %v244
    %v2524 = vunpack.c.l.b16 %v245
    %v2525 = vunpack.c.l.b16 %v246
    %v2526 = vunpack.c.l.b16 %v247
    %v2527 = vunpack.c.l.b16 %v248
    %v2528 = vunpack.c.l.b16 %v249
    %v2529 = vunpack.c.l.b16 %v250
    %v2530 = vunpack.c.l.b16 %v251
    %v2531 = vunpack.c.l.b16 %v252
    %v2532 = vunpack.c.l.b16 %v253
    %v2533 = vunpack.c.l.b16 %v254
    %v2534 = vunpack.c.l.b16 %v255
    %v2535 = vunpack.c.l.b16 %v256
    %v2536 = vunpack.c.l.b16 %v257
    %v2537 = vunpack.c.l.b16 %v258
    %v2538 = vunpack.c.l.b16 %v259
    %v2539 = vunpack.c.l.b16 %v260
    %v2540 = vunpack.c.l.b16 %v261
    %v2541 = vunpack.c.l.b16 %v262
    %v2542 = vunpack.c.l.b16 %v263
    %v2543 = vunpack.c.l.b16 %v264
    %v2544 = vunpack.c.l.b16 %v265
    %v2545 = vunpack.c.l.b16 %v266
    %v2546 = vunpack.c.l.b16 %v267
    %v2547 = vunpack.c.l.b16 %v268
    %v2548 = vunpack.c.l.b16 %v269
    %v2549 = vunpack.c.l.b16 %v270
    %v2550 = vunpack.c.l.b16 %v271
    %v2551 = vunpack.c.l.b16 %v272
    %v2552 = vunpack.c.l.b16 %v273
    %v2553 = vunpack.c.l.b16 %v274
    %v2554 = vunpack.c.l.b16 %v275
    %v2555 = vunpack.c.l.b16 %v276
    %v2556 = vunpack.c.l.b16 %v277
    %v2557 = vunpack.c.l.b16 %v278
    %v2558 = vunpack.c.l.b16 %v279
    %v2559 = vunpack.c.l.b16 %v280
    %v2560 = vunpack.c.l.b16 %v281
    %v2561 = vunpack.c.l.b16 %v282
    %v2562 = vunpack.c.l.b16 %v283
    %v2563 = vunpack.c.l.b16 %v284
    %v2564 = vunpack.c.l.b16 %v285
    %v2565 = vunpack.c.l.b16 %v286
    %v2566 = vunpack.c.l.b16 %v287
    %v2567 = vunpack.c.l.b16 %v288
    %v2568 = vunpack.c.l.b16 %v289
    %v2569 = vunpack.c.l.b16 %v290
    %v2570 = vunpack.c.l.b16 %v291
    %v2571 = vunpack.c.l.b16 %v292
    %v2572 = vunpack.c.l.b16 %v293
    %v2573 = vunpack.c.l.b16 %v294
    %v2574 = vunpack.c.l.b16 %v295
    %v2575 = vunpack.c.l.b16 %v296
    %v2576 = vunpack.c.l.b16 %v297
    %v2577 = vunpack.c.l.b16 %v298
    %v2578 = vunpack.c.l.b16 %v299
    %v2579 = vunpack.c.l.b16 %v300
    %v2580 = vunpack.c.l.b16 %v301
    %v2581 = vunpack.c.l.b16 %v302
    %v2582 = vunpack.c.l.b16 %v303
    %v2583 = vunpack.c.l.b16 %v304
    %v2584 = vunpack.c.l.b16 %v305
    %v2585 = vunpack.c.l.b16 %v306
    %v2586 = vunpack.c.l.b16 %v307
    %v2587 = vunpack.c.l.b16 %v308
    %v2588 = vunpack.c.l.b16 %v309
    %v2589 = vunpack.c.l.b16 %v310
    %v2590 = vunpack.c.l.b16 %v311
    %v2591 = vunpack.c.l.b16 %v312
    %v2592 = vunpack.c.l.b16 %v313
    %v2593 = vunpack.c.l.b16 %v314
    %v2594 = vunpack.c.l.b16 %v315
    %v2595 = vunpack.c.l.b16 %v316
    %v2596 = vunpack.c.l.b16 %v317
    %v2597 = vunpack.c.l.b16 %v318
    %v2598 = vunpack.c.l.b16 %v319
    %v2599 = vunpack.c.l.b16 %v320
    %v2600 = vunpack.c.l.b16 %v321
    %v2601 = vunpack.c.l.b16 %v322
    %v2602 = vunpack.c.l.b16 %v323
    %v2603 = vunpack.c.l.b16 %v324
    %v2604 = vunpack.c.l.b16 %v325
    %v2605 = vunpack.c.l.b16 %v326
    %v2606 = vunpack.c.l.b16 %v327
    %v2607 = vunpack.c.l.b16 %v328
    %v2608 = vunpack.c.l.b16 %v329
    %v2609 = vunpack.c.l.b16 %v330
    %v2610 = vunpack.c.l.b16 %v331
    %v2611 = vunpack.c.l.b16 %v332
    %v2612 = vunpack.c.l.b16 %v333
    %v2613 = vunpack.c.l.b16 %v334
    %v2614 = vunpack.c.l.b16 %v335
    %v2615 = vunpack.c.l.b16 %v336
    %v2616 = vunpack.c.l.b16 %v337
    %v2617 = vunpack.c.l.b16 %v338
    %v2618 = vunpack.c.l.b16 %v339
    %v2619 = vunpack.c.l.b16 %v340
    %v2620 = vunpack.c.l.b16 %v341
    %v2621 = vunpack.c.l.b16 %v342
    %v2622 = vunpack.c.l.b16 %v343
    %v2623 = vunpack.c.l.b16 %v344
    %v2624 = vunpack.c.l.b16 %v345
    %v2625 = vunpack.c.l.b16 %v346
    %v2626 = vunpack.c.l.b16 %v347
    %v2627 = vunpack.c.l.b16 %v348
    %v2628 = vunpack.c.l.b16 %v349
    %v2629 = vunpack.c.l.b16 %v350
    %v2630 = vunpack.c.l.b16 %v351
    %v2631 = vunpack.c.l.b16 %v352
    %v2632 = vunpack.c.l.b16 %v353
    %v2633 = vunpack.c.l.b16 %v354
    %v2634 = vunpack.c.l.b16 %v355
    %v2635 = vunpack.c.l.b16 %v356
    %v2636 = vunpack.c.l.b16 %v357
    %v2637 = vunpack.c.l.b16 %v358
    %v2638 = vunpack.c.l.b16 %v359
    %v2639 = vunpack.c.l.b16 %v360
    %v2640 = vunpack.c.l.b16 %v361
    %v2641 = vunpack.c.l.b16 %v362
    %v2642 = vunpack.c.l.b16 %v363
    %v2643 = vunpack.c.l.b16 %v364
    %v2644 = vunpack.c.l.b16 %v365
    %v2645 = vunpack.c.l.b16 %v366
    %v2646 = vunpack.c.l.b16 %v367
    %v2647 = vunpack.c.l.b16 %v368
    %v2648 = vunpack.c.l.b16 %v369
    %v2649 = vunpack.c.l.b16 %v370
    %v2650 = vunpack.c.l.b16 %v371
    %v2651 = vunpack.c.l.b16 %v372
    %v2652 = vunpack.c.l.b16 %v373
    %v2653 = vunpack.c.l.b16 %v374
    %v2654 = vunpack.c.l.b16 %v375
    %v2655 = vunpack.c.l.b16 %v376
    %v2656 = vunpack.c.l.b16 %v377
    %v2657 = vunpack.c.l.b16 %v378
    %v2658 = vunpack.c.l.b16 %v379
    %v2659 = vunpack.c.l.b16 %v380
    %v2660 = vunpack.c.l.b16 %v381
    %v2661 = vunpack.c.l.b16 %v382
    %v2662 = vunpack.c.l.b16 %v383
    %v2663 = vunpack.c.l.b16 %v384
    %v2664 = vunpack.c.l.b16 %v385
    %v2665 = vunpack.c.l.b16 %v386
    %v2666 = vunpack.c.l.b16 %v387
    %v2667 = vunpack.c.l.b16 %v388
    %v2668 = vunpack.c.l.b16 %v389
    %v2669 = vunpack.c.l.b16 %v390
    %v2670 = vunpack.c.l.b16 %v391
    %v2671 = vunpack.c.l.b16 %v392
    %v2672 = vunpack.c.l.b16 %v393
    %v2673 = vunpack.c.l.b16 %v394
    %v2674 = vunpack.c.l.b16 %v395
    %v2675 = vunpack.c.l.b16 %v396
    %v2676 = vunpack.c.l.b16 %v397
    %v2677 = vunpack.c.l.b16 %v398
    %v2678 = vunpack.c.l.b16 %v399
    %v2679 = vunpack.c.l.b16 %v400
    %v2680 = vunpack.c.l.b16 %v401
    %v2681 = vunpack.c.l.b16 %v402
    %v2682 = vunpack.c.l.b16 %v403
    %v2683 = vunpack.c.l.b16 %v404
    %v2684 = vunpack.c.l.b16 %v405
    %v2685 = vunpack.c.l.b16 %v406
    %v2686 = vunpack.c.l.b16 %v407
    %v2687 = vunpack.c.l.b16 %v408
    %v2688 = vunpack.c.l.b16 %v409
    %v2689 = vunpack.c.l.b16 %v410
    %v2690 = vunpack.c.l.b16 %v411
    %v2691 = vunpack.c.l.b16 %v412
    %v2692 = vunpack.c.l.b16 %v413
    %v2693 = vunpack.c.l.b16 %v414
    %v2694 = vunpack.c.l.b16 %v415
    %v2695 = vunpack.c.l.b16 %v416
    %v2696 = vunpack.c.l.b16 %v417
    %v2697 = vunpack.c.l.b16 %v418
    %v2698 = vunpack.c.l.b16 %v419
    %v2699 = vunpack.c.l.b16 %v420
    %v2700 = vunpack.c.l.b16 %v421
    %v2701 = vunpack.c.l.b16 %v422
    %v2702 = vunpack.c.l.b16 %v423
    %v2703 = vunpack.c.l.b16 %v424
    %v2704 = vunpack.c.l.b16 %v425
    %v2705 = vunpack.c.l.b16 %v426
    %v2706 = vunpack.c.l.b16 %v427
    %v2707 = vunpack.c.l.b16 %v428
    %v2708 = vunpack.c.l.b16 %v429
    %v2709 = vunpack.c.l.b16 %v430
    %v2710 = vunpack.c.l.b16 %v431
    %v2711 = vunpack.c.l.b16 %v432
    %v2712 = vunpack.c.l.b16 %v433
    %v2713 = vunpack.c.l.b16 %v434
    %v2714 = vunpack.c.l.b16 %v435
    %v2715 = vunpack.c.l.b16 %v436
    %v2716 = vunpack.c.l.b16 %v437
    %v2717 = vunpack.c.l.b16 %v438
    %v2718 = vunpack.c.l.b16 %v439
    %v2719 = vunpack.c.l.b16 %v440
    %v2720 = vunpack.c.l.b16 %v441
    %v2721 = vunpack.c.l.b16 %v442
    %v2722 = vunpack.c.l.b16 %v443
    %v2723 = vunpack.c.l.b16 %v444
    %v2724 = vunpack.c.l.b16 %v445
    %v2725 = vunpack.c.l.b16 %v446
    %v2726 = vunpack.c.l.b16 %v447
    %v2727 = vunpack.c.l.b16 %v448
    %v2728 = vunpack.c.l.b16 %v449
    %v2729 = vunpack.c.l.b16 %v450
    %v2730 = vunpack.c.l.b16 %v451
    %v2731 = vunpack.c.l.b16 %v452
    %v2732 = vunpack.c.l.b16 %v453
    %v2733 = vunpack.c.l.b16 %v454
    %v2734 = vunpack.c.l.b16 %v455
    %v2735 = vunpack.c.l.b16 %v456
    %v2736 = vunpack.c.l.b16 %v457
    %v2737 = vunpack.c.l.b16 %v458
    %v2738 = vunpack.c.l.b16 %v459
    %v2739 = vunpack.c.l.b16 %v460
    %v2740 = vunpack.c.l.b16 %v461
    %v2741 = vunpack.c.l.b16 %v462
    %v2742 = vunpack.c.l.b16 %v463
    %v2743 = vunpack.c.l.b16 %v464
    %v2744 = vunpack.c.l.b16 %v465
    %v2745 = vunpack.c.l.b16 %v466
    %v2746 = vunpack.c.l.b16 %v467
    %v2747 = vunpack.c.l.b16 %v468
    %v2748 = vunpack.c.l.b16 %v469
    %v2749 = vunpack.c.l.b16 %v470
    %v2750 = vunpack.c.l.b16 %v471
    %v2751 = vunpack.c.l.b16 %v472
    %v2752 = vunpack.c.l.b16 %v473
    %v2753 = vunpack.c.l.b16 %v474
    %v2754 = vunpack.c.l.b16 %v475
    %v2755 = vunpack.c.l.b16 %v476
    %v2756 = vunpack.c.l.b16 %v477
    %v2757 = vunpack.c.l.b16 %v478
    %v2758 = vunpack.c.l.b16 %v479
    %v2759 = vunpack.c.l.b16 %v480
    %v2760 = vunpack.c.l.b16 %v481
    %v2761 = vunpack.c.l.b16 %v482
    %v2762 = vunpack.c.l.b16 %v483
    %v2763 = vunpack.c.l.b16 %v484
    %v2764 = vunpack.c.l.b16 %v485
    %v2765 = vunpack.c.l.b16 %v486
    %v2766 = vunpack.c.l.b16 %v487
    %v2767 = vunpack.c.l.b16 %v488
    %v2768 = vunpack.c.l.b16 %v489
    %v2769 = vunpack.c.l.b16 %v490
    %v2770 = vunpack.c.l.b16 %v491
    %v2771 = vunpack.c.l.b16 %v492
    %v2772 = vunpack.c.l.b16 %v493
    %v2773 = vunpack.c.l.b16 %v494
    %v2774 = vunpack.c.l.b16 %v495
    %v2775 = vunpack.c.l.b16 %v496
    %v2776 = vunpack.c.l.b16 %v497
    %v2777 = vunpack.c.l.b16 %v498
    %v2778 = vunpack.c.l.b16 %v499
    %v2779 = vunpack.c.l.b16 %v500
    %v2780 = vunpack.c.l.b16 %v501
    %v2781 = vunpack.c.l.b16 %v502
    %v2782 = vunpack.c.l.b16 %v503
    %v2783 = vunpack.c.l.b16 %v504
    %v2784 = vunpack.c.l.b16 %v505
    %v2785 = vunpack.c.l.b16 %v506
    %v2786 = vunpack.c.l.b16 %v507
    %v2787 = vunpack.c.l.b16 %v508
    %v2788 = vunpack.c.l.b16 %v509
    %v2789 = vunpack.c.l.b16 %v510
    %v2790 = vunpack.c.l.b16 %v511
    %v2791 = vunpack.c.l.b16 %v512
    %v2792 = vunpack.c.l.b16 %v513
    %v2793 = vunpack.c.l.b16 %v514
    %v2794 = vunpack.c.l.b16 %v515
    %v2795 = vunpack.c.l.b16 %v516
    %v2796 = vunpack.c.l.b16 %v517
    %v2797 = vunpack.c.l.b16 %v518
    %v2798 = vunpack.c.l.b16 %v519
    %v2799 = vunpack.c.l.b16 %v520
    %v2800 = vunpack.c.l.b16 %v521
    %v2801 = vunpack.c.l.b16 %v522
    %v2802 = vunpack.c.l.b16 %v523
    %v2803 = vunpack.c.l.b16 %v524
    %v2804 = vunpack.c.l.b16 %v525
    %v2805 = vunpack.c.l.b16 %v526
    %v2806 = vunpack.c.l.b16 %v527
    %v2807 = vunpack.c.l.b16 %v528
    %v2808 = vunpack.c.l.b16 %v529
    %v2809 = vunpack.c.l.b16 %v530
    %v2810 = vunpack.c.l.b16 %v531
    %v2811 = vunpack.c.l.b16 %v532
    %v2812 = vunpack.c.l.b16 %v533
    %v2813 = vunpack.c.l.b16 %v534
    %v2814 = vunpack.c.l.b16 %v535
    %v2815 = vunpack.c.l.b16 %v536
    %v2816 = vunpack.c.l.b16 %v537
    %v2817 = vunpack.c.l.b16 %v538
    %v2818 = vunpack.c.l.b16 %v539
    %v2819 = vunpack.c.l.b16 %v540
    %v2820 = vunpack.c.l.b16 %v541
    %v2821 = vunpack.c.l.b16 %v542
    %v2822 = vunpack.c.l.b16 %v543
    %v2823 = vunpack.c.l.b16 %v544
    %v2824 = vunpack.c.l.b16 %v545
    %v2825 = vunpack.c.l.b16 %v546
    %v2826 = vunpack.c.l.b16 %v547
    %v2827 = vunpack.c.l.b16 %v548
    %v2828 = vunpack.c.l.b16 %v549
    %v2829 = vunpack.c.l.b16 %v550
    %v2830 = vunpack.c.l.b16 %v551
    %v2831 = vunpack.c.l.b16 %v552
    %v2832 = vunpack.c.l.b16 %v553
    %v2833 = vunpack.c.l.b16 %v554
    %v2834 = vunpack.c.l.b16 %v555
    %v2835 = vunpack.c.l.b16 %v556
    %v2836 = vunpack.c.l.b16 %v557
    %v2837 = vunpack.c.l.b16 %v558
    %v2838 = vunpack.c.l.b16 %v559
    %v2839 = vunpack.c.l.b16 %v560
    %v2840 = vunpack.c.l.b16 %v561
    %v2841 = vunpack.c.l.b16 %v562
    %v2842 = vunpack.c.l.b16 %v563
    %v2843 = vunpack.c.l.b16 %v564
    %v2844 = vunpack.c.l.b16 %v565
    %v2845 = vunpack.c.l.b16 %v566
    %v2846 = vunpack.c.l.b16 %v567
    %v2847 = vunpack.c.l.b16 %v568
    %v2848 = vunpack.c.l.b16 %v569
    %v2849 = vunpack.c.l.b16 %v570
    %v2850 = vunpack.c.l.b16 %v571
    %v2851 = vunpack.c.l.b16 %v572
    %v2852 = vunpack.c.l.b16 %v573
    %v2853 = vunpack.c.l.b16 %v574
    %v2854 = vunpack.c.l.b16 %v575
    %v2855 = vunpack.c.l.b16 %v576
    %v2856 = vunpack.c.l.b16 %v577
    %v2857 = vunpack.c.l.b16 %v578
    %v2858 = vunpack.c.l.b16 %v579
    %v2859 = vunpack.c.l.b16 %v580
    %v2860 = vunpack.c.l.b16 %v581
    %v2861 = vunpack.c.l.b16 %v582
    %v2862 = vunpack.c.l.b16 %v583
    %v2863 = vunpack.c.l.b16 %v584
    %v2864 = vunpack.c.l.b16 %v585
    %v2865 = vunpack.c.l.b16 %v586
    %v2866 = vunpack.c.l.b16 %v587
    %v2867 = vunpack.c.l.b16 %v588
    %v2868 = vunpack.c.l.b16 %v589
    %v2869 = vunpack.c.l.b16 %v590
    %v2870 = vunpack.c.l.b16 %v591
    %v2871 = vunpack.c.l.b16 %v592
    %v2872 = vunpack.c.l.b16 %v593
    %v2873 = vunpack.c.l.b16 %v594
    %v2874 = vunpack.c.l.b16 %v595
    %v2875 = vunpack.c.l.b16 %v596
    %v2876 = vunpack.c.l.b16 %v597
    %v2877 = vunpack.c.l.b16 %v598
    %v2878 = vunpack.c.l.b16 %v599
    %v2879 = vunpack.c.l.b16 %v600
    %v2880 = vunpack.c.l.b16 %v601
    %v2881 = vunpack.c.l.b16 %v602
    %v2882 = vunpack.c.l.b16 %v603
    %v2883 = vunpack.c.l.b16 %v604
    %v2884 = vunpack.c.l.b16 %v605
    %v2885 = vunpack.c.l.b16 %v606
    %v2886 = vunpack.c.l.b16 %v607
    %v2887 = vunpack.c.l.b16 %v608
    %v2888 = vunpack.c.l.b16 %v609
    %v2889 = vunpack.c.l.b16 %v610
    %v2890 = vunpack.c.l.b16 %v611
    %v2891 = vunpack.c.l.b16 %v612
    %v2892 = vunpack.c.l.b16 %v613
    %v2893 = vunpack.c.l.b16 %v614
    %v2894 = vunpack.c.l.b16 %v615
    %v2895 = vunpack.c.l.b16 %v616
    %v2896 = vunpack.c.l.b16 %v617
    %v2897 = vunpack.c.l.b16 %v618
    %v2898 = vunpack.c.l.b16 %v619
    %v2899 = vunpack.c.l.b16 %v620
    %v2900 = vunpack.c.l.b16 %v621
    %v2901 = vunpack.c.l.b16 %v622
    %v2902 = vunpack.c.l.b16 %v623
    %v2903 = vunpack.c.l.b16 %v624
    %v2904 = vunpack.c.l.b16 %v625
    %v2905 = vunpack.c.l.b16 %v626
    %v2906 = vunpack.c.l.b16 %v627
    %v2907 = vunpack.c.l.b16 %v628
    %v2908 = vunpack.c.l.b16 %v629
    %v2909 = vunpack.c.l.b16 %v630
    %v2910 = vunpack.c.l.b16 %v631
    %v2911 = vunpack.c.l.b16 %v632
    %v2912 = vunpack.c.l.b16 %v633
    %v2913 = vunpack.c.l.b16 %v634
    %v2914 = vunpack.c.l.b16 %v635
    %v2915 = vunpack.c.l.b16 %v636
    %v2916 = vunpack.c.l.b16 %v637
    %v2917 = vunpack.c.l.b16 %v638
    %v2918 = vunpack.c.l.b16 %v639
    %v2919 = vunpack.c.l.b16 %v640
    %v2920 = vunpack.c.l.b16 %v641
    %v2921 = vunpack.c.l.b16 %v642
    %v2922 = vunpack.c.l.b16 %v643
    %v2923 = vunpack.c.l.b16 %v644
    %v2924 = vunpack.c.l.b16 %v645
    %v2925 = vunpack.c.l.b16 %v646
    %v2926 = vunpack.c.l.b16 %v647
    %v2927 = vunpack.c.l.b16 %v648
    %v2928 = vunpack.c.l.b16 %v649
    %v2929 = vunpack.c.l.b16 %v650
    %v2930 = vunpack.c.l.b16 %v651
    %v2931 = vunpack.c.l.b16 %v652
    %v2932 = vunpack.c.l.b16 %v653
    %v2933 = vunpack.c.l.b16 %v654
    %v2934 = vunpack.c.l.b16 %v655
    %v2935 = vunpack.c.l.b16 %v656
    %v2936 = vunpack.c.l.b16 %v657
    %v2937 = vunpack.c.l.b16 %v658
    %v2938 = vunpack.c.l.b16 %v659
    %v2939 = vunpack.c.l.b16 %v660
    %v2940 = vunpack.c.l.b16 %v661
    %v2941 = vunpack.c.l.b16 %v662
    %v2942 = vunpack.c.l.b16 %v663
    %v2943 = vunpack.c.l.b16 %v664
    %v2944 = vunpack.c.l.b16 %v665
    %v2945 = vunpack.c.l.b16 %v666
    %v2946 = vunpack.c.l.b16 %v667
    %v2947 = vunpack.c.l.b16 %v668
    %v2948 = vunpack.c.l.b16 %v669
    %v2949 = vunpack.c.l.b16 %v670
    %v2950 = vunpack.c.l.b16 %v671
    %v2951 = vunpack.c.l.b16 %v672
    %v2952 = vunpack.c.l.b16 %v673
    %v2953 = vunpack.c.l.b16 %v674
    %v2954 = vunpack.c.l.b16 %v675
    %v2955 = vunpack.c.l.b16 %v676
    %v2956 = vunpack.c.l.b16 %v677
    %v2957 = vunpack.c.l.b16 %v678
    %v2958 = vunpack.c.l.b16 %v679
    %v2959 = vunpack.c.l.b16 %v680
    %v2960 = vunpack.c.l.b16 %v681
    %v2961 = vunpack.c.l.b16 %v682
    %v2962 = vunpack.c.l.b16 %v683
    %v2963 = vunpack.c.l.b16 %v684
    %v2964 = vunpack.c.l.b16 %v685
    %v2965 = vunpack.c.l.b16 %v686
    %v2966 = vunpack.c.l.b16 %v687
    %v2967 = vunpack.c.l.b16 %v688
    %v2968 = vunpack.c.l.b16 %v689
    %v2969 = vunpack.c.l.b16 %v690
    %v2970 = vunpack.c.l.b16 %v691
    %v2971 = vunpack.c.l.b16 %v692
    %v2972 = vunpack.c.l.b16 %v693
    %v2973 = vunpack.c.l.b16 %v694
    %v2974 = vunpack.c.l.b16 %v695
    %v2975 = vunpack.c.l.b16 %v696
    %v2976 = vunpack.c.l.b16 %v697
    %v2977 = vunpack.c.l.b16 %v698
    %v2978 = vunpack.c.l.b16 %v699
    %v2979 = vunpack.c.l.b16 %v700
    %v2980 = vunpack.c.l.b16 %v701
    %v2981 = vunpack.c.l.b16 %v702
    %v2982 = vunpack.c.l.b16 %v703
    %v2983 = vunpack.c.l.b16 %v704
    %v2984 = vunpack.c.l.b16 %v705
    %v2985 = vunpack.c.l.b16 %v706
    %v2986 = vunpack.c.l.b16 %v707
    %v2987 = vunpack.c.l.b16 %v708
    %v2988 = vunpack.c.l.b16 %v709
    %v2989 = vunpack.c.l.b16 %v710
    %v2990 = vunpack.c.l.b16 %v711
    %v2991 = vunpack.c.l.b16 %v712
    %v2992 = vunpack.c.l.b16 %v713
    %v2993 = vunpack.c.l.b16 %v714
    %v2994 = vunpack.c.l.b16 %v715
    %v2995 = vunpack.c.l.b16 %v716
    %v2996 = vunpack.c.l.b16 %v717
    %v2997 = vunpack.c.l.b16 %v718
    %v2998 = vunpack.c.l.b16 %v719
    %v2999 = vunpack.c.l.b16 %v720
    %v3000 = vunpack.c.l.b16 %v721
    %v3001 = vunpack.c.l.b16 %v722
    %v3002 = vunpack.c.l.b16 %v723
    %v3003 = vunpack.c.l.b16 %v724
    %v3004 = vunpack.c.l.b16 %v725
    %v3005 = vunpack.c.l.b16 %v726
    %v3006 = vunpack.c.l.b16 %v727
    %v3007 = vunpack.c.l.b16 %v728
    %v3008 = vunpack.c.l.b16 %v729
    %v3009 = vunpack.c.l.b16 %v730
    %v3010 = vunpack.c.l.b16 %v731
    %v3011 = vunpack.c.l.b16 %v732
    %v3012 = vunpack.c.l.b16 %v733
    %v3013 = vunpack.c.l.b16 %v734
    %v3014 = vunpack.c.l.b16 %v735
    %v3015 = vunpack.c.l.b16 %v736
    %v3016 = vunpack.c.l.b16 %v737
    %v3017 = vunpack.c.l.b16 %v738
    %v3018 = vunpack.c.l.b16 %v739
    %v3019 = vunpack.c.l.b16 %v740
    %v3020 = vunpack.c.l.b16 %v741
    %v3021 = vunpack.c.l.b16 %v742
    %v3022 = vunpack.c.l.b16 %v743
    %v3023 = vunpack.c.l.b16 %v744
    %v3024 = vunpack.c.l.b16 %v745
    %v3025 = vunpack.c.l.b16 %v746
    %v3026 = vunpack.c.l.b16 %v747
    %v3027 = vunpack.c.l.b16 %v748
    %v3028 = vunpack.c.l.b16 %v749
    %v3029 = vunpack.c.l.b16 %v750
    %v3030 = vunpack.c.l.b16 %v751
    %v3031 = vunpack.c.l.b16 %v752
    %v3032 = vunpack.c.l.b16 %v753
    %v3033 = vunpack.c.l.b16 %v754
    %v3034 = vunpack.c.l.b16 %v755
    %v3035 = vunpack.c.l.b16 %v756
    %v3036 = vunpack.c.l.b16 %v757
    %v3037 = vunpack.c.l.b16 %v758
    %v3038 = vunpack.c.l.b16 %v759
    %v3039 = vunpack.c.l.b16 %v760
    %v3040 = vunpack.c.l.b16 %v761
    %v3041 = vunpack.c.l.b16 %v762
    %v3042 = vunpack.c.l.b16 %v763
    %v3043 = vunpack.c.l.b16 %v764
    %v3044 = vunpack.c.l.b16 %v765
    %v3045 = vunpack.c.l.b16 %v766
    %v3046 = vunpack.c.l.b16 %v767
    %v3047 = vunpack.c.l.b16 %v768
    %v3048 = vunpack.c.l.b16 %v769
    %v3049 = vunpack.c.l.b16 %v770
    %v3050 = vunpack.c.l.b16 %v771
    %v3051 = vunpack.c.l.b16 %v772
    %v3052 = vunpack.c.l.b16 %v773
    %v3053 = vunpack.c.l.b16 %v774
    %v3054 = vunpack.c.l.b16 %v775
    %v3055 = vunpack.c.l.b16 %v776
    %v3056 = vunpack.c.l.b16 %v777
    %v3057 = vunpack.c.l.b16 %v778
    %v3058 = vunpack.c.l.b16 %v779
    %v3059 = vunpack.c.l.b16 %v780
    %v3060 = vunpack.c.l.b16 %v781
    %v3061 = vunpack.c.l.b16 %v782
    %v3062 = vunpack.c.l.b16 %v783
    %v3063 = vunpack.c.l.b16 %v784
    %v3064 = vunpack.c.l.b16 %v785
    %v3065 = vunpack.c.l.b16 %v786
    %v3066 = vunpack.c.l.b16 %v787
    %v3067 = vunpack.c.l.b16 %v788
    %v3068 = vunpack.c.l.b16 %v789
    %v3069 = vunpack.c.l.b16 %v790
    %v3070 = vunpack.c.l.b16 %v791
    %v3071 = vunpack.c.l.b16 %v792
    %v3072 = vunpack.c.l.b16 %v793
    %v3073 = vunpack.c.l.b16 %v794
    %v3074 = vunpack.c.l.b16 %v795
    %v3075 = vunpack.c.l.b16 %v796
    %v3076 = vunpack.c.l.b16 %v797
    %v3077 = vunpack.c.l.b16 %v798
    %v3078 = vunpack.c.l.b16 %v799
    %v3079 = vunpack.c.l.b16 %v800
    %v3080 = vunpack.c.l.b16 %v801
    %v3081 = vunpack.c.l.b16 %v802
    %v3082 = vunpack.c.l.b16 %v803
    %v3083 = vunpack.c.l.b16 %v804
    %v3084 = vunpack.c.l.b16 %v805
    %v3085 = vunpack.c.l.b16 %v806
    %v3086 = vunpack.c.l.b16 %v807
    %v3087 = vunpack.c.l.b16 %v808
    %v3088 = vunpack.c.l.b16 %v809
    %v3089 = vunpack.c.l.b16 %v810
    %v3090 = vunpack.c.l.b16 %v811
    %v3091 = vunpack.c.l.b16 %v812
    %v3092 = vunpack.c.l.b16 %v813
    %v3093 = vunpack.c.l.b16 %v814
    %v3094 = vunpack.c.l.b16 %v815
    %v3095 = vunpack.c.l.b16 %v816
    %v3096 = vunpack.c.l.b16 %v817
    %v3097 = vunpack.c.l.b16 %v818
    %v3098 = vunpack.c.l.b16 %v819
    %v3099 = vunpack.c.l.b16 %v820
    %v3100 = vunpack.c.l.b16 %v821
    %v3101 = vunpack.c.l.b16 %v822
    %v3102 = vunpack.c.l.b16 %v823
    %v3103 = vunpack.c.l.b16 %v824
    %v3104 = vunpack.c.l.b16 %v825
    %v3105 = vunpack.c.l.b16 %v826
    %v3106 = vunpack.c.l.b16 %v827
    %v3107 = vunpack.c.l.b16 %v828
    %v3108 = vunpack.c.l.b16 %v829
    %v3109 = vunpack.c.l.b16 %v830
    %v3110 = vunpack.c.l.b16 %v831
    %v3111 = vunpack.c.l.b16 %v832
    %v3112 = vunpack.c.l.b16 %v833
    %v3113 = vunpack.c.l.b16 %v834
    %v3114 = vunpack.c.l.b16 %v835
    %v3115 = vunpack.c.l.b16 %v836
    %v3116 = vunpack.c.l.b16 %v837
    %v3117 = vunpack.c.l.b16 %v838
    %v3118 = vunpack.c.l.b16 %v839
    %v3119 = vunpack.c.l.b16 %v840
    %v3120 = vunpack.c.l.b16 %v841
    %v3121 = vunpack.c.l.b16 %v842
    %v3122 = vunpack.c.l.b16 %v843
    %v3123 = vunpack.c.l.b16 %v844
    %v3124 = vunpack.c.l.b16 %v845
    %v3125 = vunpack.c.l.b16 %v846
    %v3126 = vunpack.c.l.b16 %v847
    %v3127 = vunpack.c.l.b16 %v848
    %v3128 = vunpack.c.l.b16 %v849
    %v3129 = vunpack.c.l.b16 %v850
    %v3130 = vunpack.c.l.b16 %v851
    %v3131 = vunpack.c.l.b16 %v852
    %v3132 = vunpack.c.l.b16 %v853
    %v3133 = vunpack.c.l.b16 %v854
    %v3134 = vunpack.c.l.b16 %v855
    %v3135 = vunpack.c.l.b16 %v856
    %v3136 = vunpack.c.l.b16 %v857
    %v3137 = vunpack.c.l.b16 %v858
    %v3138 = vunpack.c.l.b16 %v859
    %v3139 = vunpack.c.l.b16 %v860
    %v3140 = vunpack.c.l.b16 %v861
    %v3141 = vunpack.c.l.b16 %v862
    %v3142 = vunpack.c.l.b16 %v863
    %v3143 = vunpack.c.l.b16 %v864
    %v3144 = vunpack.c.l.b16 %v865
    %v3145 = vunpack.c.l.b16 %v866
    %v3146 = vunpack.c.l.b16 %v867
    %v3147 = vunpack.c.l.b16 %v868
    %v3148 = vunpack.c.l.b16 %v869
    %v3149 = vunpack.c.l.b16 %v870
    %v3150 = vunpack.c.l.b16 %v871
    %v3151 = vunpack.c.l.b16 %v872
    %v3152 = vunpack.c.l.b16 %v873
    %v3153 = vunpack.c.l.b16 %v874
    %v3154 = vunpack.c.l.b16 %v875
    %v3155 = vunpack.c.l.b16 %v876
    %v3156 = vunpack.c.l.b16 %v877
    %v3157 = vunpack.c.l.b16 %v878
    %v3158 = vunpack.c.l.b16 %v879
    %v3159 = vunpack.c.l.b16 %v880
    %v3160 = vunpack.c.l.b16 %v881
    %v3161 = vunpack.c.l.b16 %v882
    %v3162 = vunpack.c.l.b16 %v883
    %v3163 = vunpack.c.l.b16 %v884
    %v3164 = vunpack.c.l.b16 %v885
    %v3165 = vunpack.c.l.b16 %v886
    %v3166 = vunpack.c.l.b16 %v887
    %v3167 = vunpack.c.l.b16 %v888
    %v3168 = vunpack.c.l.b16 %v889
    %v3169 = vunpack.c.l.b16 %v890
    %v3170 = vunpack.c.l.b16 %v891
    %v3171 = vunpack.c.l.b16 %v892
    %v3172 = vunpack.c.l.b16 %v893
    %v3173 = vunpack.c.l.b16 %v894
    %v3174 = vunpack.c.l.b16 %v895
    %v3175 = vunpack.c.l.b16 %v896
    %v3176 = vunpack.c.l.b16 %v897
    %v3177 = vunpack.c.l.b16 %v898
    %v3178 = vunpack.c.l.b16 %v899
    %v3179 = vunpack.c.l.b16 %v900
    %v3180 = vunpack.c.l.b16 %v901
    %v3181 = vunpack.c.l.b16 %v902
    %v3182 = vunpack.c.l.b16 %v903
    %v3183 = vunpack.c.l.b16 %v904
    %v3184 = vunpack.c.l.b16 %v905
    %v3185 = vunpack.c.l.b16 %v906
    %v3186 = vunpack.c.l.b16 %v907
    %v3187 = vunpack.c.l.b16 %v908
    %v3188 = vunpack.c.l.b16 %v909
    %v3189 = vunpack.c.l.b16 %v910
    %v3190 = vunpack.c.l.b16 %v911
    %v3191 = vunpack.c.l.b16 %v912
    %v3192 = vunpack.c.l.b16 %v913
    %v3193 = vunpack.c.l.b16 %v914
    %v3194 = vunpack.c.l.b16 %v915
    %v3195 = vunpack.c.l.b16 %v916
    %v3196 = vunpack.c.l.b16 %v917
    %v3197 = vunpack.c.l.b16 %v918
    %v3198 = vunpack.c.l.b16 %v919
    %v3199 = vunpack.c.l.b16 %v920
    %v3200 = vunpack.c.l.b16 %v921
    %v3201 = vunpack.c.l.b16 %v922
    %v3202 = vunpack.c.l.b16 %v923
    %v3203 = vunpack.c.l.b16 %v924
    %v3204 = vunpack.c.l.b16 %v925
    %v3205 = vunpack.c.l.b16 %v926
    %v3206 = vunpack.c.l.b16 %v927
    %v3207 = vunpack.c.l.b16 %v928
    %v3208 = vunpack.c.l.b16 %v929
    %v3209 = vunpack.c.l.b16 %v930
    %v3210 = vunpack.c.l.b16 %v931
    %v3211 = vunpack.c.l.b16 %v932
    %v3212 = vunpack.c.l.b16 %v933
    %v3213 = vunpack.c.l.b16 %v934
    %v3214 = vunpack.c.l.b16 %v935
    %v3215 = vunpack.c.l.b16 %v936
    %v3216 = vunpack.c.l.b16 %v937
    %v3217 = vunpack.c.l.b16 %v938
    %v3218 = vunpack.c.l.b16 %v939
    %v3219 = vunpack.c.l.b16 %v940
    %v3220 = vunpack.c.l.b16 %v941
    %v3221 = vunpack.c.l.b16 %v942
    %v3222 = vunpack.c.l.b16 %v943
    %v3223 = vunpack.c.l.b16 %v944
    %v3224 = vunpack.c.l.b16 %v945
    %v3225 = vunpack.c.l.b16 %v946
    %v3226 = vunpack.c.l.b16 %v947
    %v3227 = vunpack.c.l.b16 %v948
    %v3228 = vunpack.c.l.b16 %v949
    %v3229 = vunpack.c.l.b16 %v950
    %v3230 = vunpack.c.l.b16 %v951
    %v3231 = vunpack.c.l.b16 %v952
    %v3232 = vunpack.c.l.b16 %v953
    %v3233 = vunpack.c.l.b16 %v954
    %v3234 = vunpack.c.l.b16 %v955
    %v3235 = vunpack.c.l.b16 %v956
    %v3236 = vunpack.c.l.b16 %v957
    %v3237 = vunpack.c.l.b16 %v958
    %v3238 = vunpack.c.l.b16 %v959
    %v3239 = vunpack.c.l.b16 %v960
    %v3240 = vunpack.c.l.b16 %v961
    %v3241 = vunpack.c.l.b16 %v962
    %v3242 = vunpack.c.l.b16 %v963
    %v3243 = vunpack.c.l.b16 %v964
    %v3244 = vunpack.c.l.b16 %v965
    %v3245 = vunpack.c.l.b16 %v966
    %v3246 = vunpack.c.l.b16 %v967
    %v3247 = vunpack.c.l.b16 %v968
    %v3248 = vunpack.c.l.b16 %v969
    %v3249 = vunpack.c.l.b16 %v970
    %v3250 = vunpack.c.l.b16 %v971
    %v3251 = vunpack.c.l.b16 %v972
    %v3252 = vunpack.c.l.b16 %v973
    %v3253 = vunpack.c.l.b16 %v974
    %v3254 = vunpack.c.l.b16 %v975
    %v3255 = vunpack.c.l.b16 %v976
    %v3256 = vunpack.c.l.b16 %v977
    %v3257 = vunpack.c.l.b16 %v978
    %v3258 = vunpack.c.l.b16 %v979
    %v3259 = vunpack.c.l.b16 %v980
    %v3260 = vunpack.c.l.b16 %v981
    %v3261 = vunpack.c.l.b16 %v982
    %v3262 = vunpack.c.l.b16 %v983
    %v3263 = vunpack.c.l.b16 %v984
    %v3264 = vunpack.c.l.b16 %v985
    %v3265 = vunpack.c.l.b16 %v986
    %v3266 = vunpack.c.l.b16 %v987
    %v3267 = vunpack.c.l.b16 %v988
    %v3268 = vunpack.c.l.b16 %v989
    %v3269 = vunpack.c.l.b16 %v990
    %v3270 = vunpack.c.l.b16 %v991
    %v3271 = vunpack.c.l.b16 %v992
    %v3272 = vunpack.c.l.b16 %v993
    %v3273 = vunpack.c.l.b16 %v994
    %v3274 = vunpack.c.l.b16 %v995
    %v3275 = vunpack.c.l.b16 %v996
    %v3276 = vunpack.c.l.b16 %v997
    %v3277 = vunpack.c.l.b16 %v998
    %v3278 = vunpack.c.l.b16 %v999
    %v3279 = vunpack.c.l.b16 %v1000
    %v3280 = vunpack.c.l.b16 %v1001
    %v3281 = vunpack.c.l.b16 %v1002
    %v3282 = vunpack.c.l.b16 %v1003
    %v3283 = vunpack.c.l.b16 %v1004
    %v3284 = vunpack.c.l.b16 %v1005
    %v3285 = vunpack.c.l.b16 %v1006
    %v3286 = vunpack.c.l.b16 %v1007
    %v3287 = vunpack.c.l.b16 %v1008
    %v3288 = vunpack.c.l.b16 %v1009
    %v3289 = vunpack.c.l.b16 %v1010
    %v3290 = vunpack.c.l.b16 %v1011
    %v3291 = vunpack.c.l.b16 %v1012
    %v3292 = vunpack.c.l.b16 %v1013
    %v3293 = vunpack.c.l.b16 %v1014
    %v3294 = vunpack.c.l.b16 %v1015
    %v3295 = vunpack.c.l.b16 %v1016
    %v3296 = vunpack.c.l.b16 %v1017
    %v3297 = vunpack.c.l.b16 %v1018
    %v3298 = vunpack.c.l.b16 %v1019
    %v3299 = vunpack.c.l.b16 %v1020
    %v3300 = vunpack.c.l.b16 %v1021
    %v3301 = vunpack.c.l.b16 %v1022
    %v3302 = vunpack.c.l.b16 %v1023
    %v3303 = vunpack.c.l.b16 %v1024
    %v3304 = vunpack.c.l.b16 %v1025
    %v3305 = vunpack.c.l.b16 %v1026
    %v3306 = vunpack.c.l.b16 %v1027
    %v3307 = vunpack.c.l.b16 %v1028
    %v3308 = vunpack.c.l.b16 %v1029
    %v3309 = vunpack.c.l.b16 %v1030
    %v3310 = vunpack.c.l.b16 %v1031
    %v3311 = vunpack.c.l.b16 %v1032
    %v3312 = vunpack.c.l.b16 %v1033
    %v3313 = vunpack.c.l.b16 %v1034
    %v3314 = vunpack.c.l.b16 %v1035
    %v3315 = vunpack.c.l.b16 %v1036
    %v3316 = vunpack.c.l.b16 %v1037
    %v3317 = vunpack.c.l.b16 %v1038
    %v3318 = vunpack.c.l.b16 %v1039
    %v3319 = vunpack.c.l.b16 %v1040
    %v3320 = vunpack.c.l.b16 %v1041
    %v3321 = vunpack.c.l.b16 %v1042
    %v3322 = vunpack.c.l.b16 %v1043
    %v3323 = vunpack.c.l.b16 %v1044
    %v3324 = vunpack.c.l.b16 %v1045
    %v3325 = vunpack.c.l.b16 %v1046
    %v3326 = vunpack.c.l.b16 %v1047
    %v3327 = vunpack.c.l.b16 %v1048
    %v3328 = vunpack.c.l.b16 %v1049
    %v3329 = vunpack.c.l.b16 %v1050
    %v3330 = vunpack.c.l.b16 %v1051
    %v3331 = vunpack.c.l.b16 %v1052
    %v3332 = vunpack.c.l.b16 %v1053
    %v3333 = vunpack.c.l.b16 %v1054
    %v3334 = vunpack.c.l.b16 %v1055
    %v3335 = vunpack.c.l.b16 %v1056
    %v3336 = vunpack.c.l.b16 %v1057
    %v3337 = vunpack.c.l.b16 %v1058
    %v3338 = vunpack.c.l.b16 %v1059
    %v3339 = vunpack.c.l.b16 %v1060
    %v3340 = vunpack.c.l.b16 %v1061
    %v3341 = vunpack.c.l.b16 %v1062
    %v3342 = vunpack.c.l.b16 %v1063
    %v3343 = vunpack.c.l.b16 %v1064
    %v3344 = vunpack.c.l.b16 %v1065
    %v3345 = vunpack.c.l.b16 %v1066
    %v3346 = vunpack.c.l.b16 %v1067
    %v3347 = vunpack.c.l.b16 %v1068
    %v3348 = vunpack.c.l.b16 %v1069
    %v3349 = vunpack.c.l.b16 %v1070
    %v3350 = vunpack.c.l.b16 %v1071
    %v3351 = vunpack.c.l.b16 %v1072
    %v3352 = vunpack.c.l.b16 %v1073
    %v3353 = vunpack.c.l.b16 %v1074
    %v3354 = vunpack.c.l.b16 %v1075
    %v3355 = vunpack.c.l.b16 %v1076
    %v3356 = vunpack.c.l.b16 %v1077
    %v3357 = vunpack.c.l.b16 %v1078
    %v3358 = vunpack.c.l.b16 %v1079
    %v3359 = vunpack.c.l.b16 %v1080
    %v3360 = vunpack.c.l.b16 %v1081
    %v3361 = vunpack.c.l.b16 %v1082
    %v3362 = vunpack.c.l.b16 %v1083
    %v3363 = vunpack.c.l.b16 %v1084
    %v3364 = vunpack.c.l.b16 %v1085
    %v3365 = vunpack.c.l.b16 %v1086
    %v3366 = vunpack.c.l.b16 %v1087
    %v3367 = vunpack.c.l.b16 %v1088
    %v3368 = vunpack.c.l.b16 %v1089
    %v3369 = vunpack.c.l.b16 %v1090
    %v3370 = vunpack.c.l.b16 %v1091
    %v3371 = vunpack.c.l.b16 %v1092
    %v3372 = vunpack.c.l.b16 %v1093
    %v3373 = vunpack.c.l.b16 %v1094
    %v3374 = vunpack.c.l.b16 %v1095
    %v3375 = vunpack.c.l.b16 %v1096
    %v3376 = vpack.c.b16 %v2353, %v2352
    %v3377 = vpack.c.b16 %v2355, %v2354
    %v3378 = vpack.c.b16 %v2357, %v2356
    %v3379 = vpack.c.b16 %v2359, %v2358
    %v3380 = vpack.c.b16 %v2361, %v2360
    %v3381 = vpack.c.b16 %v2363, %v2362
    %v3382 = vpack.c.b16 %v2365, %v2364
    %v3383 = vpack.c.b16 %v2367, %v2366
    %v3384 = vpack.c.b16 %v2369, %v2368
    %v3385 = vpack.c.b16 %v2371, %v2370
    %v3386 = vpack.c.b16 %v2373, %v2372
    %v3387 = vpack.c.b16 %v2375, %v2374
    %v3388 = vpack.c.b16 %v2377, %v2376
    %v3389 = vpack.c.b16 %v2379, %v2378
    %v3390 = vpack.c.b16 %v2381, %v2380
    %v3391 = vpack.c.b16 %v2383, %v2382
    %v3392 = vpack.c.b16 %v2385, %v2384
    %v3393 = vpack.c.b16 %v2387, %v2386
    %v3394 = vpack.c.b16 %v2389, %v2388
    %v3395 = vpack.c.b16 %v2391, %v2390
    %v3396 = vpack.c.b16 %v2393, %v2392
    %v3397 = vpack.c.b16 %v2395, %v2394
    %v3398 = vpack.c.b16 %v2397, %v2396
    %v3399 = vpack.c.b16 %v2399, %v2398
    %v3400 = vpack.c.b16 %v2401, %v2400
    %v3401 = vpack.c.b16 %v2403, %v2402
    %v3402 = vpack.c.b16 %v2405, %v2404
    %v3403 = vpack.c.b16 %v2407, %v2406
    %v3404 = vpack.c.b16 %v2409, %v2408
    %v3405 = vpack.c.b16 %v2411, %v2410
    %v3406 = vpack.c.b16 %v2413, %v2412
    %v3407 = vpack.c.b16 %v2415, %v2414
    %v3408 = vpack.c.b16 %v2417, %v2416
    %v3409 = vpack.c.b16 %v2419, %v2418
    %v3410 = vpack.c.b16 %v2421, %v2420
    %v3411 = vpack.c.b16 %v2423, %v2422
    %v3412 = vpack.c.b16 %v2425, %v2424
    %v3413 = vpack.c.b16 %v2427, %v2426
    %v3414 = vpack.c.b16 %v2429, %v2428
    %v3415 = vpack.c.b16 %v2431, %v2430
    %v3416 = vpack.c.b16 %v2433, %v2432
    %v3417 = vpack.c.b16 %v2435, %v2434
    %v3418 = vpack.c.b16 %v2437, %v2436
    %v3419 = vpack.c.b16 %v2439, %v2438
    %v3420 = vpack.c.b16 %v2441, %v2440
    %v3421 = vpack.c.b16 %v2443, %v2442
    %v3422 = vpack.c.b16 %v2445, %v2444
    %v3423 = vpack.c.b16 %v2447, %v2446
    %v3424 = vpack.c.b16 %v2449, %v2448
    %v3425 = vpack.c.b16 %v2451, %v2450
    %v3426 = vpack.c.b16 %v2453, %v2452
    %v3427 = vpack.c.b16 %v2455, %v2454
    %v3428 = vpack.c.b16 %v2457, %v2456
    %v3429 = vpack.c.b16 %v2459, %v2458
    %v3430 = vpack.c.b16 %v2461, %v2460
    %v3431 = vpack.c.b16 %v2463, %v2462
    %v3432 = vpack.c.b16 %v2465, %v2464
    %v3433 = vpack.c.b16 %v2467, %v2466
    %v3434 = vpack.c.b16 %v2469, %v2468
    %v3435 = vpack.c.b16 %v2471, %v2470
    %v3436 = vpack.c.b16 %v2473, %v2472
    %v3437 = vpack.c.b16 %v2475, %v2474
    %v3438 = vpack.c.b16 %v2477, %v2476
    %v3439 = vpack.c.b16 %v2479, %v2478
    %v3440 = vpack.c.b16 %v2481, %v2480
    %v3441 = vpack.c.b16 %v2483, %v2482
    %v3442 = vpack.c.b16 %v2485, %v2484
    %v3443 = vpack.c.b16 %v2487, %v2486
    %v3444 = vpack.c.b16 %v2489, %v2488
    %v3445 = vpack.c.b16 %v2491, %v2490
    %v3446 = vpack.c.b16 %v2493, %v2492
    %v3447 = vpack.c.b16 %v2495, %v2494
    %v3448 = vpack.c.b16 %v2497, %v2496
    %v3449 = vpack.c.b16 %v2499, %v2498
    %v3450 = vpack.c.b16 %v2501, %v2500
    %v3451 = vpack.c.b16 %v2503, %v2502
    %v3452 = vpack.c.b16 %v2505, %v2504
    %v3453 = vpack.c.b16 %v2507, %v2506
    %v3454 = vpack.c.b16 %v2509, %v2508
    %v3455 = vpack.c.b16 %v2511, %v2510
    %v3456 = vpack.c.b16 %v2513, %v2512
    %v3457 = vpack.c.b16 %v2515, %v2514
    %v3458 = vpack.c.b16 %v2517, %v2516
    %v3459 = vpack.c.b16 %v2519, %v2518
    %v3460 = vpack.c.b16 %v2521, %v2520
    %v3461 = vpack.c.b16 %v2523, %v2522
    %v3462 = vpack.c.b16 %v2525, %v2524
    %v3463 = vpack.c.b16 %v2527, %v2526
    %v3464 = vpack.c.b16 %v2529, %v2528
    %v3465 = vpack.c.b16 %v2531, %v2530
    %v3466 = vpack.c.b16 %v2533, %v2532
    %v3467 = vpack.c.b16 %v2535, %v2534
    %v3468 = vpack.c.b16 %v2537, %v2536
    %v3469 = vpack.c.b16 %v2539, %v2538
    %v3470 = vpack.c.b16 %v2541, %v2540
    %v3471 = vpack.c.b16 %v2543, %v2542
    %v3472 = vpack.c.b16 %v2545, %v2544
    %v3473 = vpack.c.b16 %v2547, %v2546
    %v3474 = vpack.c.b16 %v2549, %v2548
    %v3475 = vpack.c.b16 %v2551, %v2550
    %v3476 = vpack.c.b16 %v2553, %v2552
    %v3477 = vpack.c.b16 %v2555, %v2554
    %v3478 = vpack.c.b16 %v2557, %v2556
    %v3479 = vpack.c.b16 %v2559, %v2558
    %v3480 = vpack.c.b16 %v2561, %v2560
    %v3481 = vpack.c.b16 %v2563, %v2562
    %v3482 = vpack.c.b16 %v2565, %v2564
    %v3483 = vpack.c.b16 %v2567, %v2566
    %v3484 = vpack.c.b16 %v2569, %v2568
    %v3485 = vpack.c.b16 %v2571, %v2570
    %v3486 = vpack.c.b16 %v2573, %v2572
    %v3487 = vpack.c.b16 %v2575, %v2574
    %v3488 = vpack.c.b16 %v2577, %v2576
    %v3489 = vpack.c.b16 %v2579, %v2578
    %v3490 = vpack.c.b16 %v2581, %v2580
    %v3491 = vpack.c.b16 %v2583, %v2582
    %v3492 = vpack.c.b16 %v2585, %v2584
    %v3493 = vpack.c.b16 %v2587, %v2586
    %v3494 = vpack.c.b16 %v2589, %v2588
    %v3495 = vpack.c.b16 %v2591, %v2590
    %v3496 = vpack.c.b16 %v2593, %v2592
    %v3497 = vpack.c.b16 %v2595, %v2594
    %v3498 = vpack.c.b16 %v2597, %v2596
    %v3499 = vpack.c.b16 %v2599, %v2598
    %v3500 = vpack.c.b16 %v2601, %v2600
    %v3501 = vpack.c.b16 %v2603, %v2602
    %v3502 = vpack.c.b16 %v2605, %v2604
    %v3503 = vpack.c.b16 %v2607, %v2606
    %v3504 = vpack.c.b16 %v2609, %v2608
    %v3505 = vpack.c.b16 %v2611, %v2610
    %v3506 = vpack.c.b16 %v2613, %v2612
    %v3507 = vpack.c.b16 %v2615, %v2614
    %v3508 = vpack.c.b16 %v2617, %v2616
    %v3509 = vpack.c.b16 %v2619, %v2618
    %v3510 = vpack.c.b16 %v2621, %v2620
    %v3511 = vpack.c.b16 %v2623, %v2622
    %v3512 = vpack.c.b16 %v2625, %v2624
    %v3513 = vpack.c.b16 %v2627, %v2626
    %v3514 = vpack.c.b16 %v2629, %v2628
    %v3515 = vpack.c.b16 %v2631, %v2630
    %v3516 = vpack.c.b16 %v2633, %v2632
    %v3517 = vpack.c.b16 %v2635, %v2634
    %v3518 = vpack.c.b16 %v2637, %v2636
    %v3519 = vpack.c.b16 %v2639, %v2638
    %v3520 = vpack.c.b16 %v2641, %v2640
    %v3521 = vpack.c.b16 %v2643, %v2642
    %v3522 = vpack.c.b16 %v2645, %v2644
    %v3523 = vpack.c.b16 %v2647, %v2646
    %v3524 = vpack.c.b16 %v2649, %v2648
    %v3525 = vpack.c.b16 %v2651, %v2650
    %v3526 = vpack.c.b16 %v2653, %v2652
    %v3527 = vpack.c.b16 %v2655, %v2654
    %v3528 = vpack.c.b16 %v2657, %v2656
    %v3529 = vpack.c.b16 %v2659, %v2658
    %v3530 = vpack.c.b16 %v2661, %v2660
    %v3531 = vpack.c.b16 %v2663, %v2662
    %v3532 = vpack.c.b16 %v2665, %v2664
    %v3533 = vpack.c.b16 %v2667, %v2666
    %v3534 = vpack.c.b16 %v2669, %v2668
    %v3535 = vpack.c.b16 %v2671, %v2670
    %v3536 = vpack.c.b16 %v2673, %v2672
    %v3537 = vpack.c.b16 %v2675, %v2674
    %v3538 = vpack.c.b16 %v2677, %v2676
    %v3539 = vpack.c.b16 %v2679, %v2678
    %v3540 = vpack.c.b16 %v2681, %v2680
    %v3541 = vpack.c.b16 %v2683, %v2682
    %v3542 = vpack.c.b16 %v2685, %v2684
    %v3543 = vpack.c.b16 %v2687, %v2686
    %v3544 = vpack.c.b16 %v2689, %v2688
    %v3545 = vpack.c.b16 %v2691, %v2690
    %v3546 = vpack.c.b16 %v2693, %v2692
    %v3547 = vpack.c.b16 %v2695, %v2694
    %v3548 = vpack.c.b16 %v2697, %v2696
    %v3549 = vpack.c.b16 %v2699, %v2698
    %v3550 = vpack.c.b16 %v2701, %v2700
    %v3551 = vpack.c.b16 %v2703, %v2702
    %v3552 = vpack.c.b16 %v2705, %v2704
    %v3553 = vpack.c.b16 %v2707, %v2706
    %v3554 = vpack.c.b16 %v2709, %v2708
    %v3555 = vpack.c.b16 %v2711, %v2710
    %v3556 = vpack.c.b16 %v2713, %v2712
    %v3557 = vpack.c.b16 %v2715, %v2714
    %v3558 = vpack.c.b16 %v2717, %v2716
    %v3559 = vpack.c.b16 %v2719, %v2718
    %v3560 = vpack.c.b16 %v2721, %v2720
    %v3561 = vpack.c.b16 %v2723, %v2722
    %v3562 = vpack.c.b16 %v2725, %v2724
    %v3563 = vpack.c.b16 %v2727, %v2726
    %v3564 = vpack.c.b16 %v2729, %v2728
    %v3565 = vpack.c.b16 %v2731, %v2730
    %v3566 = vpack.c.b16 %v2733, %v2732
    %v3567 = vpack.c.b16 %v2735, %v2734
    %v3568 = vpack.c.b16 %v2737, %v2736
    %v3569 = vpack.c.b16 %v2739, %v2738
    %v3570 = vpack.c.b16 %v2741, %v2740
    %v3571 = vpack.c.b16 %v2743, %v2742
    %v3572 = vpack.c.b16 %v2745, %v2744
    %v3573 = vpack.c.b16 %v2747, %v2746
    %v3574 = vpack.c.b16 %v2749, %v2748
    %v3575 = vpack.c.b16 %v2751, %v2750
    %v3576 = vpack.c.b16 %v2753, %v2752
    %v3577 = vpack.c.b16 %v2755, %v2754
    %v3578 = vpack.c.b16 %v2757, %v2756
    %v3579 = vpack.c.b16 %v2759, %v2758
    %v3580 = vpack.c.b16 %v2761, %v2760
    %v3581 = vpack.c.b16 %v2763, %v2762
    %v3582 = vpack.c.b16 %v2765, %v2764
    %v3583 = vpack.c.b16 %v2767, %v2766
    %v3584 = vpack.c.b16 %v2769, %v2768
    %v3585 = vpack.c.b16 %v2771, %v2770
    %v3586 = vpack.c.b16 %v2773, %v2772
    %v3587 = vpack.c.b16 %v2775, %v2774
    %v3588 = vpack.c.b16 %v2777, %v2776
    %v3589 = vpack.c.b16 %v2779, %v2778
    %v3590 = vpack.c.b16 %v2781, %v2780
    %v3591 = vpack.c.b16 %v2783, %v2782
    %v3592 = vpack.c.b16 %v2785, %v2784
    %v3593 = vpack.c.b16 %v2787, %v2786
    %v3594 = vpack.c.b16 %v2789, %v2788
    %v3595 = vpack.c.b16 %v2791, %v2790
    %v3596 = vpack.c.b16 %v2793, %v2792
    %v3597 = vpack.c.b16 %v2795, %v2794
    %v3598 = vpack.c.b16 %v2797, %v2796
    %v3599 = vpack.c.b16 %v2799, %v2798
    %v3600 = vpack.c.b16 %v2801, %v2800
    %v3601 = vpack.c.b16 %v2803, %v2802
    %v3602 = vpack.c.b16 %v2805, %v2804
    %v3603 = vpack.c.b16 %v2807, %v2806
    %v3604 = vpack.c.b16 %v2809, %v2808
    %v3605 = vpack.c.b16 %v2811, %v2810
    %v3606 = vpack.c.b16 %v2813, %v2812
    %v3607 = vpack.c.b16 %v2815, %v2814
    %v3608 = vpack.c.b16 %v2817, %v2816
    %v3609 = vpack.c.b16 %v2819, %v2818
    %v3610 = vpack.c.b16 %v2821, %v2820
    %v3611 = vpack.c.b16 %v2823, %v2822
    %v3612 = vpack.c.b16 %v2825, %v2824
    %v3613 = vpack.c.b16 %v2827, %v2826
    %v3614 = vpack.c.b16 %v2829, %v2828
    %v3615 = vpack.c.b16 %v2831, %v2830
    %v3616 = vpack.c.b16 %v2833, %v2832
    %v3617 = vpack.c.b16 %v2835, %v2834
    %v3618 = vpack.c.b16 %v2837, %v2836
    %v3619 = vpack.c.b16 %v2839, %v2838
    %v3620 = vpack.c.b16 %v2841, %v2840
    %v3621 = vpack.c.b16 %v2843, %v2842
    %v3622 = vpack.c.b16 %v2845, %v2844
    %v3623 = vpack.c.b16 %v2847, %v2846
    %v3624 = vpack.c.b16 %v2849, %v2848
    %v3625 = vpack.c.b16 %v2851, %v2850
    %v3626 = vpack.c.b16 %v2853, %v2852
    %v3627 = vpack.c.b16 %v2855, %v2854
    %v3628 = vpack.c.b16 %v2857, %v2856
    %v3629 = vpack.c.b16 %v2859, %v2858
    %v3630 = vpack.c.b16 %v2861, %v2860
    %v3631 = vpack.c.b16 %v2863, %v2862
    %v3632 = vpack.c.b16 %v2865, %v2864
    %v3633 = vpack.c.b16 %v2867, %v2866
    %v3634 = vpack.c.b16 %v2869, %v2868
    %v3635 = vpack.c.b16 %v2871, %v2870
    %v3636 = vpack.c.b16 %v2873, %v2872
    %v3637 = vpack.c.b16 %v2875, %v2874
    %v3638 = vpack.c.b16 %v2877, %v2876
    %v3639 = vpack.c.b16 %v2879, %v2878
    %v3640 = vpack.c.b16 %v2881, %v2880
    %v3641 = vpack.c.b16 %v2883, %v2882
    %v3642 = vpack.c.b16 %v2885, %v2884
    %v3643 = vpack.c.b16 %v2887, %v2886
    %v3644 = vpack.c.b16 %v2889, %v2888
    %v3645 = vpack.c.b16 %v2891, %v2890
    %v3646 = vpack.c.b16 %v2893, %v2892
    %v3647 = vpack.c.b16 %v2895, %v2894
    %v3648 = vpack.c.b16 %v2897, %v2896
    %v3649 = vpack.c.b16 %v2899, %v2898
    %v3650 = vpack.c.b16 %v2901, %v2900
    %v3651 = vpack.c.b16 %v2903, %v2902
    %v3652 = vpack.c.b16 %v2905, %v2904
    %v3653 = vpack.c.b16 %v2907, %v2906
    %v3654 = vpack.c.b16 %v2909, %v2908
    %v3655 = vpack.c.b16 %v2911, %v2910
    %v3656 = vpack.c.b16 %v2913, %v2912
    %v3657 = vpack.c.b16 %v2915, %v2914
    %v3658 = vpack.c.b16 %v2917, %v2916
    %v3659 = vpack.c.b16 %v2919, %v2918
    %v3660 = vpack.c.b16 %v2921, %v2920
    %v3661 = vpack.c.b16 %v2923, %v2922
    %v3662 = vpack.c.b16 %v2925, %v2924
    %v3663 = vpack.c.b16 %v2927, %v2926
    %v3664 = vpack.c.b16 %v2929, %v2928
    %v3665 = vpack.c.b16 %v2931, %v2930
    %v3666 = vpack.c.b16 %v2933, %v2932
    %v3667 = vpack.c.b16 %v2935, %v2934
    %v3668 = vpack.c.b16 %v2937, %v2936
    %v3669 = vpack.c.b16 %v2939, %v2938
    %v3670 = vpack.c.b16 %v2941, %v2940
    %v3671 = vpack.c.b16 %v2943, %v2942
    %v3672 = vpack.c.b16 %v2945, %v2944
    %v3673 = vpack.c.b16 %v2947, %v2946
    %v3674 = vpack.c.b16 %v2949, %v2948
    %v3675 = vpack.c.b16 %v2951, %v2950
    %v3676 = vpack.c.b16 %v2953, %v2952
    %v3677 = vpack.c.b16 %v2955, %v2954
    %v3678 = vpack.c.b16 %v2957, %v2956
    %v3679 = vpack.c.b16 %v2959, %v2958
    %v3680 = vpack.c.b16 %v2961, %v2960
    %v3681 = vpack.c.b16 %v2963, %v2962
    %v3682 = vpack.c.b16 %v2965, %v2964
    %v3683 = vpack.c.b16 %v2967, %v2966
    %v3684 = vpack.c.b16 %v2969, %v2968
    %v3685 = vpack.c.b16 %v2971, %v2970
    %v3686 = vpack.c.b16 %v2973, %v2972
    %v3687 = vpack.c.b16 %v2975, %v2974
    %v3688 = vpack.c.b16 %v2977, %v2976
    %v3689 = vpack.c.b16 %v2979, %v2978
    %v3690 = vpack.c.b16 %v2981, %v2980
    %v3691 = vpack.c.b16 %v2983, %v2982
    %v3692 = vpack.c.b16 %v2985, %v2984
    %v3693 = vpack.c.b16 %v2987, %v2986
    %v3694 = vpack.c.b16 %v2989, %v2988
    %v3695 = vpack.c.b16 %v2991, %v2990
    %v3696 = vpack.c.b16 %v2993, %v2992
    %v3697 = vpack.c.b16 %v2995, %v2994
    %v3698 = vpack.c.b16 %v2997, %v2996
    %v3699 = vpack.c.b16 %v2999, %v2998
    %v3700 = vpack.c.b16 %v3001, %v3000
    %v3701 = vpack.c.b16 %v3003, %v3002
    %v3702 = vpack.c.b16 %v3005, %v3004
    %v3703 = vpack.c.b16 %v3007, %v3006
    %v3704 = vpack.c.b16 %v3009, %v3008
    %v3705 = vpack.c.b16 %v3011, %v3010
    %v3706 = vpack.c.b16 %v3013, %v3012
    %v3707 = vpack.c.b16 %v3015, %v3014
    %v3708 = vpack.c.b16 %v3017, %v3016
    %v3709 = vpack.c.b16 %v3019, %v3018
    %v3710 = vpack.c.b16 %v3021, %v3020
    %v3711 = vpack.c.b16 %v3023, %v3022
    %v3712 = vpack.c.b16 %v3025, %v3024
    %v3713 = vpack.c.b16 %v3027, %v3026
    %v3714 = vpack.c.b16 %v3029, %v3028
    %v3715 = vpack.c.b16 %v3031, %v3030
    %v3716 = vpack.c.b16 %v3033, %v3032
    %v3717 = vpack.c.b16 %v3035, %v3034
    %v3718 = vpack.c.b16 %v3037, %v3036
    %v3719 = vpack.c.b16 %v3039, %v3038
    %v3720 = vpack.c.b16 %v3041, %v3040
    %v3721 = vpack.c.b16 %v3043, %v3042
    %v3722 = vpack.c.b16 %v3045, %v3044
    %v3723 = vpack.c.b16 %v3047, %v3046
    %v3724 = vpack.c.b16 %v3049, %v3048
    %v3725 = vpack.c.b16 %v3051, %v3050
    %v3726 = vpack.c.b16 %v3053, %v3052
    %v3727 = vpack.c.b16 %v3055, %v3054
    %v3728 = vpack.c.b16 %v3057, %v3056
    %v3729 = vpack.c.b16 %v3059, %v3058
    %v3730 = vpack.c.b16 %v3061, %v3060
    %v3731 = vpack.c.b16 %v3063, %v3062
    %v3732 = vpack.c.b16 %v3065, %v3064
    %v3733 = vpack.c.b16 %v3067, %v3066
    %v3734 = vpack.c.b16 %v3069, %v3068
    %v3735 = vpack.c.b16 %v3071, %v3070
    %v3736 = vpack.c.b16 %v3073, %v3072
    %v3737 = vpack.c.b16 %v3075, %v3074
    %v3738 = vpack.c.b16 %v3077, %v3076
    %v3739 = vpack.c.b16 %v3079, %v3078
    %v3740 = vpack.c.b16 %v3081, %v3080
    %v3741 = vpack.c.b16 %v3083, %v3082
    %v3742 = vpack.c.b16 %v3085, %v3084
    %v3743 = vpack.c.b16 %v3087, %v3086
    %v3744 = vpack.c.b16 %v3089, %v3088
    %v3745 = vpack.c.b16 %v3091, %v3090
    %v3746 = vpack.c.b16 %v3093, %v3092
    %v3747 = vpack.c.b16 %v3095, %v3094
    %v3748 = vpack.c.b16 %v3097, %v3096
    %v3749 = vpack.c.b16 %v3099, %v3098
    %v3750 = vpack.c.b16 %v3101, %v3100
    %v3751 = vpack.c.b16 %v3103, %v3102
    %v3752 = vpack.c.b16 %v3105, %v3104
    %v3753 = vpack.c.b16 %v3107, %v3106
    %v3754 = vpack.c.b16 %v3109, %v3108
    %v3755 = vpack.c.b16 %v3111, %v3110
    %v3756 = vpack.c.b16 %v3113, %v3112
    %v3757 = vpack.c.b16 %v3115, %v3114
    %v3758 = vpack.c.b16 %v3117, %v3116
    %v3759 = vpack.c.b16 %v3119, %v3118
    %v3760 = vpack.c.b16 %v3121, %v3120
    %v3761 = vpack.c.b16 %v3123, %v3122
    %v3762 = vpack.c.b16 %v3125, %v3124
    %v3763 = vpack.c.b16 %v3127, %v3126
    %v3764 = vpack.c.b16 %v3129, %v3128
    %v3765 = vpack.c.b16 %v3131, %v3130
    %v3766 = vpack.c.b16 %v3133, %v3132
    %v3767 = vpack.c.b16 %v3135, %v3134
    %v3768 = vpack.c.b16 %v3137, %v3136
    %v3769 = vpack.c.b16 %v3139, %v3138
    %v3770 = vpack.c.b16 %v3141, %v3140
    %v3771 = vpack.c.b16 %v3143, %v3142
    %v3772 = vpack.c.b16 %v3145, %v3144
    %v3773 = vpack.c.b16 %v3147, %v3146
    %v3774 = vpack.c.b16 %v3149, %v3148
    %v3775 = vpack.c.b16 %v3151, %v3150
    %v3776 = vpack.c.b16 %v3153, %v3152
    %v3777 = vpack.c.b16 %v3155, %v3154
    %v3778 = vpack.c.b16 %v3157, %v3156
    %v3779 = vpack.c.b16 %v3159, %v3158
    %v3780 = vpack.c.b16 %v3161, %v3160
    %v3781 = vpack.c.b16 %v3163, %v3162
    %v3782 = vpack.c.b16 %v3165, %v3164
    %v3783 = vpack.c.b16 %v3167, %v3166
    %v3784 = vpack.c.b16 %v3169, %v3168
    %v3785 = vpack.c.b16 %v3171, %v3170
    %v3786 = vpack.c.b16 %v3173, %v3172
    %v3787 = vpack.c.b16 %v3175, %v3174
    %v3788 = vpack.c.b16 %v3177, %v3176
    %v3789 = vpack.c.b16 %v3179, %v3178
    %v3790 = vpack.c.b16 %v3181, %v3180
    %v3791 = vpack.c.b16 %v3183, %v3182
    %v3792 = vpack.c.b16 %v3185, %v3184
    %v3793 = vpack.c.b16 %v3187, %v3186
    %v3794 = vpack.c.b16 %v3189, %v3188
    %v3795 = vpack.c.b16 %v3191, %v3190
    %v3796 = vpack.c.b16 %v3193, %v3192
    %v3797 = vpack.c.b16 %v3195, %v3194
    %v3798 = vpack.c.b16 %v3197, %v3196
    %v3799 = vpack.c.b16 %v3199, %v3198
    %v3800 = vpack.c.b16 %v3201, %v3200
    %v3801 = vpack.c.b16 %v3203, %v3202
    %v3802 = vpack.c.b16 %v3205, %v3204
    %v3803 = vpack.c.b16 %v3207, %v3206
    %v3804 = vpack.c.b16 %v3209, %v3208
    %v3805 = vpack.c.b16 %v3211, %v3210
    %v3806 = vpack.c.b16 %v3213, %v3212
    %v3807 = vpack.c.b16 %v3215, %v3214
    %v3808 = vpack.c.b16 %v3217, %v3216
    %v3809 = vpack.c.b16 %v3219, %v3218
    %v3810 = vpack.c.b16 %v3221, %v3220
    %v3811 = vpack.c.b16 %v3223, %v3222
    %v3812 = vpack.c.b16 %v3225, %v3224
    %v3813 = vpack.c.b16 %v3227, %v3226
    %v3814 = vpack.c.b16 %v3229, %v3228
    %v3815 = vpack.c.b16 %v3231, %v3230
    %v3816 = vpack.c.b16 %v3233, %v3232
    %v3817 = vpack.c.b16 %v3235, %v3234
    %v3818 = vpack.c.b16 %v3237, %v3236
    %v3819 = vpack.c.b16 %v3239, %v3238
    %v3820 = vpack.c.b16 %v3241, %v3240
    %v3821 = vpack.c.b16 %v3243, %v3242
    %v3822 = vpack.c.b16 %v3245, %v3244
    %v3823 = vpack.c.b16 %v3247, %v3246
    %v3824 = vpack.c.b16 %v3249, %v3248
    %v3825 = vpack.c.b16 %v3251, %v3250
    %v3826 = vpack.c.b16 %v3253, %v3252
    %v3827 = vpack.c.b16 %v3255, %v3254
    %v3828 = vpack.c.b16 %v3257, %v3256
    %v3829 = vpack.c.b16 %v3259, %v3258
    %v3830 = vpack.c.b16 %v3261, %v3260
    %v3831 = vpack.c.b16 %v3263, %v3262
    %v3832 = vpack.c.b16 %v3265, %v3264
    %v3833 = vpack.c.b16 %v3267, %v3266
    %v3834 = vpack.c.b16 %v3269, %v3268
    %v3835 = vpack.c.b16 %v3271, %v3270
    %v3836 = vpack.c.b16 %v3273, %v3272
    %v3837 = vpack.c.b16 %v3275, %v3274
    %v3838 = vpack.c.b16 %v3277, %v3276
    %v3839 = vpack.c.b16 %v3279, %v3278
    %v3840 = vpack.c.b16 %v3281, %v3280
    %v3841 = vpack.c.b16 %v3283, %v3282
    %v3842 = vpack.c.b16 %v3285, %v3284
    %v3843 = vpack.c.b16 %v3287, %v3286
    %v3844 = vpack.c.b16 %v3289, %v3288
    %v3845 = vpack.c.b16 %v3291, %v3290
    %v3846 = vpack.c.b16 %v3293, %v3292
    %v3847 = vpack.c.b16 %v3295, %v3294
    %v3848 = vpack.c.b16 %v3297, %v3296
    %v3849 = vpack.c.b16 %v3299, %v3298
    %v3850 = vpack.c.b16 %v3301, %v3300
    %v3851 = vpack.c.b16 %v3303, %v3302
    %v3852 = vpack.c.b16 %v3305, %v3304
    %v3853 = vpack.c.b16 %v3307, %v3306
    %v3854 = vpack.c.b16 %v3309, %v3308
    %v3855 = vpack.c.b16 %v3311, %v3310
    %v3856 = vpack.c.b16 %v3313, %v3312
    %v3857 = vpack.c.b16 %v3315, %v3314
    %v3858 = vpack.c.b16 %v3317, %v3316
    %v3859 = vpack.c.b16 %v3319, %v3318
    %v3860 = vpack.c.b16 %v3321, %v3320
    %v3861 = vpack.c.b16 %v3323, %v3322
    %v3862 = vpack.c.b16 %v3325, %v3324
    %v3863 = vpack.c.b16 %v3327, %v3326
    %v3864 = vpack.c.b16 %v3329, %v3328
    %v3865 = vpack.c.b16 %v3331, %v3330
    %v3866 = vpack.c.b16 %v3333, %v3332
    %v3867 = vpack.c.b16 %v3335, %v3334
    %v3868 = vpack.c.b16 %v3337, %v3336
    %v3869 = vpack.c.b16 %v3339, %v3338
    %v3870 = vpack.c.b16 %v3341, %v3340
    %v3871 = vpack.c.b16 %v3343, %v3342
    %v3872 = vpack.c.b16 %v3345, %v3344
    %v3873 = vpack.c.b16 %v3347, %v3346
    %v3874 = vpack.c.b16 %v3349, %v3348
    %v3875 = vpack.c.b16 %v3351, %v3350
    %v3876 = vpack.c.b16 %v3353, %v3352
    %v3877 = vpack.c.b16 %v3355, %v3354
    %v3878 = vpack.c.b16 %v3357, %v3356
    %v3879 = vpack.c.b16 %v3359, %v3358
    %v3880 = vpack.c.b16 %v3361, %v3360
    %v3881 = vpack.c.b16 %v3363, %v3362
    %v3882 = vpack.c.b16 %v3365, %v3364
    %v3883 = vpack.c.b16 %v3367, %v3366
    %v3884 = vpack.c.b16 %v3369, %v3368
    %v3885 = vpack.c.b16 %v3371, %v3370
    %v3886 = vpack.c.b16 %v3373, %v3372
    %v3887 = vpack.c.b16 %v3375, %v3374
    %4400 = vmatprep.subr.bf16.mxu0 0
    %4401 = vmatpush1.bf16.msra.mxu0 %v3376
    %4402 = vmatprep.subr.bf16.mxu0 0
    %4403 = vmatpush1.bf16.msra.mxu0 %v3377
    %4404 = vmatprep.subr.bf16.mxu0 0
    %4405 = vmatpush1.bf16.msra.mxu0 %v3378
    %4406 = vmatprep.subr.bf16.mxu0 0
    %4407 = vmatpush1.bf16.msra.mxu0 %v3379
    %4408 = vmatprep.subr.bf16.mxu0 0
    %4409 = vmatpush1.bf16.msra.mxu0 %v3380
    %4410 = vmatprep.subr.bf16.mxu0 0
    %4411 = vmatpush1.bf16.msra.mxu0 %v3381
    %4412 = vmatprep.subr.bf16.mxu0 0
    %4413 = vmatpush1.bf16.msra.mxu0 %v3382
    %4414 = vmatprep.subr.bf16.mxu0 0
    %4415 = vmatpush1.bf16.msra.mxu0 %v3383
    %4416 = vmatprep.subr.bf16.mxu0 0
    %4417 = vmatpush1.bf16.msra.mxu0 %v3384
    %4418 = vmatprep.subr.bf16.mxu0 0
    %4419 = vmatpush1.bf16.msra.mxu0 %v3385
    %4420 = vmatprep.subr.bf16.mxu0 0
    %4421 = vmatpush1.bf16.msra.mxu0 %v3386
    %4422 = vmatprep.subr.bf16.mxu0 0
    %4423 = vmatpush1.bf16.msra.mxu0 %v3387
    %4424 = vmatprep.subr.bf16.mxu0 0
    %4425 = vmatpush1.bf16.msra.mxu0 %v3388
    %4426 = vmatprep.subr.bf16.mxu0 0
    %4427 = vmatpush1.bf16.msra.mxu0 %v3389
    %4428 = vmatprep.subr.bf16.mxu0 0
    %4429 = vmatpush1.bf16.msra.mxu0 %v3390
    %4430 = vmatprep.subr.bf16.mxu0 0
    %4431 = vmatpush1.bf16.msra.mxu0 %v3391
    %4432 = vmatprep.mubr.bf16.mxu0 %v1201
    %4433 = vmatmul.mubr.bf16.gmra.mrb[0].mxu0 %v1200
    %v4434 = vpop.f32.mrb[0].mxu0
    %v4435 = vadd.f32 %v1102, %v4434
    %v4436 = vpop.f32.mrb[0].mxu0
    %v4437 = vpop.f32.mrb[0].mxu0
    %v4438 = vpop.f32.mrb[0].mxu0
    %4439 = vdwg.mxu0
    %4440 = vmatprep.subr.bf16.mxu0 0
    %4441 = vmatpush1.bf16.msra.mxu0 %v3392
    %4442 = vmatprep.subr.bf16.mxu0 0
    %4443 = vmatpush1.bf16.msra.mxu0 %v3393
    %4444 = vmatprep.subr.bf16.mxu0 0
    %4445 = vmatpush1.bf16.msra.mxu0 %v3394
    %4446 = vmatprep.subr.bf16.mxu0 0
    %4447 = vmatpush1.bf16.msra.mxu0 %v3395
    %4448 = vmatprep.subr.bf16.mxu0 0
    %4449 = vmatpush1.bf16.msra.mxu0 %v3396
    %4450 = vmatprep.subr.bf16.mxu0 0
    %4451 = vmatpush1.bf16.msra.mxu0 %v3397
    %4452 = vmatprep.subr.bf16.mxu0 0
    %4453 = vmatpush1.bf16.msra.mxu0 %v3398
    %4454 = vmatprep.subr.bf16.mxu0 0
    %4455 = vmatpush1.bf16.msra.mxu0 %v3399
    %4456 = vmatprep.subr.bf16.mxu0 0
    %4457 = vmatpush1.bf16.msra.mxu0 %v3400
    %4458 = vmatprep.subr.bf16.mxu0 0
    %4459 = vmatpush1.bf16.msra.mxu0 %v3401
    %4460 = vmatprep.subr.bf16.mxu0 0
    %4461 = vmatpush1.bf16.msra.mxu0 %v3402
    %4462 = vmatprep.subr.bf16.mxu0 0
    %4463 = vmatpush1.bf16.msra.mxu0 %v3403
    %4464 = vmatprep.subr.bf16.mxu0 0
    %4465 = vmatpush1.bf16.msra.mxu0 %v3404
    %4466 = vmatprep.subr.bf16.mxu0 0
    %4467 = vmatpush1.bf16.msra.mxu0 %v3405
    %4468 = vmatprep.subr.bf16.mxu0 0
    %4469 = vmatpush1.bf16.msra.mxu0 %v3406
    %4470 = vmatprep.subr.bf16.mxu0 0
    %4471 = vmatpush1.bf16.msra.mxu0 %v3407
    %4472 = vmatprep.mubr.bf16.mxu0 %v1203
    %4473 = vmatmul.mubr.bf16.gmra.mrb[0].mxu0 %v1202
    %v4474 = vpop.f32.mrb[0].mxu0
    %v4475 = vadd.f32 %v4435, %v4474
    %v4476 = vpop.f32.mrb[0].mxu0
    %v4477 = vpop.f32.mrb[0].mxu0
    %v4478 = vpop.f32.mrb[0].mxu0
    %4479 = vdwg.mxu0
    %4480 = vmatprep.subr.bf16.mxu0 0
    %4481 = vmatpush1.bf16.msra.mxu0 %v3408
    %4482 = vmatprep.subr.bf16.mxu0 0
    %4483 = vmatpush1.bf16.msra.mxu0 %v3409
    %4484 = vmatprep.subr.bf16.mxu0 0
    %4485 = vmatpush1.bf16.msra.mxu0 %v3410
    %4486 = vmatprep.subr.bf16.mxu0 0
    %4487 = vmatpush1.bf16.msra.mxu0 %v3411
    %4488 = vmatprep.subr.bf16.mxu0 0
    %4489 = vmatpush1.bf16.msra.mxu0 %v3412
    %4490 = vmatprep.subr.bf16.mxu0 0
    %4491 = vmatpush1.bf16.msra.mxu0 %v3413
    %4492 = vmatprep.subr.bf16.mxu0 0
    %4493 = vmatpush1.bf16.msra.mxu0 %v3414
    %4494 = vmatprep.subr.bf16.mxu0 0
    %4495 = vmatpush1.bf16.msra.mxu0 %v3415
    %4496 = vmatprep.subr.bf16.mxu0 0
    %4497 = vmatpush1.bf16.msra.mxu0 %v3416
    %4498 = vmatprep.subr.bf16.mxu0 0
    %4499 = vmatpush1.bf16.msra.mxu0 %v3417
    %4500 = vmatprep.subr.bf16.mxu0 0
    %4501 = vmatpush1.bf16.msra.mxu0 %v3418
    %4502 = vmatprep.subr.bf16.mxu0 0
    %4503 = vmatpush1.bf16.msra.mxu0 %v3419
    %4504 = vmatprep.subr.bf16.mxu0 0
    %4505 = vmatpush1.bf16.msra.mxu0 %v3420
    %4506 = vmatprep.subr.bf16.mxu0 0
    %4507 = vmatpush1.bf16.msra.mxu0 %v3421
    %4508 = vmatprep.subr.bf16.mxu0 0
    %4509 = vmatpush1.bf16.msra.mxu0 %v3422
    %4510 = vmatprep.subr.bf16.mxu0 0
    %4511 = vmatpush1.bf16.msra.mxu0 %v3423
    %4512 = vmatprep.mubr.bf16.mxu0 %v1205
    %4513 = vmatmul.mubr.bf16.gmra.mrb[0].mxu0 %v1204
    %v4514 = vpop.f32.mrb[0].mxu0
    %v4515 = vadd.f32 %v4475, %v4514
    %v4516 = vpop.f32.mrb[0].mxu0
    %v4517 = vpop.f32.mrb[0].mxu0
    %v4518 = vpop.f32.mrb[0].mxu0
    %4519 = vdwg.mxu0
    %4520 = vmatprep.subr.bf16.mxu0 0
    %4521 = vmatpush1.bf16.msra.mxu0 %v3424
    %4522 = vmatprep.subr.bf16.mxu0 0
    %4523 = vmatpush1.bf16.msra.mxu0 %v3425
    %4524 = vmatprep.subr.bf16.mxu0 0
    %4525 = vmatpush1.bf16.msra.mxu0 %v3426
    %4526 = vmatprep.subr.bf16.mxu0 0
    %4527 = vmatpush1.bf16.msra.mxu0 %v3427
    %4528 = vmatprep.subr.bf16.mxu0 0
    %4529 = vmatpush1.bf16.msra.mxu0 %v3428
    %4530 = vmatprep.subr.bf16.mxu0 0
    %4531 = vmatpush1.bf16.msra.mxu0 %v3429
    %4532 = vmatprep.subr.bf16.mxu0 0
    %4533 = vmatpush1.bf16.msra.mxu0 %v3430
    %4534 = vmatprep.subr.bf16.mxu0 0
    %4535 = vmatpush1.bf16.msra.mxu0 %v3431
    %4536 = vmatprep.subr.bf16.mxu0 0
    %4537 = vmatpush1.bf16.msra.mxu0 %v3432
    %4538 = vmatprep.subr.bf16.mxu0 0
    %4539 = vmatpush1.bf16.msra.mxu0 %v3433
    %4540 = vmatprep.subr.bf16.mxu0 0
    %4541 = vmatpush1.bf16.msra.mxu0 %v3434
    %4542 = vmatprep.subr.bf16.mxu0 0
    %4543 = vmatpush1.bf16.msra.mxu0 %v3435
    %4544 = vmatprep.subr.bf16.mxu0 0
    %4545 = vmatpush1.bf16.msra.mxu0 %v3436
    %4546 = vmatprep.subr.bf16.mxu0 0
    %4547 = vmatpush1.bf16.msra.mxu0 %v3437
    %4548 = vmatprep.subr.bf16.mxu0 0
    %4549 = vmatpush1.bf16.msra.mxu0 %v3438
    %4550 = vmatprep.subr.bf16.mxu0 0
    %4551 = vmatpush1.bf16.msra.mxu0 %v3439
    %4552 = vmatprep.mubr.bf16.mxu0 %v1207
    %4553 = vmatmul.mubr.bf16.gmra.mrb[0].mxu0 %v1206
    %v4554 = vpop.f32.mrb[0].mxu0
    %v4555 = vadd.f32 %v4515, %v4554
    %v4556 = vpop.f32.mrb[0].mxu0
    %v4557 = vpop.f32.mrb[0].mxu0
    %v4558 = vpop.f32.mrb[0].mxu0
    %4559 = vdwg.mxu0
    %4560 = vmatprep.subr.bf16.mxu0 0
    %4561 = vmatpush1.bf16.msra.mxu0 %v3440
    %4562 = vmatprep.subr.bf16.mxu0 0
    %4563 = vmatpush1.bf16.msra.mxu0 %v3441
    %4564 = vmatprep.subr.bf16.mxu0 0
    %4565 = vmatpush1.bf16.msra.mxu0 %v3442
    %4566 = vmatprep.subr.bf16.mxu0 0
    %4567 = vmatpush1.bf16.msra.mxu0 %v3443
    %4568 = vmatprep.subr.bf16.mxu0 0
    %4569 = vmatpush1.bf16.msra.mxu0 %v3444
    %4570 = vmatprep.subr.bf16.mxu0 0
    %4571 = vmatpush1.bf16.msra.mxu0 %v3445
    %4572 = vmatprep.subr.bf16.mxu0 0
    %4573 = vmatpush1.bf16.msra.mxu0 %v3446
    %4574 = vmatprep.subr.bf16.mxu0 0
    %4575 = vmatpush1.bf16.msra.mxu0 %v3447
    %4576 = vmatprep.subr.bf16.mxu0 0
    %4577 = vmatpush1.bf16.msra.mxu0 %v3448
    %4578 = vmatprep.subr.bf16.mxu0 0
    %4579 = vmatpush1.bf16.msra.mxu0 %v3449
    %4580 = vmatprep.subr.bf16.mxu0 0
    %4581 = vmatpush1.bf16.msra.mxu0 %v3450
    %4582 = vmatprep.subr.bf16.mxu0 0
    %4583 = vmatpush1.bf16.msra.mxu0 %v3451
    %4584 = vmatprep.subr.bf16.mxu0 0
    %4585 = vmatpush1.bf16.msra.mxu0 %v3452
    %4586 = vmatprep.subr.bf16.mxu0 0
    %4587 = vmatpush1.bf16.msra.mxu0 %v3453
    %4588 = vmatprep.subr.bf16.mxu0 0
    %4589 = vmatpush1.bf16.msra.mxu0 %v3454
    %4590 = vmatprep.subr.bf16.mxu0 0
    %4591 = vmatpush1.bf16.msra.mxu0 %v3455
    %4592 = vmatprep.mubr.bf16.mxu0 %v1209
    %4593 = vmatmul.mubr.bf16.gmra.mrb[0].mxu0 %v1208
    %v4594 = vpop.f32.mrb[0].mxu0
    %v4595 = vadd.f32 %v4555, %v4594
    %v4596 = vpop.f32.mrb[0].mxu0
    %v4597 = vpop.f32.mrb[0].mxu0
    %v4598 = vpop.f32.mrb[0].mxu0
    %4599 = vdwg.mxu0
    %4600 = vmatprep.subr.bf16.mxu0 0
    %4601 = vmatpush1.bf16.msra.mxu0 %v3456
    %4602 = vmatprep.subr.bf16.mxu0 0
    %4603 = vmatpush1.bf16.msra.mxu0 %v3457
    %4604 = vmatprep.subr.bf16.mxu0 0
    %4605 = vmatpush1.bf16.msra.mxu0 %v3458
    %4606 = vmatprep.subr.bf16.mxu0 0
    %4607 = vmatpush1.bf16.msra.mxu0 %v3459
    %4608 = vmatprep.subr.bf16.mxu0 0
    %4609 = vmatpush1.bf16.msra.mxu0 %v3460
    %4610 = vmatprep.subr.bf16.mxu0 0
    %4611 = vmatpush1.bf16.msra.mxu0 %v3461
    %4612 = vmatprep.subr.bf16.mxu0 0
    %4613 = vmatpush1.bf16.msra.mxu0 %v3462
    %4614 = vmatprep.subr.bf16.mxu0 0
    %4615 = vmatpush1.bf16.msra.mxu0 %v3463
    %4616 = vmatprep.subr.bf16.mxu0 0
    %4617 = vmatpush1.bf16.msra.mxu0 %v3464
    %4618 = vmatprep.subr.bf16.mxu0 0
    %4619 = vmatpush1.bf16.msra.mxu0 %v3465
    %4620 = vmatprep.subr.bf16.mxu0 0
    %4621 = vmatpush1.bf16.msra.mxu0 %v3466
    %4622 = vmatprep.subr.bf16.mxu0 0
    %4623 = vmatpush1.bf16.msra.mxu0 %v3467
    %4624 = vmatprep.subr.bf16.mxu0 0
    %4625 = vmatpush1.bf16.msra.mxu0 %v3468
    %4626 = vmatprep.subr.bf16.mxu0 0
    %4627 = vmatpush1.bf16.msra.mxu0 %v3469
    %4628 = vmatprep.subr.bf16.mxu0 0
    %4629 = vmatpush1.bf16.msra.mxu0 %v3470
    %4630 = vmatprep.subr.bf16.mxu0 0
    %4631 = vmatpush1.bf16.msra.mxu0 %v3471
    %4632 = vmatprep.mubr.bf16.mxu0 %v1211
    %4633 = vmatmul.mubr.bf16.gmra.mrb[0].mxu0 %v1210
    %v4634 = vpop.f32.mrb[0].mxu0
    %v4635 = vadd.f32 %v4595, %v4634
    %v4636 = vpop.f32.mrb[0].mxu0
    %v4637 = vpop.f32.mrb[0].mxu0
    %v4638 = vpop.f32.mrb[0].mxu0
    %4639 = vdwg.mxu0
    %4640 = vmatprep.subr.bf16.mxu0 0
    %4641 = vmatpush1.bf16.msra.mxu0 %v3472
    %4642 = vmatprep.subr.bf16.mxu0 0
    %4643 = vmatpush1.bf16.msra.mxu0 %v3473
    %4644 = vmatprep.subr.bf16.mxu0 0
    %4645 = vmatpush1.bf16.msra.mxu0 %v3474
    %4646 = vmatprep.subr.bf16.mxu0 0
    %4647 = vmatpush1.bf16.msra.mxu0 %v3475
    %4648 = vmatprep.subr.bf16.mxu0 0
    %4649 = vmatpush1.bf16.msra.mxu0 %v3476
    %4650 = vmatprep.subr.bf16.mxu0 0
    %4651 = vmatpush1.bf16.msra.mxu0 %v3477
    %4652 = vmatprep.subr.bf16.mxu0 0
    %4653 = vmatpush1.bf16.msra.mxu0 %v3478
    %4654 = vmatprep.subr.bf16.mxu0 0
    %4655 = vmatpush1.bf16.msra.mxu0 %v3479
    %4656 = vmatprep.subr.bf16.mxu0 0
    %4657 = vmatpush1.bf16.msra.mxu0 %v3480
    %4658 = vmatprep.subr.bf16.mxu0 0
    %4659 = vmatpush1.bf16.msra.mxu0 %v3481
    %4660 = vmatprep.subr.bf16.mxu0 0
    %4661 = vmatpush1.bf16.msra.mxu0 %v3482
    %4662 = vmatprep.subr.bf16.mxu0 0
    %4663 = vmatpush1.bf16.msra.mxu0 %v3483
    %4664 = vmatprep.subr.bf16.mxu0 0
    %4665 = vmatpush1.bf16.msra.mxu0 %v3484
    %4666 = vmatprep.subr.bf16.mxu0 0
    %4667 = vmatpush1.bf16.msra.mxu0 %v3485
    %4668 = vmatprep.subr.bf16.mxu0 0
    %4669 = vmatpush1.bf16.msra.mxu0 %v3486
    %4670 = vmatprep.subr.bf16.mxu0 0
    %4671 = vmatpush1.bf16.msra.mxu0 %v3487
    %4672 = vmatprep.mubr.bf16.mxu0 %v1213
    %4673 = vmatmul.mubr.bf16.gmra.mrb[0].mxu0 %v1212
    %v4674 = vpop.f32.mrb[0].mxu0
    %v4675 = vadd.f32 %v4635, %v4674
    %v4676 = vpop.f32.mrb[0].mxu0
    %v4677 = vpop.f32.mrb[0].mxu0
    %v4678 = vpop.f32.mrb[0].mxu0
    %4679 = vdwg.mxu0
    %4680 = vmatprep.subr.bf16.mxu0 0
    %4681 = vmatpush1.bf16.msra.mxu0 %v3488
    %4682 = vmatprep.subr.bf16.mxu0 0
    %4683 = vmatpush1.bf16.msra.mxu0 %v3489
    %4684 = vmatprep.subr.bf16.mxu0 0
    %4685 = vmatpush1.bf16.msra.mxu0 %v3490
    %4686 = vmatprep.subr.bf16.mxu0 0
    %4687 = vmatpush1.bf16.msra.mxu0 %v3491
    %4688 = vmatprep.subr.bf16.mxu0 0
    %4689 = vmatpush1.bf16.msra.mxu0 %v3492
    %4690 = vmatprep.subr.bf16.mxu0 0
    %4691 = vmatpush1.bf16.msra.mxu0 %v3493
    %4692 = vmatprep.subr.bf16.mxu0 0
    %4693 = vmatpush1.bf16.msra.mxu0 %v3494
    %4694 = vmatprep.subr.bf16.mxu0 0
    %4695 = vmatpush1.bf16.msra.mxu0 %v3495
    %4696 = vmatprep.subr.bf16.mxu0 0
    %4697 = vmatpush1.bf16.msra.mxu0 %v3496
    %4698 = vmatprep.subr.bf16.mxu0 0
    %4699 = vmatpush1.bf16.msra.mxu0 %v3497
    %4700 = vmatprep.subr.bf16.mxu0 0
    %4701 = vmatpush1.bf16.msra.mxu0 %v3498
    %4702 = vmatprep.subr.bf16.mxu0 0
    %4703 = vmatpush1.bf16.msra.mxu0 %v3499
    %4704 = vmatprep.subr.bf16.mxu0 0
    %4705 = vmatpush1.bf16.msra.mxu0 %v3500
    %4706 = vmatprep.subr.bf16.mxu0 0
    %4707 = vmatpush1.bf16.msra.mxu0 %v3501
    %4708 = vmatprep.subr.bf16.mxu0 0
    %4709 = vmatpush1.bf16.msra.mxu0 %v3502
    %4710 = vmatprep.subr.bf16.mxu0 0
    %4711 = vmatpush1.bf16.msra.mxu0 %v3503
    %4712 = vmatprep.mubr.bf16.mxu0 %v1215
    %4713 = vmatmul.mubr.bf16.gmra.mrb[0].mxu0 %v1214
    %v4714 = vpop.f32.mrb[0].mxu0
    %v4715 = vadd.f32 %v4675, %v4714
    %v4716 = vpop.f32.mrb[0].mxu0
    %v4717 = vpop.f32.mrb[0].mxu0
    %v4718 = vpop.f32.mrb[0].mxu0
    %4719 = vdwg.mxu0
    %4720 = vmatprep.subr.bf16.mxu0 0
    %4721 = vmatpush1.bf16.msra.mxu0 %v3504
    %4722 = vmatprep.subr.bf16.mxu0 0
    %4723 = vmatpush1.bf16.msra.mxu0 %v3505
    %4724 = vmatprep.subr.bf16.mxu0 0
    %4725 = vmatpush1.bf16.msra.mxu0 %v3506
    %4726 = vmatprep.subr.bf16.mxu0 0
    %4727 = vmatpush1.bf16.msra.mxu0 %v3507
    %4728 = vmatprep.subr.bf16.mxu0 0
    %4729 = vmatpush1.bf16.msra.mxu0 %v3508
    %4730 = vmatprep.subr.bf16.mxu0 0
    %4731 = vmatpush1.bf16.msra.mxu0 %v3509
    %4732 = vmatprep.subr.bf16.mxu0 0
    %4733 = vmatpush1.bf16.msra.mxu0 %v3510
    %4734 = vmatprep.subr.bf16.mxu0 0
    %4735 = vmatpush1.bf16.msra.mxu0 %v3511
    %4736 = vmatprep.subr.bf16.mxu0 0
    %4737 = vmatpush1.bf16.msra.mxu0 %v3512
    %4738 = vmatprep.subr.bf16.mxu0 0
    %4739 = vmatpush1.bf16.msra.mxu0 %v3513
    %4740 = vmatprep.subr.bf16.mxu0 0
    %4741 = vmatpush1.bf16.msra.mxu0 %v3514
    %4742 = vmatprep.subr.bf16.mxu0 0
    %4743 = vmatpush1.bf16.msra.mxu0 %v3515
    %4744 = vmatprep.subr.bf16.mxu0 0
    %4745 = vmatpush1.bf16.msra.mxu0 %v3516
    %4746 = vmatprep.subr.bf16.mxu0 0
    %4747 = vmatpush1.bf16.msra.mxu0 %v3517
    %4748 = vmatprep.subr.bf16.mxu0 0
    %4749 = vmatpush1.bf16.msra.mxu0 %v3518
    %4750 = vmatprep.subr.bf16.mxu0 0
    %4751 = vmatpush1.bf16.msra.mxu0 %v3519
    %4752 = vmatprep.mubr.bf16.mxu0 %v1217
    %4753 = vmatmul.mubr.bf16.gmra.mrb[0].mxu0 %v1216
    %v4754 = vpop.f32.mrb[0].mxu0
    %v4755 = vadd.f32 %v4715, %v4754
    %v4756 = vpop.f32.mrb[0].mxu0
    %v4757 = vpop.f32.mrb[0].mxu0
    %v4758 = vpop.f32.mrb[0].mxu0
    %4759 = vdwg.mxu0
    %4760 = vmatprep.subr.bf16.mxu0 0
    %4761 = vmatpush1.bf16.msra.mxu0 %v3520
    %4762 = vmatprep.subr.bf16.mxu0 0
    %4763 = vmatpush1.bf16.msra.mxu0 %v3521
    %4764 = vmatprep.subr.bf16.mxu0 0
    %4765 = vmatpush1.bf16.msra.mxu0 %v3522
    %4766 = vmatprep.subr.bf16.mxu0 0
    %4767 = vmatpush1.bf16.msra.mxu0 %v3523
    %4768 = vmatprep.subr.bf16.mxu0 0
    %4769 = vmatpush1.bf16.msra.mxu0 %v3524
    %4770 = vmatprep.subr.bf16.mxu0 0
    %4771 = vmatpush1.bf16.msra.mxu0 %v3525
    %4772 = vmatprep.subr.bf16.mxu0 0
    %4773 = vmatpush1.bf16.msra.mxu0 %v3526
    %4774 = vmatprep.subr.bf16.mxu0 0
    %4775 = vmatpush1.bf16.msra.mxu0 %v3527
    %4776 = vmatprep.subr.bf16.mxu0 0
    %4777 = vmatpush1.bf16.msra.mxu0 %v3528
    %4778 = vmatprep.subr.bf16.mxu0 0
    %4779 = vmatpush1.bf16.msra.mxu0 %v3529
    %4780 = vmatprep.subr.bf16.mxu0 0
    %4781 = vmatpush1.bf16.msra.mxu0 %v3530
    %4782 = vmatprep.subr.bf16.mxu0 0
    %4783 = vmatpush1.bf16.msra.mxu0 %v3531
    %4784 = vmatprep.subr.bf16.mxu0 0
    %4785 = vmatpush1.bf16.msra.mxu0 %v3532
    %4786 = vmatprep.subr.bf16.mxu0 0
    %4787 = vmatpush1.bf16.msra.mxu0 %v3533
    %4788 = vmatprep.subr.bf16.mxu0 0
    %4789 = vmatpush1.bf16.msra.mxu0 %v3534
    %4790 = vmatprep.subr.bf16.mxu0 0
    %4791 = vmatpush1.bf16.msra.mxu0 %v3535
    %4792 = vmatprep.mubr.bf16.mxu0 %v1219
    %4793 = vmatmul.mubr.bf16.gmra.mrb[0].mxu0 %v1218
    %v4794 = vpop.f32.mrb[0].mxu0
    %v4795 = vadd.f32 %v4755, %v4794
    %v4796 = vpop.f32.mrb[0].mxu0
    %v4797 = vpop.f32.mrb[0].mxu0
    %v4798 = vpop.f32.mrb[0].mxu0
    %4799 = vdwg.mxu0
    %4800 = vmatprep.subr.bf16.mxu0 0
    %4801 = vmatpush1.bf16.msra.mxu0 %v3536
    %4802 = vmatprep.subr.bf16.mxu0 0
    %4803 = vmatpush1.bf16.msra.mxu0 %v3537
    %4804 = vmatprep.subr.bf16.mxu0 0
    %4805 = vmatpush1.bf16.msra.mxu0 %v3538
    %4806 = vmatprep.subr.bf16.mxu0 0
    %4807 = vmatpush1.bf16.msra.mxu0 %v3539
    %4808 = vmatprep.subr.bf16.mxu0 0
    %4809 = vmatpush1.bf16.msra.mxu0 %v3540
    %4810 = vmatprep.subr.bf16.mxu0 0
    %4811 = vmatpush1.bf16.msra.mxu0 %v3541
    %4812 = vmatprep.subr.bf16.mxu0 0
    %4813 = vmatpush1.bf16.msra.mxu0 %v3542
    %4814 = vmatprep.subr.bf16.mxu0 0
    %4815 = vmatpush1.bf16.msra.mxu0 %v3543
    %4816 = vmatprep.subr.bf16.mxu0 0
    %4817 = vmatpush1.bf16.msra.mxu0 %v3544
    %4818 = vmatprep.subr.bf16.mxu0 0
    %4819 = vmatpush1.bf16.msra.mxu0 %v3545
    %4820 = vmatprep.subr.bf16.mxu0 0
    %4821 = vmatpush1.bf16.msra.mxu0 %v3546
    %4822 = vmatprep.subr.bf16.mxu0 0
    %4823 = vmatpush1.bf16.msra.mxu0 %v3547
    %4824 = vmatprep.subr.bf16.mxu0 0
    %4825 = vmatpush1.bf16.msra.mxu0 %v3548
    %4826 = vmatprep.subr.bf16.mxu0 0
    %4827 = vmatpush1.bf16.msra.mxu0 %v3549
    %4828 = vmatprep.subr.bf16.mxu0 0
    %4829 = vmatpush1.bf16.msra.mxu0 %v3550
    %4830 = vmatprep.subr.bf16.mxu0 0
    %4831 = vmatpush1.bf16.msra.mxu0 %v3551
    %4832 = vmatprep.mubr.bf16.mxu0 %v1221
    %4833 = vmatmul.mubr.bf16.gmra.mrb[0].mxu0 %v1220
    %v4834 = vpop.f32.mrb[0].mxu0
    %v4835 = vadd.f32 %v4795, %v4834
    %v4836 = vpop.f32.mrb[0].mxu0
    %v4837 = vpop.f32.mrb[0].mxu0
    %v4838 = vpop.f32.mrb[0].mxu0
    %4839 = vdwg.mxu0
    %4840 = vmatprep.subr.bf16.mxu0 0
    %4841 = vmatpush1.bf16.msra.mxu0 %v3552
    %4842 = vmatprep.subr.bf16.mxu0 0
    %4843 = vmatpush1.bf16.msra.mxu0 %v3553
    %4844 = vmatprep.subr.bf16.mxu0 0
    %4845 = vmatpush1.bf16.msra.mxu0 %v3554
    %4846 = vmatprep.subr.bf16.mxu0 0
    %4847 = vmatpush1.bf16.msra.mxu0 %v3555
    %4848 = vmatprep.subr.bf16.mxu0 0
    %4849 = vmatpush1.bf16.msra.mxu0 %v3556
    %4850 = vmatprep.subr.bf16.mxu0 0
    %4851 = vmatpush1.bf16.msra.mxu0 %v3557
    %4852 = vmatprep.subr.bf16.mxu0 0
    %4853 = vmatpush1.bf16.msra.mxu0 %v3558
    %4854 = vmatprep.subr.bf16.mxu0 0
    %4855 = vmatpush1.bf16.msra.mxu0 %v3559
    %4856 = vmatprep.subr.bf16.mxu0 0
    %4857 = vmatpush1.bf16.msra.mxu0 %v3560
    %4858 = vmatprep.subr.bf16.mxu0 0
    %4859 = vmatpush1.bf16.msra.mxu0 %v3561
    %4860 = vmatprep.subr.bf16.mxu0 0
    %4861 = vmatpush1.bf16.msra.mxu0 %v3562
    %4862 = vmatprep.subr.bf16.mxu0 0
    %4863 = vmatpush1.bf16.msra.mxu0 %v3563
    %4864 = vmatprep.subr.bf16.mxu0 0
    %4865 = vmatpush1.bf16.msra.mxu0 %v3564
    %4866 = vmatprep.subr.bf16.mxu0 0
    %4867 = vmatpush1.bf16.msra.mxu0 %v3565
    %4868 = vmatprep.subr.bf16.mxu0 0
    %4869 = vmatpush1.bf16.msra.mxu0 %v3566
    %4870 = vmatprep.subr.bf16.mxu0 0
    %4871 = vmatpush1.bf16.msra.mxu0 %v3567
    %4872 = vmatprep.mubr.bf16.mxu0 %v1223
    %4873 = vmatmul.mubr.bf16.gmra.mrb[0].mxu0 %v1222
    %v4874 = vpop.f32.mrb[0].mxu0
    %v4875 = vadd.f32 %v4835, %v4874
    %v4876 = vpop.f32.mrb[0].mxu0
    %v4877 = vpop.f32.mrb[0].mxu0
    %v4878 = vpop.f32.mrb[0].mxu0
    %4879 = vdwg.mxu0
    %4880 = vmatprep.subr.bf16.mxu0 0
    %4881 = vmatpush1.bf16.msra.mxu0 %v3568
    %4882 = vmatprep.subr.bf16.mxu0 0
    %4883 = vmatpush1.bf16.msra.mxu0 %v3569
    %4884 = vmatprep.subr.bf16.mxu0 0
    %4885 = vmatpush1.bf16.msra.mxu0 %v3570
    %4886 = vmatprep.subr.bf16.mxu0 0
    %4887 = vmatpush1.bf16.msra.mxu0 %v3571
    %4888 = vmatprep.subr.bf16.mxu0 0
    %4889 = vmatpush1.bf16.msra.mxu0 %v3572
    %4890 = vmatprep.subr.bf16.mxu0 0
    %4891 = vmatpush1.bf16.msra.mxu0 %v3573
    %4892 = vmatprep.subr.bf16.mxu0 0
    %4893 = vmatpush1.bf16.msra.mxu0 %v3574
    %4894 = vmatprep.subr.bf16.mxu0 0
    %4895 = vmatpush1.bf16.msra.mxu0 %v3575
    %4896 = vmatprep.subr.bf16.mxu0 0
    %4897 = vmatpush1.bf16.msra.mxu0 %v3576
    %4898 = vmatprep.subr.bf16.mxu0 0
    %4899 = vmatpush1.bf16.msra.mxu0 %v3577
    %4900 = vmatprep.subr.bf16.mxu0 0
    %4901 = vmatpush1.bf16.msra.mxu0 %v3578
    %4902 = vmatprep.subr.bf16.mxu0 0
    %4903 = vmatpush1.bf16.msra.mxu0 %v3579
    %4904 = vmatprep.subr.bf16.mxu0 0
    %4905 = vmatpush1.bf16.msra.mxu0 %v3580
    %4906 = vmatprep.subr.bf16.mxu0 0
    %4907 = vmatpush1.bf16.msra.mxu0 %v3581
    %4908 = vmatprep.subr.bf16.mxu0 0
    %4909 = vmatpush1.bf16.msra.mxu0 %v3582
    %4910 = vmatprep.subr.bf16.mxu0 0
    %4911 = vmatpush1.bf16.msra.mxu0 %v3583
    %4912 = vmatprep.mubr.bf16.mxu0 %v1225
    %4913 = vmatmul.mubr.bf16.gmra.mrb[0].mxu0 %v1224
    %v4914 = vpop.f32.mrb[0].mxu0
    %v4915 = vadd.f32 %v4875, %v4914
    %v4916 = vpop.f32.mrb[0].mxu0
    %v4917 = vpop.f32.mrb[0].mxu0
    %v4918 = vpop.f32.mrb[0].mxu0
    %4919 = vdwg.mxu0
    %4920 = vmatprep.subr.bf16.mxu0 0
    %4921 = vmatpush1.bf16.msra.mxu0 %v3584
    %4922 = vmatprep.subr.bf16.mxu0 0
    %4923 = vmatpush1.bf16.msra.mxu0 %v3585
    %4924 = vmatprep.subr.bf16.mxu0 0
    %4925 = vmatpush1.bf16.msra.mxu0 %v3586
    %4926 = vmatprep.subr.bf16.mxu0 0
    %4927 = vmatpush1.bf16.msra.mxu0 %v3587
    %4928 = vmatprep.subr.bf16.mxu0 0
    %4929 = vmatpush1.bf16.msra.mxu0 %v3588
    %4930 = vmatprep.subr.bf16.mxu0 0
    %4931 = vmatpush1.bf16.msra.mxu0 %v3589
    %4932 = vmatprep.subr.bf16.mxu0 0
    %4933 = vmatpush1.bf16.msra.mxu0 %v3590
    %4934 = vmatprep.subr.bf16.mxu0 0
    %4935 = vmatpush1.bf16.msra.mxu0 %v3591
    %4936 = vmatprep.subr.bf16.mxu0 0
    %4937 = vmatpush1.bf16.msra.mxu0 %v3592
    %4938 = vmatprep.subr.bf16.mxu0 0
    %4939 = vmatpush1.bf16.msra.mxu0 %v3593
    %4940 = vmatprep.subr.bf16.mxu0 0
    %4941 = vmatpush1.bf16.msra.mxu0 %v3594
    %4942 = vmatprep.subr.bf16.mxu0 0
    %4943 = vmatpush1.bf16.msra.mxu0 %v3595
    %4944 = vmatprep.subr.bf16.mxu0 0
    %4945 = vmatpush1.bf16.msra.mxu0 %v3596
    %4946 = vmatprep.subr.bf16.mxu0 0
    %4947 = vmatpush1.bf16.msra.mxu0 %v3597
    %4948 = vmatprep.subr.bf16.mxu0 0
    %4949 = vmatpush1.bf16.msra.mxu0 %v3598
    %4950 = vmatprep.subr.bf16.mxu0 0
    %4951 = vmatpush1.bf16.msra.mxu0 %v3599
    %4952 = vmatprep.mubr.bf16.mxu0 %v1227
    %4953 = vmatmul.mubr.bf16.gmra.mrb[0].mxu0 %v1226
    %v4954 = vpop.f32.mrb[0].mxu0
    %v4955 = vadd.f32 %v4915, %v4954
    %v4956 = vpop.f32.mrb[0].mxu0
    %v4957 = vpop.f32.mrb[0].mxu0
    %v4958 = vpop.f32.mrb[0].mxu0
    %4959 = vdwg.mxu0
    %4960 = vmatprep.subr.bf16.mxu0 0
    %4961 = vmatpush1.bf16.msra.mxu0 %v3600
    %4962 = vmatprep.subr.bf16.mxu0 0
    %4963 = vmatpush1.bf16.msra.mxu0 %v3601
    %4964 = vmatprep.subr.bf16.mxu0 0
    %4965 = vmatpush1.bf16.msra.mxu0 %v3602
    %4966 = vmatprep.subr.bf16.mxu0 0
    %4967 = vmatpush1.bf16.msra.mxu0 %v3603
    %4968 = vmatprep.subr.bf16.mxu0 0
    %4969 = vmatpush1.bf16.msra.mxu0 %v3604
    %4970 = vmatprep.subr.bf16.mxu0 0
    %4971 = vmatpush1.bf16.msra.mxu0 %v3605
    %4972 = vmatprep.subr.bf16.mxu0 0
    %4973 = vmatpush1.bf16.msra.mxu0 %v3606
    %4974 = vmatprep.subr.bf16.mxu0 0
    %4975 = vmatpush1.bf16.msra.mxu0 %v3607
    %4976 = vmatprep.subr.bf16.mxu0 0
    %4977 = vmatpush1.bf16.msra.mxu0 %v3608
    %4978 = vmatprep.subr.bf16.mxu0 0
    %4979 = vmatpush1.bf16.msra.mxu0 %v3609
    %4980 = vmatprep.subr.bf16.mxu0 0
    %4981 = vmatpush1.bf16.msra.mxu0 %v3610
    %4982 = vmatprep.subr.bf16.mxu0 0
    %4983 = vmatpush1.bf16.msra.mxu0 %v3611
    %4984 = vmatprep.subr.bf16.mxu0 0
    %4985 = vmatpush1.bf16.msra.mxu0 %v3612
    %4986 = vmatprep.subr.bf16.mxu0 0
    %4987 = vmatpush1.bf16.msra.mxu0 %v3613
    %4988 = vmatprep.subr.bf16.mxu0 0
    %4989 = vmatpush1.bf16.msra.mxu0 %v3614
    %4990 = vmatprep.subr.bf16.mxu0 0
    %4991 = vmatpush1.bf16.msra.mxu0 %v3615
    %4992 = vmatprep.mubr.bf16.mxu0 %v1229
    %4993 = vmatmul.mubr.bf16.gmra.mrb[0].mxu0 %v1228
    %v4994 = vpop.f32.mrb[0].mxu0
    %v4995 = vadd.f32 %v4955, %v4994
    %v4996 = vpop.f32.mrb[0].mxu0
    %v4997 = vpop.f32.mrb[0].mxu0
    %v4998 = vpop.f32.mrb[0].mxu0
    %4999 = vdwg.mxu0
    %5000 = vmatprep.subr.bf16.mxu0 0
    %5001 = vmatpush1.bf16.msra.mxu0 %v3616
    %5002 = vmatprep.subr.bf16.mxu0 0
    %5003 = vmatpush1.bf16.msra.mxu0 %v3617
    %5004 = vmatprep.subr.bf16.mxu0 0
    %5005 = vmatpush1.bf16.msra.mxu0 %v3618
    %5006 = vmatprep.subr.bf16.mxu0 0
    %5007 = vmatpush1.bf16.msra.mxu0 %v3619
    %5008 = vmatprep.subr.bf16.mxu0 0
    %5009 = vmatpush1.bf16.msra.mxu0 %v3620
    %5010 = vmatprep.subr.bf16.mxu0 0
    %5011 = vmatpush1.bf16.msra.mxu0 %v3621
    %5012 = vmatprep.subr.bf16.mxu0 0
    %5013 = vmatpush1.bf16.msra.mxu0 %v3622
    %5014 = vmatprep.subr.bf16.mxu0 0
    %5015 = vmatpush1.bf16.msra.mxu0 %v3623
    %5016 = vmatprep.subr.bf16.mxu0 0
    %5017 = vmatpush1.bf16.msra.mxu0 %v3624
    %5018 = vmatprep.subr.bf16.mxu0 0
    %5019 = vmatpush1.bf16.msra.mxu0 %v3625
    %5020 = vmatprep.subr.bf16.mxu0 0
    %5021 = vmatpush1.bf16.msra.mxu0 %v3626
    %5022 = vmatprep.subr.bf16.mxu0 0
    %5023 = vmatpush1.bf16.msra.mxu0 %v3627
    %5024 = vmatprep.subr.bf16.mxu0 0
    %5025 = vmatpush1.bf16.msra.mxu0 %v3628
    %5026 = vmatprep.subr.bf16.mxu0 0
    %5027 = vmatpush1.bf16.msra.mxu0 %v3629
    %5028 = vmatprep.subr.bf16.mxu0 0
    %5029 = vmatpush1.bf16.msra.mxu0 %v3630
    %5030 = vmatprep.subr.bf16.mxu0 0
    %5031 = vmatpush1.bf16.msra.mxu0 %v3631
    %5032 = vmatprep.mubr.bf16.mxu0 %v1231
    %5033 = vmatmul.mubr.bf16.gmra.mrb[0].mxu0 %v1230
    %v5034 = vpop.f32.mrb[0].mxu0
    %v5035 = vadd.f32 %v4995, %v5034
    %v5036 = vpop.f32.mrb[0].mxu0
    %v5037 = vpop.f32.mrb[0].mxu0
    %v5038 = vpop.f32.mrb[0].mxu0
    %5039 = vdwg.mxu0
    %5040 = vmatprep.subr.bf16.mxu0 0
    %5041 = vmatpush1.bf16.msra.mxu0 %v3632
    %5042 = vmatprep.subr.bf16.mxu0 0
    %5043 = vmatpush1.bf16.msra.mxu0 %v3633
    %5044 = vmatprep.subr.bf16.mxu0 0
    %5045 = vmatpush1.bf16.msra.mxu0 %v3634
    %5046 = vmatprep.subr.bf16.mxu0 0
    %5047 = vmatpush1.bf16.msra.mxu0 %v3635
    %5048 = vmatprep.subr.bf16.mxu0 0
    %5049 = vmatpush1.bf16.msra.mxu0 %v3636
    %5050 = vmatprep.subr.bf16.mxu0 0
    %5051 = vmatpush1.bf16.msra.mxu0 %v3637
    %5052 = vmatprep.subr.bf16.mxu0 0
    %5053 = vmatpush1.bf16.msra.mxu0 %v3638
    %5054 = vmatprep.subr.bf16.mxu0 0
    %5055 = vmatpush1.bf16.msra.mxu0 %v3639
    %5056 = vmatprep.subr.bf16.mxu0 0
    %5057 = vmatpush1.bf16.msra.mxu0 %v3640
    %5058 = vmatprep.subr.bf16.mxu0 0
    %5059 = vmatpush1.bf16.msra.mxu0 %v3641
    %5060 = vmatprep.subr.bf16.mxu0 0
    %5061 = vmatpush1.bf16.msra.mxu0 %v3642
    %5062 = vmatprep.subr.bf16.mxu0 0
    %5063 = vmatpush1.bf16.msra.mxu0 %v3643
    %5064 = vmatprep.subr.bf16.mxu0 0
    %5065 = vmatpush1.bf16.msra.mxu0 %v3644
    %5066 = vmatprep.subr.bf16.mxu0 0
    %5067 = vmatpush1.bf16.msra.mxu0 %v3645
    %5068 = vmatprep.subr.bf16.mxu0 0
    %5069 = vmatpush1.bf16.msra.mxu0 %v3646
    %5070 = vmatprep.subr.bf16.mxu0 0
    %5071 = vmatpush1.bf16.msra.mxu0 %v3647
    %5072 = vmatprep.mubr.bf16.mxu0 %v1233
    %5073 = vmatmul.mubr.bf16.gmra.mrb[0].mxu0 %v1232
    %v5074 = vpop.f32.mrb[0].mxu0
    %v5075 = vadd.f32 %v5035, %v5074
    %v5076 = vpop.f32.mrb[0].mxu0
    %v5077 = vpop.f32.mrb[0].mxu0
    %v5078 = vpop.f32.mrb[0].mxu0
    %5079 = vdwg.mxu0
    %5080 = vmatprep.subr.bf16.mxu0 0
    %5081 = vmatpush1.bf16.msra.mxu0 %v3648
    %5082 = vmatprep.subr.bf16.mxu0 0
    %5083 = vmatpush1.bf16.msra.mxu0 %v3649
    %5084 = vmatprep.subr.bf16.mxu0 0
    %5085 = vmatpush1.bf16.msra.mxu0 %v3650
    %5086 = vmatprep.subr.bf16.mxu0 0
    %5087 = vmatpush1.bf16.msra.mxu0 %v3651
    %5088 = vmatprep.subr.bf16.mxu0 0
    %5089 = vmatpush1.bf16.msra.mxu0 %v3652
    %5090 = vmatprep.subr.bf16.mxu0 0
    %5091 = vmatpush1.bf16.msra.mxu0 %v3653
    %5092 = vmatprep.subr.bf16.mxu0 0
    %5093 = vmatpush1.bf16.msra.mxu0 %v3654
    %5094 = vmatprep.subr.bf16.mxu0 0
    %5095 = vmatpush1.bf16.msra.mxu0 %v3655
    %5096 = vmatprep.subr.bf16.mxu0 0
    %5097 = vmatpush1.bf16.msra.mxu0 %v3656
    %5098 = vmatprep.subr.bf16.mxu0 0
    %5099 = vmatpush1.bf16.msra.mxu0 %v3657
    %5100 = vmatprep.subr.bf16.mxu0 0
    %5101 = vmatpush1.bf16.msra.mxu0 %v3658
    %5102 = vmatprep.subr.bf16.mxu0 0
    %5103 = vmatpush1.bf16.msra.mxu0 %v3659
    %5104 = vmatprep.subr.bf16.mxu0 0
    %5105 = vmatpush1.bf16.msra.mxu0 %v3660
    %5106 = vmatprep.subr.bf16.mxu0 0
    %5107 = vmatpush1.bf16.msra.mxu0 %v3661
    %5108 = vmatprep.subr.bf16.mxu0 0
    %5109 = vmatpush1.bf16.msra.mxu0 %v3662
    %5110 = vmatprep.subr.bf16.mxu0 0
    %5111 = vmatpush1.bf16.msra.mxu0 %v3663
    %5112 = vmatprep.mubr.bf16.mxu0 %v1235
    %5113 = vmatmul.mubr.bf16.gmra.mrb[0].mxu0 %v1234
    %v5114 = vpop.f32.mrb[0].mxu0
    %v5115 = vadd.f32 %v5075, %v5114
    %v5116 = vpop.f32.mrb[0].mxu0
    %v5117 = vpop.f32.mrb[0].mxu0
    %v5118 = vpop.f32.mrb[0].mxu0
    %5119 = vdwg.mxu0
    %5120 = vmatprep.subr.bf16.mxu0 0
    %5121 = vmatpush1.bf16.msra.mxu0 %v3664
    %5122 = vmatprep.subr.bf16.mxu0 0
    %5123 = vmatpush1.bf16.msra.mxu0 %v3665
    %5124 = vmatprep.subr.bf16.mxu0 0
    %5125 = vmatpush1.bf16.msra.mxu0 %v3666
    %5126 = vmatprep.subr.bf16.mxu0 0
    %5127 = vmatpush1.bf16.msra.mxu0 %v3667
    %5128 = vmatprep.subr.bf16.mxu0 0
    %5129 = vmatpush1.bf16.msra.mxu0 %v3668
    %5130 = vmatprep.subr.bf16.mxu0 0
    %5131 = vmatpush1.bf16.msra.mxu0 %v3669
    %5132 = vmatprep.subr.bf16.mxu0 0
    %5133 = vmatpush1.bf16.msra.mxu0 %v3670
    %5134 = vmatprep.subr.bf16.mxu0 0
    %5135 = vmatpush1.bf16.msra.mxu0 %v3671
    %5136 = vmatprep.subr.bf16.mxu0 0
    %5137 = vmatpush1.bf16.msra.mxu0 %v3672
    %5138 = vmatprep.subr.bf16.mxu0 0
    %5139 = vmatpush1.bf16.msra.mxu0 %v3673
    %5140 = vmatprep.subr.bf16.mxu0 0
    %5141 = vmatpush1.bf16.msra.mxu0 %v3674
    %5142 = vmatprep.subr.bf16.mxu0 0
    %5143 = vmatpush1.bf16.msra.mxu0 %v3675
    %5144 = vmatprep.subr.bf16.mxu0 0
    %5145 = vmatpush1.bf16.msra.mxu0 %v3676
    %5146 = vmatprep.subr.bf16.mxu0 0
    %5147 = vmatpush1.bf16.msra.mxu0 %v3677
    %5148 = vmatprep.subr.bf16.mxu0 0
    %5149 = vmatpush1.bf16.msra.mxu0 %v3678
    %5150 = vmatprep.subr.bf16.mxu0 0
    %5151 = vmatpush1.bf16.msra.mxu0 %v3679
    %5152 = vmatprep.mubr.bf16.mxu0 %v1237
    %5153 = vmatmul.mubr.bf16.gmra.mrb[0].mxu0 %v1236
    %v5154 = vpop.f32.mrb[0].mxu0
    %v5155 = vadd.f32 %v5115, %v5154
    %v5156 = vpop.f32.mrb[0].mxu0
    %v5157 = vpop.f32.mrb[0].mxu0
    %v5158 = vpop.f32.mrb[0].mxu0
    %5159 = vdwg.mxu0
    %5160 = vmatprep.subr.bf16.mxu0 0
    %5161 = vmatpush1.bf16.msra.mxu0 %v3680
    %5162 = vmatprep.subr.bf16.mxu0 0
    %5163 = vmatpush1.bf16.msra.mxu0 %v3681
    %5164 = vmatprep.subr.bf16.mxu0 0
    %5165 = vmatpush1.bf16.msra.mxu0 %v3682
    %5166 = vmatprep.subr.bf16.mxu0 0
    %5167 = vmatpush1.bf16.msra.mxu0 %v3683
    %5168 = vmatprep.subr.bf16.mxu0 0
    %5169 = vmatpush1.bf16.msra.mxu0 %v3684
    %5170 = vmatprep.subr.bf16.mxu0 0
    %5171 = vmatpush1.bf16.msra.mxu0 %v3685
    %5172 = vmatprep.subr.bf16.mxu0 0
    %5173 = vmatpush1.bf16.msra.mxu0 %v3686
    %5174 = vmatprep.subr.bf16.mxu0 0
    %5175 = vmatpush1.bf16.msra.mxu0 %v3687
    %5176 = vmatprep.subr.bf16.mxu0 0
    %5177 = vmatpush1.bf16.msra.mxu0 %v3688
    %5178 = vmatprep.subr.bf16.mxu0 0
    %5179 = vmatpush1.bf16.msra.mxu0 %v3689
    %5180 = vmatprep.subr.bf16.mxu0 0
    %5181 = vmatpush1.bf16.msra.mxu0 %v3690
    %5182 = vmatprep.subr.bf16.mxu0 0
    %5183 = vmatpush1.bf16.msra.mxu0 %v3691
    %5184 = vmatprep.subr.bf16.mxu0 0
    %5185 = vmatpush1.bf16.msra.mxu0 %v3692
    %5186 = vmatprep.subr.bf16.mxu0 0
    %5187 = vmatpush1.bf16.msra.mxu0 %v3693
    %5188 = vmatprep.subr.bf16.mxu0 0
    %5189 = vmatpush1.bf16.msra.mxu0 %v3694
    %5190 = vmatprep.subr.bf16.mxu0 0
    %5191 = vmatpush1.bf16.msra.mxu0 %v3695
    %5192 = vmatprep.mubr.bf16.mxu0 %v1239
    %5193 = vmatmul.mubr.bf16.gmra.mrb[0].mxu0 %v1238
    %v5194 = vpop.f32.mrb[0].mxu0
    %v5195 = vadd.f32 %v5155, %v5194
    %v5196 = vpop.f32.mrb[0].mxu0
    %v5197 = vpop.f32.mrb[0].mxu0
    %v5198 = vpop.f32.mrb[0].mxu0
    %5199 = vdwg.mxu0
    %5200 = vmatprep.subr.bf16.mxu0 0
    %5201 = vmatpush1.bf16.msra.mxu0 %v3696
    %5202 = vmatprep.subr.bf16.mxu0 0
    %5203 = vmatpush1.bf16.msra.mxu0 %v3697
    %5204 = vmatprep.subr.bf16.mxu0 0
    %5205 = vmatpush1.bf16.msra.mxu0 %v3698
    %5206 = vmatprep.subr.bf16.mxu0 0
    %5207 = vmatpush1.bf16.msra.mxu0 %v3699
    %5208 = vmatprep.subr.bf16.mxu0 0
    %5209 = vmatpush1.bf16.msra.mxu0 %v3700
    %5210 = vmatprep.subr.bf16.mxu0 0
    %5211 = vmatpush1.bf16.msra.mxu0 %v3701
    %5212 = vmatprep.subr.bf16.mxu0 0
    %5213 = vmatpush1.bf16.msra.mxu0 %v3702
    %5214 = vmatprep.subr.bf16.mxu0 0
    %5215 = vmatpush1.bf16.msra.mxu0 %v3703
    %5216 = vmatprep.subr.bf16.mxu0 0
    %5217 = vmatpush1.bf16.msra.mxu0 %v3704
    %5218 = vmatprep.subr.bf16.mxu0 0
    %5219 = vmatpush1.bf16.msra.mxu0 %v3705
    %5220 = vmatprep.subr.bf16.mxu0 0
    %5221 = vmatpush1.bf16.msra.mxu0 %v3706
    %5222 = vmatprep.subr.bf16.mxu0 0
    %5223 = vmatpush1.bf16.msra.mxu0 %v3707
    %5224 = vmatprep.subr.bf16.mxu0 0
    %5225 = vmatpush1.bf16.msra.mxu0 %v3708
    %5226 = vmatprep.subr.bf16.mxu0 0
    %5227 = vmatpush1.bf16.msra.mxu0 %v3709
    %5228 = vmatprep.subr.bf16.mxu0 0
    %5229 = vmatpush1.bf16.msra.mxu0 %v3710
    %5230 = vmatprep.subr.bf16.mxu0 0
    %5231 = vmatpush1.bf16.msra.mxu0 %v3711
    %5232 = vmatprep.mubr.bf16.mxu0 %v1241
    %5233 = vmatmul.mubr.bf16.gmra.mrb[0].mxu0 %v1240
    %v5234 = vpop.f32.mrb[0].mxu0
    %v5235 = vadd.f32 %v5195, %v5234
    %v5236 = vpop.f32.mrb[0].mxu0
    %v5237 = vpop.f32.mrb[0].mxu0
    %v5238 = vpop.f32.mrb[0].mxu0
    %5239 = vdwg.mxu0
    %5240 = vmatprep.subr.bf16.mxu0 0
    %5241 = vmatpush1.bf16.msra.mxu0 %v3712
    %5242 = vmatprep.subr.bf16.mxu0 0
    %5243 = vmatpush1.bf16.msra.mxu0 %v3713
    %5244 = vmatprep.subr.bf16.mxu0 0
    %5245 = vmatpush1.bf16.msra.mxu0 %v3714
    %5246 = vmatprep.subr.bf16.mxu0 0
    %5247 = vmatpush1.bf16.msra.mxu0 %v3715
    %5248 = vmatprep.subr.bf16.mxu0 0
    %5249 = vmatpush1.bf16.msra.mxu0 %v3716
    %5250 = vmatprep.subr.bf16.mxu0 0
    %5251 = vmatpush1.bf16.msra.mxu0 %v3717
    %5252 = vmatprep.subr.bf16.mxu0 0
    %5253 = vmatpush1.bf16.msra.mxu0 %v3718
    %5254 = vmatprep.subr.bf16.mxu0 0
    %5255 = vmatpush1.bf16.msra.mxu0 %v3719
    %5256 = vmatprep.subr.bf16.mxu0 0
    %5257 = vmatpush1.bf16.msra.mxu0 %v3720
    %5258 = vmatprep.subr.bf16.mxu0 0
    %5259 = vmatpush1.bf16.msra.mxu0 %v3721
    %5260 = vmatprep.subr.bf16.mxu0 0
    %5261 = vmatpush1.bf16.msra.mxu0 %v3722
    %5262 = vmatprep.subr.bf16.mxu0 0
    %5263 = vmatpush1.bf16.msra.mxu0 %v3723
    %5264 = vmatprep.subr.bf16.mxu0 0
    %5265 = vmatpush1.bf16.msra.mxu0 %v3724
    %5266 = vmatprep.subr.bf16.mxu0 0
    %5267 = vmatpush1.bf16.msra.mxu0 %v3725
    %5268 = vmatprep.subr.bf16.mxu0 0
    %5269 = vmatpush1.bf16.msra.mxu0 %v3726
    %5270 = vmatprep.subr.bf16.mxu0 0
    %5271 = vmatpush1.bf16.msra.mxu0 %v3727
    %5272 = vmatprep.mubr.bf16.mxu0 %v1243
    %5273 = vmatmul.mubr.bf16.gmra.mrb[0].mxu0 %v1242
    %v5274 = vpop.f32.mrb[0].mxu0
    %v5275 = vadd.f32 %v5235, %v5274
    %v5276 = vpop.f32.mrb[0].mxu0
    %v5277 = vpop.f32.mrb[0].mxu0
    %v5278 = vpop.f32.mrb[0].mxu0
    %5279 = vdwg.mxu0
    %5280 = vmatprep.subr.bf16.mxu0 0
    %5281 = vmatpush1.bf16.msra.mxu0 %v3728
    %5282 = vmatprep.subr.bf16.mxu0 0
    %5283 = vmatpush1.bf16.msra.mxu0 %v3729
    %5284 = vmatprep.subr.bf16.mxu0 0
    %5285 = vmatpush1.bf16.msra.mxu0 %v3730
    %5286 = vmatprep.subr.bf16.mxu0 0
    %5287 = vmatpush1.bf16.msra.mxu0 %v3731
    %5288 = vmatprep.subr.bf16.mxu0 0
    %5289 = vmatpush1.bf16.msra.mxu0 %v3732
    %5290 = vmatprep.subr.bf16.mxu0 0
    %5291 = vmatpush1.bf16.msra.mxu0 %v3733
    %5292 = vmatprep.subr.bf16.mxu0 0
    %5293 = vmatpush1.bf16.msra.mxu0 %v3734
    %5294 = vmatprep.subr.bf16.mxu0 0
    %5295 = vmatpush1.bf16.msra.mxu0 %v3735
    %5296 = vmatprep.subr.bf16.mxu0 0
    %5297 = vmatpush1.bf16.msra.mxu0 %v3736
    %5298 = vmatprep.subr.bf16.mxu0 0
    %5299 = vmatpush1.bf16.msra.mxu0 %v3737
    %5300 = vmatprep.subr.bf16.mxu0 0
    %5301 = vmatpush1.bf16.msra.mxu0 %v3738
    %5302 = vmatprep.subr.bf16.mxu0 0
    %5303 = vmatpush1.bf16.msra.mxu0 %v3739
    %5304 = vmatprep.subr.bf16.mxu0 0
    %5305 = vmatpush1.bf16.msra.mxu0 %v3740
    %5306 = vmatprep.subr.bf16.mxu0 0
    %5307 = vmatpush1.bf16.msra.mxu0 %v3741
    %5308 = vmatprep.subr.bf16.mxu0 0
    %5309 = vmatpush1.bf16.msra.mxu0 %v3742
    %5310 = vmatprep.subr.bf16.mxu0 0
    %5311 = vmatpush1.bf16.msra.mxu0 %v3743
    %5312 = vmatprep.mubr.bf16.mxu0 %v1245
    %5313 = vmatmul.mubr.bf16.gmra.mrb[0].mxu0 %v1244
    %v5314 = vpop.f32.mrb[0].mxu0
    %v5315 = vadd.f32 %v5275, %v5314
    %v5316 = vpop.f32.mrb[0].mxu0
    %v5317 = vpop.f32.mrb[0].mxu0
    %v5318 = vpop.f32.mrb[0].mxu0
    %5319 = vdwg.mxu0
    %5320 = vmatprep.subr.bf16.mxu0 0
    %5321 = vmatpush1.bf16.msra.mxu0 %v3744
    %5322 = vmatprep.subr.bf16.mxu0 0
    %5323 = vmatpush1.bf16.msra.mxu0 %v3745
    %5324 = vmatprep.subr.bf16.mxu0 0
    %5325 = vmatpush1.bf16.msra.mxu0 %v3746
    %5326 = vmatprep.subr.bf16.mxu0 0
    %5327 = vmatpush1.bf16.msra.mxu0 %v3747
    %5328 = vmatprep.subr.bf16.mxu0 0
    %5329 = vmatpush1.bf16.msra.mxu0 %v3748
    %5330 = vmatprep.subr.bf16.mxu0 0
    %5331 = vmatpush1.bf16.msra.mxu0 %v3749
    %5332 = vmatprep.subr.bf16.mxu0 0
    %5333 = vmatpush1.bf16.msra.mxu0 %v3750
    %5334 = vmatprep.subr.bf16.mxu0 0
    %5335 = vmatpush1.bf16.msra.mxu0 %v3751
    %5336 = vmatprep.subr.bf16.mxu0 0
    %5337 = vmatpush1.bf16.msra.mxu0 %v3752
    %5338 = vmatprep.subr.bf16.mxu0 0
    %5339 = vmatpush1.bf16.msra.mxu0 %v3753
    %5340 = vmatprep.subr.bf16.mxu0 0
    %5341 = vmatpush1.bf16.msra.mxu0 %v3754
    %5342 = vmatprep.subr.bf16.mxu0 0
    %5343 = vmatpush1.bf16.msra.mxu0 %v3755
    %5344 = vmatprep.subr.bf16.mxu0 0
    %5345 = vmatpush1.bf16.msra.mxu0 %v3756
    %5346 = vmatprep.subr.bf16.mxu0 0
    %5347 = vmatpush1.bf16.msra.mxu0 %v3757
    %5348 = vmatprep.subr.bf16.mxu0 0
    %5349 = vmatpush1.bf16.msra.mxu0 %v3758
    %5350 = vmatprep.subr.bf16.mxu0 0
    %5351 = vmatpush1.bf16.msra.mxu0 %v3759
    %5352 = vmatprep.mubr.bf16.mxu0 %v1247
    %5353 = vmatmul.mubr.bf16.gmra.mrb[0].mxu0 %v1246
    %v5354 = vpop.f32.mrb[0].mxu0
    %v5355 = vadd.f32 %v5315, %v5354
    %v5356 = vpop.f32.mrb[0].mxu0
    %v5357 = vpop.f32.mrb[0].mxu0
    %v5358 = vpop.f32.mrb[0].mxu0
    %5359 = vdwg.mxu0
    %5360 = vmatprep.subr.bf16.mxu0 0
    %5361 = vmatpush1.bf16.msra.mxu0 %v3760
    %5362 = vmatprep.subr.bf16.mxu0 0
    %5363 = vmatpush1.bf16.msra.mxu0 %v3761
    %5364 = vmatprep.subr.bf16.mxu0 0
    %5365 = vmatpush1.bf16.msra.mxu0 %v3762
    %5366 = vmatprep.subr.bf16.mxu0 0
    %5367 = vmatpush1.bf16.msra.mxu0 %v3763
    %5368 = vmatprep.subr.bf16.mxu0 0
    %5369 = vmatpush1.bf16.msra.mxu0 %v3764
    %5370 = vmatprep.subr.bf16.mxu0 0
    %5371 = vmatpush1.bf16.msra.mxu0 %v3765
    %5372 = vmatprep.subr.bf16.mxu0 0
    %5373 = vmatpush1.bf16.msra.mxu0 %v3766
    %5374 = vmatprep.subr.bf16.mxu0 0
    %5375 = vmatpush1.bf16.msra.mxu0 %v3767
    %5376 = vmatprep.subr.bf16.mxu0 0
    %5377 = vmatpush1.bf16.msra.mxu0 %v3768
    %5378 = vmatprep.subr.bf16.mxu0 0
    %5379 = vmatpush1.bf16.msra.mxu0 %v3769
    %5380 = vmatprep.subr.bf16.mxu0 0
    %5381 = vmatpush1.bf16.msra.mxu0 %v3770
    %5382 = vmatprep.subr.bf16.mxu0 0
    %5383 = vmatpush1.bf16.msra.mxu0 %v3771
    %5384 = vmatprep.subr.bf16.mxu0 0
    %5385 = vmatpush1.bf16.msra.mxu0 %v3772
    %5386 = vmatprep.subr.bf16.mxu0 0
    %5387 = vmatpush1.bf16.msra.mxu0 %v3773
    %5388 = vmatprep.subr.bf16.mxu0 0
    %5389 = vmatpush1.bf16.msra.mxu0 %v3774
    %5390 = vmatprep.subr.bf16.mxu0 0
    %5391 = vmatpush1.bf16.msra.mxu0 %v3775
    %5392 = vmatprep.mubr.bf16.mxu0 %v1249
    %5393 = vmatmul.mubr.bf16.gmra.mrb[0].mxu0 %v1248
    %v5394 = vpop.f32.mrb[0].mxu0
    %v5395 = vadd.f32 %v5355, %v5394
    %v5396 = vpop.f32.mrb[0].mxu0
    %v5397 = vpop.f32.mrb[0].mxu0
    %v5398 = vpop.f32.mrb[0].mxu0
    %5399 = vdwg.mxu0
    %5400 = vmatprep.subr.bf16.mxu0 0
    %5401 = vmatpush1.bf16.msra.mxu0 %v3776
    %5402 = vmatprep.subr.bf16.mxu0 0
    %5403 = vmatpush1.bf16.msra.mxu0 %v3777
    %5404 = vmatprep.subr.bf16.mxu0 0
    %5405 = vmatpush1.bf16.msra.mxu0 %v3778
    %5406 = vmatprep.subr.bf16.mxu0 0
    %5407 = vmatpush1.bf16.msra.mxu0 %v3779
    %5408 = vmatprep.subr.bf16.mxu0 0
    %5409 = vmatpush1.bf16.msra.mxu0 %v3780
    %5410 = vmatprep.subr.bf16.mxu0 0
    %5411 = vmatpush1.bf16.msra.mxu0 %v3781
    %5412 = vmatprep.subr.bf16.mxu0 0
    %5413 = vmatpush1.bf16.msra.mxu0 %v3782
    %5414 = vmatprep.subr.bf16.mxu0 0
    %5415 = vmatpush1.bf16.msra.mxu0 %v3783
    %5416 = vmatprep.subr.bf16.mxu0 0
    %5417 = vmatpush1.bf16.msra.mxu0 %v3784
    %5418 = vmatprep.subr.bf16.mxu0 0
    %5419 = vmatpush1.bf16.msra.mxu0 %v3785
    %5420 = vmatprep.subr.bf16.mxu0 0
    %5421 = vmatpush1.bf16.msra.mxu0 %v3786
    %5422 = vmatprep.subr.bf16.mxu0 0
    %5423 = vmatpush1.bf16.msra.mxu0 %v3787
    %5424 = vmatprep.subr.bf16.mxu0 0
    %5425 = vmatpush1.bf16.msra.mxu0 %v3788
    %5426 = vmatprep.subr.bf16.mxu0 0
    %5427 = vmatpush1.bf16.msra.mxu0 %v3789
    %5428 = vmatprep.subr.bf16.mxu0 0
    %5429 = vmatpush1.bf16.msra.mxu0 %v3790
    %5430 = vmatprep.subr.bf16.mxu0 0
    %5431 = vmatpush1.bf16.msra.mxu0 %v3791
    %5432 = vmatprep.mubr.bf16.mxu0 %v1251
    %5433 = vmatmul.mubr.bf16.gmra.mrb[0].mxu0 %v1250
    %v5434 = vpop.f32.mrb[0].mxu0
    %v5435 = vadd.f32 %v5395, %v5434
    %v5436 = vpop.f32.mrb[0].mxu0
    %v5437 = vpop.f32.mrb[0].mxu0
    %v5438 = vpop.f32.mrb[0].mxu0
    %5439 = vdwg.mxu0
    %5440 = vmatprep.subr.bf16.mxu0 0
    %5441 = vmatpush1.bf16.msra.mxu0 %v3792
    %5442 = vmatprep.subr.bf16.mxu0 0
    %5443 = vmatpush1.bf16.msra.mxu0 %v3793
    %5444 = vmatprep.subr.bf16.mxu0 0
    %5445 = vmatpush1.bf16.msra.mxu0 %v3794
    %5446 = vmatprep.subr.bf16.mxu0 0
    %5447 = vmatpush1.bf16.msra.mxu0 %v3795
    %5448 = vmatprep.subr.bf16.mxu0 0
    %5449 = vmatpush1.bf16.msra.mxu0 %v3796
    %5450 = vmatprep.subr.bf16.mxu0 0
    %5451 = vmatpush1.bf16.msra.mxu0 %v3797
    %5452 = vmatprep.subr.bf16.mxu0 0
    %5453 = vmatpush1.bf16.msra.mxu0 %v3798
    %5454 = vmatprep.subr.bf16.mxu0 0
    %5455 = vmatpush1.bf16.msra.mxu0 %v3799
    %5456 = vmatprep.subr.bf16.mxu0 0
    %5457 = vmatpush1.bf16.msra.mxu0 %v3800
    %5458 = vmatprep.subr.bf16.mxu0 0
    %5459 = vmatpush1.bf16.msra.mxu0 %v3801
    %5460 = vmatprep.subr.bf16.mxu0 0
    %5461 = vmatpush1.bf16.msra.mxu0 %v3802
    %5462 = vmatprep.subr.bf16.mxu0 0
    %5463 = vmatpush1.bf16.msra.mxu0 %v3803
    %5464 = vmatprep.subr.bf16.mxu0 0
    %5465 = vmatpush1.bf16.msra.mxu0 %v3804
    %5466 = vmatprep.subr.bf16.mxu0 0
    %5467 = vmatpush1.bf16.msra.mxu0 %v3805
    %5468 = vmatprep.subr.bf16.mxu0 0
    %5469 = vmatpush1.bf16.msra.mxu0 %v3806
    %5470 = vmatprep.subr.bf16.mxu0 0
    %5471 = vmatpush1.bf16.msra.mxu0 %v3807
    %5472 = vmatprep.mubr.bf16.mxu0 %v1253
    %5473 = vmatmul.mubr.bf16.gmra.mrb[0].mxu0 %v1252
    %v5474 = vpop.f32.mrb[0].mxu0
    %v5475 = vadd.f32 %v5435, %v5474
    %v5476 = vpop.f32.mrb[0].mxu0
    %v5477 = vpop.f32.mrb[0].mxu0
    %v5478 = vpop.f32.mrb[0].mxu0
    %5479 = vdwg.mxu0
    %5480 = vmatprep.subr.bf16.mxu0 0
    %5481 = vmatpush1.bf16.msra.mxu0 %v3808
    %5482 = vmatprep.subr.bf16.mxu0 0
    %5483 = vmatpush1.bf16.msra.mxu0 %v3809
    %5484 = vmatprep.subr.bf16.mxu0 0
    %5485 = vmatpush1.bf16.msra.mxu0 %v3810
    %5486 = vmatprep.subr.bf16.mxu0 0
    %5487 = vmatpush1.bf16.msra.mxu0 %v3811
    %5488 = vmatprep.subr.bf16.mxu0 0
    %5489 = vmatpush1.bf16.msra.mxu0 %v3812
    %5490 = vmatprep.subr.bf16.mxu0 0
    %5491 = vmatpush1.bf16.msra.mxu0 %v3813
    %5492 = vmatprep.subr.bf16.mxu0 0
    %5493 = vmatpush1.bf16.msra.mxu0 %v3814
    %5494 = vmatprep.subr.bf16.mxu0 0
    %5495 = vmatpush1.bf16.msra.mxu0 %v3815
    %5496 = vmatprep.subr.bf16.mxu0 0
    %5497 = vmatpush1.bf16.msra.mxu0 %v3816
    %5498 = vmatprep.subr.bf16.mxu0 0
    %5499 = vmatpush1.bf16.msra.mxu0 %v3817
    %5500 = vmatprep.subr.bf16.mxu0 0
    %5501 = vmatpush1.bf16.msra.mxu0 %v3818
    %5502 = vmatprep.subr.bf16.mxu0 0
    %5503 = vmatpush1.bf16.msra.mxu0 %v3819
    %5504 = vmatprep.subr.bf16.mxu0 0
    %5505 = vmatpush1.bf16.msra.mxu0 %v3820
    %5506 = vmatprep.subr.bf16.mxu0 0
    %5507 = vmatpush1.bf16.msra.mxu0 %v3821
    %5508 = vmatprep.subr.bf16.mxu0 0
    %5509 = vmatpush1.bf16.msra.mxu0 %v3822
    %5510 = vmatprep.subr.bf16.mxu0 0
    %5511 = vmatpush1.bf16.msra.mxu0 %v3823
    %5512 = vmatprep.mubr.bf16.mxu0 %v1255
    %5513 = vmatmul.mubr.bf16.gmra.mrb[0].mxu0 %v1254
    %v5514 = vpop.f32.mrb[0].mxu0
    %v5515 = vadd.f32 %v5475, %v5514
    %v5516 = vpop.f32.mrb[0].mxu0
    %v5517 = vpop.f32.mrb[0].mxu0
    %v5518 = vpop.f32.mrb[0].mxu0
    %5519 = vdwg.mxu0
    %5520 = vmatprep.subr.bf16.mxu0 0
    %5521 = vmatpush1.bf16.msra.mxu0 %v3824
    %5522 = vmatprep.subr.bf16.mxu0 0
    %5523 = vmatpush1.bf16.msra.mxu0 %v3825
    %5524 = vmatprep.subr.bf16.mxu0 0
    %5525 = vmatpush1.bf16.msra.mxu0 %v3826
    %5526 = vmatprep.subr.bf16.mxu0 0
    %5527 = vmatpush1.bf16.msra.mxu0 %v3827
    %5528 = vmatprep.subr.bf16.mxu0 0
    %5529 = vmatpush1.bf16.msra.mxu0 %v3828
    %5530 = vmatprep.subr.bf16.mxu0 0
    %5531 = vmatpush1.bf16.msra.mxu0 %v3829
    %5532 = vmatprep.subr.bf16.mxu0 0
    %5533 = vmatpush1.bf16.msra.mxu0 %v3830
    %5534 = vmatprep.subr.bf16.mxu0 0
    %5535 = vmatpush1.bf16.msra.mxu0 %v3831
    %5536 = vmatprep.subr.bf16.mxu0 0
    %5537 = vmatpush1.bf16.msra.mxu0 %v3832
    %5538 = vmatprep.subr.bf16.mxu0 0
    %5539 = vmatpush1.bf16.msra.mxu0 %v3833
    %5540 = vmatprep.subr.bf16.mxu0 0
    %5541 = vmatpush1.bf16.msra.mxu0 %v3834
    %5542 = vmatprep.subr.bf16.mxu0 0
    %5543 = vmatpush1.bf16.msra.mxu0 %v3835
    %5544 = vmatprep.subr.bf16.mxu0 0
    %5545 = vmatpush1.bf16.msra.mxu0 %v3836
    %5546 = vmatprep.subr.bf16.mxu0 0
    %5547 = vmatpush1.bf16.msra.mxu0 %v3837
    %5548 = vmatprep.subr.bf16.mxu0 0
    %5549 = vmatpush1.bf16.msra.mxu0 %v3838
    %5550 = vmatprep.subr.bf16.mxu0 0
    %5551 = vmatpush1.bf16.msra.mxu0 %v3839
    %5552 = vmatprep.mubr.bf16.mxu0 %v1257
    %5553 = vmatmul.mubr.bf16.gmra.mrb[0].mxu0 %v1256
    %v5554 = vpop.f32.mrb[0].mxu0
    %v5555 = vadd.f32 %v5515, %v5554
    %v5556 = vpop.f32.mrb[0].mxu0
    %v5557 = vpop.f32.mrb[0].mxu0
    %v5558 = vpop.f32.mrb[0].mxu0
    %5559 = vdwg.mxu0
    %5560 = vmatprep.subr.bf16.mxu0 0
    %5561 = vmatpush1.bf16.msra.mxu0 %v3840
    %5562 = vmatprep.subr.bf16.mxu0 0
    %5563 = vmatpush1.bf16.msra.mxu0 %v3841
    %5564 = vmatprep.subr.bf16.mxu0 0
    %5565 = vmatpush1.bf16.msra.mxu0 %v3842
    %5566 = vmatprep.subr.bf16.mxu0 0
    %5567 = vmatpush1.bf16.msra.mxu0 %v3843
    %5568 = vmatprep.subr.bf16.mxu0 0
    %5569 = vmatpush1.bf16.msra.mxu0 %v3844
    %5570 = vmatprep.subr.bf16.mxu0 0
    %5571 = vmatpush1.bf16.msra.mxu0 %v3845
    %5572 = vmatprep.subr.bf16.mxu0 0
    %5573 = vmatpush1.bf16.msra.mxu0 %v3846
    %5574 = vmatprep.subr.bf16.mxu0 0
    %5575 = vmatpush1.bf16.msra.mxu0 %v3847
    %5576 = vmatprep.subr.bf16.mxu0 0
    %5577 = vmatpush1.bf16.msra.mxu0 %v3848
    %5578 = vmatprep.subr.bf16.mxu0 0
    %5579 = vmatpush1.bf16.msra.mxu0 %v3849
    %5580 = vmatprep.subr.bf16.mxu0 0
    %5581 = vmatpush1.bf16.msra.mxu0 %v3850
    %5582 = vmatprep.subr.bf16.mxu0 0
    %5583 = vmatpush1.bf16.msra.mxu0 %v3851
    %5584 = vmatprep.subr.bf16.mxu0 0
    %5585 = vmatpush1.bf16.msra.mxu0 %v3852
    %5586 = vmatprep.subr.bf16.mxu0 0
    %5587 = vmatpush1.bf16.msra.mxu0 %v3853
    %5588 = vmatprep.subr.bf16.mxu0 0
    %5589 = vmatpush1.bf16.msra.mxu0 %v3854
    %5590 = vmatprep.subr.bf16.mxu0 0
    %5591 = vmatpush1.bf16.msra.mxu0 %v3855
    %5592 = vmatprep.mubr.bf16.mxu0 %v1259
    %5593 = vmatmul.mubr.bf16.gmra.mrb[0].mxu0 %v1258
    %v5594 = vpop.f32.mrb[0].mxu0
    %v5595 = vadd.f32 %v5555, %v5594
    %v5596 = vpop.f32.mrb[0].mxu0
    %v5597 = vpop.f32.mrb[0].mxu0
    %v5598 = vpop.f32.mrb[0].mxu0
    %5599 = vdwg.mxu0
    %5600 = vmatprep.subr.bf16.mxu0 0
    %5601 = vmatpush1.bf16.msra.mxu0 %v3856
    %5602 = vmatprep.subr.bf16.mxu0 0
    %5603 = vmatpush1.bf16.msra.mxu0 %v3857
    %5604 = vmatprep.subr.bf16.mxu0 0
    %5605 = vmatpush1.bf16.msra.mxu0 %v3858
    %5606 = vmatprep.subr.bf16.mxu0 0
    %5607 = vmatpush1.bf16.msra.mxu0 %v3859
    %5608 = vmatprep.subr.bf16.mxu0 0
    %5609 = vmatpush1.bf16.msra.mxu0 %v3860
    %5610 = vmatprep.subr.bf16.mxu0 0
    %5611 = vmatpush1.bf16.msra.mxu0 %v3861
    %5612 = vmatprep.subr.bf16.mxu0 0
    %5613 = vmatpush1.bf16.msra.mxu0 %v3862
    %5614 = vmatprep.subr.bf16.mxu0 0
    %5615 = vmatpush1.bf16.msra.mxu0 %v3863
    %5616 = vmatprep.subr.bf16.mxu0 0
    %5617 = vmatpush1.bf16.msra.mxu0 %v3864
    %5618 = vmatprep.subr.bf16.mxu0 0
    %5619 = vmatpush1.bf16.msra.mxu0 %v3865
    %5620 = vmatprep.subr.bf16.mxu0 0
    %5621 = vmatpush1.bf16.msra.mxu0 %v3866
    %5622 = vmatprep.subr.bf16.mxu0 0
    %5623 = vmatpush1.bf16.msra.mxu0 %v3867
    %5624 = vmatprep.subr.bf16.mxu0 0
    %5625 = vmatpush1.bf16.msra.mxu0 %v3868
    %5626 = vmatprep.subr.bf16.mxu0 0
    %5627 = vmatpush1.bf16.msra.mxu0 %v3869
    %5628 = vmatprep.subr.bf16.mxu0 0
    %5629 = vmatpush1.bf16.msra.mxu0 %v3870
    %5630 = vmatprep.subr.bf16.mxu0 0
    %5631 = vmatpush1.bf16.msra.mxu0 %v3871
    %5632 = vmatprep.mubr.bf16.mxu0 %v1261
    %5633 = vmatmul.mubr.bf16.gmra.mrb[0].mxu0 %v1260
    %v5634 = vpop.f32.mrb[0].mxu0
    %v5635 = vadd.f32 %v5595, %v5634
    %v5636 = vpop.f32.mrb[0].mxu0
    %v5637 = vpop.f32.mrb[0].mxu0
    %v5638 = vpop.f32.mrb[0].mxu0
    %5639 = vdwg.mxu0
    %5640 = vmatprep.subr.bf16.mxu0 0
    %5641 = vmatpush1.bf16.msra.mxu0 %v3872
    %5642 = vmatprep.subr.bf16.mxu0 0
    %5643 = vmatpush1.bf16.msra.mxu0 %v3873
    %5644 = vmatprep.subr.bf16.mxu0 0
    %5645 = vmatpush1.bf16.msra.mxu0 %v3874
    %5646 = vmatprep.subr.bf16.mxu0 0
    %5647 = vmatpush1.bf16.msra.mxu0 %v3875
    %5648 = vmatprep.subr.bf16.mxu0 0
    %5649 = vmatpush1.bf16.msra.mxu0 %v3876
    %5650 = vmatprep.subr.bf16.mxu0 0
    %5651 = vmatpush1.bf16.msra.mxu0 %v3877
    %5652 = vmatprep.subr.bf16.mxu0 0
    %5653 = vmatpush1.bf16.msra.mxu0 %v3878
    %5654 = vmatprep.subr.bf16.mxu0 0
    %5655 = vmatpush1.bf16.msra.mxu0 %v3879
    %5656 = vmatprep.subr.bf16.mxu0 0
    %5657 = vmatpush1.bf16.msra.mxu0 %v3880
    %5658 = vmatprep.subr.bf16.mxu0 0
    %5659 = vmatpush1.bf16.msra.mxu0 %v3881
    %5660 = vmatprep.subr.bf16.mxu0 0
    %5661 = vmatpush1.bf16.msra.mxu0 %v3882
    %5662 = vmatprep.subr.bf16.mxu0 0
    %5663 = vmatpush1.bf16.msra.mxu0 %v3883
    %5664 = vmatprep.subr.bf16.mxu0 0
    %5665 = vmatpush1.bf16.msra.mxu0 %v3884
    %5666 = vmatprep.subr.bf16.mxu0 0
    %5667 = vmatpush1.bf16.msra.mxu0 %v3885
    %5668 = vmatprep.subr.bf16.mxu0 0
    %5669 = vmatpush1.bf16.msra.mxu0 %v3886
    %5670 = vmatprep.subr.bf16.mxu0 0
    %5671 = vmatpush1.bf16.msra.mxu0 %v3887
    %5672 = vmatprep.mubr.bf16.mxu0 %v1263
    %5673 = vmatmul.mubr.bf16.gmra.mrb[0].mxu0 %v1262
    %v5674 = vpop.f32.mrb[0].mxu0
    %v5675 = vadd.f32 %v5635, %v5674
    %v5676 = vpop.f32.mrb[0].mxu0
    %v5677 = vpop.f32.mrb[0].mxu0
    %v5678 = vpop.f32.mrb[0].mxu0
    %5679 = vdwg.mxu0
    %5680 = vst [vmem:[%s3] sm:$0xff] %v5675
    // Predicated region
    $region22: #{mobilenet_forward.3} parent=1 // pred_check
      _
    $region23: #{mobilenet_forward.3} parent=1 // pred_check_branch
      %5682 = sbr.rel (0) target = $region25
    $region24: #{mobilenet_forward.3} parent=1 // pred_region
      _
    $region25: #{mobilenet_forward.3} parent=1 // pred_fallthru
      _
    // Predicated region
    $region26: #{mobilenet_forward.3} parent=1 // pred_check
      _
    $region27: #{mobilenet_forward.3} parent=1 // pred_check_branch
      %5684 = sbr.rel (0) target = $region29
    $region28: #{mobilenet_forward.3} parent=1 // pred_region
      _
    $region29: #{mobilenet_forward.3} parent=1 // pred_fallthru
      _
    %5685 = vsyncpa [#allocation3], 1
    %5686 = vsyncpa [#allocation5], 1

</llo_original>
